<compile_context>
chip_gen: v7x
topology: tpu7x:2x2x1
jax: 0.10.0
libtpu: 0.0.40
codegen_flags: <defaults>
</compile_context>

<pallas_src>
import jax
import jax.numpy as jnp
from jax.experimental import pallas as pl
from jax.experimental.pallas import tpu as pltpu


# ----------------------------------------------------------------------------
# Pallas kernel: sequential time recurrence, both GRU cells on-chip.
# ----------------------------------------------------------------------------
def _mtgru_kernel(alpha_ref,                       # SMEM (4,): [a1, 1-a1, a2, 1-a2]
                  gix_ref,                         # VMEM (Bp, Tb, 6H) f32: [gi1 | gi2x] (+b_ih)
                  wh1_ref, wih2h_ref, wh2_ref,     # VMEM (H, 3H) bf16 each
                  bh1_ref, bh2_ref,                # VMEM (1, 3H) f32 each
                  out_ref,                         # VMEM (Bp, Tb, 2H) f32
                  h1_s, h2_s):                     # VMEM scratch (Bp, H) f32 each
    tb = pl.program_id(0)
    Bp, H = h1_s.shape
    Tb = gix_ref.shape[1]
    H3 = 3 * H

    @pl.when(tb == 0)
    def _():
        h1_s[...] = jnp.zeros_like(h1_s)
        h2_s[...] = jnp.zeros_like(h2_s)

    a1, om_a1 = alpha_ref[0], alpha_ref[1]
    a2, om_a2 = alpha_ref[2], alpha_ref[3]

    # Loop-invariant reads / broadcasts hoisted out of the per-timestep loop.
    wh1 = wh1_ref[...]
    wih2h = wih2h_ref[...]
    wh2 = wh2_ref[...]
    bh1 = jnp.broadcast_to(bh1_ref[...], (Bp, H3))
    bh2 = jnp.broadcast_to(bh2_ref[...], (Bp, H3))

    def gru_update(gi, gh, h):
        # PyTorch GRUCell gate order: r, z, n.  n uses r * (W_hn h + b_hn).
        r = jax.nn.sigmoid(gi[:, :H] + gh[:, :H])
        z = jax.nn.sigmoid(gi[:, H:2 * H] + gh[:, H:2 * H])
        n = jnp.tanh(gi[:, 2 * H:] + r * gh[:, 2 * H:])
        return (1.0 - z) * n + z * h

    h1 = h1_s[...]
    h2 = h2_s[...]

    # Tb is a static block dim: fully unrolled, all indices static.
    for tt in range(Tb):
        gi = gix_ref[:, tt, :]            # (Bp, 6H), input-side gates, biases folded
        gi1 = gi[:, :H3]
        gi2x = gi[:, H3:]

        # ---- GRU cell 1 (input part precomputed) ----
        gh1 = jnp.dot(h1.astype(jnp.bfloat16), wh1,
                      preferred_element_type=jnp.float32) + bh1
        h1 = om_a1 * h1 + a1 * gru_update(gi1, gh1, h1)

        # ---- GRU cell 2 on concat(x_t, h1): split-weight form, no concat ----
        gi2 = gi2x + jnp.dot(h1.astype(jnp.bfloat16), wih2h,
                             preferred_element_type=jnp.float32)
        gh2 = jnp.dot(h2.astype(jnp.bfloat16), wh2,
                      preferred_element_type=jnp.float32) + bh2
        h2 = om_a2 * h2 + a2 * gru_update(gi2, gh2, h2)

        out_ref[:, tt, :H] = h1
        out_ref[:, tt, H:] = h2

    h1_s[...] = h1
    h2_s[...] = h2


# ----------------------------------------------------------------------------
# Wrapper (params are in PyTorch layout: W_ih (3H, in), W_hh (3H, H), b (3H,))
# ----------------------------------------------------------------------------
def mtgru_pallas(params, encoder_outputs, *, block_t=8):
    """encoder_outputs: (B, S, 768) f32 -> (B, S, 2*d_model) f32 (pre-dropout)."""
    x = encoder_outputs.astype(jnp.float32)
    B, S, Din = x.shape
    H3, H = params["w_hh1"].shape          # torch layout (3H, H)
    assert H3 == 3 * H

    Bp = ((B + 7) // 8) * 8                # pad batch to full 8-sublane vregs
    Tb = max(1, min(block_t, S))           # timesteps per grid step
    S_pad = pl.cdiv(S, Tb) * Tb

    if Bp != B or S_pad != S:
        x = jnp.pad(x, ((0, Bp - B), (0, S_pad - S), (0, 0)))

    # --- Hoisted input projections: one MXU-friendly matmul over all timesteps.
    # columns = [ W_ih1^T | (W_ih2 x-part)^T ], biases folded in.
    w_in = jnp.concatenate([params["w_ih1"].T,
                            params["w_ih2"][:, :Din].T], axis=1)          # (Din, 6H)
    b_in = jnp.concatenate([params["b_ih1"], params["b_ih2"]])            # (6H,)
    gix = jnp.dot(x.astype(jnp.bfloat16), w_in.astype(jnp.bfloat16),
                  preferred_element_type=jnp.float32) + b_in              # (Bp, S_pad, 6H)

    # --- Recurrent-path weights (bf16 once, halves DMA + native MXU).
    wh1_t = params["w_hh1"].T.astype(jnp.bfloat16)                        # (H, 3H)
    wih2h_t = params["w_ih2"][:, Din:].T.astype(jnp.bfloat16)             # (H, 3H)
    wh2_t = params["w_hh2"].T.astype(jnp.bfloat16)                        # (H, 3H)
    bh1 = params["b_hh1"].reshape(1, H3).astype(jnp.float32)
    bh2 = params["b_hh2"].reshape(1, H3).astype(jnp.float32)

    a1 = (1.0 / params["tau1"]).reshape(()).astype(jnp.float32)
    a2 = (1.0 / params["tau2"]).reshape(()).astype(jnp.float32)
    alphas = jnp.stack([a1, 1.0 - a1, a2, 1.0 - a2])                      # (4,) SMEM

    const = lambda shape: pl.BlockSpec(shape, lambda t: (0, 0))

    out = pl.pallas_call(
        _mtgru_kernel,
        out_shape=jax.ShapeDtypeStruct((Bp, S_pad, 2 * H), jnp.float32),
        grid_spec=pltpu.PrefetchScalarGridSpec(
            num_scalar_prefetch=0,
            grid=(S_pad // Tb,),
            in_specs=[
                pl.BlockSpec(memory_space=pltpu.MemorySpace.SMEM),        # alphas
                pl.BlockSpec((Bp, Tb, 2 * H3), lambda t: (0, t, 0)),      # gate slab
                const((H, H3)),                                           # W_hh1^T
                const((H, H3)),                                           # W_ih2^T (h1 part)
                const((H, H3)),                                           # W_hh2^T
                const((1, H3)),                                           # b_hh1
                const((1, H3)),                                           # b_hh2
            ],
            out_specs=pl.BlockSpec((Bp, Tb, 2 * H), lambda t: (0, t, 0)),
            scratch_shapes=[pltpu.VMEM((Bp, H), jnp.float32),
                            pltpu.VMEM((Bp, H), jnp.float32)],
        ),
        compiler_params=pltpu.CompilerParams(
            dimension_semantics=("arbitrary",),   # recurrence: keep sequential
        ),
    )(alphas, gix, wh1_t, wih2h_t, wh2_t, bh1, bh2)

    return out[:B, :S, :]                                                  # (B, S, 2H)


def mtgru_forward(params, encoder_outputs, dropout_key, p=0.5):
    """Full forward matching MTGRU.forward (F.dropout defaults to training=True)."""
    y = mtgru_pallas(params, encoder_outputs)
    # TODO(synk): torch's F.dropout RNG stream cannot be bit-matched; jax.random used.
    # (Could be fused into the kernel's output store via pltpu.prng_seed +
    #  pltpu.stateful_bernoulli to save one HBM round trip.)
    keep = jax.random.bernoulli(dropout_key, 1.0 - p, y.shape)
    return jnp.where(keep, y / (1.0 - p), 0.0)


# ----------------------------------------------------------------------------
# Deterministic parameter construction (PyTorch GRUCell init: U(-1/sqrt(H), 1/sqrt(H)))
# ----------------------------------------------------------------------------
def init_params(key, d_model=128, d_in=768):
    H, H3 = d_model, 3 * d_model
    bound = 1.0 / jnp.sqrt(jnp.float32(H))
    ks = jax.random.split(key, 8)
    u = lambda k, shape: jax.random.uniform(k, shape, jnp.float32, -bound, bound)
    return dict(
        tau1=jnp.array([1.0], jnp.float32),
        tau2=jnp.array([1.2], jnp.float32),
        w_ih1=u(ks[0], (H3, d_in)),          # torch layout (3H, in)
        w_hh1=u(ks[1], (H3, H)),
        b_ih1=u(ks[2], (H3,)),
        b_hh1=u(ks[3], (H3,)),
        w_ih2=u(ks[4], (H3, d_in + H)),
        w_hh2=u(ks[5], (H3, H)),
        b_ih2=u(ks[6], (H3,)),
        b_hh2=u(ks[7], (H3,)),
    )


# ----------------------------------------------------------------------------
# Pure-JAX f32 HIGHEST-precision reference (no dropout) for the sanity check
# ----------------------------------------------------------------------------
def mtgru_reference(params, x):
    B, S, Din = x.shape
    H3, H = params["w_hh1"].shape            # torch layout (3H, H) -> H is dim 1
    hp = jax.lax.Precision.HIGHEST

    wi1_t, wh1_t = params["w_ih1"].T, params["w_hh1"].T
    wi2_t, wh2_t = params["w_ih2"].T, params["w_hh2"].T
    bi1, bh1 = params["b_ih1"], params["b_hh1"]
    bi2, bh2 = params["b_ih2"], params["b_hh2"]
    a1 = (1.0 / params["tau1"]).reshape(())
    a2 = (1.0 / params["tau2"]).reshape(())

    def cell(inp, h, wi_t, wh_t, bi, bh):
        gi = jnp.dot(inp, wi_t, precision=hp) + bi
        gh = jnp.dot(h, wh_t, precision=hp) + bh
        r = jax.nn.sigmoid(gi[:, :H] + gh[:, :H])
        z = jax.nn.sigmoid(gi[:, H:2 * H] + gh[:, H:2 * H])
        n = jnp.tanh(gi[:, 2 * H:] + r * gh[:, 2 * H:])
        return (1.0 - z) * n + z * h

    def step(carry, x_t):
        h1, h2 = carry
        h1c = cell(x_t, h1, wi1_t, wh1_t, bi1, bh1)
        h1n = (1.0 - a1) * h1 + a1 * h1c
        h2c = cell(jnp.concatenate([x_t, h1n], axis=1), h2, wi2_t, wh2_t, bi2, bh2)
        h2n = (1.0 - a2) * h2 + a2 * h2c
        return (h1n, h2n), jnp.concatenate([h1n, h2n], axis=-1)

    h0 = (jnp.zeros((B, H), jnp.float32), jnp.zeros((B, H), jnp.float32))
    _, ys = jax.lax.scan(step, h0, jnp.transpose(x, (1, 0, 2)))
    return jnp.transpose(ys, (1, 0, 2))


if __name__ == "__main__":
    B, S, D_IN, D_MODEL = 4, 8, 768, 128

    key = jax.random.PRNGKey(0)
    k_param, k_x, k_drop = jax.random.split(key, 3)
    params = init_params(k_param, d_model=D_MODEL, d_in=D_IN)
    x = jax.random.normal(k_x, (B, S, D_IN), jnp.float32)

    # Pre-dropout kernel output vs. pure-JAX f32 reference.
    # Error budget: bf16 MXU operands (f32 accumulation) vs. f32 HIGHEST reference
    # over 8 recurrent steps -> a few 1e-2 worst-case on O(1) activations.
    y_kernel = jax.block_until_ready(mtgru_pallas(params, x))
    y_ref = jax.block_until_ready(mtgru_reference(params, x))
    assert y_kernel.shape == (B, S, 2 * D_MODEL)
    assert jnp.allclose(y_kernel, y_ref, rtol=3e-2, atol=3e-2), (
        f"mismatch vs reference: max|err|={float(jnp.max(jnp.abs(y_kernel - y_ref)))}")

    # Full forward (includes dropout, matching F.dropout training=True default).
    y_full = jax.block_until_ready(mtgru_forward(params, x, k_drop, p=0.5))
    assert y_full.shape == (B, S, 2 * D_MODEL)

    print("KERNEL_OK")
</pallas_src>

<mosaic_0001>
module attributes {stable_mosaic.version = 11 : i64} {
  func.func @_mtgru_kernel(%arg0: i32, %arg1: memref<4xf32, #tpu.memory_space<smem>>, %arg2: memref<8x8x768xf32, #tpu.memory_space<vmem>>, %arg3: memref<128x384xbf16, #tpu.memory_space<vmem>>, %arg4: memref<128x384xbf16, #tpu.memory_space<vmem>>, %arg5: memref<128x384xbf16, #tpu.memory_space<vmem>>, %arg6: memref<1x384xf32, #tpu.memory_space<vmem>>, %arg7: memref<1x384xf32, #tpu.memory_space<vmem>>, %arg8: memref<8x8x256xf32, #tpu.memory_space<vmem>>, %arg9: memref<8x128xf32, #tpu.memory_space<vmem>>, %arg10: memref<8x128xf32, #tpu.memory_space<vmem>>) attributes {dimension_semantics = [#tpu.dimension_semantics<arbitrary>], iteration_bounds = array<i64: 1>, scalar_prefetch = 0 : i64, scratch_operands = 2 : i64, tpu.core_type = #tpu.core_type<tc>, window_params = [{transform_indices = @transform_0, window_bounds = array<i64: 4>}, {transform_indices = @transform_1, window_bounds = array<i64: 8, 8, 768>}, {pipeline_mode = #tpu.pipeline_mode<synchronous>, transform_indices = @transform_2, window_bounds = array<i64: 128, 384>}, {pipeline_mode = #tpu.pipeline_mode<synchronous>, transform_indices = @transform_3, window_bounds = array<i64: 128, 384>}, {pipeline_mode = #tpu.pipeline_mode<synchronous>, transform_indices = @transform_4, window_bounds = array<i64: 128, 384>}, {pipeline_mode = #tpu.pipeline_mode<synchronous>, transform_indices = @transform_5, window_bounds = array<i64: 1, 384>}, {pipeline_mode = #tpu.pipeline_mode<synchronous>, transform_indices = @transform_6, window_bounds = array<i64: 1, 384>}, {transform_indices = @transform_7, window_bounds = array<i64: 8, 8, 256>}]} {
    %c0_i32 = arith.constant 0 : i32
    %0 = arith.cmpi eq, %arg0, %c0_i32 : i32
    %1 = arith.extui %0 : i1 to i32
    %c0_i32_0 = arith.constant 0 : i32
    %2 = arith.cmpi ne, %1, %c0_i32_0 : i32
    scf.if %2 {
      %cst_157 = arith.constant 0.000000e+00 : f32
      %668 = vector.broadcast %cst_157 : f32 to vector<8x128xf32>
      %c0_158 = arith.constant 0 : index
      %c0_159 = arith.constant 0 : index
      %669 = vector.load %arg9[%c0_158, %c0_159] : memref<8x128xf32, #tpu.memory_space<vmem>>, vector<8x128xf32>
      tpu.vector_store %arg9[%c0_158, %c0_159], %668 {strides = array<i32>} : memref<8x128xf32, #tpu.memory_space<vmem>>, vector<8x128xf32>,
      %cst_160 = arith.constant 0.000000e+00 : f32
      %670 = vector.broadcast %cst_160 : f32 to vector<8x128xf32>
      %c0_161 = arith.constant 0 : index
      %c0_162 = arith.constant 0 : index
      %671 = vector.load %arg10[%c0_161, %c0_162] : memref<8x128xf32, #tpu.memory_space<vmem>>, vector<8x128xf32>
      tpu.vector_store %arg10[%c0_161, %c0_162], %670 {strides = array<i32>} : memref<8x128xf32, #tpu.memory_space<vmem>>, vector<8x128xf32>,
    } else {
    }
    %c0 = arith.constant 0 : index
    %3 = memref.load %arg1[%c0] : memref<4xf32, #tpu.memory_space<smem>>
    %c1 = arith.constant 1 : index
    %4 = memref.load %arg1[%c1] : memref<4xf32, #tpu.memory_space<smem>>
    %c2 = arith.constant 2 : index
    %5 = memref.load %arg1[%c2] : memref<4xf32, #tpu.memory_space<smem>>
    %c3 = arith.constant 3 : index
    %6 = memref.load %arg1[%c3] : memref<4xf32, #tpu.memory_space<smem>>
    %c0_1 = arith.constant 0 : index
    %c0_2 = arith.constant 0 : index
    %7 = vector.load %arg3[%c0_1, %c0_2] : memref<128x384xbf16, #tpu.memory_space<vmem>>, vector<128x384xbf16>
    %c0_3 = arith.constant 0 : index
    %c0_4 = arith.constant 0 : index
    %8 = vector.load %arg4[%c0_3, %c0_4] : memref<128x384xbf16, #tpu.memory_space<vmem>>, vector<128x384xbf16>
    %c0_5 = arith.constant 0 : index
    %c0_6 = arith.constant 0 : index
    %9 = vector.load %arg5[%c0_5, %c0_6] : memref<128x384xbf16, #tpu.memory_space<vmem>>, vector<128x384xbf16>
    %c0_7 = arith.constant 0 : index
    %c0_8 = arith.constant 0 : index
    %10 = vector.load %arg6[%c0_7, %c0_8] : memref<1x384xf32, #tpu.memory_space<vmem>>, vector<1x384xf32>
    %11 = vector.shape_cast %10 : vector<1x384xf32> to vector<1x384xf32>
    %12 = vector.broadcast %11 : vector<1x384xf32> to vector<8x384xf32>
    %c0_9 = arith.constant 0 : index
    %c0_10 = arith.constant 0 : index
    %13 = vector.load %arg7[%c0_9, %c0_10] : memref<1x384xf32, #tpu.memory_space<vmem>>, vector<1x384xf32>
    %14 = vector.shape_cast %13 : vector<1x384xf32> to vector<1x384xf32>
    %15 = vector.broadcast %14 : vector<1x384xf32> to vector<8x384xf32>
    %c0_11 = arith.constant 0 : index
    %c0_12 = arith.constant 0 : index
    %16 = vector.load %arg9[%c0_11, %c0_12] : memref<8x128xf32, #tpu.memory_space<vmem>>, vector<8x128xf32>
    %c0_13 = arith.constant 0 : index
    %c0_14 = arith.constant 0 : index
    %17 = vector.load %arg10[%c0_13, %c0_14] : memref<8x128xf32, #tpu.memory_space<vmem>>, vector<8x128xf32>
    %c0_15 = arith.constant 0 : index
    %c0_16 = arith.constant 0 : index
    %c0_17 = arith.constant 0 : index
    %18 = vector.load %arg2[%c0_15, %c0_16, %c0_17] : memref<8x8x768xf32, #tpu.memory_space<vmem>>, vector<8x1x768xf32>
    %19 = vector.shape_cast %18 : vector<8x1x768xf32> to vector<8x768xf32>
    %20 = vector.extract_strided_slice %19 {offsets = [0, 0], sizes = [8, 384], strides = [1, 1]} : vector<8x768xf32> to vector<8x384xf32>
    %21 = vector.extract_strided_slice %19 {offsets = [0, 384], sizes = [8, 384], strides = [1, 1]} : vector<8x768xf32> to vector<8x384xf32>
    %22 = arith.truncf %16 : vector<8x128xf32> to vector<8x128xbf16>
    %cst = arith.constant dense<0.000000e+00> : vector<8x384xf32>
    %23 = tpu.matmul %22, %7, %cst {dimension_numbers = #tpu.dot_dimension_numbers<[1], [0], [0], [1], [0, 0, 1, 1], [], []>} : vector<8x128xbf16>, vector<128x384xbf16>, vector<8x384xf32> -> vector<8x384xf32>
    %24 = arith.addf %23, %12 : vector<8x384xf32>
    %25 = vector.broadcast %4 : f32 to vector<8x128xf32>
    %26 = arith.mulf %25, %16 : vector<8x128xf32>
    %27 = vector.extract_strided_slice %20 {offsets = [0, 0], sizes = [8, 128], strides = [1, 1]} : vector<8x384xf32> to vector<8x128xf32>
    %28 = vector.extract_strided_slice %24 {offsets = [0, 0], sizes = [8, 128], strides = [1, 1]} : vector<8x384xf32> to vector<8x128xf32>
    %29 = arith.addf %27, %28 : vector<8x128xf32>
    %30 = arith.negf %29 : vector<8x128xf32>
    %31 = math.exp %30 : vector<8x128xf32>
    %cst_18 = arith.constant 1.000000e+00 : f32
    %32 = vector.broadcast %cst_18 : f32 to vector<8x128xf32>
    %33 = arith.addf %32, %31 : vector<8x128xf32>
    %34 = arith.divf %32, %33 : vector<8x128xf32>
    %35 = vector.extract_strided_slice %20 {offsets = [0, 128], sizes = [8, 128], strides = [1, 1]} : vector<8x384xf32> to vector<8x128xf32>
    %36 = vector.extract_strided_slice %24 {offsets = [0, 128], sizes = [8, 128], strides = [1, 1]} : vector<8x384xf32> to vector<8x128xf32>
    %37 = arith.addf %35, %36 : vector<8x128xf32>
    %38 = arith.negf %37 : vector<8x128xf32>
    %39 = math.exp %38 : vector<8x128xf32>
    %cst_19 = arith.constant 1.000000e+00 : f32
    %40 = vector.broadcast %cst_19 : f32 to vector<8x128xf32>
    %41 = arith.addf %40, %39 : vector<8x128xf32>
    %42 = arith.divf %40, %41 : vector<8x128xf32>
    %43 = vector.extract_strided_slice %20 {offsets = [0, 256], sizes = [8, 128], strides = [1, 1]} : vector<8x384xf32> to vector<8x128xf32>
    %44 = vector.extract_strided_slice %24 {offsets = [0, 256], sizes = [8, 128], strides = [1, 1]} : vector<8x384xf32> to vector<8x128xf32>
    %45 = arith.mulf %34, %44 : vector<8x128xf32>
    %46 = arith.addf %43, %45 : vector<8x128xf32>
    %47 = math.tanh %46 : vector<8x128xf32>
    %cst_20 = arith.constant 1.000000e+00 : f32
    %48 = vector.broadcast %cst_20 : f32 to vector<8x128xf32>
    %49 = arith.subf %48, %42 : vector<8x128xf32>
    %50 = arith.mulf %49, %47 : vector<8x128xf32>
    %51 = arith.mulf %42, %16 : vector<8x128xf32>
    %52 = arith.addf %50, %51 : vector<8x128xf32>
    %53 = vector.broadcast %3 : f32 to vector<8x128xf32>
    %54 = arith.mulf %53, %52 : vector<8x128xf32>
    %55 = arith.addf %26, %54 : vector<8x128xf32>
    %56 = arith.truncf %55 : vector<8x128xf32> to vector<8x128xbf16>
    %cst_21 = arith.constant dense<0.000000e+00> : vector<8x384xf32>
    %57 = tpu.matmul %56, %8, %cst_21 {dimension_numbers = #tpu.dot_dimension_numbers<[1], [0], [0], [1], [0, 0, 1, 1], [], []>} : vector<8x128xbf16>, vector<128x384xbf16>, vector<8x384xf32> -> vector<8x384xf32>
    %58 = arith.addf %21, %57 : vector<8x384xf32>
    %59 = arith.truncf %17 : vector<8x128xf32> to vector<8x128xbf16>
    %cst_22 = arith.constant dense<0.000000e+00> : vector<8x384xf32>
    %60 = tpu.matmul %59, %9, %cst_22 {dimension_numbers = #tpu.dot_dimension_numbers<[1], [0], [0], [1], [0, 0, 1, 1], [], []>} : vector<8x128xbf16>, vector<128x384xbf16>, vector<8x384xf32> -> vector<8x384xf32>
    %61 = arith.addf %60, %15 : vector<8x384xf32>
    %62 = vector.broadcast %6 : f32 to vector<8x128xf32>
    %63 = arith.mulf %62, %17 : vector<8x128xf32>
    %64 = vector.extract_strided_slice %58 {offsets = [0, 0], sizes = [8, 128], strides = [1, 1]} : vector<8x384xf32> to vector<8x128xf32>
    %65 = vector.extract_strided_slice %61 {offsets = [0, 0], sizes = [8, 128], strides = [1, 1]} : vector<8x384xf32> to vector<8x128xf32>
    %66 = arith.addf %64, %65 : vector<8x128xf32>
    %67 = arith.negf %66 : vector<8x128xf32>
    %68 = math.exp %67 : vector<8x128xf32>
    %cst_23 = arith.constant 1.000000e+00 : f32
    %69 = vector.broadcast %cst_23 : f32 to vector<8x128xf32>
    %70 = arith.addf %69, %68 : vector<8x128xf32>
    %71 = arith.divf %69, %70 : vector<8x128xf32>
    %72 = vector.extract_strided_slice %58 {offsets = [0, 128], sizes = [8, 128], strides = [1, 1]} : vector<8x384xf32> to vector<8x128xf32>
    %73 = vector.extract_strided_slice %61 {offsets = [0, 128], sizes = [8, 128], strides = [1, 1]} : vector<8x384xf32> to vector<8x128xf32>
    %74 = arith.addf %72, %73 : vector<8x128xf32>
    %75 = arith.negf %74 : vector<8x128xf32>
    %76 = math.exp %75 : vector<8x128xf32>
    %cst_24 = arith.constant 1.000000e+00 : f32
    %77 = vector.broadcast %cst_24 : f32 to vector<8x128xf32>
    %78 = arith.addf %77, %76 : vector<8x128xf32>
    %79 = arith.divf %77, %78 : vector<8x128xf32>
    %80 = vector.extract_strided_slice %58 {offsets = [0, 256], sizes = [8, 128], strides = [1, 1]} : vector<8x384xf32> to vector<8x128xf32>
    %81 = vector.extract_strided_slice %61 {offsets = [0, 256], sizes = [8, 128], strides = [1, 1]} : vector<8x384xf32> to vector<8x128xf32>
    %82 = arith.mulf %71, %81 : vector<8x128xf32>
    %83 = arith.addf %80, %82 : vector<8x128xf32>
    %84 = math.tanh %83 : vector<8x128xf32>
    %cst_25 = arith.constant 1.000000e+00 : f32
    %85 = vector.broadcast %cst_25 : f32 to vector<8x128xf32>
    %86 = arith.subf %85, %79 : vector<8x128xf32>
    %87 = arith.mulf %86, %84 : vector<8x128xf32>
    %88 = arith.mulf %79, %17 : vector<8x128xf32>
    %89 = arith.addf %87, %88 : vector<8x128xf32>
    %90 = vector.broadcast %5 : f32 to vector<8x128xf32>
    %91 = arith.mulf %90, %89 : vector<8x128xf32>
    %92 = arith.addf %63, %91 : vector<8x128xf32>
    %c0_26 = arith.constant 0 : index
    %c0_27 = arith.constant 0 : index
    %c0_28 = arith.constant 0 : index
    %93 = vector.load %arg8[%c0_26, %c0_27, %c0_28] : memref<8x8x256xf32, #tpu.memory_space<vmem>>, vector<8x1x128xf32>
    %94 = vector.shape_cast %93 : vector<8x1x128xf32> to vector<8x128xf32>
    %95 = vector.shape_cast %55 : vector<8x128xf32> to vector<8x1x128xf32>
    tpu.vector_store %arg8[%c0_26, %c0_27, %c0_28], %95 {strides = array<i32>} : memref<8x8x256xf32, #tpu.memory_space<vmem>>, vector<8x1x128xf32>,
    %c0_29 = arith.constant 0 : index
    %c0_30 = arith.constant 0 : index
    %c128 = arith.constant 128 : index
    %96 = vector.load %arg8[%c0_29, %c0_30, %c128] : memref<8x8x256xf32, #tpu.memory_space<vmem>>, vector<8x1x128xf32>
    %97 = vector.shape_cast %96 : vector<8x1x128xf32> to vector<8x128xf32>
    %98 = vector.shape_cast %92 : vector<8x128xf32> to vector<8x1x128xf32>
    tpu.vector_store %arg8[%c0_29, %c0_30, %c128], %98 {strides = array<i32>} : memref<8x8x256xf32, #tpu.memory_space<vmem>>, vector<8x1x128xf32>,
    %c0_31 = arith.constant 0 : index
    %c1_32 = arith.constant 1 : index
    %c0_33 = arith.constant 0 : index
    %99 = vector.load %arg2[%c0_31, %c1_32, %c0_33] : memref<8x8x768xf32, #tpu.memory_space<vmem>>, vector<8x1x768xf32>
    %100 = vector.shape_cast %99 : vector<8x1x768xf32> to vector<8x768xf32>
    %101 = vector.extract_strided_slice %100 {offsets = [0, 0], sizes = [8, 384], strides = [1, 1]} : vector<8x768xf32> to vector<8x384xf32>
    %102 = vector.extract_strided_slice %100 {offsets = [0, 384], sizes = [8, 384], strides = [1, 1]} : vector<8x768xf32> to vector<8x384xf32>
    %103 = arith.truncf %55 : vector<8x128xf32> to vector<8x128xbf16>
    %cst_34 = arith.constant dense<0.000000e+00> : vector<8x384xf32>
    %104 = tpu.matmul %103, %7, %cst_34 {dimension_numbers = #tpu.dot_dimension_numbers<[1], [0], [0], [1], [0, 0, 1, 1], [], []>} : vector<8x128xbf16>, vector<128x384xbf16>, vector<8x384xf32> -> vector<8x384xf32>
    %105 = arith.addf %104, %12 : vector<8x384xf32>
    %106 = vector.broadcast %4 : f32 to vector<8x128xf32>
    %107 = arith.mulf %106, %55 : vector<8x128xf32>
    %108 = vector.extract_strided_slice %101 {offsets = [0, 0], sizes = [8, 128], strides = [1, 1]} : vector<8x384xf32> to vector<8x128xf32>
    %109 = vector.extract_strided_slice %105 {offsets = [0, 0], sizes = [8, 128], strides = [1, 1]} : vector<8x384xf32> to vector<8x128xf32>
    %110 = arith.addf %108, %109 : vector<8x128xf32>
    %111 = arith.negf %110 : vector<8x128xf32>
    %112 = math.exp %111 : vector<8x128xf32>
    %cst_35 = arith.constant 1.000000e+00 : f32
    %113 = vector.broadcast %cst_35 : f32 to vector<8x128xf32>
    %114 = arith.addf %113, %112 : vector<8x128xf32>
    %115 = arith.divf %113, %114 : vector<8x128xf32>
    %116 = vector.extract_strided_slice %101 {offsets = [0, 128], sizes = [8, 128], strides = [1, 1]} : vector<8x384xf32> to vector<8x128xf32>
    %117 = vector.extract_strided_slice %105 {offsets = [0, 128], sizes = [8, 128], strides = [1, 1]} : vector<8x384xf32> to vector<8x128xf32>
    %118 = arith.addf %116, %117 : vector<8x128xf32>
    %119 = arith.negf %118 : vector<8x128xf32>
    %120 = math.exp %119 : vector<8x128xf32>
    %cst_36 = arith.constant 1.000000e+00 : f32
    %121 = vector.broadcast %cst_36 : f32 to vector<8x128xf32>
    %122 = arith.addf %121, %120 : vector<8x128xf32>
    %123 = arith.divf %121, %122 : vector<8x128xf32>
    %124 = vector.extract_strided_slice %101 {offsets = [0, 256], sizes = [8, 128], strides = [1, 1]} : vector<8x384xf32> to vector<8x128xf32>
    %125 = vector.extract_strided_slice %105 {offsets = [0, 256], sizes = [8, 128], strides = [1, 1]} : vector<8x384xf32> to vector<8x128xf32>
    %126 = arith.mulf %115, %125 : vector<8x128xf32>
    %127 = arith.addf %124, %126 : vector<8x128xf32>
    %128 = math.tanh %127 : vector<8x128xf32>
    %cst_37 = arith.constant 1.000000e+00 : f32
    %129 = vector.broadcast %cst_37 : f32 to vector<8x128xf32>
    %130 = arith.subf %129, %123 : vector<8x128xf32>
    %131 = arith.mulf %130, %128 : vector<8x128xf32>
    %132 = arith.mulf %123, %55 : vector<8x128xf32>
    %133 = arith.addf %131, %132 : vector<8x128xf32>
    %134 = vector.broadcast %3 : f32 to vector<8x128xf32>
    %135 = arith.mulf %134, %133 : vector<8x128xf32>
    %136 = arith.addf %107, %135 : vector<8x128xf32>
    %137 = arith.truncf %136 : vector<8x128xf32> to vector<8x128xbf16>
    %cst_38 = arith.constant dense<0.000000e+00> : vector<8x384xf32>
    %138 = tpu.matmul %137, %8, %cst_38 {dimension_numbers = #tpu.dot_dimension_numbers<[1], [0], [0], [1], [0, 0, 1, 1], [], []>} : vector<8x128xbf16>, vector<128x384xbf16>, vector<8x384xf32> -> vector<8x384xf32>
    %139 = arith.addf %102, %138 : vector<8x384xf32>
    %140 = arith.truncf %92 : vector<8x128xf32> to vector<8x128xbf16>
    %cst_39 = arith.constant dense<0.000000e+00> : vector<8x384xf32>
    %141 = tpu.matmul %140, %9, %cst_39 {dimension_numbers = #tpu.dot_dimension_numbers<[1], [0], [0], [1], [0, 0, 1, 1], [], []>} : vector<8x128xbf16>, vector<128x384xbf16>, vector<8x384xf32> -> vector<8x384xf32>
    %142 = arith.addf %141, %15 : vector<8x384xf32>
    %143 = vector.broadcast %6 : f32 to vector<8x128xf32>
    %144 = arith.mulf %143, %92 : vector<8x128xf32>
    %145 = vector.extract_strided_slice %139 {offsets = [0, 0], sizes = [8, 128], strides = [1, 1]} : vector<8x384xf32> to vector<8x128xf32>
    %146 = vector.extract_strided_slice %142 {offsets = [0, 0], sizes = [8, 128], strides = [1, 1]} : vector<8x384xf32> to vector<8x128xf32>
    %147 = arith.addf %145, %146 : vector<8x128xf32>
    %148 = arith.negf %147 : vector<8x128xf32>
    %149 = math.exp %148 : vector<8x128xf32>
    %cst_40 = arith.constant 1.000000e+00 : f32
    %150 = vector.broadcast %cst_40 : f32 to vector<8x128xf32>
    %151 = arith.addf %150, %149 : vector<8x128xf32>
    %152 = arith.divf %150, %151 : vector<8x128xf32>
    %153 = vector.extract_strided_slice %139 {offsets = [0, 128], sizes = [8, 128], strides = [1, 1]} : vector<8x384xf32> to vector<8x128xf32>
    %154 = vector.extract_strided_slice %142 {offsets = [0, 128], sizes = [8, 128], strides = [1, 1]} : vector<8x384xf32> to vector<8x128xf32>
    %155 = arith.addf %153, %154 : vector<8x128xf32>
    %156 = arith.negf %155 : vector<8x128xf32>
    %157 = math.exp %156 : vector<8x128xf32>
    %cst_41 = arith.constant 1.000000e+00 : f32
    %158 = vector.broadcast %cst_41 : f32 to vector<8x128xf32>
    %159 = arith.addf %158, %157 : vector<8x128xf32>
    %160 = arith.divf %158, %159 : vector<8x128xf32>
    %161 = vector.extract_strided_slice %139 {offsets = [0, 256], sizes = [8, 128], strides = [1, 1]} : vector<8x384xf32> to vector<8x128xf32>
    %162 = vector.extract_strided_slice %142 {offsets = [0, 256], sizes = [8, 128], strides = [1, 1]} : vector<8x384xf32> to vector<8x128xf32>
    %163 = arith.mulf %152, %162 : vector<8x128xf32>
    %164 = arith.addf %161, %163 : vector<8x128xf32>
    %165 = math.tanh %164 : vector<8x128xf32>
    %cst_42 = arith.constant 1.000000e+00 : f32
    %166 = vector.broadcast %cst_42 : f32 to vector<8x128xf32>
    %167 = arith.subf %166, %160 : vector<8x128xf32>
    %168 = arith.mulf %167, %165 : vector<8x128xf32>
    %169 = arith.mulf %160, %92 : vector<8x128xf32>
    %170 = arith.addf %168, %169 : vector<8x128xf32>
    %171 = vector.broadcast %5 : f32 to vector<8x128xf32>
    %172 = arith.mulf %171, %170 : vector<8x128xf32>
    %173 = arith.addf %144, %172 : vector<8x128xf32>
    %c0_43 = arith.constant 0 : index
    %c1_44 = arith.constant 1 : index
    %c0_45 = arith.constant 0 : index
    %174 = vector.load %arg8[%c0_43, %c1_44, %c0_45] : memref<8x8x256xf32, #tpu.memory_space<vmem>>, vector<8x1x128xf32>
    %175 = vector.shape_cast %174 : vector<8x1x128xf32> to vector<8x128xf32>
    %176 = vector.shape_cast %136 : vector<8x128xf32> to vector<8x1x128xf32>
    tpu.vector_store %arg8[%c0_43, %c1_44, %c0_45], %176 {strides = array<i32>} : memref<8x8x256xf32, #tpu.memory_space<vmem>>, vector<8x1x128xf32>,
    %c0_46 = arith.constant 0 : index
    %c1_47 = arith.constant 1 : index
    %c128_48 = arith.constant 128 : index
    %177 = vector.load %arg8[%c0_46, %c1_47, %c128_48] : memref<8x8x256xf32, #tpu.memory_space<vmem>>, vector<8x1x128xf32>
    %178 = vector.shape_cast %177 : vector<8x1x128xf32> to vector<8x128xf32>
    %179 = vector.shape_cast %173 : vector<8x128xf32> to vector<8x1x128xf32>
    tpu.vector_store %arg8[%c0_46, %c1_47, %c128_48], %179 {strides = array<i32>} : memref<8x8x256xf32, #tpu.memory_space<vmem>>, vector<8x1x128xf32>,
    %c0_49 = arith.constant 0 : index
    %c2_50 = arith.constant 2 : index
    %c0_51 = arith.constant 0 : index
    %180 = vector.load %arg2[%c0_49, %c2_50, %c0_51] : memref<8x8x768xf32, #tpu.memory_space<vmem>>, vector<8x1x768xf32>
    %181 = vector.shape_cast %180 : vector<8x1x768xf32> to vector<8x768xf32>
    %182 = vector.extract_strided_slice %181 {offsets = [0, 0], sizes = [8, 384], strides = [1, 1]} : vector<8x768xf32> to vector<8x384xf32>
    %183 = vector.extract_strided_slice %181 {offsets = [0, 384], sizes = [8, 384], strides = [1, 1]} : vector<8x768xf32> to vector<8x384xf32>
    %184 = arith.truncf %136 : vector<8x128xf32> to vector<8x128xbf16>
    %cst_52 = arith.constant dense<0.000000e+00> : vector<8x384xf32>
    %185 = tpu.matmul %184, %7, %cst_52 {dimension_numbers = #tpu.dot_dimension_numbers<[1], [0], [0], [1], [0, 0, 1, 1], [], []>} : vector<8x128xbf16>, vector<128x384xbf16>, vector<8x384xf32> -> vector<8x384xf32>
    %186 = arith.addf %185, %12 : vector<8x384xf32>
    %187 = vector.broadcast %4 : f32 to vector<8x128xf32>
    %188 = arith.mulf %187, %136 : vector<8x128xf32>
    %189 = vector.extract_strided_slice %182 {offsets = [0, 0], sizes = [8, 128], strides = [1, 1]} : vector<8x384xf32> to vector<8x128xf32>
    %190 = vector.extract_strided_slice %186 {offsets = [0, 0], sizes = [8, 128], strides = [1, 1]} : vector<8x384xf32> to vector<8x128xf32>
    %191 = arith.addf %189, %190 : vector<8x128xf32>
    %192 = arith.negf %191 : vector<8x128xf32>
    %193 = math.exp %192 : vector<8x128xf32>
    %cst_53 = arith.constant 1.000000e+00 : f32
    %194 = vector.broadcast %cst_53 : f32 to vector<8x128xf32>
    %195 = arith.addf %194, %193 : vector<8x128xf32>
    %196 = arith.divf %194, %195 : vector<8x128xf32>
    %197 = vector.extract_strided_slice %182 {offsets = [0, 128], sizes = [8, 128], strides = [1, 1]} : vector<8x384xf32> to vector<8x128xf32>
    %198 = vector.extract_strided_slice %186 {offsets = [0, 128], sizes = [8, 128], strides = [1, 1]} : vector<8x384xf32> to vector<8x128xf32>
    %199 = arith.addf %197, %198 : vector<8x128xf32>
    %200 = arith.negf %199 : vector<8x128xf32>
    %201 = math.exp %200 : vector<8x128xf32>
    %cst_54 = arith.constant 1.000000e+00 : f32
    %202 = vector.broadcast %cst_54 : f32 to vector<8x128xf32>
    %203 = arith.addf %202, %201 : vector<8x128xf32>
    %204 = arith.divf %202, %203 : vector<8x128xf32>
    %205 = vector.extract_strided_slice %182 {offsets = [0, 256], sizes = [8, 128], strides = [1, 1]} : vector<8x384xf32> to vector<8x128xf32>
    %206 = vector.extract_strided_slice %186 {offsets = [0, 256], sizes = [8, 128], strides = [1, 1]} : vector<8x384xf32> to vector<8x128xf32>
    %207 = arith.mulf %196, %206 : vector<8x128xf32>
    %208 = arith.addf %205, %207 : vector<8x128xf32>
    %209 = math.tanh %208 : vector<8x128xf32>
    %cst_55 = arith.constant 1.000000e+00 : f32
    %210 = vector.broadcast %cst_55 : f32 to vector<8x128xf32>
    %211 = arith.subf %210, %204 : vector<8x128xf32>
    %212 = arith.mulf %211, %209 : vector<8x128xf32>
    %213 = arith.mulf %204, %136 : vector<8x128xf32>
    %214 = arith.addf %212, %213 : vector<8x128xf32>
    %215 = vector.broadcast %3 : f32 to vector<8x128xf32>
    %216 = arith.mulf %215, %214 : vector<8x128xf32>
    %217 = arith.addf %188, %216 : vector<8x128xf32>
    %218 = arith.truncf %217 : vector<8x128xf32> to vector<8x128xbf16>
    %cst_56 = arith.constant dense<0.000000e+00> : vector<8x384xf32>
    %219 = tpu.matmul %218, %8, %cst_56 {dimension_numbers = #tpu.dot_dimension_numbers<[1], [0], [0], [1], [0, 0, 1, 1], [], []>} : vector<8x128xbf16>, vector<128x384xbf16>, vector<8x384xf32> -> vector<8x384xf32>
    %220 = arith.addf %183, %219 : vector<8x384xf32>
    %221 = arith.truncf %173 : vector<8x128xf32> to vector<8x128xbf16>
    %cst_57 = arith.constant dense<0.000000e+00> : vector<8x384xf32>
    %222 = tpu.matmul %221, %9, %cst_57 {dimension_numbers = #tpu.dot_dimension_numbers<[1], [0], [0], [1], [0, 0, 1, 1], [], []>} : vector<8x128xbf16>, vector<128x384xbf16>, vector<8x384xf32> -> vector<8x384xf32>
    %223 = arith.addf %222, %15 : vector<8x384xf32>
    %224 = vector.broadcast %6 : f32 to vector<8x128xf32>
    %225 = arith.mulf %224, %173 : vector<8x128xf32>
    %226 = vector.extract_strided_slice %220 {offsets = [0, 0], sizes = [8, 128], strides = [1, 1]} : vector<8x384xf32> to vector<8x128xf32>
    %227 = vector.extract_strided_slice %223 {offsets = [0, 0], sizes = [8, 128], strides = [1, 1]} : vector<8x384xf32> to vector<8x128xf32>
    %228 = arith.addf %226, %227 : vector<8x128xf32>
    %229 = arith.negf %228 : vector<8x128xf32>
    %230 = math.exp %229 : vector<8x128xf32>
    %cst_58 = arith.constant 1.000000e+00 : f32
    %231 = vector.broadcast %cst_58 : f32 to vector<8x128xf32>
    %232 = arith.addf %231, %230 : vector<8x128xf32>
    %233 = arith.divf %231, %232 : vector<8x128xf32>
    %234 = vector.extract_strided_slice %220 {offsets = [0, 128], sizes = [8, 128], strides = [1, 1]} : vector<8x384xf32> to vector<8x128xf32>
    %235 = vector.extract_strided_slice %223 {offsets = [0, 128], sizes = [8, 128], strides = [1, 1]} : vector<8x384xf32> to vector<8x128xf32>
    %236 = arith.addf %234, %235 : vector<8x128xf32>
    %237 = arith.negf %236 : vector<8x128xf32>
    %238 = math.exp %237 : vector<8x128xf32>
    %cst_59 = arith.constant 1.000000e+00 : f32
    %239 = vector.broadcast %cst_59 : f32 to vector<8x128xf32>
    %240 = arith.addf %239, %238 : vector<8x128xf32>
    %241 = arith.divf %239, %240 : vector<8x128xf32>
    %242 = vector.extract_strided_slice %220 {offsets = [0, 256], sizes = [8, 128], strides = [1, 1]} : vector<8x384xf32> to vector<8x128xf32>
    %243 = vector.extract_strided_slice %223 {offsets = [0, 256], sizes = [8, 128], strides = [1, 1]} : vector<8x384xf32> to vector<8x128xf32>
    %244 = arith.mulf %233, %243 : vector<8x128xf32>
    %245 = arith.addf %242, %244 : vector<8x128xf32>
    %246 = math.tanh %245 : vector<8x128xf32>
    %cst_60 = arith.constant 1.000000e+00 : f32
    %247 = vector.broadcast %cst_60 : f32 to vector<8x128xf32>
    %248 = arith.subf %247, %241 : vector<8x128xf32>
    %249 = arith.mulf %248, %246 : vector<8x128xf32>
    %250 = arith.mulf %241, %173 : vector<8x128xf32>
    %251 = arith.addf %249, %250 : vector<8x128xf32>
    %252 = vector.broadcast %5 : f32 to vector<8x128xf32>
    %253 = arith.mulf %252, %251 : vector<8x128xf32>
    %254 = arith.addf %225, %253 : vector<8x128xf32>
    %c0_61 = arith.constant 0 : index
    %c2_62 = arith.constant 2 : index
    %c0_63 = arith.constant 0 : index
    %255 = vector.load %arg8[%c0_61, %c2_62, %c0_63] : memref<8x8x256xf32, #tpu.memory_space<vmem>>, vector<8x1x128xf32>
    %256 = vector.shape_cast %255 : vector<8x1x128xf32> to vector<8x128xf32>
    %257 = vector.shape_cast %217 : vector<8x128xf32> to vector<8x1x128xf32>
    tpu.vector_store %arg8[%c0_61, %c2_62, %c0_63], %257 {strides = array<i32>} : memref<8x8x256xf32, #tpu.memory_space<vmem>>, vector<8x1x128xf32>,
    %c0_64 = arith.constant 0 : index
    %c2_65 = arith.constant 2 : index
    %c128_66 = arith.constant 128 : index
    %258 = vector.load %arg8[%c0_64, %c2_65, %c128_66] : memref<8x8x256xf32, #tpu.memory_space<vmem>>, vector<8x1x128xf32>
    %259 = vector.shape_cast %258 : vector<8x1x128xf32> to vector<8x128xf32>
    %260 = vector.shape_cast %254 : vector<8x128xf32> to vector<8x1x128xf32>
    tpu.vector_store %arg8[%c0_64, %c2_65, %c128_66], %260 {strides = array<i32>} : memref<8x8x256xf32, #tpu.memory_space<vmem>>, vector<8x1x128xf32>,
    %c0_67 = arith.constant 0 : index
    %c3_68 = arith.constant 3 : index
    %c0_69 = arith.constant 0 : index
    %261 = vector.load %arg2[%c0_67, %c3_68, %c0_69] : memref<8x8x768xf32, #tpu.memory_space<vmem>>, vector<8x1x768xf32>
    %262 = vector.shape_cast %261 : vector<8x1x768xf32> to vector<8x768xf32>
    %263 = vector.extract_strided_slice %262 {offsets = [0, 0], sizes = [8, 384], strides = [1, 1]} : vector<8x768xf32> to vector<8x384xf32>
    %264 = vector.extract_strided_slice %262 {offsets = [0, 384], sizes = [8, 384], strides = [1, 1]} : vector<8x768xf32> to vector<8x384xf32>
    %265 = arith.truncf %217 : vector<8x128xf32> to vector<8x128xbf16>
    %cst_70 = arith.constant dense<0.000000e+00> : vector<8x384xf32>
    %266 = tpu.matmul %265, %7, %cst_70 {dimension_numbers = #tpu.dot_dimension_numbers<[1], [0], [0], [1], [0, 0, 1, 1], [], []>} : vector<8x128xbf16>, vector<128x384xbf16>, vector<8x384xf32> -> vector<8x384xf32>
    %267 = arith.addf %266, %12 : vector<8x384xf32>
    %268 = vector.broadcast %4 : f32 to vector<8x128xf32>
    %269 = arith.mulf %268, %217 : vector<8x128xf32>
    %270 = vector.extract_strided_slice %263 {offsets = [0, 0], sizes = [8, 128], strides = [1, 1]} : vector<8x384xf32> to vector<8x128xf32>
    %271 = vector.extract_strided_slice %267 {offsets = [0, 0], sizes = [8, 128], strides = [1, 1]} : vector<8x384xf32> to vector<8x128xf32>
    %272 = arith.addf %270, %271 : vector<8x128xf32>
    %273 = arith.negf %272 : vector<8x128xf32>
    %274 = math.exp %273 : vector<8x128xf32>
    %cst_71 = arith.constant 1.000000e+00 : f32
    %275 = vector.broadcast %cst_71 : f32 to vector<8x128xf32>
    %276 = arith.addf %275, %274 : vector<8x128xf32>
    %277 = arith.divf %275, %276 : vector<8x128xf32>
    %278 = vector.extract_strided_slice %263 {offsets = [0, 128], sizes = [8, 128], strides = [1, 1]} : vector<8x384xf32> to vector<8x128xf32>
    %279 = vector.extract_strided_slice %267 {offsets = [0, 128], sizes = [8, 128], strides = [1, 1]} : vector<8x384xf32> to vector<8x128xf32>
    %280 = arith.addf %278, %279 : vector<8x128xf32>
    %281 = arith.negf %280 : vector<8x128xf32>
    %282 = math.exp %281 : vector<8x128xf32>
    %cst_72 = arith.constant 1.000000e+00 : f32
    %283 = vector.broadcast %cst_72 : f32 to vector<8x128xf32>
    %284 = arith.addf %283, %282 : vector<8x128xf32>
    %285 = arith.divf %283, %284 : vector<8x128xf32>
    %286 = vector.extract_strided_slice %263 {offsets = [0, 256], sizes = [8, 128], strides = [1, 1]} : vector<8x384xf32> to vector<8x128xf32>
    %287 = vector.extract_strided_slice %267 {offsets = [0, 256], sizes = [8, 128], strides = [1, 1]} : vector<8x384xf32> to vector<8x128xf32>
    %288 = arith.mulf %277, %287 : vector<8x128xf32>
    %289 = arith.addf %286, %288 : vector<8x128xf32>
    %290 = math.tanh %289 : vector<8x128xf32>
    %cst_73 = arith.constant 1.000000e+00 : f32
    %291 = vector.broadcast %cst_73 : f32 to vector<8x128xf32>
    %292 = arith.subf %291, %285 : vector<8x128xf32>
    %293 = arith.mulf %292, %290 : vector<8x128xf32>
    %294 = arith.mulf %285, %217 : vector<8x128xf32>
    %295 = arith.addf %293, %294 : vector<8x128xf32>
    %296 = vector.broadcast %3 : f32 to vector<8x128xf32>
    %297 = arith.mulf %296, %295 : vector<8x128xf32>
    %298 = arith.addf %269, %297 : vector<8x128xf32>
    %299 = arith.truncf %298 : vector<8x128xf32> to vector<8x128xbf16>
    %cst_74 = arith.constant dense<0.000000e+00> : vector<8x384xf32>
    %300 = tpu.matmul %299, %8, %cst_74 {dimension_numbers = #tpu.dot_dimension_numbers<[1], [0], [0], [1], [0, 0, 1, 1], [], []>} : vector<8x128xbf16>, vector<128x384xbf16>, vector<8x384xf32> -> vector<8x384xf32>
    %301 = arith.addf %264, %300 : vector<8x384xf32>
    %302 = arith.truncf %254 : vector<8x128xf32> to vector<8x128xbf16>
    %cst_75 = arith.constant dense<0.000000e+00> : vector<8x384xf32>
    %303 = tpu.matmul %302, %9, %cst_75 {dimension_numbers = #tpu.dot_dimension_numbers<[1], [0], [0], [1], [0, 0, 1, 1], [], []>} : vector<8x128xbf16>, vector<128x384xbf16>, vector<8x384xf32> -> vector<8x384xf32>
    %304 = arith.addf %303, %15 : vector<8x384xf32>
    %305 = vector.broadcast %6 : f32 to vector<8x128xf32>
    %306 = arith.mulf %305, %254 : vector<8x128xf32>
    %307 = vector.extract_strided_slice %301 {offsets = [0, 0], sizes = [8, 128], strides = [1, 1]} : vector<8x384xf32> to vector<8x128xf32>
    %308 = vector.extract_strided_slice %304 {offsets = [0, 0], sizes = [8, 128], strides = [1, 1]} : vector<8x384xf32> to vector<8x128xf32>
    %309 = arith.addf %307, %308 : vector<8x128xf32>
    %310 = arith.negf %309 : vector<8x128xf32>
    %311 = math.exp %310 : vector<8x128xf32>
    %cst_76 = arith.constant 1.000000e+00 : f32
    %312 = vector.broadcast %cst_76 : f32 to vector<8x128xf32>
    %313 = arith.addf %312, %311 : vector<8x128xf32>
    %314 = arith.divf %312, %313 : vector<8x128xf32>
    %315 = vector.extract_strided_slice %301 {offsets = [0, 128], sizes = [8, 128], strides = [1, 1]} : vector<8x384xf32> to vector<8x128xf32>
    %316 = vector.extract_strided_slice %304 {offsets = [0, 128], sizes = [8, 128], strides = [1, 1]} : vector<8x384xf32> to vector<8x128xf32>
    %317 = arith.addf %315, %316 : vector<8x128xf32>
    %318 = arith.negf %317 : vector<8x128xf32>
    %319 = math.exp %318 : vector<8x128xf32>
    %cst_77 = arith.constant 1.000000e+00 : f32
    %320 = vector.broadcast %cst_77 : f32 to vector<8x128xf32>
    %321 = arith.addf %320, %319 : vector<8x128xf32>
    %322 = arith.divf %320, %321 : vector<8x128xf32>
    %323 = vector.extract_strided_slice %301 {offsets = [0, 256], sizes = [8, 128], strides = [1, 1]} : vector<8x384xf32> to vector<8x128xf32>
    %324 = vector.extract_strided_slice %304 {offsets = [0, 256], sizes = [8, 128], strides = [1, 1]} : vector<8x384xf32> to vector<8x128xf32>
    %325 = arith.mulf %314, %324 : vector<8x128xf32>
    %326 = arith.addf %323, %325 : vector<8x128xf32>
    %327 = math.tanh %326 : vector<8x128xf32>
    %cst_78 = arith.constant 1.000000e+00 : f32
    %328 = vector.broadcast %cst_78 : f32 to vector<8x128xf32>
    %329 = arith.subf %328, %322 : vector<8x128xf32>
    %330 = arith.mulf %329, %327 : vector<8x128xf32>
    %331 = arith.mulf %322, %254 : vector<8x128xf32>
    %332 = arith.addf %330, %331 : vector<8x128xf32>
    %333 = vector.broadcast %5 : f32 to vector<8x128xf32>
    %334 = arith.mulf %333, %332 : vector<8x128xf32>
    %335 = arith.addf %306, %334 : vector<8x128xf32>
    %c0_79 = arith.constant 0 : index
    %c3_80 = arith.constant 3 : index
    %c0_81 = arith.constant 0 : index
    %336 = vector.load %arg8[%c0_79, %c3_80, %c0_81] : memref<8x8x256xf32, #tpu.memory_space<vmem>>, vector<8x1x128xf32>
    %337 = vector.shape_cast %336 : vector<8x1x128xf32> to vector<8x128xf32>
    %338 = vector.shape_cast %298 : vector<8x128xf32> to vector<8x1x128xf32>
    tpu.vector_store %arg8[%c0_79, %c3_80, %c0_81], %338 {strides = array<i32>} : memref<8x8x256xf32, #tpu.memory_space<vmem>>, vector<8x1x128xf32>,
    %c0_82 = arith.constant 0 : index
    %c3_83 = arith.constant 3 : index
    %c128_84 = arith.constant 128 : index
    %339 = vector.load %arg8[%c0_82, %c3_83, %c128_84] : memref<8x8x256xf32, #tpu.memory_space<vmem>>, vector<8x1x128xf32>
    %340 = vector.shape_cast %339 : vector<8x1x128xf32> to vector<8x128xf32>
    %341 = vector.shape_cast %335 : vector<8x128xf32> to vector<8x1x128xf32>
    tpu.vector_store %arg8[%c0_82, %c3_83, %c128_84], %341 {strides = array<i32>} : memref<8x8x256xf32, #tpu.memory_space<vmem>>, vector<8x1x128xf32>,
    %c0_85 = arith.constant 0 : index
    %c4 = arith.constant 4 : index
    %c0_86 = arith.constant 0 : index
    %342 = vector.load %arg2[%c0_85, %c4, %c0_86] : memref<8x8x768xf32, #tpu.memory_space<vmem>>, vector<8x1x768xf32>
    %343 = vector.shape_cast %342 : vector<8x1x768xf32> to vector<8x768xf32>
    %344 = vector.extract_strided_slice %343 {offsets = [0, 0], sizes = [8, 384], strides = [1, 1]} : vector<8x768xf32> to vector<8x384xf32>
    %345 = vector.extract_strided_slice %343 {offsets = [0, 384], sizes = [8, 384], strides = [1, 1]} : vector<8x768xf32> to vector<8x384xf32>
    %346 = arith.truncf %298 : vector<8x128xf32> to vector<8x128xbf16>
    %cst_87 = arith.constant dense<0.000000e+00> : vector<8x384xf32>
    %347 = tpu.matmul %346, %7, %cst_87 {dimension_numbers = #tpu.dot_dimension_numbers<[1], [0], [0], [1], [0, 0, 1, 1], [], []>} : vector<8x128xbf16>, vector<128x384xbf16>, vector<8x384xf32> -> vector<8x384xf32>
    %348 = arith.addf %347, %12 : vector<8x384xf32>
    %349 = vector.broadcast %4 : f32 to vector<8x128xf32>
    %350 = arith.mulf %349, %298 : vector<8x128xf32>
    %351 = vector.extract_strided_slice %344 {offsets = [0, 0], sizes = [8, 128], strides = [1, 1]} : vector<8x384xf32> to vector<8x128xf32>
    %352 = vector.extract_strided_slice %348 {offsets = [0, 0], sizes = [8, 128], strides = [1, 1]} : vector<8x384xf32> to vector<8x128xf32>
    %353 = arith.addf %351, %352 : vector<8x128xf32>
    %354 = arith.negf %353 : vector<8x128xf32>
    %355 = math.exp %354 : vector<8x128xf32>
    %cst_88 = arith.constant 1.000000e+00 : f32
    %356 = vector.broadcast %cst_88 : f32 to vector<8x128xf32>
    %357 = arith.addf %356, %355 : vector<8x128xf32>
    %358 = arith.divf %356, %357 : vector<8x128xf32>
    %359 = vector.extract_strided_slice %344 {offsets = [0, 128], sizes = [8, 128], strides = [1, 1]} : vector<8x384xf32> to vector<8x128xf32>
    %360 = vector.extract_strided_slice %348 {offsets = [0, 128], sizes = [8, 128], strides = [1, 1]} : vector<8x384xf32> to vector<8x128xf32>
    %361 = arith.addf %359, %360 : vector<8x128xf32>
    %362 = arith.negf %361 : vector<8x128xf32>
    %363 = math.exp %362 : vector<8x128xf32>
    %cst_89 = arith.constant 1.000000e+00 : f32
    %364 = vector.broadcast %cst_89 : f32 to vector<8x128xf32>
    %365 = arith.addf %364, %363 : vector<8x128xf32>
    %366 = arith.divf %364, %365 : vector<8x128xf32>
    %367 = vector.extract_strided_slice %344 {offsets = [0, 256], sizes = [8, 128], strides = [1, 1]} : vector<8x384xf32> to vector<8x128xf32>
    %368 = vector.extract_strided_slice %348 {offsets = [0, 256], sizes = [8, 128], strides = [1, 1]} : vector<8x384xf32> to vector<8x128xf32>
    %369 = arith.mulf %358, %368 : vector<8x128xf32>
    %370 = arith.addf %367, %369 : vector<8x128xf32>
    %371 = math.tanh %370 : vector<8x128xf32>
    %cst_90 = arith.constant 1.000000e+00 : f32
    %372 = vector.broadcast %cst_90 : f32 to vector<8x128xf32>
    %373 = arith.subf %372, %366 : vector<8x128xf32>
    %374 = arith.mulf %373, %371 : vector<8x128xf32>
    %375 = arith.mulf %366, %298 : vector<8x128xf32>
    %376 = arith.addf %374, %375 : vector<8x128xf32>
    %377 = vector.broadcast %3 : f32 to vector<8x128xf32>
    %378 = arith.mulf %377, %376 : vector<8x128xf32>
    %379 = arith.addf %350, %378 : vector<8x128xf32>
    %380 = arith.truncf %379 : vector<8x128xf32> to vector<8x128xbf16>
    %cst_91 = arith.constant dense<0.000000e+00> : vector<8x384xf32>
    %381 = tpu.matmul %380, %8, %cst_91 {dimension_numbers = #tpu.dot_dimension_numbers<[1], [0], [0], [1], [0, 0, 1, 1], [], []>} : vector<8x128xbf16>, vector<128x384xbf16>, vector<8x384xf32> -> vector<8x384xf32>
    %382 = arith.addf %345, %381 : vector<8x384xf32>
    %383 = arith.truncf %335 : vector<8x128xf32> to vector<8x128xbf16>
    %cst_92 = arith.constant dense<0.000000e+00> : vector<8x384xf32>
    %384 = tpu.matmul %383, %9, %cst_92 {dimension_numbers = #tpu.dot_dimension_numbers<[1], [0], [0], [1], [0, 0, 1, 1], [], []>} : vector<8x128xbf16>, vector<128x384xbf16>, vector<8x384xf32> -> vector<8x384xf32>
    %385 = arith.addf %384, %15 : vector<8x384xf32>
    %386 = vector.broadcast %6 : f32 to vector<8x128xf32>
    %387 = arith.mulf %386, %335 : vector<8x128xf32>
    %388 = vector.extract_strided_slice %382 {offsets = [0, 0], sizes = [8, 128], strides = [1, 1]} : vector<8x384xf32> to vector<8x128xf32>
    %389 = vector.extract_strided_slice %385 {offsets = [0, 0], sizes = [8, 128], strides = [1, 1]} : vector<8x384xf32> to vector<8x128xf32>
    %390 = arith.addf %388, %389 : vector<8x128xf32>
    %391 = arith.negf %390 : vector<8x128xf32>
    %392 = math.exp %391 : vector<8x128xf32>
    %cst_93 = arith.constant 1.000000e+00 : f32
    %393 = vector.broadcast %cst_93 : f32 to vector<8x128xf32>
    %394 = arith.addf %393, %392 : vector<8x128xf32>
    %395 = arith.divf %393, %394 : vector<8x128xf32>
    %396 = vector.extract_strided_slice %382 {offsets = [0, 128], sizes = [8, 128], strides = [1, 1]} : vector<8x384xf32> to vector<8x128xf32>
    %397 = vector.extract_strided_slice %385 {offsets = [0, 128], sizes = [8, 128], strides = [1, 1]} : vector<8x384xf32> to vector<8x128xf32>
    %398 = arith.addf %396, %397 : vector<8x128xf32>
    %399 = arith.negf %398 : vector<8x128xf32>
    %400 = math.exp %399 : vector<8x128xf32>
    %cst_94 = arith.constant 1.000000e+00 : f32
    %401 = vector.broadcast %cst_94 : f32 to vector<8x128xf32>
    %402 = arith.addf %401, %400 : vector<8x128xf32>
    %403 = arith.divf %401, %402 : vector<8x128xf32>
    %404 = vector.extract_strided_slice %382 {offsets = [0, 256], sizes = [8, 128], strides = [1, 1]} : vector<8x384xf32> to vector<8x128xf32>
    %405 = vector.extract_strided_slice %385 {offsets = [0, 256], sizes = [8, 128], strides = [1, 1]} : vector<8x384xf32> to vector<8x128xf32>
    %406 = arith.mulf %395, %405 : vector<8x128xf32>
    %407 = arith.addf %404, %406 : vector<8x128xf32>
    %408 = math.tanh %407 : vector<8x128xf32>
    %cst_95 = arith.constant 1.000000e+00 : f32
    %409 = vector.broadcast %cst_95 : f32 to vector<8x128xf32>
    %410 = arith.subf %409, %403 : vector<8x128xf32>
    %411 = arith.mulf %410, %408 : vector<8x128xf32>
    %412 = arith.mulf %403, %335 : vector<8x128xf32>
    %413 = arith.addf %411, %412 : vector<8x128xf32>
    %414 = vector.broadcast %5 : f32 to vector<8x128xf32>
    %415 = arith.mulf %414, %413 : vector<8x128xf32>
    %416 = arith.addf %387, %415 : vector<8x128xf32>
    %c0_96 = arith.constant 0 : index
    %c4_97 = arith.constant 4 : index
    %c0_98 = arith.constant 0 : index
    %417 = vector.load %arg8[%c0_96, %c4_97, %c0_98] : memref<8x8x256xf32, #tpu.memory_space<vmem>>, vector<8x1x128xf32>
    %418 = vector.shape_cast %417 : vector<8x1x128xf32> to vector<8x128xf32>
    %419 = vector.shape_cast %379 : vector<8x128xf32> to vector<8x1x128xf32>
    tpu.vector_store %arg8[%c0_96, %c4_97, %c0_98], %419 {strides = array<i32>} : memref<8x8x256xf32, #tpu.memory_space<vmem>>, vector<8x1x128xf32>,
    %c0_99 = arith.constant 0 : index
    %c4_100 = arith.constant 4 : index
    %c128_101 = arith.constant 128 : index
    %420 = vector.load %arg8[%c0_99, %c4_100, %c128_101] : memref<8x8x256xf32, #tpu.memory_space<vmem>>, vector<8x1x128xf32>
    %421 = vector.shape_cast %420 : vector<8x1x128xf32> to vector<8x128xf32>
    %422 = vector.shape_cast %416 : vector<8x128xf32> to vector<8x1x128xf32>
    tpu.vector_store %arg8[%c0_99, %c4_100, %c128_101], %422 {strides = array<i32>} : memref<8x8x256xf32, #tpu.memory_space<vmem>>, vector<8x1x128xf32>,
    %c0_102 = arith.constant 0 : index
    %c5 = arith.constant 5 : index
    %c0_103 = arith.constant 0 : index
    %423 = vector.load %arg2[%c0_102, %c5, %c0_103] : memref<8x8x768xf32, #tpu.memory_space<vmem>>, vector<8x1x768xf32>
    %424 = vector.shape_cast %423 : vector<8x1x768xf32> to vector<8x768xf32>
    %425 = vector.extract_strided_slice %424 {offsets = [0, 0], sizes = [8, 384], strides = [1, 1]} : vector<8x768xf32> to vector<8x384xf32>
    %426 = vector.extract_strided_slice %424 {offsets = [0, 384], sizes = [8, 384], strides = [1, 1]} : vector<8x768xf32> to vector<8x384xf32>
    %427 = arith.truncf %379 : vector<8x128xf32> to vector<8x128xbf16>
    %cst_104 = arith.constant dense<0.000000e+00> : vector<8x384xf32>
    %428 = tpu.matmul %427, %7, %cst_104 {dimension_numbers = #tpu.dot_dimension_numbers<[1], [0], [0], [1], [0, 0, 1, 1], [], []>} : vector<8x128xbf16>, vector<128x384xbf16>, vector<8x384xf32> -> vector<8x384xf32>
    %429 = arith.addf %428, %12 : vector<8x384xf32>
    %430 = vector.broadcast %4 : f32 to vector<8x128xf32>
    %431 = arith.mulf %430, %379 : vector<8x128xf32>
    %432 = vector.extract_strided_slice %425 {offsets = [0, 0], sizes = [8, 128], strides = [1, 1]} : vector<8x384xf32> to vector<8x128xf32>
    %433 = vector.extract_strided_slice %429 {offsets = [0, 0], sizes = [8, 128], strides = [1, 1]} : vector<8x384xf32> to vector<8x128xf32>
    %434 = arith.addf %432, %433 : vector<8x128xf32>
    %435 = arith.negf %434 : vector<8x128xf32>
    %436 = math.exp %435 : vector<8x128xf32>
    %cst_105 = arith.constant 1.000000e+00 : f32
    %437 = vector.broadcast %cst_105 : f32 to vector<8x128xf32>
    %438 = arith.addf %437, %436 : vector<8x128xf32>
    %439 = arith.divf %437, %438 : vector<8x128xf32>
    %440 = vector.extract_strided_slice %425 {offsets = [0, 128], sizes = [8, 128], strides = [1, 1]} : vector<8x384xf32> to vector<8x128xf32>
    %441 = vector.extract_strided_slice %429 {offsets = [0, 128], sizes = [8, 128], strides = [1, 1]} : vector<8x384xf32> to vector<8x128xf32>
    %442 = arith.addf %440, %441 : vector<8x128xf32>
    %443 = arith.negf %442 : vector<8x128xf32>
    %444 = math.exp %443 : vector<8x128xf32>
    %cst_106 = arith.constant 1.000000e+00 : f32
    %445 = vector.broadcast %cst_106 : f32 to vector<8x128xf32>
    %446 = arith.addf %445, %444 : vector<8x128xf32>
    %447 = arith.divf %445, %446 : vector<8x128xf32>
    %448 = vector.extract_strided_slice %425 {offsets = [0, 256], sizes = [8, 128], strides = [1, 1]} : vector<8x384xf32> to vector<8x128xf32>
    %449 = vector.extract_strided_slice %429 {offsets = [0, 256], sizes = [8, 128], strides = [1, 1]} : vector<8x384xf32> to vector<8x128xf32>
    %450 = arith.mulf %439, %449 : vector<8x128xf32>
    %451 = arith.addf %448, %450 : vector<8x128xf32>
    %452 = math.tanh %451 : vector<8x128xf32>
    %cst_107 = arith.constant 1.000000e+00 : f32
    %453 = vector.broadcast %cst_107 : f32 to vector<8x128xf32>
    %454 = arith.subf %453, %447 : vector<8x128xf32>
    %455 = arith.mulf %454, %452 : vector<8x128xf32>
    %456 = arith.mulf %447, %379 : vector<8x128xf32>
    %457 = arith.addf %455, %456 : vector<8x128xf32>
    %458 = vector.broadcast %3 : f32 to vector<8x128xf32>
    %459 = arith.mulf %458, %457 : vector<8x128xf32>
    %460 = arith.addf %431, %459 : vector<8x128xf32>
    %461 = arith.truncf %460 : vector<8x128xf32> to vector<8x128xbf16>
    %cst_108 = arith.constant dense<0.000000e+00> : vector<8x384xf32>
    %462 = tpu.matmul %461, %8, %cst_108 {dimension_numbers = #tpu.dot_dimension_numbers<[1], [0], [0], [1], [0, 0, 1, 1], [], []>} : vector<8x128xbf16>, vector<128x384xbf16>, vector<8x384xf32> -> vector<8x384xf32>
    %463 = arith.addf %426, %462 : vector<8x384xf32>
    %464 = arith.truncf %416 : vector<8x128xf32> to vector<8x128xbf16>
    %cst_109 = arith.constant dense<0.000000e+00> : vector<8x384xf32>
    %465 = tpu.matmul %464, %9, %cst_109 {dimension_numbers = #tpu.dot_dimension_numbers<[1], [0], [0], [1], [0, 0, 1, 1], [], []>} : vector<8x128xbf16>, vector<128x384xbf16>, vector<8x384xf32> -> vector<8x384xf32>
    %466 = arith.addf %465, %15 : vector<8x384xf32>
    %467 = vector.broadcast %6 : f32 to vector<8x128xf32>
    %468 = arith.mulf %467, %416 : vector<8x128xf32>
    %469 = vector.extract_strided_slice %463 {offsets = [0, 0], sizes = [8, 128], strides = [1, 1]} : vector<8x384xf32> to vector<8x128xf32>
    %470 = vector.extract_strided_slice %466 {offsets = [0, 0], sizes = [8, 128], strides = [1, 1]} : vector<8x384xf32> to vector<8x128xf32>
    %471 = arith.addf %469, %470 : vector<8x128xf32>
    %472 = arith.negf %471 : vector<8x128xf32>
    %473 = math.exp %472 : vector<8x128xf32>
    %cst_110 = arith.constant 1.000000e+00 : f32
    %474 = vector.broadcast %cst_110 : f32 to vector<8x128xf32>
    %475 = arith.addf %474, %473 : vector<8x128xf32>
    %476 = arith.divf %474, %475 : vector<8x128xf32>
    %477 = vector.extract_strided_slice %463 {offsets = [0, 128], sizes = [8, 128], strides = [1, 1]} : vector<8x384xf32> to vector<8x128xf32>
    %478 = vector.extract_strided_slice %466 {offsets = [0, 128], sizes = [8, 128], strides = [1, 1]} : vector<8x384xf32> to vector<8x128xf32>
    %479 = arith.addf %477, %478 : vector<8x128xf32>
    %480 = arith.negf %479 : vector<8x128xf32>
    %481 = math.exp %480 : vector<8x128xf32>
    %cst_111 = arith.constant 1.000000e+00 : f32
    %482 = vector.broadcast %cst_111 : f32 to vector<8x128xf32>
    %483 = arith.addf %482, %481 : vector<8x128xf32>
    %484 = arith.divf %482, %483 : vector<8x128xf32>
    %485 = vector.extract_strided_slice %463 {offsets = [0, 256], sizes = [8, 128], strides = [1, 1]} : vector<8x384xf32> to vector<8x128xf32>
    %486 = vector.extract_strided_slice %466 {offsets = [0, 256], sizes = [8, 128], strides = [1, 1]} : vector<8x384xf32> to vector<8x128xf32>
    %487 = arith.mulf %476, %486 : vector<8x128xf32>
    %488 = arith.addf %485, %487 : vector<8x128xf32>
    %489 = math.tanh %488 : vector<8x128xf32>
    %cst_112 = arith.constant 1.000000e+00 : f32
    %490 = vector.broadcast %cst_112 : f32 to vector<8x128xf32>
    %491 = arith.subf %490, %484 : vector<8x128xf32>
    %492 = arith.mulf %491, %489 : vector<8x128xf32>
    %493 = arith.mulf %484, %416 : vector<8x128xf32>
    %494 = arith.addf %492, %493 : vector<8x128xf32>
    %495 = vector.broadcast %5 : f32 to vector<8x128xf32>
    %496 = arith.mulf %495, %494 : vector<8x128xf32>
    %497 = arith.addf %468, %496 : vector<8x128xf32>
    %c0_113 = arith.constant 0 : index
    %c5_114 = arith.constant 5 : index
    %c0_115 = arith.constant 0 : index
    %498 = vector.load %arg8[%c0_113, %c5_114, %c0_115] : memref<8x8x256xf32, #tpu.memory_space<vmem>>, vector<8x1x128xf32>
    %499 = vector.shape_cast %498 : vector<8x1x128xf32> to vector<8x128xf32>
    %500 = vector.shape_cast %460 : vector<8x128xf32> to vector<8x1x128xf32>
    tpu.vector_store %arg8[%c0_113, %c5_114, %c0_115], %500 {strides = array<i32>} : memref<8x8x256xf32, #tpu.memory_space<vmem>>, vector<8x1x128xf32>,
    %c0_116 = arith.constant 0 : index
    %c5_117 = arith.constant 5 : index
    %c128_118 = arith.constant 128 : index
    %501 = vector.load %arg8[%c0_116, %c5_117, %c128_118] : memref<8x8x256xf32, #tpu.memory_space<vmem>>, vector<8x1x128xf32>
    %502 = vector.shape_cast %501 : vector<8x1x128xf32> to vector<8x128xf32>
    %503 = vector.shape_cast %497 : vector<8x128xf32> to vector<8x1x128xf32>
    tpu.vector_store %arg8[%c0_116, %c5_117, %c128_118], %503 {strides = array<i32>} : memref<8x8x256xf32, #tpu.memory_space<vmem>>, vector<8x1x128xf32>,
    %c0_119 = arith.constant 0 : index
    %c6 = arith.constant 6 : index
    %c0_120 = arith.constant 0 : index
    %504 = vector.load %arg2[%c0_119, %c6, %c0_120] : memref<8x8x768xf32, #tpu.memory_space<vmem>>, vector<8x1x768xf32>
    %505 = vector.shape_cast %504 : vector<8x1x768xf32> to vector<8x768xf32>
    %506 = vector.extract_strided_slice %505 {offsets = [0, 0], sizes = [8, 384], strides = [1, 1]} : vector<8x768xf32> to vector<8x384xf32>
    %507 = vector.extract_strided_slice %505 {offsets = [0, 384], sizes = [8, 384], strides = [1, 1]} : vector<8x768xf32> to vector<8x384xf32>
    %508 = arith.truncf %460 : vector<8x128xf32> to vector<8x128xbf16>
    %cst_121 = arith.constant dense<0.000000e+00> : vector<8x384xf32>
    %509 = tpu.matmul %508, %7, %cst_121 {dimension_numbers = #tpu.dot_dimension_numbers<[1], [0], [0], [1], [0, 0, 1, 1], [], []>} : vector<8x128xbf16>, vector<128x384xbf16>, vector<8x384xf32> -> vector<8x384xf32>
    %510 = arith.addf %509, %12 : vector<8x384xf32>
    %511 = vector.broadcast %4 : f32 to vector<8x128xf32>
    %512 = arith.mulf %511, %460 : vector<8x128xf32>
    %513 = vector.extract_strided_slice %506 {offsets = [0, 0], sizes = [8, 128], strides = [1, 1]} : vector<8x384xf32> to vector<8x128xf32>
    %514 = vector.extract_strided_slice %510 {offsets = [0, 0], sizes = [8, 128], strides = [1, 1]} : vector<8x384xf32> to vector<8x128xf32>
    %515 = arith.addf %513, %514 : vector<8x128xf32>
    %516 = arith.negf %515 : vector<8x128xf32>
    %517 = math.exp %516 : vector<8x128xf32>
    %cst_122 = arith.constant 1.000000e+00 : f32
    %518 = vector.broadcast %cst_122 : f32 to vector<8x128xf32>
    %519 = arith.addf %518, %517 : vector<8x128xf32>
    %520 = arith.divf %518, %519 : vector<8x128xf32>
    %521 = vector.extract_strided_slice %506 {offsets = [0, 128], sizes = [8, 128], strides = [1, 1]} : vector<8x384xf32> to vector<8x128xf32>
    %522 = vector.extract_strided_slice %510 {offsets = [0, 128], sizes = [8, 128], strides = [1, 1]} : vector<8x384xf32> to vector<8x128xf32>
    %523 = arith.addf %521, %522 : vector<8x128xf32>
    %524 = arith.negf %523 : vector<8x128xf32>
    %525 = math.exp %524 : vector<8x128xf32>
    %cst_123 = arith.constant 1.000000e+00 : f32
    %526 = vector.broadcast %cst_123 : f32 to vector<8x128xf32>
    %527 = arith.addf %526, %525 : vector<8x128xf32>
    %528 = arith.divf %526, %527 : vector<8x128xf32>
    %529 = vector.extract_strided_slice %506 {offsets = [0, 256], sizes = [8, 128], strides = [1, 1]} : vector<8x384xf32> to vector<8x128xf32>
    %530 = vector.extract_strided_slice %510 {offsets = [0, 256], sizes = [8, 128], strides = [1, 1]} : vector<8x384xf32> to vector<8x128xf32>
    %531 = arith.mulf %520, %530 : vector<8x128xf32>
    %532 = arith.addf %529, %531 : vector<8x128xf32>
    %533 = math.tanh %532 : vector<8x128xf32>
    %cst_124 = arith.constant 1.000000e+00 : f32
    %534 = vector.broadcast %cst_124 : f32 to vector<8x128xf32>
    %535 = arith.subf %534, %528 : vector<8x128xf32>
    %536 = arith.mulf %535, %533 : vector<8x128xf32>
    %537 = arith.mulf %528, %460 : vector<8x128xf32>
    %538 = arith.addf %536, %537 : vector<8x128xf32>
    %539 = vector.broadcast %3 : f32 to vector<8x128xf32>
    %540 = arith.mulf %539, %538 : vector<8x128xf32>
    %541 = arith.addf %512, %540 : vector<8x128xf32>
    %542 = arith.truncf %541 : vector<8x128xf32> to vector<8x128xbf16>
    %cst_125 = arith.constant dense<0.000000e+00> : vector<8x384xf32>
    %543 = tpu.matmul %542, %8, %cst_125 {dimension_numbers = #tpu.dot_dimension_numbers<[1], [0], [0], [1], [0, 0, 1, 1], [], []>} : vector<8x128xbf16>, vector<128x384xbf16>, vector<8x384xf32> -> vector<8x384xf32>
    %544 = arith.addf %507, %543 : vector<8x384xf32>
    %545 = arith.truncf %497 : vector<8x128xf32> to vector<8x128xbf16>
    %cst_126 = arith.constant dense<0.000000e+00> : vector<8x384xf32>
    %546 = tpu.matmul %545, %9, %cst_126 {dimension_numbers = #tpu.dot_dimension_numbers<[1], [0], [0], [1], [0, 0, 1, 1], [], []>} : vector<8x128xbf16>, vector<128x384xbf16>, vector<8x384xf32> -> vector<8x384xf32>
    %547 = arith.addf %546, %15 : vector<8x384xf32>
    %548 = vector.broadcast %6 : f32 to vector<8x128xf32>
    %549 = arith.mulf %548, %497 : vector<8x128xf32>
    %550 = vector.extract_strided_slice %544 {offsets = [0, 0], sizes = [8, 128], strides = [1, 1]} : vector<8x384xf32> to vector<8x128xf32>
    %551 = vector.extract_strided_slice %547 {offsets = [0, 0], sizes = [8, 128], strides = [1, 1]} : vector<8x384xf32> to vector<8x128xf32>
    %552 = arith.addf %550, %551 : vector<8x128xf32>
    %553 = arith.negf %552 : vector<8x128xf32>
    %554 = math.exp %553 : vector<8x128xf32>
    %cst_127 = arith.constant 1.000000e+00 : f32
    %555 = vector.broadcast %cst_127 : f32 to vector<8x128xf32>
    %556 = arith.addf %555, %554 : vector<8x128xf32>
    %557 = arith.divf %555, %556 : vector<8x128xf32>
    %558 = vector.extract_strided_slice %544 {offsets = [0, 128], sizes = [8, 128], strides = [1, 1]} : vector<8x384xf32> to vector<8x128xf32>
    %559 = vector.extract_strided_slice %547 {offsets = [0, 128], sizes = [8, 128], strides = [1, 1]} : vector<8x384xf32> to vector<8x128xf32>
    %560 = arith.addf %558, %559 : vector<8x128xf32>
    %561 = arith.negf %560 : vector<8x128xf32>
    %562 = math.exp %561 : vector<8x128xf32>
    %cst_128 = arith.constant 1.000000e+00 : f32
    %563 = vector.broadcast %cst_128 : f32 to vector<8x128xf32>
    %564 = arith.addf %563, %562 : vector<8x128xf32>
    %565 = arith.divf %563, %564 : vector<8x128xf32>
    %566 = vector.extract_strided_slice %544 {offsets = [0, 256], sizes = [8, 128], strides = [1, 1]} : vector<8x384xf32> to vector<8x128xf32>
    %567 = vector.extract_strided_slice %547 {offsets = [0, 256], sizes = [8, 128], strides = [1, 1]} : vector<8x384xf32> to vector<8x128xf32>
    %568 = arith.mulf %557, %567 : vector<8x128xf32>
    %569 = arith.addf %566, %568 : vector<8x128xf32>
    %570 = math.tanh %569 : vector<8x128xf32>
    %cst_129 = arith.constant 1.000000e+00 : f32
    %571 = vector.broadcast %cst_129 : f32 to vector<8x128xf32>
    %572 = arith.subf %571, %565 : vector<8x128xf32>
    %573 = arith.mulf %572, %570 : vector<8x128xf32>
    %574 = arith.mulf %565, %497 : vector<8x128xf32>
    %575 = arith.addf %573, %574 : vector<8x128xf32>
    %576 = vector.broadcast %5 : f32 to vector<8x128xf32>
    %577 = arith.mulf %576, %575 : vector<8x128xf32>
    %578 = arith.addf %549, %577 : vector<8x128xf32>
    %c0_130 = arith.constant 0 : index
    %c6_131 = arith.constant 6 : index
    %c0_132 = arith.constant 0 : index
    %579 = vector.load %arg8[%c0_130, %c6_131, %c0_132] : memref<8x8x256xf32, #tpu.memory_space<vmem>>, vector<8x1x128xf32>
    %580 = vector.shape_cast %579 : vector<8x1x128xf32> to vector<8x128xf32>
    %581 = vector.shape_cast %541 : vector<8x128xf32> to vector<8x1x128xf32>
    tpu.vector_store %arg8[%c0_130, %c6_131, %c0_132], %581 {strides = array<i32>} : memref<8x8x256xf32, #tpu.memory_space<vmem>>, vector<8x1x128xf32>,
    %c0_133 = arith.constant 0 : index
    %c6_134 = arith.constant 6 : index
    %c128_135 = arith.constant 128 : index
    %582 = vector.load %arg8[%c0_133, %c6_134, %c128_135] : memref<8x8x256xf32, #tpu.memory_space<vmem>>, vector<8x1x128xf32>
    %583 = vector.shape_cast %582 : vector<8x1x128xf32> to vector<8x128xf32>
    %584 = vector.shape_cast %578 : vector<8x128xf32> to vector<8x1x128xf32>
    tpu.vector_store %arg8[%c0_133, %c6_134, %c128_135], %584 {strides = array<i32>} : memref<8x8x256xf32, #tpu.memory_space<vmem>>, vector<8x1x128xf32>,
    %c0_136 = arith.constant 0 : index
    %c7 = arith.constant 7 : index
    %c0_137 = arith.constant 0 : index
    %585 = vector.load %arg2[%c0_136, %c7, %c0_137] : memref<8x8x768xf32, #tpu.memory_space<vmem>>, vector<8x1x768xf32>
    %586 = vector.shape_cast %585 : vector<8x1x768xf32> to vector<8x768xf32>
    %587 = vector.extract_strided_slice %586 {offsets = [0, 0], sizes = [8, 384], strides = [1, 1]} : vector<8x768xf32> to vector<8x384xf32>
    %588 = vector.extract_strided_slice %586 {offsets = [0, 384], sizes = [8, 384], strides = [1, 1]} : vector<8x768xf32> to vector<8x384xf32>
    %589 = arith.truncf %541 : vector<8x128xf32> to vector<8x128xbf16>
    %cst_138 = arith.constant dense<0.000000e+00> : vector<8x384xf32>
    %590 = tpu.matmul %589, %7, %cst_138 {dimension_numbers = #tpu.dot_dimension_numbers<[1], [0], [0], [1], [0, 0, 1, 1], [], []>} : vector<8x128xbf16>, vector<128x384xbf16>, vector<8x384xf32> -> vector<8x384xf32>
    %591 = arith.addf %590, %12 : vector<8x384xf32>
    %592 = vector.broadcast %4 : f32 to vector<8x128xf32>
    %593 = arith.mulf %592, %541 : vector<8x128xf32>
    %594 = vector.extract_strided_slice %587 {offsets = [0, 0], sizes = [8, 128], strides = [1, 1]} : vector<8x384xf32> to vector<8x128xf32>
    %595 = vector.extract_strided_slice %591 {offsets = [0, 0], sizes = [8, 128], strides = [1, 1]} : vector<8x384xf32> to vector<8x128xf32>
    %596 = arith.addf %594, %595 : vector<8x128xf32>
    %597 = arith.negf %596 : vector<8x128xf32>
    %598 = math.exp %597 : vector<8x128xf32>
    %cst_139 = arith.constant 1.000000e+00 : f32
    %599 = vector.broadcast %cst_139 : f32 to vector<8x128xf32>
    %600 = arith.addf %599, %598 : vector<8x128xf32>
    %601 = arith.divf %599, %600 : vector<8x128xf32>
    %602 = vector.extract_strided_slice %587 {offsets = [0, 128], sizes = [8, 128], strides = [1, 1]} : vector<8x384xf32> to vector<8x128xf32>
    %603 = vector.extract_strided_slice %591 {offsets = [0, 128], sizes = [8, 128], strides = [1, 1]} : vector<8x384xf32> to vector<8x128xf32>
    %604 = arith.addf %602, %603 : vector<8x128xf32>
    %605 = arith.negf %604 : vector<8x128xf32>
    %606 = math.exp %605 : vector<8x128xf32>
    %cst_140 = arith.constant 1.000000e+00 : f32
    %607 = vector.broadcast %cst_140 : f32 to vector<8x128xf32>
    %608 = arith.addf %607, %606 : vector<8x128xf32>
    %609 = arith.divf %607, %608 : vector<8x128xf32>
    %610 = vector.extract_strided_slice %587 {offsets = [0, 256], sizes = [8, 128], strides = [1, 1]} : vector<8x384xf32> to vector<8x128xf32>
    %611 = vector.extract_strided_slice %591 {offsets = [0, 256], sizes = [8, 128], strides = [1, 1]} : vector<8x384xf32> to vector<8x128xf32>
    %612 = arith.mulf %601, %611 : vector<8x128xf32>
    %613 = arith.addf %610, %612 : vector<8x128xf32>
    %614 = math.tanh %613 : vector<8x128xf32>
    %cst_141 = arith.constant 1.000000e+00 : f32
    %615 = vector.broadcast %cst_141 : f32 to vector<8x128xf32>
    %616 = arith.subf %615, %609 : vector<8x128xf32>
    %617 = arith.mulf %616, %614 : vector<8x128xf32>
    %618 = arith.mulf %609, %541 : vector<8x128xf32>
    %619 = arith.addf %617, %618 : vector<8x128xf32>
    %620 = vector.broadcast %3 : f32 to vector<8x128xf32>
    %621 = arith.mulf %620, %619 : vector<8x128xf32>
    %622 = arith.addf %593, %621 : vector<8x128xf32>
    %623 = arith.truncf %622 : vector<8x128xf32> to vector<8x128xbf16>
    %cst_142 = arith.constant dense<0.000000e+00> : vector<8x384xf32>
    %624 = tpu.matmul %623, %8, %cst_142 {dimension_numbers = #tpu.dot_dimension_numbers<[1], [0], [0], [1], [0, 0, 1, 1], [], []>} : vector<8x128xbf16>, vector<128x384xbf16>, vector<8x384xf32> -> vector<8x384xf32>
    %625 = arith.addf %588, %624 : vector<8x384xf32>
    %626 = arith.truncf %578 : vector<8x128xf32> to vector<8x128xbf16>
    %cst_143 = arith.constant dense<0.000000e+00> : vector<8x384xf32>
    %627 = tpu.matmul %626, %9, %cst_143 {dimension_numbers = #tpu.dot_dimension_numbers<[1], [0], [0], [1], [0, 0, 1, 1], [], []>} : vector<8x128xbf16>, vector<128x384xbf16>, vector<8x384xf32> -> vector<8x384xf32>
    %628 = arith.addf %627, %15 : vector<8x384xf32>
    %629 = vector.broadcast %6 : f32 to vector<8x128xf32>
    %630 = arith.mulf %629, %578 : vector<8x128xf32>
    %631 = vector.extract_strided_slice %625 {offsets = [0, 0], sizes = [8, 128], strides = [1, 1]} : vector<8x384xf32> to vector<8x128xf32>
    %632 = vector.extract_strided_slice %628 {offsets = [0, 0], sizes = [8, 128], strides = [1, 1]} : vector<8x384xf32> to vector<8x128xf32>
    %633 = arith.addf %631, %632 : vector<8x128xf32>
    %634 = arith.negf %633 : vector<8x128xf32>
    %635 = math.exp %634 : vector<8x128xf32>
    %cst_144 = arith.constant 1.000000e+00 : f32
    %636 = vector.broadcast %cst_144 : f32 to vector<8x128xf32>
    %637 = arith.addf %636, %635 : vector<8x128xf32>
    %638 = arith.divf %636, %637 : vector<8x128xf32>
    %639 = vector.extract_strided_slice %625 {offsets = [0, 128], sizes = [8, 128], strides = [1, 1]} : vector<8x384xf32> to vector<8x128xf32>
    %640 = vector.extract_strided_slice %628 {offsets = [0, 128], sizes = [8, 128], strides = [1, 1]} : vector<8x384xf32> to vector<8x128xf32>
    %641 = arith.addf %639, %640 : vector<8x128xf32>
    %642 = arith.negf %641 : vector<8x128xf32>
    %643 = math.exp %642 : vector<8x128xf32>
    %cst_145 = arith.constant 1.000000e+00 : f32
    %644 = vector.broadcast %cst_145 : f32 to vector<8x128xf32>
    %645 = arith.addf %644, %643 : vector<8x128xf32>
    %646 = arith.divf %644, %645 : vector<8x128xf32>
    %647 = vector.extract_strided_slice %625 {offsets = [0, 256], sizes = [8, 128], strides = [1, 1]} : vector<8x384xf32> to vector<8x128xf32>
    %648 = vector.extract_strided_slice %628 {offsets = [0, 256], sizes = [8, 128], strides = [1, 1]} : vector<8x384xf32> to vector<8x128xf32>
    %649 = arith.mulf %638, %648 : vector<8x128xf32>
    %650 = arith.addf %647, %649 : vector<8x128xf32>
    %651 = math.tanh %650 : vector<8x128xf32>
    %cst_146 = arith.constant 1.000000e+00 : f32
    %652 = vector.broadcast %cst_146 : f32 to vector<8x128xf32>
    %653 = arith.subf %652, %646 : vector<8x128xf32>
    %654 = arith.mulf %653, %651 : vector<8x128xf32>
    %655 = arith.mulf %646, %578 : vector<8x128xf32>
    %656 = arith.addf %654, %655 : vector<8x128xf32>
    %657 = vector.broadcast %5 : f32 to vector<8x128xf32>
    %658 = arith.mulf %657, %656 : vector<8x128xf32>
    %659 = arith.addf %630, %658 : vector<8x128xf32>
    %c0_147 = arith.constant 0 : index
    %c7_148 = arith.constant 7 : index
    %c0_149 = arith.constant 0 : index
    %660 = vector.load %arg8[%c0_147, %c7_148, %c0_149] : memref<8x8x256xf32, #tpu.memory_space<vmem>>, vector<8x1x128xf32>
    %661 = vector.shape_cast %660 : vector<8x1x128xf32> to vector<8x128xf32>
    %662 = vector.shape_cast %622 : vector<8x128xf32> to vector<8x1x128xf32>
    tpu.vector_store %arg8[%c0_147, %c7_148, %c0_149], %662 {strides = array<i32>} : memref<8x8x256xf32, #tpu.memory_space<vmem>>, vector<8x1x128xf32>,
    %c0_150 = arith.constant 0 : index
    %c7_151 = arith.constant 7 : index
    %c128_152 = arith.constant 128 : index
    %663 = vector.load %arg8[%c0_150, %c7_151, %c128_152] : memref<8x8x256xf32, #tpu.memory_space<vmem>>, vector<8x1x128xf32>
    %664 = vector.shape_cast %663 : vector<8x1x128xf32> to vector<8x128xf32>
    %665 = vector.shape_cast %659 : vector<8x128xf32> to vector<8x1x128xf32>
    tpu.vector_store %arg8[%c0_150, %c7_151, %c128_152], %665 {strides = array<i32>} : memref<8x8x256xf32, #tpu.memory_space<vmem>>, vector<8x1x128xf32>,
    %c0_153 = arith.constant 0 : index
    %c0_154 = arith.constant 0 : index
    %666 = vector.load %arg9[%c0_153, %c0_154] : memref<8x128xf32, #tpu.memory_space<vmem>>, vector<8x128xf32>
    tpu.vector_store %arg9[%c0_153, %c0_154], %622 {strides = array<i32>} : memref<8x128xf32, #tpu.memory_space<vmem>>, vector<8x128xf32>,
    %c0_155 = arith.constant 0 : index
    %c0_156 = arith.constant 0 : index
    %667 = vector.load %arg10[%c0_155, %c0_156] : memref<8x128xf32, #tpu.memory_space<vmem>>, vector<8x128xf32>
    tpu.vector_store %arg10[%c0_155, %c0_156], %659 {strides = array<i32>} : memref<8x128xf32, #tpu.memory_space<vmem>>, vector<8x128xf32>,
    return
  }
  func.func @transform_0(%arg0: i32) -> i32 {
    %c0_i32 = arith.constant 0 : i32
    %c0_i32_0 = arith.constant 0 : i32
    return %c0_i32 : i32
  }
  func.func @transform_1(%arg0: i32) -> (i32, i32, i32) {
    %c0_i32 = arith.constant 0 : i32
    %c0_i32_0 = arith.constant 0 : i32
    %c0_i32_1 = arith.constant 0 : i32
    return %c0_i32, %arg0, %c0_i32_0 : i32, i32, i32
  }
  func.func @transform_2(%arg0: i32) -> (i32, i32) {
    %c0_i32 = arith.constant 0 : i32
    %c0_i32_0 = arith.constant 0 : i32
    %c0_i32_1 = arith.constant 0 : i32
    return %c0_i32, %c0_i32_0 : i32, i32
  }
  func.func @transform_3(%arg0: i32) -> (i32, i32) {
    %c0_i32 = arith.constant 0 : i32
    %c0_i32_0 = arith.constant 0 : i32
    %c0_i32_1 = arith.constant 0 : i32
    return %c0_i32, %c0_i32_0 : i32, i32
  }
  func.func @transform_4(%arg0: i32) -> (i32, i32) {
    %c0_i32 = arith.constant 0 : i32
    %c0_i32_0 = arith.constant 0 : i32
    %c0_i32_1 = arith.constant 0 : i32
    return %c0_i32, %c0_i32_0 : i32, i32
  }
  func.func @transform_5(%arg0: i32) -> (i32, i32) {
    %c0_i32 = arith.constant 0 : i32
    %c0_i32_0 = arith.constant 0 : i32
    %c0_i32_1 = arith.constant 0 : i32
    return %c0_i32, %c0_i32_0 : i32, i32
  }
  func.func @transform_6(%arg0: i32) -> (i32, i32) {
    %c0_i32 = arith.constant 0 : i32
    %c0_i32_0 = arith.constant 0 : i32
    %c0_i32_1 = arith.constant 0 : i32
    return %c0_i32, %c0_i32_0 : i32, i32
  }
  func.func @transform_7(%arg0: i32) -> (i32, i32, i32) {
    %c0_i32 = arith.constant 0 : i32
    %c0_i32_0 = arith.constant 0 : i32
    %c0_i32_1 = arith.constant 0 : i32
    return %c0_i32, %arg0, %c0_i32_0 : i32, i32, i32
  }
}

</mosaic_0001>

<llo_original>
// kernel: tpu_custom_call.1
$region0: #{tpu_custom_call.1}
  #allocation0 [shape = 'u32[]', space=smem, size = 0x4, offset = 0x4, fixed_abs, tag = 'smem constant byte address 0x4 - core index']
  #allocation1 [shape = 'u32[144,128]{1,0:T(1,128)}', space=vmem, size = 0x12000, scoped, tag = 'internal scratch']
  #allocation2 [shape = 'f32[8,128]{1,0:T(8,128)}', space=vmem, size = 0x1000, scoped, tag = 'scratch operand']
  #allocation3 [shape = 'f32[8,128]{1,0:T(8,128)}', space=vmem, size = 0x1000, scoped, tag = 'scratch operand']
  %s0 = inlined_call_operand.hbm [shape: f32[4], index: 0, kind: input, shape index: {}]
  %s1 = inlined_call_operand.hbm [shape: f32[8,8,768], index: 1, kind: input, shape index: {}]
  %s2 = inlined_call_operand.hbm [shape: bf16[128,384], index: 2, kind: input, shape index: {}]
  %s3 = inlined_call_operand.hbm [shape: bf16[128,384], index: 3, kind: input, shape index: {}]
  %s4 = inlined_call_operand.hbm [shape: bf16[128,384], index: 4, kind: input, shape index: {}]
  %s5 = inlined_call_operand.vmem [shape: f32[1,384], index: 5, kind: input, shape index: {}]
  %s6 = inlined_call_operand.vmem [shape: f32[1,384], index: 6, kind: input, shape index: {}]
  %s7 = inlined_call_operand.hbm [shape: f32[8,8,256], index: 7, kind: output, shape index: {}]
  %s8 = sld [smem:[#allocation0]]
  $region62: #{tpu_custom_call.1} parent=0
    _
  %s10 = ssub.s32 1, %s8
  %s11 = scalar_select 0, %s10, %s8
  $region1: #{tpu_custom_call.1} parent=0
    #allocation4 [shape = 'u8[512]{0}', space=smem, size = 0x200, scoped, tag = 'input window, operand 0, single buffered']
    #allocation5 [shape = 's32[1]{0}', space=sflag, size = 0x4, scoped, tag = 'scoped memory for tpu_custom_call.1']
    #allocation6 [shape = 's32[1]{0}', space=sflag, size = 0x4, scoped, tag = 'scoped memory for tpu_custom_call.1']
    #allocation7 [shape = 's32[1]{0}', space=sflag, size = 0x4, scoped, tag = 'scoped memory for tpu_custom_call.1']
    #allocation8 [shape = 'u8[196608]{0}', space=vmem, size = 0x30000, scoped, tag = 'input window, operand 1, single buffered']
    #allocation9 [shape = 'u8[98304]{0}', space=vmem, size = 0x18000, scoped, tag = 'input window, operand 2, single buffered']
    #allocation10 [shape = 's32[1]{0}', space=sflag, size = 0x4, scoped, tag = 'scoped memory for tpu_custom_call.1']
    #allocation11 [shape = 'u8[98304]{0}', space=vmem, size = 0x18000, scoped, tag = 'input window, operand 3, single buffered']
    #allocation12 [shape = 'u8[98304]{0}', space=vmem, size = 0x18000, scoped, tag = 'input window, operand 4, single buffered']
    #allocation13 [shape = 's32[1]{0}', space=sflag, size = 0x4, scoped, tag = 'scoped memory for tpu_custom_call.1']
    #allocation14 [shape = 'u8[65536]{0}', space=vmem, size = 0x10000, scoped, tag = 'output window, operand 0, single buffered']
    %12 = vsyncpa [#allocation7], 0
    %13 = vsyncpa [#allocation5], 0
    %14 = vsyncpa [#allocation10], 0
    %15 = vsyncpa [#allocation13], 0
    %16 = vsyncpa [#allocation6], 0
    // Predicated region
    $region2: #{tpu_custom_call.1} parent=1 // pred_check
      _
    $region3: #{tpu_custom_call.1} parent=1 // pred_check_branch
      %18 = sbr.rel (0) target = $region5
    $region4: #{tpu_custom_call.1} parent=1 // pred_region
      %s20 = ssub.s32 16, 16
      %21 = vsyncadd [#allocation7], %s20
      %24 = dma.hbm_to_smem %s0, 16, [#allocation4], [#allocation7]
    $region5: #{tpu_custom_call.1} parent=1 // pred_fallthru
      _
    // Predicated region
    $region6: #{tpu_custom_call.1} parent=1 // pred_check
      _
    $region7: #{tpu_custom_call.1} parent=1 // pred_check_branch
      %26 = sbr.rel (0) target = $region9
    $region8: #{tpu_custom_call.1} parent=1 // pred_region
      %s28 = ssub.s32 6144, 6144
      %29 = vsyncadd [#allocation5], %s28
      %s30 = sshll.u32 [#allocation8], 4
      %s31 = int_to_ptr.vmem [resolvable:$true] %s30
      %36 = dma.hbm_to_vmem [thread:$0]  %s1, 6144, %s31, [#allocation5], 768, 768, 48
    $region9: #{tpu_custom_call.1} parent=1 // pred_fallthru
      _
    // Predicated region
    $region10: #{tpu_custom_call.1} parent=1 // pred_check
      _
    $region11: #{tpu_custom_call.1} parent=1 // pred_check_branch
      %38 = sbr.rel (0) target = $region13
    $region12: #{tpu_custom_call.1} parent=1 // pred_region
      %s40 = ssub.s32 3072, 3072
      %41 = vsyncadd [#allocation10], %s40
      %s42 = sshll.u32 [#allocation9], 4
      %s43 = int_to_ptr.vmem [resolvable:$true] %s42
      %48 = dma.hbm_to_vmem [thread:$0]  %s2, 3072, %s43, [#allocation10], 192, 192, 12
    $region13: #{tpu_custom_call.1} parent=1 // pred_fallthru
      _
    // Predicated region
    $region14: #{tpu_custom_call.1} parent=1 // pred_check
      _
    $region15: #{tpu_custom_call.1} parent=1 // pred_check_branch
      %50 = sbr.rel (0) target = $region17
    $region16: #{tpu_custom_call.1} parent=1 // pred_region
      %s52 = ssub.s32 3072, 3072
      %53 = vsyncadd [#allocation10], %s52
      %s54 = sshll.u32 [#allocation11], 4
      %s55 = int_to_ptr.vmem [resolvable:$true] %s54
      %60 = dma.hbm_to_vmem [thread:$0]  %s3, 3072, %s55, [#allocation10], 192, 192, 12
    $region17: #{tpu_custom_call.1} parent=1 // pred_fallthru
      _
    // Predicated region
    $region18: #{tpu_custom_call.1} parent=1 // pred_check
      _
    $region19: #{tpu_custom_call.1} parent=1 // pred_check_branch
      %62 = sbr.rel (0) target = $region21
    $region20: #{tpu_custom_call.1} parent=1 // pred_region
      %s64 = ssub.s32 3072, 3072
      %65 = vsyncadd [#allocation13], %s64
      %s66 = sshll.u32 [#allocation12], 4
      %s67 = int_to_ptr.vmem [resolvable:$true] %s66
      %72 = dma.hbm_to_vmem [thread:$0]  %s4, 3072, %s67, [#allocation13], 192, 192, 12
    $region21: #{tpu_custom_call.1} parent=1 // pred_fallthru
      _
    // Predicated region
    $region22: #{tpu_custom_call.1} parent=1 // pred_check
      _
    $region23: #{tpu_custom_call.1} parent=1 // pred_check_branch
      %74 = sbr.rel (0) target = $region25
    $region24: #{tpu_custom_call.1} parent=1 // pred_region
      _
    $region25: #{tpu_custom_call.1} parent=1 // pred_fallthru
      _
    // Predicated region
    $region26: #{tpu_custom_call.1} parent=1 // pred_check
      _
    $region27: #{tpu_custom_call.1} parent=1 // pred_check_branch
      %76 = sbr.rel (0) target = $region29
    $region28: #{tpu_custom_call.1} parent=1 // pred_region
      _
    $region29: #{tpu_custom_call.1} parent=1 // pred_fallthru
      _
    // Predicated region
    $region30: #{tpu_custom_call.1} parent=1 // pred_check
      _
    $region31: #{tpu_custom_call.1} parent=1 // pred_check_branch
      %78 = sbr.rel (0) target = $region33
    $region32: #{tpu_custom_call.1} parent=1 // pred_region
      %79 = dma.done [#allocation7], 16
    $region33: #{tpu_custom_call.1} parent=1 // pred_fallthru
      _
    // Predicated region
    $region34: #{tpu_custom_call.1} parent=1 // pred_check
      _
    $region35: #{tpu_custom_call.1} parent=1 // pred_check_branch
      %81 = sbr.rel (0) target = $region37
    $region36: #{tpu_custom_call.1} parent=1 // pred_region
      %82 = dma.done [#allocation5], 6144
    $region37: #{tpu_custom_call.1} parent=1 // pred_fallthru
      _
    // Predicated region
    $region38: #{tpu_custom_call.1} parent=1 // pred_check
      _
    $region39: #{tpu_custom_call.1} parent=1 // pred_check_branch
      %84 = sbr.rel (0) target = $region41
    $region40: #{tpu_custom_call.1} parent=1 // pred_region
      %85 = dma.done [#allocation10], 3072
    $region41: #{tpu_custom_call.1} parent=1 // pred_fallthru
      _
    // Predicated region
    $region42: #{tpu_custom_call.1} parent=1 // pred_check
      _
    $region43: #{tpu_custom_call.1} parent=1 // pred_check_branch
      %87 = sbr.rel (0) target = $region45
    $region44: #{tpu_custom_call.1} parent=1 // pred_region
      %88 = dma.done [#allocation10], 3072
    $region45: #{tpu_custom_call.1} parent=1 // pred_fallthru
      _
    // Predicated region
    $region46: #{tpu_custom_call.1} parent=1 // pred_check
      _
    $region47: #{tpu_custom_call.1} parent=1 // pred_check_branch
      %90 = sbr.rel (0) target = $region49
    $region48: #{tpu_custom_call.1} parent=1 // pred_region
      %91 = dma.done [#allocation13], 3072
    $region49: #{tpu_custom_call.1} parent=1 // pred_fallthru
      _
    %92 = sfence
    %p94 = scmp.eq.s32.totalorder 0, 0
    // Predicated region
    $region50: #{tpu_custom_call.1} parent=1 // pred_check
      %p95 = pneg %p94
    $region51: #{tpu_custom_call.1} parent=1 // pred_check_branch
      %97 = sbr.rel (%p95) target = $region53
    $region52: #{tpu_custom_call.1} parent=1 // pred_region
      %98 = vst [vmem:[#allocation2] sm:$0xff] 0.0
      %99 = vst [vmem:[#allocation3] sm:$0xff] 0.0
    $region53: #{tpu_custom_call.1} parent=1 // pred_fallthru
      _
    %s100 = sld [smem:[#allocation4]]
    %s101 = sld [smem:[#allocation4 + $0x1]]
    %s102 = sld [smem:[#allocation4 + $0x2]]
    %s103 = sld [smem:[#allocation4 + $0x3]]
    %v104 = vld [vmem:[#allocation9] sm:$0xff]
    %v105 = vld [vmem:[#allocation9 + $0x8] sm:$0xf]
    %v106 = vld [vmem:[#allocation9 + $0xc] sm:$0xff]
    %v107 = vld [vmem:[#allocation9 + $0x14] sm:$0xf]
    %v108 = vld [vmem:[#allocation9 + $0x18] sm:$0xff]
    %v109 = vld [vmem:[#allocation9 + $0x20] sm:$0xf]
    %v110 = vld [vmem:[#allocation9 + $0x24] sm:$0xff]
    %v111 = vld [vmem:[#allocation9 + $0x2c] sm:$0xf]
    %v112 = vld [vmem:[#allocation9 + $0x30] sm:$0xff]
    %v113 = vld [vmem:[#allocation9 + $0x38] sm:$0xf]
    %v114 = vld [vmem:[#allocation9 + $0x3c] sm:$0xff]
    %v115 = vld [vmem:[#allocation9 + $0x44] sm:$0xf]
    %v116 = vld [vmem:[#allocation9 + $0x48] sm:$0xff]
    %v117 = vld [vmem:[#allocation9 + $0x50] sm:$0xf]
    %v118 = vld [vmem:[#allocation9 + $0x54] sm:$0xff]
    %v119 = vld [vmem:[#allocation9 + $0x5c] sm:$0xf]
    %v120 = vld [vmem:[#allocation9 + $0x60] sm:$0xff]
    %v121 = vld [vmem:[#allocation9 + $0x68] sm:$0xf]
    %v122 = vld [vmem:[#allocation9 + $0x6c] sm:$0xff]
    %v123 = vld [vmem:[#allocation9 + $0x74] sm:$0xf]
    %v124 = vld [vmem:[#allocation9 + $0x78] sm:$0xff]
    %v125 = vld [vmem:[#allocation9 + $0x80] sm:$0xf]
    %v126 = vld [vmem:[#allocation9 + $0x84] sm:$0xff]
    %v127 = vld [vmem:[#allocation9 + $0x8c] sm:$0xf]
    %v128 = vld [vmem:[#allocation9 + $0x90] sm:$0xff]
    %v129 = vld [vmem:[#allocation9 + $0x98] sm:$0xf]
    %v130 = vld [vmem:[#allocation9 + $0x9c] sm:$0xff]
    %v131 = vld [vmem:[#allocation9 + $0xa4] sm:$0xf]
    %v132 = vld [vmem:[#allocation9 + $0xa8] sm:$0xff]
    %v133 = vld [vmem:[#allocation9 + $0xb0] sm:$0xf]
    %v134 = vld [vmem:[#allocation9 + $0xb4] sm:$0xff]
    %v135 = vld [vmem:[#allocation9 + $0xbc] sm:$0xf]
    %v136 = vld [vmem:[#allocation11] sm:$0xff]
    %v137 = vld [vmem:[#allocation11 + $0x8] sm:$0xf]
    %v138 = vld [vmem:[#allocation11 + $0xc] sm:$0xff]
    %v139 = vld [vmem:[#allocation11 + $0x14] sm:$0xf]
    %v140 = vld [vmem:[#allocation11 + $0x18] sm:$0xff]
    %v141 = vld [vmem:[#allocation11 + $0x20] sm:$0xf]
    %v142 = vld [vmem:[#allocation11 + $0x24] sm:$0xff]
    %v143 = vld [vmem:[#allocation11 + $0x2c] sm:$0xf]
    %v144 = vld [vmem:[#allocation11 + $0x30] sm:$0xff]
    %v145 = vld [vmem:[#allocation11 + $0x38] sm:$0xf]
    %v146 = vld [vmem:[#allocation11 + $0x3c] sm:$0xff]
    %v147 = vld [vmem:[#allocation11 + $0x44] sm:$0xf]
    %v148 = vld [vmem:[#allocation11 + $0x48] sm:$0xff]
    %v149 = vld [vmem:[#allocation11 + $0x50] sm:$0xf]
    %v150 = vld [vmem:[#allocation11 + $0x54] sm:$0xff]
    %v151 = vld [vmem:[#allocation11 + $0x5c] sm:$0xf]
    %v152 = vld [vmem:[#allocation11 + $0x60] sm:$0xff]
    %v153 = vld [vmem:[#allocation11 + $0x68] sm:$0xf]
    %v154 = vld [vmem:[#allocation11 + $0x6c] sm:$0xff]
    %v155 = vld [vmem:[#allocation11 + $0x74] sm:$0xf]
    %v156 = vld [vmem:[#allocation11 + $0x78] sm:$0xff]
    %v157 = vld [vmem:[#allocation11 + $0x80] sm:$0xf]
    %v158 = vld [vmem:[#allocation11 + $0x84] sm:$0xff]
    %v159 = vld [vmem:[#allocation11 + $0x8c] sm:$0xf]
    %v160 = vld [vmem:[#allocation11 + $0x90] sm:$0xff]
    %v161 = vld [vmem:[#allocation11 + $0x98] sm:$0xf]
    %v162 = vld [vmem:[#allocation11 + $0x9c] sm:$0xff]
    %v163 = vld [vmem:[#allocation11 + $0xa4] sm:$0xf]
    %v164 = vld [vmem:[#allocation11 + $0xa8] sm:$0xff]
    %v165 = vld [vmem:[#allocation11 + $0xb0] sm:$0xf]
    %v166 = vld [vmem:[#allocation11 + $0xb4] sm:$0xff]
    %v167 = vld [vmem:[#allocation11 + $0xbc] sm:$0xf]
    %v168 = vld [vmem:[#allocation12] sm:$0xff]
    %v169 = vld [vmem:[#allocation12 + $0x8] sm:$0xf]
    %v170 = vld [vmem:[#allocation12 + $0xc] sm:$0xff]
    %v171 = vld [vmem:[#allocation12 + $0x14] sm:$0xf]
    %v172 = vld [vmem:[#allocation12 + $0x18] sm:$0xff]
    %v173 = vld [vmem:[#allocation12 + $0x20] sm:$0xf]
    %v174 = vld [vmem:[#allocation12 + $0x24] sm:$0xff]
    %v175 = vld [vmem:[#allocation12 + $0x2c] sm:$0xf]
    %v176 = vld [vmem:[#allocation12 + $0x30] sm:$0xff]
    %v177 = vld [vmem:[#allocation12 + $0x38] sm:$0xf]
    %v178 = vld [vmem:[#allocation12 + $0x3c] sm:$0xff]
    %v179 = vld [vmem:[#allocation12 + $0x44] sm:$0xf]
    %v180 = vld [vmem:[#allocation12 + $0x48] sm:$0xff]
    %v181 = vld [vmem:[#allocation12 + $0x50] sm:$0xf]
    %v182 = vld [vmem:[#allocation12 + $0x54] sm:$0xff]
    %v183 = vld [vmem:[#allocation12 + $0x5c] sm:$0xf]
    %v184 = vld [vmem:[#allocation12 + $0x60] sm:$0xff]
    %v185 = vld [vmem:[#allocation12 + $0x68] sm:$0xf]
    %v186 = vld [vmem:[#allocation12 + $0x6c] sm:$0xff]
    %v187 = vld [vmem:[#allocation12 + $0x74] sm:$0xf]
    %v188 = vld [vmem:[#allocation12 + $0x78] sm:$0xff]
    %v189 = vld [vmem:[#allocation12 + $0x80] sm:$0xf]
    %v190 = vld [vmem:[#allocation12 + $0x84] sm:$0xff]
    %v191 = vld [vmem:[#allocation12 + $0x8c] sm:$0xf]
    %v192 = vld [vmem:[#allocation12 + $0x90] sm:$0xff]
    %v193 = vld [vmem:[#allocation12 + $0x98] sm:$0xf]
    %v194 = vld [vmem:[#allocation12 + $0x9c] sm:$0xff]
    %v195 = vld [vmem:[#allocation12 + $0xa4] sm:$0xf]
    %v196 = vld [vmem:[#allocation12 + $0xa8] sm:$0xff]
    %v197 = vld [vmem:[#allocation12 + $0xb0] sm:$0xf]
    %v198 = vld [vmem:[#allocation12 + $0xb4] sm:$0xff]
    %v199 = vld [vmem:[#allocation12 + $0xbc] sm:$0xf]
    %v200 = vld [vmem:[%s5] sm:$0x7]
    %v202 = vlaneseq
    %v203 = vshrl.u32 %v202, 7
    %v204 = vsub.s32 0, %v203
    %v205 = vrot.slane %v200, %v204
    %v206 = vlaneseq
    %v207 = vshrl.u32 %v206, 7
    %v208 = vsub.s32 1, %v207
    %v209 = vrot.slane %v200, %v208
    %v210 = vlaneseq
    %v211 = vshrl.u32 %v210, 7
    %v212 = vsub.s32 2, %v211
    %v213 = vrot.slane %v200, %v212
    %v217 = vld [vmem:[%s6] sm:$0x7]
    %v219 = vlaneseq
    %v220 = vshrl.u32 %v219, 7
    %v221 = vsub.s32 0, %v220
    %v222 = vrot.slane %v217, %v221
    %v223 = vlaneseq
    %v224 = vshrl.u32 %v223, 7
    %v225 = vsub.s32 1, %v224
    %v226 = vrot.slane %v217, %v225
    %v227 = vlaneseq
    %v228 = vshrl.u32 %v227, 7
    %v229 = vsub.s32 2, %v228
    %v230 = vrot.slane %v217, %v229
    %v234 = vld [vmem:[#allocation2] sm:$0xff]
    %v235 = vld [vmem:[#allocation3] sm:$0xff]
    %v236 = vld [vmem:[#allocation8] ss:$8 sm:$0xf]
    %v237 = vld [vmem:[#allocation8] ss:$8 sm:$0x30]
    %v238 = vor.u32 %v236, %v237
    %s239 = scalar_lea.vmem [#allocation8], 48
    %v240 = vld [vmem:[%s239] ss:$8 sm:$0xf]
    %v241 = vld [vmem:[%s239] ss:$8 sm:$0x30]
    %v242 = vor.u32 %v240, %v241
    %s243 = scalar_lea.vmem [#allocation8], 96
    %v244 = vld [vmem:[%s243] ss:$8 sm:$0xf]
    %v245 = vld [vmem:[%s243] ss:$8 sm:$0x30]
    %v246 = vor.u32 %v244, %v245
    %s247 = scalar_lea.vmem [#allocation8], 144
    %v248 = vld [vmem:[%s247] ss:$8 sm:$0xf]
    %v249 = vld [vmem:[%s247] ss:$8 sm:$0x30]
    %v250 = vor.u32 %v248, %v249
    %s251 = scalar_lea.vmem [#allocation8], 192
    %v252 = vld [vmem:[%s251] ss:$8 sm:$0xf]
    %v253 = vld [vmem:[%s251] ss:$8 sm:$0x30]
    %v254 = vor.u32 %v252, %v253
    %s255 = scalar_lea.vmem [#allocation8], 240
    %v256 = vld [vmem:[%s255] ss:$8 sm:$0xf]
    %v257 = vld [vmem:[%s255] ss:$8 sm:$0x30]
    %v258 = vor.u32 %v256, %v257
    %s259 = scalar_lea.vmem [#allocation8], 288
    %v260 = vld [vmem:[%s259] ss:$8 sm:$0xf]
    %v261 = vld [vmem:[%s259] ss:$8 sm:$0x30]
    %v262 = vor.u32 %v260, %v261
    %s263 = scalar_lea.vmem [#allocation8], 336
    %v264 = vld [vmem:[%s263] ss:$8 sm:$0xf]
    %v265 = vld [vmem:[%s263] ss:$8 sm:$0x30]
    %v266 = vor.u32 %v264, %v265
    %v267 = vpack.c.bf16 %v234, %v234
    %v300 = vunpack.c.l.b16 %v104
    %v301 = vunpack.c.h.b16 %v104
    %v302 = vunpack.c.l.b16 %v105
    %v303 = vunpack.c.l.b16 %v106
    %v304 = vunpack.c.h.b16 %v106
    %v305 = vunpack.c.l.b16 %v107
    %v306 = vunpack.c.l.b16 %v108
    %v307 = vunpack.c.h.b16 %v108
    %v308 = vunpack.c.l.b16 %v109
    %v309 = vunpack.c.l.b16 %v110
    %v310 = vunpack.c.h.b16 %v110
    %v311 = vunpack.c.l.b16 %v111
    %v312 = vunpack.c.l.b16 %v112
    %v313 = vunpack.c.h.b16 %v112
    %v314 = vunpack.c.l.b16 %v113
    %v315 = vunpack.c.l.b16 %v114
    %v316 = vunpack.c.h.b16 %v114
    %v317 = vunpack.c.l.b16 %v115
    %v318 = vunpack.c.l.b16 %v116
    %v319 = vunpack.c.h.b16 %v116
    %v320 = vunpack.c.l.b16 %v117
    %v321 = vunpack.c.l.b16 %v118
    %v322 = vunpack.c.h.b16 %v118
    %v323 = vunpack.c.l.b16 %v119
    %v324 = vunpack.c.l.b16 %v120
    %v325 = vunpack.c.h.b16 %v120
    %v326 = vunpack.c.l.b16 %v121
    %v327 = vunpack.c.l.b16 %v122
    %v328 = vunpack.c.h.b16 %v122
    %v329 = vunpack.c.l.b16 %v123
    %v330 = vunpack.c.l.b16 %v124
    %v331 = vunpack.c.h.b16 %v124
    %v332 = vunpack.c.l.b16 %v125
    %v333 = vunpack.c.l.b16 %v126
    %v334 = vunpack.c.h.b16 %v126
    %v335 = vunpack.c.l.b16 %v127
    %v336 = vunpack.c.l.b16 %v128
    %v337 = vunpack.c.h.b16 %v128
    %v338 = vunpack.c.l.b16 %v129
    %v339 = vunpack.c.l.b16 %v130
    %v340 = vunpack.c.h.b16 %v130
    %v341 = vunpack.c.l.b16 %v131
    %v342 = vunpack.c.l.b16 %v132
    %v343 = vunpack.c.h.b16 %v132
    %v344 = vunpack.c.l.b16 %v133
    %v345 = vunpack.c.l.b16 %v134
    %v346 = vunpack.c.h.b16 %v134
    %v347 = vunpack.c.l.b16 %v135
    %v348 = vpack.c.b16 %v303, %v300
    %v349 = vpack.c.b16 %v304, %v301
    %v350 = vpack.c.b16 %v305, %v302
    %v351 = vpack.c.b16 %v309, %v306
    %v352 = vpack.c.b16 %v310, %v307
    %v353 = vpack.c.b16 %v311, %v308
    %v354 = vpack.c.b16 %v315, %v312
    %v355 = vpack.c.b16 %v316, %v313
    %v356 = vpack.c.b16 %v317, %v314
    %v357 = vpack.c.b16 %v321, %v318
    %v358 = vpack.c.b16 %v322, %v319
    %v359 = vpack.c.b16 %v323, %v320
    %v360 = vpack.c.b16 %v327, %v324
    %v361 = vpack.c.b16 %v328, %v325
    %v362 = vpack.c.b16 %v329, %v326
    %v363 = vpack.c.b16 %v333, %v330
    %v364 = vpack.c.b16 %v334, %v331
    %v365 = vpack.c.b16 %v335, %v332
    %v366 = vpack.c.b16 %v339, %v336
    %v367 = vpack.c.b16 %v340, %v337
    %v368 = vpack.c.b16 %v341, %v338
    %v369 = vpack.c.b16 %v345, %v342
    %v370 = vpack.c.b16 %v346, %v343
    %v371 = vpack.c.b16 %v347, %v344
    %396 = vmatprep.subr.bf16.mxu0 %v349
    %397 = vmatpush1.bf16.msra.mxu0 %v348
    %398 = vmatprep.subr.bf16.mxu0 %v352
    %399 = vmatpush1.bf16.msra.mxu0 %v351
    %400 = vmatprep.subr.bf16.mxu0 %v355
    %401 = vmatpush1.bf16.msra.mxu0 %v354
    %402 = vmatprep.subr.bf16.mxu0 %v358
    %403 = vmatpush1.bf16.msra.mxu0 %v357
    %404 = vmatprep.subr.bf16.mxu0 %v361
    %405 = vmatpush1.bf16.msra.mxu0 %v360
    %406 = vmatprep.subr.bf16.mxu0 %v364
    %407 = vmatpush1.bf16.msra.mxu0 %v363
    %408 = vmatprep.subr.bf16.mxu0 %v367
    %409 = vmatpush1.bf16.msra.mxu0 %v366
    %410 = vmatprep.subr.bf16.mxu0 %v370
    %411 = vmatpush1.bf16.msra.mxu0 %v369
    %412 = vmatprep.subr.bf16.mxu0 0
    %413 = vmatpush1.bf16.msra.mxu0 0
    %414 = vmatprep.subr.bf16.mxu0 0
    %415 = vmatpush1.bf16.msra.mxu0 0
    %416 = vmatprep.subr.bf16.mxu0 0
    %417 = vmatpush1.bf16.msra.mxu0 0
    %418 = vmatprep.subr.bf16.mxu0 0
    %419 = vmatpush1.bf16.msra.mxu0 0
    %420 = vmatprep.subr.bf16.mxu0 0
    %421 = vmatpush1.bf16.msra.mxu0 0
    %422 = vmatprep.subr.bf16.mxu0 0
    %423 = vmatpush1.bf16.msra.mxu0 0
    %424 = vmatprep.subr.bf16.mxu0 0
    %425 = vmatpush1.bf16.msra.mxu0 0
    %426 = vmatprep.subr.bf16.mxu0 0
    %427 = vmatpush1.bf16.msra.mxu0 0
    %428 = vmatprep.mubr.bf16.mxu0 0
    %429 = vmatmul.mubr.bf16.gmra.mrb[0].mxu0 %v267
    %v430 = vpop.f32.mrb[0].mxu0
    %v431 = vadd.f32 %v205, %v430
    %v432 = vpop.f32.mrb[0].mxu0
    %v433 = vadd.f32 %v209, %v432
    %v434 = vpop.f32.mrb[0].mxu0
    %v435 = vpop.f32.mrb[0].mxu0
    %436 = vdwg.mxu0
    %437 = vmatprep.subr.bf16.mxu0 0
    %438 = vmatpush1.bf16.msra.mxu0 %v350
    %439 = vmatprep.subr.bf16.mxu0 0
    %440 = vmatpush1.bf16.msra.mxu0 %v353
    %441 = vmatprep.subr.bf16.mxu0 0
    %442 = vmatpush1.bf16.msra.mxu0 %v356
    %443 = vmatprep.subr.bf16.mxu0 0
    %444 = vmatpush1.bf16.msra.mxu0 %v359
    %445 = vmatprep.subr.bf16.mxu0 0
    %446 = vmatpush1.bf16.msra.mxu0 %v362
    %447 = vmatprep.subr.bf16.mxu0 0
    %448 = vmatpush1.bf16.msra.mxu0 %v365
    %449 = vmatprep.subr.bf16.mxu0 0
    %450 = vmatpush1.bf16.msra.mxu0 %v368
    %451 = vmatprep.subr.bf16.mxu0 0
    %452 = vmatpush1.bf16.msra.mxu0 %v371
    %453 = vmatprep.subr.bf16.mxu0 0
    %454 = vmatpush1.bf16.msra.mxu0 0
    %455 = vmatprep.subr.bf16.mxu0 0
    %456 = vmatpush1.bf16.msra.mxu0 0
    %457 = vmatprep.subr.bf16.mxu0 0
    %458 = vmatpush1.bf16.msra.mxu0 0
    %459 = vmatprep.subr.bf16.mxu0 0
    %460 = vmatpush1.bf16.msra.mxu0 0
    %461 = vmatprep.subr.bf16.mxu0 0
    %462 = vmatpush1.bf16.msra.mxu0 0
    %463 = vmatprep.subr.bf16.mxu0 0
    %464 = vmatpush1.bf16.msra.mxu0 0
    %465 = vmatprep.subr.bf16.mxu0 0
    %466 = vmatpush1.bf16.msra.mxu0 0
    %467 = vmatprep.subr.bf16.mxu0 0
    %468 = vmatpush1.bf16.msra.mxu0 0
    %469 = vmatprep.mubr.bf16.mxu0 0
    %470 = vmatmul.mubr.bf16.gmra.mrb[0].mxu0 %v267
    %v471 = vpop.f32.mrb[0].mxu0
    %v472 = vadd.f32 %v213, %v471
    %v473 = vpop.f32.mrb[0].mxu0
    %v474 = vpop.f32.mrb[0].mxu0
    %v475 = vpop.f32.mrb[0].mxu0
    %476 = vdwg.mxu0
    %v477 = vstv %s101
    %v478 = vmul.f32 %v477, %v234
    %v480 = vcombine.high %v431, %v431
    %v482 = vunpack.c.l.s4 1966171168
    %v483 = vunpack.c.0.s8 %v482
    %v484 = vlaneseq
    %v485 = vshrl.u32 %v484, 7
    %v486 = vsub.s32 %v483, %v485
    %v487 = vrot.slane %v431, %v486
    %v489 = vunpack.c.l.s4 1966171168
    %v490 = vunpack.c.0.s8 %v489
    %v491 = vlaneseq
    %v492 = vshrl.u32 %v491, 7
    %v493 = vsub.s32 %v490, %v492
    %v494 = vrot.slane %v480, %v493
    %v495 = vcombine.high %v487, %v487
    %v496 = vcombine.high %v494, %v494
    %v498 = vunpack.c.l.s4 1966171168
    %v499 = vunpack.c.0.s8 %v498
    %v500 = vlaneseq
    %v501 = vshrl.u32 %v500, 7
    %v502 = vsub.s32 %v499, %v501
    %v503 = vrot.slane %v487, %v502
    %v505 = vunpack.c.l.s4 1966171168
    %v506 = vunpack.c.0.s8 %v505
    %v507 = vlaneseq
    %v508 = vshrl.u32 %v507, 7
    %v509 = vsub.s32 %v506, %v508
    %v510 = vrot.slane %v494, %v509
    %v512 = vunpack.c.l.s4 1966171168
    %v513 = vunpack.c.0.s8 %v512
    %v514 = vlaneseq
    %v515 = vshrl.u32 %v514, 7
    %v516 = vsub.s32 %v513, %v515
    %v517 = vrot.slane %v495, %v516
    %v519 = vunpack.c.l.s4 1966171168
    %v520 = vunpack.c.0.s8 %v519
    %v521 = vlaneseq
    %v522 = vshrl.u32 %v521, 7
    %v523 = vsub.s32 %v520, %v522
    %v524 = vrot.slane %v496, %v523
    %v525 = vcombine.high %v503, %v503
    %v526 = vcombine.high %v510, %v510
    %v527 = vcombine.high %v517, %v517
    %v528 = vcombine.high %v524, %v524
    %v537 = vadd.f32 %v238, %v503
    %v538 = vadd.f32 %v242, %v517
    %v539 = vadd.f32 %v246, %v525
    %v540 = vadd.f32 %v250, %v527
    %v541 = vadd.f32 %v254, %v510
    %v542 = vadd.f32 %v258, %v524
    %v543 = vadd.f32 %v262, %v526
    %v544 = vadd.f32 %v266, %v528
    %v545 = vxor.u32 %v537, 2147483648
    %v546 = vxor.u32 %v538, 2147483648
    %v547 = vxor.u32 %v539, 2147483648
    %v548 = vxor.u32 %v540, 2147483648
    %v549 = vxor.u32 %v541, 2147483648
    %v550 = vxor.u32 %v542, 2147483648
    %v551 = vxor.u32 %v543, 2147483648
    %v552 = vxor.u32 %v544, 2147483648
    %v553 = vmul.f32 %v545, 1.442695
    %v554 = vpow.pop %v553
    %v555 = vmul.f32 %v546, 1.442695
    %v556 = vpow.pop %v555
    %v557 = vmul.f32 %v547, 1.442695
    %v558 = vpow.pop %v557
    %v559 = vmul.f32 %v548, 1.442695
    %v560 = vpow.pop %v559
    %v561 = vmul.f32 %v549, 1.442695
    %v562 = vpow.pop %v561
    %v563 = vmul.f32 %v550, 1.442695
    %v564 = vpow.pop %v563
    %v565 = vmul.f32 %v551, 1.442695
    %v566 = vpow.pop %v565
    %v567 = vmul.f32 %v552, 1.442695
    %v568 = vpow.pop %v567
    %v569 = vadd.f32 %v554, 1.0
    %v570 = vadd.f32 %v556, 1.0
    %v571 = vadd.f32 %v558, 1.0
    %v572 = vadd.f32 %v560, 1.0
    %v573 = vadd.f32 %v562, 1.0
    %v574 = vadd.f32 %v564, 1.0
    %v575 = vadd.f32 %v566, 1.0
    %v576 = vadd.f32 %v568, 1.0
    %v577 = vrcp.pop %v569
    %v578 = vmul.f32 1.0, %v577
    %v579 = vrcp.pop %v570
    %v580 = vmul.f32 1.0, %v579
    %v581 = vrcp.pop %v571
    %v582 = vmul.f32 1.0, %v581
    %v583 = vrcp.pop %v572
    %v584 = vmul.f32 1.0, %v583
    %v585 = vrcp.pop %v573
    %v586 = vmul.f32 1.0, %v585
    %v587 = vrcp.pop %v574
    %v588 = vmul.f32 1.0, %v587
    %v589 = vrcp.pop %v575
    %v590 = vmul.f32 1.0, %v589
    %v591 = vrcp.pop %v576
    %v592 = vmul.f32 1.0, %v591
    %v601 = vrot.slane %v238, 1
    %v602 = vrot.slane %v242, 1
    %v603 = vrot.slane %v246, 1
    %v604 = vrot.slane %v250, 1
    %v605 = vrot.slane %v254, 1
    %v606 = vrot.slane %v258, 1
    %v607 = vrot.slane %v262, 1
    %v608 = vrot.slane %v266, 1
    %v618 = vcombine.high %v433, %v433
    %v620 = vunpack.c.l.s4 1966171168
    %v621 = vunpack.c.0.s8 %v620
    %v622 = vlaneseq
    %v623 = vshrl.u32 %v622, 7
    %v624 = vsub.s32 %v621, %v623
    %v625 = vrot.slane %v433, %v624
    %v627 = vunpack.c.l.s4 1966171168
    %v628 = vunpack.c.0.s8 %v627
    %v629 = vlaneseq
    %v630 = vshrl.u32 %v629, 7
    %v631 = vsub.s32 %v628, %v630
    %v632 = vrot.slane %v618, %v631
    %v633 = vcombine.high %v625, %v625
    %v634 = vcombine.high %v632, %v632
    %v636 = vunpack.c.l.s4 1966171168
    %v637 = vunpack.c.0.s8 %v636
    %v638 = vlaneseq
    %v639 = vshrl.u32 %v638, 7
    %v640 = vsub.s32 %v637, %v639
    %v641 = vrot.slane %v625, %v640
    %v643 = vunpack.c.l.s4 1966171168
    %v644 = vunpack.c.0.s8 %v643
    %v645 = vlaneseq
    %v646 = vshrl.u32 %v645, 7
    %v647 = vsub.s32 %v644, %v646
    %v648 = vrot.slane %v632, %v647
    %v650 = vunpack.c.l.s4 1966171168
    %v651 = vunpack.c.0.s8 %v650
    %v652 = vlaneseq
    %v653 = vshrl.u32 %v652, 7
    %v654 = vsub.s32 %v651, %v653
    %v655 = vrot.slane %v633, %v654
    %v657 = vunpack.c.l.s4 1966171168
    %v658 = vunpack.c.0.s8 %v657
    %v659 = vlaneseq
    %v660 = vshrl.u32 %v659, 7
    %v661 = vsub.s32 %v658, %v660
    %v662 = vrot.slane %v634, %v661
    %v663 = vcombine.high %v641, %v641
    %v664 = vcombine.high %v648, %v648
    %v665 = vcombine.high %v655, %v655
    %v666 = vcombine.high %v662, %v662
    %v675 = vadd.f32 %v601, %v641
    %v676 = vadd.f32 %v602, %v655
    %v677 = vadd.f32 %v603, %v663
    %v678 = vadd.f32 %v604, %v665
    %v679 = vadd.f32 %v605, %v648
    %v680 = vadd.f32 %v606, %v662
    %v681 = vadd.f32 %v607, %v664
    %v682 = vadd.f32 %v608, %v666
    %v683 = vxor.u32 %v675, 2147483648
    %v684 = vxor.u32 %v676, 2147483648
    %v685 = vxor.u32 %v677, 2147483648
    %v686 = vxor.u32 %v678, 2147483648
    %v687 = vxor.u32 %v679, 2147483648
    %v688 = vxor.u32 %v680, 2147483648
    %v689 = vxor.u32 %v681, 2147483648
    %v690 = vxor.u32 %v682, 2147483648
    %v691 = vmul.f32 %v683, 1.442695
    %v692 = vpow.pop %v691
    %v693 = vmul.f32 %v684, 1.442695
    %v694 = vpow.pop %v693
    %v695 = vmul.f32 %v685, 1.442695
    %v696 = vpow.pop %v695
    %v697 = vmul.f32 %v686, 1.442695
    %v698 = vpow.pop %v697
    %v699 = vmul.f32 %v687, 1.442695
    %v700 = vpow.pop %v699
    %v701 = vmul.f32 %v688, 1.442695
    %v702 = vpow.pop %v701
    %v703 = vmul.f32 %v689, 1.442695
    %v704 = vpow.pop %v703
    %v705 = vmul.f32 %v690, 1.442695
    %v706 = vpow.pop %v705
    %v707 = vadd.f32 %v692, 1.0
    %v708 = vadd.f32 %v694, 1.0
    %v709 = vadd.f32 %v696, 1.0
    %v710 = vadd.f32 %v698, 1.0
    %v711 = vadd.f32 %v700, 1.0
    %v712 = vadd.f32 %v702, 1.0
    %v713 = vadd.f32 %v704, 1.0
    %v714 = vadd.f32 %v706, 1.0
    %v715 = vrcp.pop %v707
    %v716 = vmul.f32 1.0, %v715
    %v717 = vrcp.pop %v708
    %v718 = vmul.f32 1.0, %v717
    %v719 = vrcp.pop %v709
    %v720 = vmul.f32 1.0, %v719
    %v721 = vrcp.pop %v710
    %v722 = vmul.f32 1.0, %v721
    %v723 = vrcp.pop %v711
    %v724 = vmul.f32 1.0, %v723
    %v725 = vrcp.pop %v712
    %v726 = vmul.f32 1.0, %v725
    %v727 = vrcp.pop %v713
    %v728 = vmul.f32 1.0, %v727
    %v729 = vrcp.pop %v714
    %v730 = vmul.f32 1.0, %v729
    %v732 = vcombine.high %v472, %v472
    %v734 = vunpack.c.l.s4 1966171168
    %v735 = vunpack.c.0.s8 %v734
    %v736 = vlaneseq
    %v737 = vshrl.u32 %v736, 7
    %v738 = vsub.s32 %v735, %v737
    %v739 = vrot.slane %v472, %v738
    %v741 = vunpack.c.l.s4 1966171168
    %v742 = vunpack.c.0.s8 %v741
    %v743 = vlaneseq
    %v744 = vshrl.u32 %v743, 7
    %v745 = vsub.s32 %v742, %v744
    %v746 = vrot.slane %v732, %v745
    %v747 = vcombine.high %v739, %v739
    %v748 = vcombine.high %v746, %v746
    %v750 = vunpack.c.l.s4 1966171168
    %v751 = vunpack.c.0.s8 %v750
    %v752 = vlaneseq
    %v753 = vshrl.u32 %v752, 7
    %v754 = vsub.s32 %v751, %v753
    %v755 = vrot.slane %v739, %v754
    %v757 = vunpack.c.l.s4 1966171168
    %v758 = vunpack.c.0.s8 %v757
    %v759 = vlaneseq
    %v760 = vshrl.u32 %v759, 7
    %v761 = vsub.s32 %v758, %v760
    %v762 = vrot.slane %v746, %v761
    %v764 = vunpack.c.l.s4 1966171168
    %v765 = vunpack.c.0.s8 %v764
    %v766 = vlaneseq
    %v767 = vshrl.u32 %v766, 7
    %v768 = vsub.s32 %v765, %v767
    %v769 = vrot.slane %v747, %v768
    %v771 = vunpack.c.l.s4 1966171168
    %v772 = vunpack.c.0.s8 %v771
    %v773 = vlaneseq
    %v774 = vshrl.u32 %v773, 7
    %v775 = vsub.s32 %v772, %v774
    %v776 = vrot.slane %v748, %v775
    %v777 = vcombine.high %v755, %v755
    %v778 = vcombine.high %v762, %v762
    %v779 = vcombine.high %v769, %v769
    %v780 = vcombine.high %v776, %v776
    %v789 = vmul.f32 %v578, %v755
    %v790 = vmul.f32 %v580, %v769
    %v791 = vmul.f32 %v582, %v777
    %v792 = vmul.f32 %v584, %v779
    %v793 = vmul.f32 %v586, %v762
    %v794 = vmul.f32 %v588, %v776
    %v795 = vmul.f32 %v590, %v778
    %v796 = vmul.f32 %v592, %v780
    %v797 = vrot.slane %v238, 2
    %v798 = vrot.slane %v242, 2
    %v799 = vrot.slane %v246, 2
    %v800 = vrot.slane %v250, 2
    %v801 = vrot.slane %v254, 2
    %v802 = vrot.slane %v258, 2
    %v803 = vrot.slane %v262, 2
    %v804 = vrot.slane %v266, 2
    %v813 = vadd.f32 %v797, %v789
    %v814 = vadd.f32 %v798, %v790
    %v815 = vadd.f32 %v799, %v791
    %v816 = vadd.f32 %v800, %v792
    %v817 = vadd.f32 %v801, %v793
    %v818 = vadd.f32 %v802, %v794
    %v819 = vadd.f32 %v803, %v795
    %v820 = vadd.f32 %v804, %v796
    %v821 = vtanh.pop %v813
    %v822 = vtanh.pop %v814
    %v823 = vtanh.pop %v815
    %v824 = vtanh.pop %v816
    %v825 = vtanh.pop %v817
    %v826 = vtanh.pop %v818
    %v827 = vtanh.pop %v819
    %v828 = vtanh.pop %v820
    %v829 = vsub.f32 1.0, %v716
    %v830 = vsub.f32 1.0, %v718
    %v831 = vsub.f32 1.0, %v720
    %v832 = vsub.f32 1.0, %v722
    %v833 = vsub.f32 1.0, %v724
    %v834 = vsub.f32 1.0, %v726
    %v835 = vsub.f32 1.0, %v728
    %v836 = vsub.f32 1.0, %v730
    %v837 = vmul.f32 %v829, %v821
    %v838 = vmul.f32 %v830, %v822
    %v839 = vmul.f32 %v831, %v823
    %v840 = vmul.f32 %v832, %v824
    %v841 = vmul.f32 %v833, %v825
    %v842 = vmul.f32 %v834, %v826
    %v843 = vmul.f32 %v835, %v827
    %v844 = vmul.f32 %v836, %v828
    %v846 = vcombine.high %v234, %v234
    %v848 = vunpack.c.l.s4 1966171168
    %v849 = vunpack.c.0.s8 %v848
    %v850 = vlaneseq
    %v851 = vshrl.u32 %v850, 7
    %v852 = vsub.s32 %v849, %v851
    %v853 = vrot.slane %v234, %v852
    %v855 = vunpack.c.l.s4 1966171168
    %v856 = vunpack.c.0.s8 %v855
    %v857 = vlaneseq
    %v858 = vshrl.u32 %v857, 7
    %v859 = vsub.s32 %v856, %v858
    %v860 = vrot.slane %v846, %v859
    %v861 = vcombine.high %v853, %v853
    %v862 = vcombine.high %v860, %v860
    %v864 = vunpack.c.l.s4 1966171168
    %v865 = vunpack.c.0.s8 %v864
    %v866 = vlaneseq
    %v867 = vshrl.u32 %v866, 7
    %v868 = vsub.s32 %v865, %v867
    %v869 = vrot.slane %v853, %v868
    %v871 = vunpack.c.l.s4 1966171168
    %v872 = vunpack.c.0.s8 %v871
    %v873 = vlaneseq
    %v874 = vshrl.u32 %v873, 7
    %v875 = vsub.s32 %v872, %v874
    %v876 = vrot.slane %v860, %v875
    %v878 = vunpack.c.l.s4 1966171168
    %v879 = vunpack.c.0.s8 %v878
    %v880 = vlaneseq
    %v881 = vshrl.u32 %v880, 7
    %v882 = vsub.s32 %v879, %v881
    %v883 = vrot.slane %v861, %v882
    %v885 = vunpack.c.l.s4 1966171168
    %v886 = vunpack.c.0.s8 %v885
    %v887 = vlaneseq
    %v888 = vshrl.u32 %v887, 7
    %v889 = vsub.s32 %v886, %v888
    %v890 = vrot.slane %v862, %v889
    %v891 = vcombine.high %v869, %v869
    %v892 = vcombine.high %v876, %v876
    %v893 = vcombine.high %v883, %v883
    %v894 = vcombine.high %v890, %v890
    %v903 = vmul.f32 %v716, %v869
    %v904 = vmul.f32 %v718, %v883
    %v905 = vmul.f32 %v720, %v891
    %v906 = vmul.f32 %v722, %v893
    %v907 = vmul.f32 %v724, %v876
    %v908 = vmul.f32 %v726, %v890
    %v909 = vmul.f32 %v728, %v892
    %v910 = vmul.f32 %v730, %v894
    %v911 = vadd.f32 %v837, %v903
    %v912 = vadd.f32 %v838, %v904
    %v913 = vadd.f32 %v839, %v905
    %v914 = vadd.f32 %v840, %v906
    %v915 = vadd.f32 %v841, %v907
    %v916 = vadd.f32 %v842, %v908
    %v917 = vadd.f32 %v843, %v909
    %v918 = vadd.f32 %v844, %v910
    %v919 = vstv %s100
    %v920 = vmul.f32 %v919, %v911
    %v921 = vmul.f32 %v919, %v912
    %v922 = vmul.f32 %v919, %v913
    %v923 = vmul.f32 %v919, %v914
    %v924 = vmul.f32 %v919, %v915
    %v925 = vmul.f32 %v919, %v916
    %v926 = vmul.f32 %v919, %v917
    %v927 = vmul.f32 %v919, %v918
    %v936 = vcombine.low %v920, %v921
    %v937 = vcombine.low %v922, %v923
    %v938 = vcombine.low %v924, %v925
    %v939 = vcombine.low %v926, %v927
    %v941 = vunpack.c.l.s4 1966171168
    %v942 = vunpack.c.0.s8 %v941
    %v943 = vlaneseq
    %v944 = vshrl.u32 %v943, 7
    %v945 = vsub.s32 %v942, %v944
    %v946 = vrot.slane %v936, %v945
    %v948 = vunpack.c.l.s4 1966171168
    %v949 = vunpack.c.0.s8 %v948
    %v950 = vlaneseq
    %v951 = vshrl.u32 %v950, 7
    %v952 = vsub.s32 %v949, %v951
    %v953 = vrot.slane %v937, %v952
    %v955 = vunpack.c.l.s4 1966171168
    %v956 = vunpack.c.0.s8 %v955
    %v957 = vlaneseq
    %v958 = vshrl.u32 %v957, 7
    %v959 = vsub.s32 %v956, %v958
    %v960 = vrot.slane %v938, %v959
    %v962 = vunpack.c.l.s4 1966171168
    %v963 = vunpack.c.0.s8 %v962
    %v964 = vlaneseq
    %v965 = vshrl.u32 %v964, 7
    %v966 = vsub.s32 %v963, %v965
    %v967 = vrot.slane %v939, %v966
    %v968 = vcombine.low %v946, %v953
    %v969 = vcombine.low %v960, %v967
    %v971 = vunpack.c.l.s4 1966171168
    %v972 = vunpack.c.0.s8 %v971
    %v973 = vlaneseq
    %v974 = vshrl.u32 %v973, 7
    %v975 = vsub.s32 %v972, %v974
    %v976 = vrot.slane %v968, %v975
    %v978 = vunpack.c.l.s4 1966171168
    %v979 = vunpack.c.0.s8 %v978
    %v980 = vlaneseq
    %v981 = vshrl.u32 %v980, 7
    %v982 = vsub.s32 %v979, %v981
    %v983 = vrot.slane %v969, %v982
    %v984 = vcombine.low %v976, %v983
    %v986 = vadd.f32 %v478, %v984
    %v987 = vpack.c.bf16 %v986, %v986
    %v1020 = vunpack.c.l.b16 %v136
    %v1021 = vunpack.c.h.b16 %v136
    %v1022 = vunpack.c.l.b16 %v137
    %v1023 = vunpack.c.l.b16 %v138
    %v1024 = vunpack.c.h.b16 %v138
    %v1025 = vunpack.c.l.b16 %v139
    %v1026 = vunpack.c.l.b16 %v140
    %v1027 = vunpack.c.h.b16 %v140
    %v1028 = vunpack.c.l.b16 %v141
    %v1029 = vunpack.c.l.b16 %v142
    %v1030 = vunpack.c.h.b16 %v142
    %v1031 = vunpack.c.l.b16 %v143
    %v1032 = vunpack.c.l.b16 %v144
    %v1033 = vunpack.c.h.b16 %v144
    %v1034 = vunpack.c.l.b16 %v145
    %v1035 = vunpack.c.l.b16 %v146
    %v1036 = vunpack.c.h.b16 %v146
    %v1037 = vunpack.c.l.b16 %v147
    %v1038 = vunpack.c.l.b16 %v148
    %v1039 = vunpack.c.h.b16 %v148
    %v1040 = vunpack.c.l.b16 %v149
    %v1041 = vunpack.c.l.b16 %v150
    %v1042 = vunpack.c.h.b16 %v150
    %v1043 = vunpack.c.l.b16 %v151
    %v1044 = vunpack.c.l.b16 %v152
    %v1045 = vunpack.c.h.b16 %v152
    %v1046 = vunpack.c.l.b16 %v153
    %v1047 = vunpack.c.l.b16 %v154
    %v1048 = vunpack.c.h.b16 %v154
    %v1049 = vunpack.c.l.b16 %v155
    %v1050 = vunpack.c.l.b16 %v156
    %v1051 = vunpack.c.h.b16 %v156
    %v1052 = vunpack.c.l.b16 %v157
    %v1053 = vunpack.c.l.b16 %v158
    %v1054 = vunpack.c.h.b16 %v158
    %v1055 = vunpack.c.l.b16 %v159
    %v1056 = vunpack.c.l.b16 %v160
    %v1057 = vunpack.c.h.b16 %v160
    %v1058 = vunpack.c.l.b16 %v161
    %v1059 = vunpack.c.l.b16 %v162
    %v1060 = vunpack.c.h.b16 %v162
    %v1061 = vunpack.c.l.b16 %v163
    %v1062 = vunpack.c.l.b16 %v164
    %v1063 = vunpack.c.h.b16 %v164
    %v1064 = vunpack.c.l.b16 %v165
    %v1065 = vunpack.c.l.b16 %v166
    %v1066 = vunpack.c.h.b16 %v166
    %v1067 = vunpack.c.l.b16 %v167
    %v1068 = vpack.c.b16 %v1023, %v1020
    %v1069 = vpack.c.b16 %v1024, %v1021
    %v1070 = vpack.c.b16 %v1025, %v1022
    %v1071 = vpack.c.b16 %v1029, %v1026
    %v1072 = vpack.c.b16 %v1030, %v1027
    %v1073 = vpack.c.b16 %v1031, %v1028
    %v1074 = vpack.c.b16 %v1035, %v1032
    %v1075 = vpack.c.b16 %v1036, %v1033
    %v1076 = vpack.c.b16 %v1037, %v1034
    %v1077 = vpack.c.b16 %v1041, %v1038
    %v1078 = vpack.c.b16 %v1042, %v1039
    %v1079 = vpack.c.b16 %v1043, %v1040
    %v1080 = vpack.c.b16 %v1047, %v1044
    %v1081 = vpack.c.b16 %v1048, %v1045
    %v1082 = vpack.c.b16 %v1049, %v1046
    %v1083 = vpack.c.b16 %v1053, %v1050
    %v1084 = vpack.c.b16 %v1054, %v1051
    %v1085 = vpack.c.b16 %v1055, %v1052
    %v1086 = vpack.c.b16 %v1059, %v1056
    %v1087 = vpack.c.b16 %v1060, %v1057
    %v1088 = vpack.c.b16 %v1061, %v1058
    %v1089 = vpack.c.b16 %v1065, %v1062
    %v1090 = vpack.c.b16 %v1066, %v1063
    %v1091 = vpack.c.b16 %v1067, %v1064
    %1116 = vmatprep.subr.bf16.mxu0 %v1069
    %1117 = vmatpush1.bf16.msra.mxu0 %v1068
    %1118 = vmatprep.subr.bf16.mxu0 %v1072
    %1119 = vmatpush1.bf16.msra.mxu0 %v1071
    %1120 = vmatprep.subr.bf16.mxu0 %v1075
    %1121 = vmatpush1.bf16.msra.mxu0 %v1074
    %1122 = vmatprep.subr.bf16.mxu0 %v1078
    %1123 = vmatpush1.bf16.msra.mxu0 %v1077
    %1124 = vmatprep.subr.bf16.mxu0 %v1081
    %1125 = vmatpush1.bf16.msra.mxu0 %v1080
    %1126 = vmatprep.subr.bf16.mxu0 %v1084
    %1127 = vmatpush1.bf16.msra.mxu0 %v1083
    %1128 = vmatprep.subr.bf16.mxu0 %v1087
    %1129 = vmatpush1.bf16.msra.mxu0 %v1086
    %1130 = vmatprep.subr.bf16.mxu0 %v1090
    %1131 = vmatpush1.bf16.msra.mxu0 %v1089
    %1132 = vmatprep.subr.bf16.mxu0 0
    %1133 = vmatpush1.bf16.msra.mxu0 0
    %1134 = vmatprep.subr.bf16.mxu0 0
    %1135 = vmatpush1.bf16.msra.mxu0 0
    %1136 = vmatprep.subr.bf16.mxu0 0
    %1137 = vmatpush1.bf16.msra.mxu0 0
    %1138 = vmatprep.subr.bf16.mxu0 0
    %1139 = vmatpush1.bf16.msra.mxu0 0
    %1140 = vmatprep.subr.bf16.mxu0 0
    %1141 = vmatpush1.bf16.msra.mxu0 0
    %1142 = vmatprep.subr.bf16.mxu0 0
    %1143 = vmatpush1.bf16.msra.mxu0 0
    %1144 = vmatprep.subr.bf16.mxu0 0
    %1145 = vmatpush1.bf16.msra.mxu0 0
    %1146 = vmatprep.subr.bf16.mxu0 0
    %1147 = vmatpush1.bf16.msra.mxu0 0
    %1148 = vmatprep.mubr.bf16.mxu0 0
    %1149 = vmatmul.mubr.bf16.gmra.mrb[0].mxu0 %v987
    %v1150 = vpop.f32.mrb[0].mxu0
    %v1151 = vadd.f32 0.0, %v1150
    %v1152 = vpop.f32.mrb[0].mxu0
    %v1153 = vadd.f32 0.0, %v1152
    %v1154 = vpop.f32.mrb[0].mxu0
    %v1155 = vpop.f32.mrb[0].mxu0
    %1156 = vdwg.mxu0
    %1157 = vmatprep.subr.bf16.mxu0 0
    %1158 = vmatpush1.bf16.msra.mxu0 %v1070
    %1159 = vmatprep.subr.bf16.mxu0 0
    %1160 = vmatpush1.bf16.msra.mxu0 %v1073
    %1161 = vmatprep.subr.bf16.mxu0 0
    %1162 = vmatpush1.bf16.msra.mxu0 %v1076
    %1163 = vmatprep.subr.bf16.mxu0 0
    %1164 = vmatpush1.bf16.msra.mxu0 %v1079
    %1165 = vmatprep.subr.bf16.mxu0 0
    %1166 = vmatpush1.bf16.msra.mxu0 %v1082
    %1167 = vmatprep.subr.bf16.mxu0 0
    %1168 = vmatpush1.bf16.msra.mxu0 %v1085
    %1169 = vmatprep.subr.bf16.mxu0 0
    %1170 = vmatpush1.bf16.msra.mxu0 %v1088
    %1171 = vmatprep.subr.bf16.mxu0 0
    %1172 = vmatpush1.bf16.msra.mxu0 %v1091
    %1173 = vmatprep.subr.bf16.mxu0 0
    %1174 = vmatpush1.bf16.msra.mxu0 0
    %1175 = vmatprep.subr.bf16.mxu0 0
    %1176 = vmatpush1.bf16.msra.mxu0 0
    %1177 = vmatprep.subr.bf16.mxu0 0
    %1178 = vmatpush1.bf16.msra.mxu0 0
    %1179 = vmatprep.subr.bf16.mxu0 0
    %1180 = vmatpush1.bf16.msra.mxu0 0
    %1181 = vmatprep.subr.bf16.mxu0 0
    %1182 = vmatpush1.bf16.msra.mxu0 0
    %1183 = vmatprep.subr.bf16.mxu0 0
    %1184 = vmatpush1.bf16.msra.mxu0 0
    %1185 = vmatprep.subr.bf16.mxu0 0
    %1186 = vmatpush1.bf16.msra.mxu0 0
    %1187 = vmatprep.subr.bf16.mxu0 0
    %1188 = vmatpush1.bf16.msra.mxu0 0
    %1189 = vmatprep.mubr.bf16.mxu0 0
    %1190 = vmatmul.mubr.bf16.gmra.mrb[0].mxu0 %v987
    %v1191 = vpop.f32.mrb[0].mxu0
    %v1192 = vadd.f32 0.0, %v1191
    %v1193 = vpop.f32.mrb[0].mxu0
    %v1194 = vpop.f32.mrb[0].mxu0
    %v1195 = vpop.f32.mrb[0].mxu0
    %1196 = vdwg.mxu0
    %v1197 = vrot.slane %v238, 3
    %v1198 = vrot.slane %v242, 3
    %v1199 = vrot.slane %v246, 3
    %v1200 = vrot.slane %v250, 3
    %v1201 = vrot.slane %v254, 3
    %v1202 = vrot.slane %v258, 3
    %v1203 = vrot.slane %v262, 3
    %v1204 = vrot.slane %v266, 3
    %v1216 = vcombine.low %v1151, %v1153
    %v1217 = vcombine.high %v1151, %v1153
    %v1218 = vcombine.high %v1192, %v1192
    %v1220 = vunpack.c.l.s4 1966171168
    %v1221 = vunpack.c.0.s8 %v1220
    %v1222 = vlaneseq
    %v1223 = vshrl.u32 %v1222, 7
    %v1224 = vsub.s32 %v1221, %v1223
    %v1225 = vrot.slane %v1216, %v1224
    %v1227 = vunpack.c.l.s4 1966171168
    %v1228 = vunpack.c.0.s8 %v1227
    %v1229 = vlaneseq
    %v1230 = vshrl.u32 %v1229, 7
    %v1231 = vsub.s32 %v1228, %v1230
    %v1232 = vrot.slane %v1217, %v1231
    %v1234 = vunpack.c.l.s4 1966171168
    %v1235 = vunpack.c.0.s8 %v1234
    %v1236 = vlaneseq
    %v1237 = vshrl.u32 %v1236, 7
    %v1238 = vsub.s32 %v1235, %v1237
    %v1239 = vrot.slane %v1192, %v1238
    %v1241 = vunpack.c.l.s4 1966171168
    %v1242 = vunpack.c.0.s8 %v1241
    %v1243 = vlaneseq
    %v1244 = vshrl.u32 %v1243, 7
    %v1245 = vsub.s32 %v1242, %v1244
    %v1246 = vrot.slane %v1218, %v1245
    %v1247 = vcombine.low %v1225, %v1239
    %v1248 = vcombine.high %v1225, %v1239
    %v1249 = vcombine.low %v1232, %v1246
    %v1250 = vcombine.high %v1232, %v1246
    %v1252 = vunpack.c.l.s4 1966171168
    %v1253 = vunpack.c.0.s8 %v1252
    %v1254 = vlaneseq
    %v1255 = vshrl.u32 %v1254, 7
    %v1256 = vsub.s32 %v1253, %v1255
    %v1257 = vrot.slane %v1247, %v1256
    %v1259 = vunpack.c.l.s4 1966171168
    %v1260 = vunpack.c.0.s8 %v1259
    %v1261 = vlaneseq
    %v1262 = vshrl.u32 %v1261, 7
    %v1263 = vsub.s32 %v1260, %v1262
    %v1264 = vrot.slane %v1249, %v1263
    %v1266 = vunpack.c.l.s4 1966171168
    %v1267 = vunpack.c.0.s8 %v1266
    %v1268 = vlaneseq
    %v1269 = vshrl.u32 %v1268, 7
    %v1270 = vsub.s32 %v1267, %v1269
    %v1271 = vrot.slane %v1248, %v1270
    %v1273 = vunpack.c.l.s4 1966171168
    %v1274 = vunpack.c.0.s8 %v1273
    %v1275 = vlaneseq
    %v1276 = vshrl.u32 %v1275, 7
    %v1277 = vsub.s32 %v1274, %v1276
    %v1278 = vrot.slane %v1250, %v1277
    %v1279 = vcombine.high %v1257, %v1257
    %v1280 = vcombine.high %v1264, %v1264
    %v1281 = vcombine.high %v1271, %v1271
    %v1282 = vcombine.high %v1278, %v1278
    %v1291 = vadd.f32 %v1197, %v1257
    %v1292 = vadd.f32 %v1198, %v1271
    %v1293 = vadd.f32 %v1199, %v1279
    %v1294 = vadd.f32 %v1200, %v1281
    %v1295 = vadd.f32 %v1201, %v1264
    %v1296 = vadd.f32 %v1202, %v1278
    %v1297 = vadd.f32 %v1203, %v1280
    %v1298 = vadd.f32 %v1204, %v1282
    %v1299 = vpack.c.bf16 %v235, %v235
    %v1332 = vunpack.c.l.b16 %v168
    %v1333 = vunpack.c.h.b16 %v168
    %v1334 = vunpack.c.l.b16 %v169
    %v1335 = vunpack.c.l.b16 %v170
    %v1336 = vunpack.c.h.b16 %v170
    %v1337 = vunpack.c.l.b16 %v171
    %v1338 = vunpack.c.l.b16 %v172
    %v1339 = vunpack.c.h.b16 %v172
    %v1340 = vunpack.c.l.b16 %v173
    %v1341 = vunpack.c.l.b16 %v174
    %v1342 = vunpack.c.h.b16 %v174
    %v1343 = vunpack.c.l.b16 %v175
    %v1344 = vunpack.c.l.b16 %v176
    %v1345 = vunpack.c.h.b16 %v176
    %v1346 = vunpack.c.l.b16 %v177
    %v1347 = vunpack.c.l.b16 %v178
    %v1348 = vunpack.c.h.b16 %v178
    %v1349 = vunpack.c.l.b16 %v179
    %v1350 = vunpack.c.l.b16 %v180
    %v1351 = vunpack.c.h.b16 %v180
    %v1352 = vunpack.c.l.b16 %v181
    %v1353 = vunpack.c.l.b16 %v182
    %v1354 = vunpack.c.h.b16 %v182
    %v1355 = vunpack.c.l.b16 %v183
    %v1356 = vunpack.c.l.b16 %v184
    %v1357 = vunpack.c.h.b16 %v184
    %v1358 = vunpack.c.l.b16 %v185
    %v1359 = vunpack.c.l.b16 %v186
    %v1360 = vunpack.c.h.b16 %v186
    %v1361 = vunpack.c.l.b16 %v187
    %v1362 = vunpack.c.l.b16 %v188
    %v1363 = vunpack.c.h.b16 %v188
    %v1364 = vunpack.c.l.b16 %v189
    %v1365 = vunpack.c.l.b16 %v190
    %v1366 = vunpack.c.h.b16 %v190
    %v1367 = vunpack.c.l.b16 %v191
    %v1368 = vunpack.c.l.b16 %v192
    %v1369 = vunpack.c.h.b16 %v192
    %v1370 = vunpack.c.l.b16 %v193
    %v1371 = vunpack.c.l.b16 %v194
    %v1372 = vunpack.c.h.b16 %v194
    %v1373 = vunpack.c.l.b16 %v195
    %v1374 = vunpack.c.l.b16 %v196
    %v1375 = vunpack.c.h.b16 %v196
    %v1376 = vunpack.c.l.b16 %v197
    %v1377 = vunpack.c.l.b16 %v198
    %v1378 = vunpack.c.h.b16 %v198
    %v1379 = vunpack.c.l.b16 %v199
    %v1380 = vpack.c.b16 %v1335, %v1332
    %v1381 = vpack.c.b16 %v1336, %v1333
    %v1382 = vpack.c.b16 %v1337, %v1334
    %v1383 = vpack.c.b16 %v1341, %v1338
    %v1384 = vpack.c.b16 %v1342, %v1339
    %v1385 = vpack.c.b16 %v1343, %v1340
    %v1386 = vpack.c.b16 %v1347, %v1344
    %v1387 = vpack.c.b16 %v1348, %v1345
    %v1388 = vpack.c.b16 %v1349, %v1346
    %v1389 = vpack.c.b16 %v1353, %v1350
    %v1390 = vpack.c.b16 %v1354, %v1351
    %v1391 = vpack.c.b16 %v1355, %v1352
    %v1392 = vpack.c.b16 %v1359, %v1356
    %v1393 = vpack.c.b16 %v1360, %v1357
    %v1394 = vpack.c.b16 %v1361, %v1358
    %v1395 = vpack.c.b16 %v1365, %v1362
    %v1396 = vpack.c.b16 %v1366, %v1363
    %v1397 = vpack.c.b16 %v1367, %v1364
    %v1398 = vpack.c.b16 %v1371, %v1368
    %v1399 = vpack.c.b16 %v1372, %v1369
    %v1400 = vpack.c.b16 %v1373, %v1370
    %v1401 = vpack.c.b16 %v1377, %v1374
    %v1402 = vpack.c.b16 %v1378, %v1375
    %v1403 = vpack.c.b16 %v1379, %v1376
    %1428 = vmatprep.subr.bf16.mxu0 %v1381
    %1429 = vmatpush1.bf16.msra.mxu0 %v1380
    %1430 = vmatprep.subr.bf16.mxu0 %v1384
    %1431 = vmatpush1.bf16.msra.mxu0 %v1383
    %1432 = vmatprep.subr.bf16.mxu0 %v1387
    %1433 = vmatpush1.bf16.msra.mxu0 %v1386
    %1434 = vmatprep.subr.bf16.mxu0 %v1390
    %1435 = vmatpush1.bf16.msra.mxu0 %v1389
    %1436 = vmatprep.subr.bf16.mxu0 %v1393
    %1437 = vmatpush1.bf16.msra.mxu0 %v1392
    %1438 = vmatprep.subr.bf16.mxu0 %v1396
    %1439 = vmatpush1.bf16.msra.mxu0 %v1395
    %1440 = vmatprep.subr.bf16.mxu0 %v1399
    %1441 = vmatpush1.bf16.msra.mxu0 %v1398
    %1442 = vmatprep.subr.bf16.mxu0 %v1402
    %1443 = vmatpush1.bf16.msra.mxu0 %v1401
    %1444 = vmatprep.subr.bf16.mxu0 0
    %1445 = vmatpush1.bf16.msra.mxu0 0
    %1446 = vmatprep.subr.bf16.mxu0 0
    %1447 = vmatpush1.bf16.msra.mxu0 0
    %1448 = vmatprep.subr.bf16.mxu0 0
    %1449 = vmatpush1.bf16.msra.mxu0 0
    %1450 = vmatprep.subr.bf16.mxu0 0
    %1451 = vmatpush1.bf16.msra.mxu0 0
    %1452 = vmatprep.subr.bf16.mxu0 0
    %1453 = vmatpush1.bf16.msra.mxu0 0
    %1454 = vmatprep.subr.bf16.mxu0 0
    %1455 = vmatpush1.bf16.msra.mxu0 0
    %1456 = vmatprep.subr.bf16.mxu0 0
    %1457 = vmatpush1.bf16.msra.mxu0 0
    %1458 = vmatprep.subr.bf16.mxu0 0
    %1459 = vmatpush1.bf16.msra.mxu0 0
    %1460 = vmatprep.mubr.bf16.mxu0 0
    %1461 = vmatmul.mubr.bf16.gmra.mrb[0].mxu0 %v1299
    %v1462 = vpop.f32.mrb[0].mxu0
    %v1463 = vadd.f32 %v222, %v1462
    %v1464 = vpop.f32.mrb[0].mxu0
    %v1465 = vadd.f32 %v226, %v1464
    %v1466 = vpop.f32.mrb[0].mxu0
    %v1467 = vpop.f32.mrb[0].mxu0
    %1468 = vdwg.mxu0
    %1469 = vmatprep.subr.bf16.mxu0 0
    %1470 = vmatpush1.bf16.msra.mxu0 %v1382
    %1471 = vmatprep.subr.bf16.mxu0 0
    %1472 = vmatpush1.bf16.msra.mxu0 %v1385
    %1473 = vmatprep.subr.bf16.mxu0 0
    %1474 = vmatpush1.bf16.msra.mxu0 %v1388
    %1475 = vmatprep.subr.bf16.mxu0 0
    %1476 = vmatpush1.bf16.msra.mxu0 %v1391
    %1477 = vmatprep.subr.bf16.mxu0 0
    %1478 = vmatpush1.bf16.msra.mxu0 %v1394
    %1479 = vmatprep.subr.bf16.mxu0 0
    %1480 = vmatpush1.bf16.msra.mxu0 %v1397
    %1481 = vmatprep.subr.bf16.mxu0 0
    %1482 = vmatpush1.bf16.msra.mxu0 %v1400
    %1483 = vmatprep.subr.bf16.mxu0 0
    %1484 = vmatpush1.bf16.msra.mxu0 %v1403
    %1485 = vmatprep.subr.bf16.mxu0 0
    %1486 = vmatpush1.bf16.msra.mxu0 0
    %1487 = vmatprep.subr.bf16.mxu0 0
    %1488 = vmatpush1.bf16.msra.mxu0 0
    %1489 = vmatprep.subr.bf16.mxu0 0
    %1490 = vmatpush1.bf16.msra.mxu0 0
    %1491 = vmatprep.subr.bf16.mxu0 0
    %1492 = vmatpush1.bf16.msra.mxu0 0
    %1493 = vmatprep.subr.bf16.mxu0 0
    %1494 = vmatpush1.bf16.msra.mxu0 0
    %1495 = vmatprep.subr.bf16.mxu0 0
    %1496 = vmatpush1.bf16.msra.mxu0 0
    %1497 = vmatprep.subr.bf16.mxu0 0
    %1498 = vmatpush1.bf16.msra.mxu0 0
    %1499 = vmatprep.subr.bf16.mxu0 0
    %1500 = vmatpush1.bf16.msra.mxu0 0
    %1501 = vmatprep.mubr.bf16.mxu0 0
    %1502 = vmatmul.mubr.bf16.gmra.mrb[0].mxu0 %v1299
    %v1503 = vpop.f32.mrb[0].mxu0
    %v1504 = vadd.f32 %v230, %v1503
    %v1505 = vpop.f32.mrb[0].mxu0
    %v1506 = vpop.f32.mrb[0].mxu0
    %v1507 = vpop.f32.mrb[0].mxu0
    %1508 = vdwg.mxu0
    %v1509 = vstv %s103
    %v1510 = vmul.f32 %v1509, %v235
    %v1512 = vcombine.high %v1463, %v1463
    %v1514 = vunpack.c.l.s4 1966171168
    %v1515 = vunpack.c.0.s8 %v1514
    %v1516 = vlaneseq
    %v1517 = vshrl.u32 %v1516, 7
    %v1518 = vsub.s32 %v1515, %v1517
    %v1519 = vrot.slane %v1463, %v1518
    %v1521 = vunpack.c.l.s4 1966171168
    %v1522 = vunpack.c.0.s8 %v1521
    %v1523 = vlaneseq
    %v1524 = vshrl.u32 %v1523, 7
    %v1525 = vsub.s32 %v1522, %v1524
    %v1526 = vrot.slane %v1512, %v1525
    %v1527 = vcombine.high %v1519, %v1519
    %v1528 = vcombine.high %v1526, %v1526
    %v1530 = vunpack.c.l.s4 1966171168
    %v1531 = vunpack.c.0.s8 %v1530
    %v1532 = vlaneseq
    %v1533 = vshrl.u32 %v1532, 7
    %v1534 = vsub.s32 %v1531, %v1533
    %v1535 = vrot.slane %v1519, %v1534
    %v1537 = vunpack.c.l.s4 1966171168
    %v1538 = vunpack.c.0.s8 %v1537
    %v1539 = vlaneseq
    %v1540 = vshrl.u32 %v1539, 7
    %v1541 = vsub.s32 %v1538, %v1540
    %v1542 = vrot.slane %v1526, %v1541
    %v1544 = vunpack.c.l.s4 1966171168
    %v1545 = vunpack.c.0.s8 %v1544
    %v1546 = vlaneseq
    %v1547 = vshrl.u32 %v1546, 7
    %v1548 = vsub.s32 %v1545, %v1547
    %v1549 = vrot.slane %v1527, %v1548
    %v1551 = vunpack.c.l.s4 1966171168
    %v1552 = vunpack.c.0.s8 %v1551
    %v1553 = vlaneseq
    %v1554 = vshrl.u32 %v1553, 7
    %v1555 = vsub.s32 %v1552, %v1554
    %v1556 = vrot.slane %v1528, %v1555
    %v1557 = vcombine.high %v1535, %v1535
    %v1558 = vcombine.high %v1542, %v1542
    %v1559 = vcombine.high %v1549, %v1549
    %v1560 = vcombine.high %v1556, %v1556
    %v1569 = vadd.f32 %v1291, %v1535
    %v1570 = vadd.f32 %v1292, %v1549
    %v1571 = vadd.f32 %v1293, %v1557
    %v1572 = vadd.f32 %v1294, %v1559
    %v1573 = vadd.f32 %v1295, %v1542
    %v1574 = vadd.f32 %v1296, %v1556
    %v1575 = vadd.f32 %v1297, %v1558
    %v1576 = vadd.f32 %v1298, %v1560
    %v1577 = vxor.u32 %v1569, 2147483648
    %v1578 = vxor.u32 %v1570, 2147483648
    %v1579 = vxor.u32 %v1571, 2147483648
    %v1580 = vxor.u32 %v1572, 2147483648
    %v1581 = vxor.u32 %v1573, 2147483648
    %v1582 = vxor.u32 %v1574, 2147483648
    %v1583 = vxor.u32 %v1575, 2147483648
    %v1584 = vxor.u32 %v1576, 2147483648
    %v1585 = vmul.f32 %v1577, 1.442695
    %v1586 = vpow.pop %v1585
    %v1587 = vmul.f32 %v1578, 1.442695
    %v1588 = vpow.pop %v1587
    %v1589 = vmul.f32 %v1579, 1.442695
    %v1590 = vpow.pop %v1589
    %v1591 = vmul.f32 %v1580, 1.442695
    %v1592 = vpow.pop %v1591
    %v1593 = vmul.f32 %v1581, 1.442695
    %v1594 = vpow.pop %v1593
    %v1595 = vmul.f32 %v1582, 1.442695
    %v1596 = vpow.pop %v1595
    %v1597 = vmul.f32 %v1583, 1.442695
    %v1598 = vpow.pop %v1597
    %v1599 = vmul.f32 %v1584, 1.442695
    %v1600 = vpow.pop %v1599
    %v1601 = vadd.f32 %v1586, 1.0
    %v1602 = vadd.f32 %v1588, 1.0
    %v1603 = vadd.f32 %v1590, 1.0
    %v1604 = vadd.f32 %v1592, 1.0
    %v1605 = vadd.f32 %v1594, 1.0
    %v1606 = vadd.f32 %v1596, 1.0
    %v1607 = vadd.f32 %v1598, 1.0
    %v1608 = vadd.f32 %v1600, 1.0
    %v1609 = vrcp.pop %v1601
    %v1610 = vmul.f32 1.0, %v1609
    %v1611 = vrcp.pop %v1602
    %v1612 = vmul.f32 1.0, %v1611
    %v1613 = vrcp.pop %v1603
    %v1614 = vmul.f32 1.0, %v1613
    %v1615 = vrcp.pop %v1604
    %v1616 = vmul.f32 1.0, %v1615
    %v1617 = vrcp.pop %v1605
    %v1618 = vmul.f32 1.0, %v1617
    %v1619 = vrcp.pop %v1606
    %v1620 = vmul.f32 1.0, %v1619
    %v1621 = vrcp.pop %v1607
    %v1622 = vmul.f32 1.0, %v1621
    %v1623 = vrcp.pop %v1608
    %v1624 = vmul.f32 1.0, %v1623
    %v1633 = vrot.slane %v1291, 1
    %v1634 = vrot.slane %v1292, 1
    %v1635 = vrot.slane %v1293, 1
    %v1636 = vrot.slane %v1294, 1
    %v1637 = vrot.slane %v1295, 1
    %v1638 = vrot.slane %v1296, 1
    %v1639 = vrot.slane %v1297, 1
    %v1640 = vrot.slane %v1298, 1
    %v1650 = vcombine.high %v1465, %v1465
    %v1652 = vunpack.c.l.s4 1966171168
    %v1653 = vunpack.c.0.s8 %v1652
    %v1654 = vlaneseq
    %v1655 = vshrl.u32 %v1654, 7
    %v1656 = vsub.s32 %v1653, %v1655
    %v1657 = vrot.slane %v1465, %v1656
    %v1659 = vunpack.c.l.s4 1966171168
    %v1660 = vunpack.c.0.s8 %v1659
    %v1661 = vlaneseq
    %v1662 = vshrl.u32 %v1661, 7
    %v1663 = vsub.s32 %v1660, %v1662
    %v1664 = vrot.slane %v1650, %v1663
    %v1665 = vcombine.high %v1657, %v1657
    %v1666 = vcombine.high %v1664, %v1664
    %v1668 = vunpack.c.l.s4 1966171168
    %v1669 = vunpack.c.0.s8 %v1668
    %v1670 = vlaneseq
    %v1671 = vshrl.u32 %v1670, 7
    %v1672 = vsub.s32 %v1669, %v1671
    %v1673 = vrot.slane %v1657, %v1672
    %v1675 = vunpack.c.l.s4 1966171168
    %v1676 = vunpack.c.0.s8 %v1675
    %v1677 = vlaneseq
    %v1678 = vshrl.u32 %v1677, 7
    %v1679 = vsub.s32 %v1676, %v1678
    %v1680 = vrot.slane %v1664, %v1679
    %v1682 = vunpack.c.l.s4 1966171168
    %v1683 = vunpack.c.0.s8 %v1682
    %v1684 = vlaneseq
    %v1685 = vshrl.u32 %v1684, 7
    %v1686 = vsub.s32 %v1683, %v1685
    %v1687 = vrot.slane %v1665, %v1686
    %v1689 = vunpack.c.l.s4 1966171168
    %v1690 = vunpack.c.0.s8 %v1689
    %v1691 = vlaneseq
    %v1692 = vshrl.u32 %v1691, 7
    %v1693 = vsub.s32 %v1690, %v1692
    %v1694 = vrot.slane %v1666, %v1693
    %v1695 = vcombine.high %v1673, %v1673
    %v1696 = vcombine.high %v1680, %v1680
    %v1697 = vcombine.high %v1687, %v1687
    %v1698 = vcombine.high %v1694, %v1694
    %v1707 = vadd.f32 %v1633, %v1673
    %v1708 = vadd.f32 %v1634, %v1687
    %v1709 = vadd.f32 %v1635, %v1695
    %v1710 = vadd.f32 %v1636, %v1697
    %v1711 = vadd.f32 %v1637, %v1680
    %v1712 = vadd.f32 %v1638, %v1694
    %v1713 = vadd.f32 %v1639, %v1696
    %v1714 = vadd.f32 %v1640, %v1698
    %v1715 = vxor.u32 %v1707, 2147483648
    %v1716 = vxor.u32 %v1708, 2147483648
    %v1717 = vxor.u32 %v1709, 2147483648
    %v1718 = vxor.u32 %v1710, 2147483648
    %v1719 = vxor.u32 %v1711, 2147483648
    %v1720 = vxor.u32 %v1712, 2147483648
    %v1721 = vxor.u32 %v1713, 2147483648
    %v1722 = vxor.u32 %v1714, 2147483648
    %v1723 = vmul.f32 %v1715, 1.442695
    %v1724 = vpow.pop %v1723
    %v1725 = vmul.f32 %v1716, 1.442695
    %v1726 = vpow.pop %v1725
    %v1727 = vmul.f32 %v1717, 1.442695
    %v1728 = vpow.pop %v1727
    %v1729 = vmul.f32 %v1718, 1.442695
    %v1730 = vpow.pop %v1729
    %v1731 = vmul.f32 %v1719, 1.442695
    %v1732 = vpow.pop %v1731
    %v1733 = vmul.f32 %v1720, 1.442695
    %v1734 = vpow.pop %v1733
    %v1735 = vmul.f32 %v1721, 1.442695
    %v1736 = vpow.pop %v1735
    %v1737 = vmul.f32 %v1722, 1.442695
    %v1738 = vpow.pop %v1737
    %v1739 = vadd.f32 %v1724, 1.0
    %v1740 = vadd.f32 %v1726, 1.0
    %v1741 = vadd.f32 %v1728, 1.0
    %v1742 = vadd.f32 %v1730, 1.0
    %v1743 = vadd.f32 %v1732, 1.0
    %v1744 = vadd.f32 %v1734, 1.0
    %v1745 = vadd.f32 %v1736, 1.0
    %v1746 = vadd.f32 %v1738, 1.0
    %v1747 = vrcp.pop %v1739
    %v1748 = vmul.f32 1.0, %v1747
    %v1749 = vrcp.pop %v1740
    %v1750 = vmul.f32 1.0, %v1749
    %v1751 = vrcp.pop %v1741
    %v1752 = vmul.f32 1.0, %v1751
    %v1753 = vrcp.pop %v1742
    %v1754 = vmul.f32 1.0, %v1753
    %v1755 = vrcp.pop %v1743
    %v1756 = vmul.f32 1.0, %v1755
    %v1757 = vrcp.pop %v1744
    %v1758 = vmul.f32 1.0, %v1757
    %v1759 = vrcp.pop %v1745
    %v1760 = vmul.f32 1.0, %v1759
    %v1761 = vrcp.pop %v1746
    %v1762 = vmul.f32 1.0, %v1761
    %v1764 = vcombine.high %v1504, %v1504
    %v1766 = vunpack.c.l.s4 1966171168
    %v1767 = vunpack.c.0.s8 %v1766
    %v1768 = vlaneseq
    %v1769 = vshrl.u32 %v1768, 7
    %v1770 = vsub.s32 %v1767, %v1769
    %v1771 = vrot.slane %v1504, %v1770
    %v1773 = vunpack.c.l.s4 1966171168
    %v1774 = vunpack.c.0.s8 %v1773
    %v1775 = vlaneseq
    %v1776 = vshrl.u32 %v1775, 7
    %v1777 = vsub.s32 %v1774, %v1776
    %v1778 = vrot.slane %v1764, %v1777
    %v1779 = vcombine.high %v1771, %v1771
    %v1780 = vcombine.high %v1778, %v1778
    %v1782 = vunpack.c.l.s4 1966171168
    %v1783 = vunpack.c.0.s8 %v1782
    %v1784 = vlaneseq
    %v1785 = vshrl.u32 %v1784, 7
    %v1786 = vsub.s32 %v1783, %v1785
    %v1787 = vrot.slane %v1771, %v1786
    %v1789 = vunpack.c.l.s4 1966171168
    %v1790 = vunpack.c.0.s8 %v1789
    %v1791 = vlaneseq
    %v1792 = vshrl.u32 %v1791, 7
    %v1793 = vsub.s32 %v1790, %v1792
    %v1794 = vrot.slane %v1778, %v1793
    %v1796 = vunpack.c.l.s4 1966171168
    %v1797 = vunpack.c.0.s8 %v1796
    %v1798 = vlaneseq
    %v1799 = vshrl.u32 %v1798, 7
    %v1800 = vsub.s32 %v1797, %v1799
    %v1801 = vrot.slane %v1779, %v1800
    %v1803 = vunpack.c.l.s4 1966171168
    %v1804 = vunpack.c.0.s8 %v1803
    %v1805 = vlaneseq
    %v1806 = vshrl.u32 %v1805, 7
    %v1807 = vsub.s32 %v1804, %v1806
    %v1808 = vrot.slane %v1780, %v1807
    %v1809 = vcombine.high %v1787, %v1787
    %v1810 = vcombine.high %v1794, %v1794
    %v1811 = vcombine.high %v1801, %v1801
    %v1812 = vcombine.high %v1808, %v1808
    %v1821 = vmul.f32 %v1610, %v1787
    %v1822 = vmul.f32 %v1612, %v1801
    %v1823 = vmul.f32 %v1614, %v1809
    %v1824 = vmul.f32 %v1616, %v1811
    %v1825 = vmul.f32 %v1618, %v1794
    %v1826 = vmul.f32 %v1620, %v1808
    %v1827 = vmul.f32 %v1622, %v1810
    %v1828 = vmul.f32 %v1624, %v1812
    %v1829 = vrot.slane %v1291, 2
    %v1830 = vrot.slane %v1292, 2
    %v1831 = vrot.slane %v1293, 2
    %v1832 = vrot.slane %v1294, 2
    %v1833 = vrot.slane %v1295, 2
    %v1834 = vrot.slane %v1296, 2
    %v1835 = vrot.slane %v1297, 2
    %v1836 = vrot.slane %v1298, 2
    %v1845 = vadd.f32 %v1829, %v1821
    %v1846 = vadd.f32 %v1830, %v1822
    %v1847 = vadd.f32 %v1831, %v1823
    %v1848 = vadd.f32 %v1832, %v1824
    %v1849 = vadd.f32 %v1833, %v1825
    %v1850 = vadd.f32 %v1834, %v1826
    %v1851 = vadd.f32 %v1835, %v1827
    %v1852 = vadd.f32 %v1836, %v1828
    %v1853 = vtanh.pop %v1845
    %v1854 = vtanh.pop %v1846
    %v1855 = vtanh.pop %v1847
    %v1856 = vtanh.pop %v1848
    %v1857 = vtanh.pop %v1849
    %v1858 = vtanh.pop %v1850
    %v1859 = vtanh.pop %v1851
    %v1860 = vtanh.pop %v1852
    %v1861 = vsub.f32 1.0, %v1748
    %v1862 = vsub.f32 1.0, %v1750
    %v1863 = vsub.f32 1.0, %v1752
    %v1864 = vsub.f32 1.0, %v1754
    %v1865 = vsub.f32 1.0, %v1756
    %v1866 = vsub.f32 1.0, %v1758
    %v1867 = vsub.f32 1.0, %v1760
    %v1868 = vsub.f32 1.0, %v1762
    %v1869 = vmul.f32 %v1861, %v1853
    %v1870 = vmul.f32 %v1862, %v1854
    %v1871 = vmul.f32 %v1863, %v1855
    %v1872 = vmul.f32 %v1864, %v1856
    %v1873 = vmul.f32 %v1865, %v1857
    %v1874 = vmul.f32 %v1866, %v1858
    %v1875 = vmul.f32 %v1867, %v1859
    %v1876 = vmul.f32 %v1868, %v1860
    %v1878 = vcombine.high %v235, %v235
    %v1880 = vunpack.c.l.s4 1966171168
    %v1881 = vunpack.c.0.s8 %v1880
    %v1882 = vlaneseq
    %v1883 = vshrl.u32 %v1882, 7
    %v1884 = vsub.s32 %v1881, %v1883
    %v1885 = vrot.slane %v235, %v1884
    %v1887 = vunpack.c.l.s4 1966171168
    %v1888 = vunpack.c.0.s8 %v1887
    %v1889 = vlaneseq
    %v1890 = vshrl.u32 %v1889, 7
    %v1891 = vsub.s32 %v1888, %v1890
    %v1892 = vrot.slane %v1878, %v1891
    %v1893 = vcombine.high %v1885, %v1885
    %v1894 = vcombine.high %v1892, %v1892
    %v1896 = vunpack.c.l.s4 1966171168
    %v1897 = vunpack.c.0.s8 %v1896
    %v1898 = vlaneseq
    %v1899 = vshrl.u32 %v1898, 7
    %v1900 = vsub.s32 %v1897, %v1899
    %v1901 = vrot.slane %v1885, %v1900
    %v1903 = vunpack.c.l.s4 1966171168
    %v1904 = vunpack.c.0.s8 %v1903
    %v1905 = vlaneseq
    %v1906 = vshrl.u32 %v1905, 7
    %v1907 = vsub.s32 %v1904, %v1906
    %v1908 = vrot.slane %v1892, %v1907
    %v1910 = vunpack.c.l.s4 1966171168
    %v1911 = vunpack.c.0.s8 %v1910
    %v1912 = vlaneseq
    %v1913 = vshrl.u32 %v1912, 7
    %v1914 = vsub.s32 %v1911, %v1913
    %v1915 = vrot.slane %v1893, %v1914
    %v1917 = vunpack.c.l.s4 1966171168
    %v1918 = vunpack.c.0.s8 %v1917
    %v1919 = vlaneseq
    %v1920 = vshrl.u32 %v1919, 7
    %v1921 = vsub.s32 %v1918, %v1920
    %v1922 = vrot.slane %v1894, %v1921
    %v1923 = vcombine.high %v1901, %v1901
    %v1924 = vcombine.high %v1908, %v1908
    %v1925 = vcombine.high %v1915, %v1915
    %v1926 = vcombine.high %v1922, %v1922
    %v1935 = vmul.f32 %v1748, %v1901
    %v1936 = vmul.f32 %v1750, %v1915
    %v1937 = vmul.f32 %v1752, %v1923
    %v1938 = vmul.f32 %v1754, %v1925
    %v1939 = vmul.f32 %v1756, %v1908
    %v1940 = vmul.f32 %v1758, %v1922
    %v1941 = vmul.f32 %v1760, %v1924
    %v1942 = vmul.f32 %v1762, %v1926
    %v1943 = vadd.f32 %v1869, %v1935
    %v1944 = vadd.f32 %v1870, %v1936
    %v1945 = vadd.f32 %v1871, %v1937
    %v1946 = vadd.f32 %v1872, %v1938
    %v1947 = vadd.f32 %v1873, %v1939
    %v1948 = vadd.f32 %v1874, %v1940
    %v1949 = vadd.f32 %v1875, %v1941
    %v1950 = vadd.f32 %v1876, %v1942
    %v1951 = vstv %s102
    %v1952 = vmul.f32 %v1951, %v1943
    %v1953 = vmul.f32 %v1951, %v1944
    %v1954 = vmul.f32 %v1951, %v1945
    %v1955 = vmul.f32 %v1951, %v1946
    %v1956 = vmul.f32 %v1951, %v1947
    %v1957 = vmul.f32 %v1951, %v1948
    %v1958 = vmul.f32 %v1951, %v1949
    %v1959 = vmul.f32 %v1951, %v1950
    %v1968 = vcombine.low %v1952, %v1953
    %v1969 = vcombine.low %v1954, %v1955
    %v1970 = vcombine.low %v1956, %v1957
    %v1971 = vcombine.low %v1958, %v1959
    %v1973 = vunpack.c.l.s4 1966171168
    %v1974 = vunpack.c.0.s8 %v1973
    %v1975 = vlaneseq
    %v1976 = vshrl.u32 %v1975, 7
    %v1977 = vsub.s32 %v1974, %v1976
    %v1978 = vrot.slane %v1968, %v1977
    %v1980 = vunpack.c.l.s4 1966171168
    %v1981 = vunpack.c.0.s8 %v1980
    %v1982 = vlaneseq
    %v1983 = vshrl.u32 %v1982, 7
    %v1984 = vsub.s32 %v1981, %v1983
    %v1985 = vrot.slane %v1969, %v1984
    %v1987 = vunpack.c.l.s4 1966171168
    %v1988 = vunpack.c.0.s8 %v1987
    %v1989 = vlaneseq
    %v1990 = vshrl.u32 %v1989, 7
    %v1991 = vsub.s32 %v1988, %v1990
    %v1992 = vrot.slane %v1970, %v1991
    %v1994 = vunpack.c.l.s4 1966171168
    %v1995 = vunpack.c.0.s8 %v1994
    %v1996 = vlaneseq
    %v1997 = vshrl.u32 %v1996, 7
    %v1998 = vsub.s32 %v1995, %v1997
    %v1999 = vrot.slane %v1971, %v1998
    %v2000 = vcombine.low %v1978, %v1985
    %v2001 = vcombine.low %v1992, %v1999
    %v2003 = vunpack.c.l.s4 1966171168
    %v2004 = vunpack.c.0.s8 %v2003
    %v2005 = vlaneseq
    %v2006 = vshrl.u32 %v2005, 7
    %v2007 = vsub.s32 %v2004, %v2006
    %v2008 = vrot.slane %v2000, %v2007
    %v2010 = vunpack.c.l.s4 1966171168
    %v2011 = vunpack.c.0.s8 %v2010
    %v2012 = vlaneseq
    %v2013 = vshrl.u32 %v2012, 7
    %v2014 = vsub.s32 %v2011, %v2013
    %v2015 = vrot.slane %v2001, %v2014
    %v2016 = vcombine.low %v2008, %v2015
    %v2018 = vadd.f32 %v1510, %v2016
    %v2020 = vcombine.high %v986, %v986
    %v2022 = vunpack.c.l.s4 1966171168
    %v2023 = vunpack.c.0.s8 %v2022
    %v2024 = vlaneseq
    %v2025 = vshrl.u32 %v2024, 7
    %v2026 = vsub.s32 %v2023, %v2025
    %v2027 = vrot.slane %v986, %v2026
    %v2029 = vunpack.c.l.s4 1966171168
    %v2030 = vunpack.c.0.s8 %v2029
    %v2031 = vlaneseq
    %v2032 = vshrl.u32 %v2031, 7
    %v2033 = vsub.s32 %v2030, %v2032
    %v2034 = vrot.slane %v2020, %v2033
    %v2035 = vcombine.high %v2027, %v2027
    %v2036 = vcombine.high %v2034, %v2034
    %v2038 = vunpack.c.l.s4 1966171168
    %v2039 = vunpack.c.0.s8 %v2038
    %v2040 = vlaneseq
    %v2041 = vshrl.u32 %v2040, 7
    %v2042 = vsub.s32 %v2039, %v2041
    %v2043 = vrot.slane %v2027, %v2042
    %v2045 = vunpack.c.l.s4 1966171168
    %v2046 = vunpack.c.0.s8 %v2045
    %v2047 = vlaneseq
    %v2048 = vshrl.u32 %v2047, 7
    %v2049 = vsub.s32 %v2046, %v2048
    %v2050 = vrot.slane %v2034, %v2049
    %v2052 = vunpack.c.l.s4 1966171168
    %v2053 = vunpack.c.0.s8 %v2052
    %v2054 = vlaneseq
    %v2055 = vshrl.u32 %v2054, 7
    %v2056 = vsub.s32 %v2053, %v2055
    %v2057 = vrot.slane %v2035, %v2056
    %v2059 = vunpack.c.l.s4 1966171168
    %v2060 = vunpack.c.0.s8 %v2059
    %v2061 = vlaneseq
    %v2062 = vshrl.u32 %v2061, 7
    %v2063 = vsub.s32 %v2060, %v2062
    %v2064 = vrot.slane %v2036, %v2063
    %v2065 = vcombine.high %v2043, %v2043
    %v2066 = vcombine.high %v2050, %v2050
    %v2067 = vcombine.high %v2057, %v2057
    %v2068 = vcombine.high %v2064, %v2064
    %2077 = vst [vmem:[#allocation14] sm:$0x1] %v2043
    %2078 = vst [vmem:[#allocation14 + $0x10] sm:$0x1] %v2057
    %2079 = vst [vmem:[#allocation14 + $0x20] sm:$0x1] %v2065
    %2080 = vst [vmem:[#allocation14 + $0x30] sm:$0x1] %v2067
    %2081 = vst [vmem:[#allocation14 + $0x40] sm:$0x1] %v2050
    %2082 = vst [vmem:[#allocation14 + $0x50] sm:$0x1] %v2064
    %2083 = vst [vmem:[#allocation14 + $0x60] sm:$0x1] %v2066
    %2084 = vst [vmem:[#allocation14 + $0x70] sm:$0x1] %v2068
    %v2086 = vcombine.high %v2018, %v2018
    %v2088 = vunpack.c.l.s4 1966171168
    %v2089 = vunpack.c.0.s8 %v2088
    %v2090 = vlaneseq
    %v2091 = vshrl.u32 %v2090, 7
    %v2092 = vsub.s32 %v2089, %v2091
    %v2093 = vrot.slane %v2018, %v2092
    %v2095 = vunpack.c.l.s4 1966171168
    %v2096 = vunpack.c.0.s8 %v2095
    %v2097 = vlaneseq
    %v2098 = vshrl.u32 %v2097, 7
    %v2099 = vsub.s32 %v2096, %v2098
    %v2100 = vrot.slane %v2086, %v2099
    %v2101 = vcombine.high %v2093, %v2093
    %v2102 = vcombine.high %v2100, %v2100
    %v2104 = vunpack.c.l.s4 1966171168
    %v2105 = vunpack.c.0.s8 %v2104
    %v2106 = vlaneseq
    %v2107 = vshrl.u32 %v2106, 7
    %v2108 = vsub.s32 %v2105, %v2107
    %v2109 = vrot.slane %v2093, %v2108
    %v2111 = vunpack.c.l.s4 1966171168
    %v2112 = vunpack.c.0.s8 %v2111
    %v2113 = vlaneseq
    %v2114 = vshrl.u32 %v2113, 7
    %v2115 = vsub.s32 %v2112, %v2114
    %v2116 = vrot.slane %v2100, %v2115
    %v2118 = vunpack.c.l.s4 1966171168
    %v2119 = vunpack.c.0.s8 %v2118
    %v2120 = vlaneseq
    %v2121 = vshrl.u32 %v2120, 7
    %v2122 = vsub.s32 %v2119, %v2121
    %v2123 = vrot.slane %v2101, %v2122
    %v2125 = vunpack.c.l.s4 1966171168
    %v2126 = vunpack.c.0.s8 %v2125
    %v2127 = vlaneseq
    %v2128 = vshrl.u32 %v2127, 7
    %v2129 = vsub.s32 %v2126, %v2128
    %v2130 = vrot.slane %v2102, %v2129
    %v2131 = vcombine.high %v2109, %v2109
    %v2132 = vcombine.high %v2116, %v2116
    %v2133 = vcombine.high %v2123, %v2123
    %v2134 = vcombine.high %v2130, %v2130
    %2143 = vst [vmem:[#allocation14 + $0x8] sm:$0x1] %v2109
    %2144 = vst [vmem:[#allocation14 + $0x18] sm:$0x1] %v2123
    %2145 = vst [vmem:[#allocation14 + $0x28] sm:$0x1] %v2131
    %2146 = vst [vmem:[#allocation14 + $0x38] sm:$0x1] %v2133
    %2147 = vst [vmem:[#allocation14 + $0x48] sm:$0x1] %v2116
    %2148 = vst [vmem:[#allocation14 + $0x58] sm:$0x1] %v2130
    %2149 = vst [vmem:[#allocation14 + $0x68] sm:$0x1] %v2132
    %2150 = vst [vmem:[#allocation14 + $0x78] sm:$0x1] %v2134
    %s2151 = scalar_lea.vmem [#allocation8], 1
    %v2152 = vld [vmem:[%s2151] ss:$8 sm:$0xf]
    %v2153 = vld [vmem:[%s2151] ss:$8 sm:$0x30]
    %v2154 = vor.u32 %v2152, %v2153
    %s2155 = scalar_lea.vmem [#allocation8], 49
    %v2156 = vld [vmem:[%s2155] ss:$8 sm:$0xf]
    %v2157 = vld [vmem:[%s2155] ss:$8 sm:$0x30]
    %v2158 = vor.u32 %v2156, %v2157
    %s2159 = scalar_lea.vmem [#allocation8], 97
    %v2160 = vld [vmem:[%s2159] ss:$8 sm:$0xf]
    %v2161 = vld [vmem:[%s2159] ss:$8 sm:$0x30]
    %v2162 = vor.u32 %v2160, %v2161
    %s2163 = scalar_lea.vmem [#allocation8], 145
    %v2164 = vld [vmem:[%s2163] ss:$8 sm:$0xf]
    %v2165 = vld [vmem:[%s2163] ss:$8 sm:$0x30]
    %v2166 = vor.u32 %v2164, %v2165
    %s2167 = scalar_lea.vmem [#allocation8], 193
    %v2168 = vld [vmem:[%s2167] ss:$8 sm:$0xf]
    %v2169 = vld [vmem:[%s2167] ss:$8 sm:$0x30]
    %v2170 = vor.u32 %v2168, %v2169
    %s2171 = scalar_lea.vmem [#allocation8], 241
    %v2172 = vld [vmem:[%s2171] ss:$8 sm:$0xf]
    %v2173 = vld [vmem:[%s2171] ss:$8 sm:$0x30]
    %v2174 = vor.u32 %v2172, %v2173
    %s2175 = scalar_lea.vmem [#allocation8], 289
    %v2176 = vld [vmem:[%s2175] ss:$8 sm:$0xf]
    %v2177 = vld [vmem:[%s2175] ss:$8 sm:$0x30]
    %v2178 = vor.u32 %v2176, %v2177
    %s2179 = scalar_lea.vmem [#allocation8], 337
    %v2180 = vld [vmem:[%s2179] ss:$8 sm:$0xf]
    %v2181 = vld [vmem:[%s2179] ss:$8 sm:$0x30]
    %v2182 = vor.u32 %v2180, %v2181
    %2183 = vmatprep.subr.bf16.mxu0 %v349
    %2184 = vmatpush1.bf16.msra.mxu0 %v348
    %2185 = vmatprep.subr.bf16.mxu0 %v352
    %2186 = vmatpush1.bf16.msra.mxu0 %v351
    %2187 = vmatprep.subr.bf16.mxu0 %v355
    %2188 = vmatpush1.bf16.msra.mxu0 %v354
    %2189 = vmatprep.subr.bf16.mxu0 %v358
    %2190 = vmatpush1.bf16.msra.mxu0 %v357
    %2191 = vmatprep.subr.bf16.mxu0 %v361
    %2192 = vmatpush1.bf16.msra.mxu0 %v360
    %2193 = vmatprep.subr.bf16.mxu0 %v364
    %2194 = vmatpush1.bf16.msra.mxu0 %v363
    %2195 = vmatprep.subr.bf16.mxu0 %v367
    %2196 = vmatpush1.bf16.msra.mxu0 %v366
    %2197 = vmatprep.subr.bf16.mxu0 %v370
    %2198 = vmatpush1.bf16.msra.mxu0 %v369
    %2199 = vmatprep.subr.bf16.mxu0 0
    %2200 = vmatpush1.bf16.msra.mxu0 0
    %2201 = vmatprep.subr.bf16.mxu0 0
    %2202 = vmatpush1.bf16.msra.mxu0 0
    %2203 = vmatprep.subr.bf16.mxu0 0
    %2204 = vmatpush1.bf16.msra.mxu0 0
    %2205 = vmatprep.subr.bf16.mxu0 0
    %2206 = vmatpush1.bf16.msra.mxu0 0
    %2207 = vmatprep.subr.bf16.mxu0 0
    %2208 = vmatpush1.bf16.msra.mxu0 0
    %2209 = vmatprep.subr.bf16.mxu0 0
    %2210 = vmatpush1.bf16.msra.mxu0 0
    %2211 = vmatprep.subr.bf16.mxu0 0
    %2212 = vmatpush1.bf16.msra.mxu0 0
    %2213 = vmatprep.subr.bf16.mxu0 0
    %2214 = vmatpush1.bf16.msra.mxu0 0
    %2215 = vmatprep.mubr.bf16.mxu0 0
    %2216 = vmatmul.mubr.bf16.gmra.mrb[0].mxu0 %v987
    %v2217 = vpop.f32.mrb[0].mxu0
    %v2218 = vadd.f32 %v205, %v2217
    %v2219 = vpop.f32.mrb[0].mxu0
    %v2220 = vadd.f32 %v209, %v2219
    %v2221 = vpop.f32.mrb[0].mxu0
    %v2222 = vpop.f32.mrb[0].mxu0
    %2223 = vdwg.mxu0
    %2224 = vmatprep.subr.bf16.mxu0 0
    %2225 = vmatpush1.bf16.msra.mxu0 %v350
    %2226 = vmatprep.subr.bf16.mxu0 0
    %2227 = vmatpush1.bf16.msra.mxu0 %v353
    %2228 = vmatprep.subr.bf16.mxu0 0
    %2229 = vmatpush1.bf16.msra.mxu0 %v356
    %2230 = vmatprep.subr.bf16.mxu0 0
    %2231 = vmatpush1.bf16.msra.mxu0 %v359
    %2232 = vmatprep.subr.bf16.mxu0 0
    %2233 = vmatpush1.bf16.msra.mxu0 %v362
    %2234 = vmatprep.subr.bf16.mxu0 0
    %2235 = vmatpush1.bf16.msra.mxu0 %v365
    %2236 = vmatprep.subr.bf16.mxu0 0
    %2237 = vmatpush1.bf16.msra.mxu0 %v368
    %2238 = vmatprep.subr.bf16.mxu0 0
    %2239 = vmatpush1.bf16.msra.mxu0 %v371
    %2240 = vmatprep.subr.bf16.mxu0 0
    %2241 = vmatpush1.bf16.msra.mxu0 0
    %2242 = vmatprep.subr.bf16.mxu0 0
    %2243 = vmatpush1.bf16.msra.mxu0 0
    %2244 = vmatprep.subr.bf16.mxu0 0
    %2245 = vmatpush1.bf16.msra.mxu0 0
    %2246 = vmatprep.subr.bf16.mxu0 0
    %2247 = vmatpush1.bf16.msra.mxu0 0
    %2248 = vmatprep.subr.bf16.mxu0 0
    %2249 = vmatpush1.bf16.msra.mxu0 0
    %2250 = vmatprep.subr.bf16.mxu0 0
    %2251 = vmatpush1.bf16.msra.mxu0 0
    %2252 = vmatprep.subr.bf16.mxu0 0
    %2253 = vmatpush1.bf16.msra.mxu0 0
    %2254 = vmatprep.subr.bf16.mxu0 0
    %2255 = vmatpush1.bf16.msra.mxu0 0
    %2256 = vmatprep.mubr.bf16.mxu0 0
    %2257 = vmatmul.mubr.bf16.gmra.mrb[0].mxu0 %v987
    %v2258 = vpop.f32.mrb[0].mxu0
    %v2259 = vadd.f32 %v213, %v2258
    %v2260 = vpop.f32.mrb[0].mxu0
    %v2261 = vpop.f32.mrb[0].mxu0
    %v2262 = vpop.f32.mrb[0].mxu0
    %2263 = vdwg.mxu0
    %v2264 = vmul.f32 %v477, %v986
    %v2266 = vcombine.high %v2218, %v2218
    %v2268 = vunpack.c.l.s4 1966171168
    %v2269 = vunpack.c.0.s8 %v2268
    %v2270 = vlaneseq
    %v2271 = vshrl.u32 %v2270, 7
    %v2272 = vsub.s32 %v2269, %v2271
    %v2273 = vrot.slane %v2218, %v2272
    %v2275 = vunpack.c.l.s4 1966171168
    %v2276 = vunpack.c.0.s8 %v2275
    %v2277 = vlaneseq
    %v2278 = vshrl.u32 %v2277, 7
    %v2279 = vsub.s32 %v2276, %v2278
    %v2280 = vrot.slane %v2266, %v2279
    %v2281 = vcombine.high %v2273, %v2273
    %v2282 = vcombine.high %v2280, %v2280
    %v2284 = vunpack.c.l.s4 1966171168
    %v2285 = vunpack.c.0.s8 %v2284
    %v2286 = vlaneseq
    %v2287 = vshrl.u32 %v2286, 7
    %v2288 = vsub.s32 %v2285, %v2287
    %v2289 = vrot.slane %v2273, %v2288
    %v2291 = vunpack.c.l.s4 1966171168
    %v2292 = vunpack.c.0.s8 %v2291
    %v2293 = vlaneseq
    %v2294 = vshrl.u32 %v2293, 7
    %v2295 = vsub.s32 %v2292, %v2294
    %v2296 = vrot.slane %v2280, %v2295
    %v2298 = vunpack.c.l.s4 1966171168
    %v2299 = vunpack.c.0.s8 %v2298
    %v2300 = vlaneseq
    %v2301 = vshrl.u32 %v2300, 7
    %v2302 = vsub.s32 %v2299, %v2301
    %v2303 = vrot.slane %v2281, %v2302
    %v2305 = vunpack.c.l.s4 1966171168
    %v2306 = vunpack.c.0.s8 %v2305
    %v2307 = vlaneseq
    %v2308 = vshrl.u32 %v2307, 7
    %v2309 = vsub.s32 %v2306, %v2308
    %v2310 = vrot.slane %v2282, %v2309
    %v2311 = vcombine.high %v2289, %v2289
    %v2312 = vcombine.high %v2296, %v2296
    %v2313 = vcombine.high %v2303, %v2303
    %v2314 = vcombine.high %v2310, %v2310
    %v2323 = vadd.f32 %v2154, %v2289
    %v2324 = vadd.f32 %v2158, %v2303
    %v2325 = vadd.f32 %v2162, %v2311
    %v2326 = vadd.f32 %v2166, %v2313
    %v2327 = vadd.f32 %v2170, %v2296
    %v2328 = vadd.f32 %v2174, %v2310
    %v2329 = vadd.f32 %v2178, %v2312
    %v2330 = vadd.f32 %v2182, %v2314
    %v2331 = vxor.u32 %v2323, 2147483648
    %v2332 = vxor.u32 %v2324, 2147483648
    %v2333 = vxor.u32 %v2325, 2147483648
    %v2334 = vxor.u32 %v2326, 2147483648
    %v2335 = vxor.u32 %v2327, 2147483648
    %v2336 = vxor.u32 %v2328, 2147483648
    %v2337 = vxor.u32 %v2329, 2147483648
    %v2338 = vxor.u32 %v2330, 2147483648
    %v2339 = vmul.f32 %v2331, 1.442695
    %v2340 = vpow.pop %v2339
    %v2341 = vmul.f32 %v2332, 1.442695
    %v2342 = vpow.pop %v2341
    %v2343 = vmul.f32 %v2333, 1.442695
    %v2344 = vpow.pop %v2343
    %v2345 = vmul.f32 %v2334, 1.442695
    %v2346 = vpow.pop %v2345
    %v2347 = vmul.f32 %v2335, 1.442695
    %v2348 = vpow.pop %v2347
    %v2349 = vmul.f32 %v2336, 1.442695
    %v2350 = vpow.pop %v2349
    %v2351 = vmul.f32 %v2337, 1.442695
    %v2352 = vpow.pop %v2351
    %v2353 = vmul.f32 %v2338, 1.442695
    %v2354 = vpow.pop %v2353
    %v2355 = vadd.f32 %v2340, 1.0
    %v2356 = vadd.f32 %v2342, 1.0
    %v2357 = vadd.f32 %v2344, 1.0
    %v2358 = vadd.f32 %v2346, 1.0
    %v2359 = vadd.f32 %v2348, 1.0
    %v2360 = vadd.f32 %v2350, 1.0
    %v2361 = vadd.f32 %v2352, 1.0
    %v2362 = vadd.f32 %v2354, 1.0
    %v2363 = vrcp.pop %v2355
    %v2364 = vmul.f32 1.0, %v2363
    %v2365 = vrcp.pop %v2356
    %v2366 = vmul.f32 1.0, %v2365
    %v2367 = vrcp.pop %v2357
    %v2368 = vmul.f32 1.0, %v2367
    %v2369 = vrcp.pop %v2358
    %v2370 = vmul.f32 1.0, %v2369
    %v2371 = vrcp.pop %v2359
    %v2372 = vmul.f32 1.0, %v2371
    %v2373 = vrcp.pop %v2360
    %v2374 = vmul.f32 1.0, %v2373
    %v2375 = vrcp.pop %v2361
    %v2376 = vmul.f32 1.0, %v2375
    %v2377 = vrcp.pop %v2362
    %v2378 = vmul.f32 1.0, %v2377
    %v2387 = vrot.slane %v2154, 1
    %v2388 = vrot.slane %v2158, 1
    %v2389 = vrot.slane %v2162, 1
    %v2390 = vrot.slane %v2166, 1
    %v2391 = vrot.slane %v2170, 1
    %v2392 = vrot.slane %v2174, 1
    %v2393 = vrot.slane %v2178, 1
    %v2394 = vrot.slane %v2182, 1
    %v2404 = vcombine.high %v2220, %v2220
    %v2406 = vunpack.c.l.s4 1966171168
    %v2407 = vunpack.c.0.s8 %v2406
    %v2408 = vlaneseq
    %v2409 = vshrl.u32 %v2408, 7
    %v2410 = vsub.s32 %v2407, %v2409
    %v2411 = vrot.slane %v2220, %v2410
    %v2413 = vunpack.c.l.s4 1966171168
    %v2414 = vunpack.c.0.s8 %v2413
    %v2415 = vlaneseq
    %v2416 = vshrl.u32 %v2415, 7
    %v2417 = vsub.s32 %v2414, %v2416
    %v2418 = vrot.slane %v2404, %v2417
    %v2419 = vcombine.high %v2411, %v2411
    %v2420 = vcombine.high %v2418, %v2418
    %v2422 = vunpack.c.l.s4 1966171168
    %v2423 = vunpack.c.0.s8 %v2422
    %v2424 = vlaneseq
    %v2425 = vshrl.u32 %v2424, 7
    %v2426 = vsub.s32 %v2423, %v2425
    %v2427 = vrot.slane %v2411, %v2426
    %v2429 = vunpack.c.l.s4 1966171168
    %v2430 = vunpack.c.0.s8 %v2429
    %v2431 = vlaneseq
    %v2432 = vshrl.u32 %v2431, 7
    %v2433 = vsub.s32 %v2430, %v2432
    %v2434 = vrot.slane %v2418, %v2433
    %v2436 = vunpack.c.l.s4 1966171168
    %v2437 = vunpack.c.0.s8 %v2436
    %v2438 = vlaneseq
    %v2439 = vshrl.u32 %v2438, 7
    %v2440 = vsub.s32 %v2437, %v2439
    %v2441 = vrot.slane %v2419, %v2440
    %v2443 = vunpack.c.l.s4 1966171168
    %v2444 = vunpack.c.0.s8 %v2443
    %v2445 = vlaneseq
    %v2446 = vshrl.u32 %v2445, 7
    %v2447 = vsub.s32 %v2444, %v2446
    %v2448 = vrot.slane %v2420, %v2447
    %v2449 = vcombine.high %v2427, %v2427
    %v2450 = vcombine.high %v2434, %v2434
    %v2451 = vcombine.high %v2441, %v2441
    %v2452 = vcombine.high %v2448, %v2448
    %v2461 = vadd.f32 %v2387, %v2427
    %v2462 = vadd.f32 %v2388, %v2441
    %v2463 = vadd.f32 %v2389, %v2449
    %v2464 = vadd.f32 %v2390, %v2451
    %v2465 = vadd.f32 %v2391, %v2434
    %v2466 = vadd.f32 %v2392, %v2448
    %v2467 = vadd.f32 %v2393, %v2450
    %v2468 = vadd.f32 %v2394, %v2452
    %v2469 = vxor.u32 %v2461, 2147483648
    %v2470 = vxor.u32 %v2462, 2147483648
    %v2471 = vxor.u32 %v2463, 2147483648
    %v2472 = vxor.u32 %v2464, 2147483648
    %v2473 = vxor.u32 %v2465, 2147483648
    %v2474 = vxor.u32 %v2466, 2147483648
    %v2475 = vxor.u32 %v2467, 2147483648
    %v2476 = vxor.u32 %v2468, 2147483648
    %v2477 = vmul.f32 %v2469, 1.442695
    %v2478 = vpow.pop %v2477
    %v2479 = vmul.f32 %v2470, 1.442695
    %v2480 = vpow.pop %v2479
    %v2481 = vmul.f32 %v2471, 1.442695
    %v2482 = vpow.pop %v2481
    %v2483 = vmul.f32 %v2472, 1.442695
    %v2484 = vpow.pop %v2483
    %v2485 = vmul.f32 %v2473, 1.442695
    %v2486 = vpow.pop %v2485
    %v2487 = vmul.f32 %v2474, 1.442695
    %v2488 = vpow.pop %v2487
    %v2489 = vmul.f32 %v2475, 1.442695
    %v2490 = vpow.pop %v2489
    %v2491 = vmul.f32 %v2476, 1.442695
    %v2492 = vpow.pop %v2491
    %v2493 = vadd.f32 %v2478, 1.0
    %v2494 = vadd.f32 %v2480, 1.0
    %v2495 = vadd.f32 %v2482, 1.0
    %v2496 = vadd.f32 %v2484, 1.0
    %v2497 = vadd.f32 %v2486, 1.0
    %v2498 = vadd.f32 %v2488, 1.0
    %v2499 = vadd.f32 %v2490, 1.0
    %v2500 = vadd.f32 %v2492, 1.0
    %v2501 = vrcp.pop %v2493
    %v2502 = vmul.f32 1.0, %v2501
    %v2503 = vrcp.pop %v2494
    %v2504 = vmul.f32 1.0, %v2503
    %v2505 = vrcp.pop %v2495
    %v2506 = vmul.f32 1.0, %v2505
    %v2507 = vrcp.pop %v2496
    %v2508 = vmul.f32 1.0, %v2507
    %v2509 = vrcp.pop %v2497
    %v2510 = vmul.f32 1.0, %v2509
    %v2511 = vrcp.pop %v2498
    %v2512 = vmul.f32 1.0, %v2511
    %v2513 = vrcp.pop %v2499
    %v2514 = vmul.f32 1.0, %v2513
    %v2515 = vrcp.pop %v2500
    %v2516 = vmul.f32 1.0, %v2515
    %v2518 = vcombine.high %v2259, %v2259
    %v2520 = vunpack.c.l.s4 1966171168
    %v2521 = vunpack.c.0.s8 %v2520
    %v2522 = vlaneseq
    %v2523 = vshrl.u32 %v2522, 7
    %v2524 = vsub.s32 %v2521, %v2523
    %v2525 = vrot.slane %v2259, %v2524
    %v2527 = vunpack.c.l.s4 1966171168
    %v2528 = vunpack.c.0.s8 %v2527
    %v2529 = vlaneseq
    %v2530 = vshrl.u32 %v2529, 7
    %v2531 = vsub.s32 %v2528, %v2530
    %v2532 = vrot.slane %v2518, %v2531
    %v2533 = vcombine.high %v2525, %v2525
    %v2534 = vcombine.high %v2532, %v2532
    %v2536 = vunpack.c.l.s4 1966171168
    %v2537 = vunpack.c.0.s8 %v2536
    %v2538 = vlaneseq
    %v2539 = vshrl.u32 %v2538, 7
    %v2540 = vsub.s32 %v2537, %v2539
    %v2541 = vrot.slane %v2525, %v2540
    %v2543 = vunpack.c.l.s4 1966171168
    %v2544 = vunpack.c.0.s8 %v2543
    %v2545 = vlaneseq
    %v2546 = vshrl.u32 %v2545, 7
    %v2547 = vsub.s32 %v2544, %v2546
    %v2548 = vrot.slane %v2532, %v2547
    %v2550 = vunpack.c.l.s4 1966171168
    %v2551 = vunpack.c.0.s8 %v2550
    %v2552 = vlaneseq
    %v2553 = vshrl.u32 %v2552, 7
    %v2554 = vsub.s32 %v2551, %v2553
    %v2555 = vrot.slane %v2533, %v2554
    %v2557 = vunpack.c.l.s4 1966171168
    %v2558 = vunpack.c.0.s8 %v2557
    %v2559 = vlaneseq
    %v2560 = vshrl.u32 %v2559, 7
    %v2561 = vsub.s32 %v2558, %v2560
    %v2562 = vrot.slane %v2534, %v2561
    %v2563 = vcombine.high %v2541, %v2541
    %v2564 = vcombine.high %v2548, %v2548
    %v2565 = vcombine.high %v2555, %v2555
    %v2566 = vcombine.high %v2562, %v2562
    %v2575 = vmul.f32 %v2364, %v2541
    %v2576 = vmul.f32 %v2366, %v2555
    %v2577 = vmul.f32 %v2368, %v2563
    %v2578 = vmul.f32 %v2370, %v2565
    %v2579 = vmul.f32 %v2372, %v2548
    %v2580 = vmul.f32 %v2374, %v2562
    %v2581 = vmul.f32 %v2376, %v2564
    %v2582 = vmul.f32 %v2378, %v2566
    %v2583 = vrot.slane %v2154, 2
    %v2584 = vrot.slane %v2158, 2
    %v2585 = vrot.slane %v2162, 2
    %v2586 = vrot.slane %v2166, 2
    %v2587 = vrot.slane %v2170, 2
    %v2588 = vrot.slane %v2174, 2
    %v2589 = vrot.slane %v2178, 2
    %v2590 = vrot.slane %v2182, 2
    %v2599 = vadd.f32 %v2583, %v2575
    %v2600 = vadd.f32 %v2584, %v2576
    %v2601 = vadd.f32 %v2585, %v2577
    %v2602 = vadd.f32 %v2586, %v2578
    %v2603 = vadd.f32 %v2587, %v2579
    %v2604 = vadd.f32 %v2588, %v2580
    %v2605 = vadd.f32 %v2589, %v2581
    %v2606 = vadd.f32 %v2590, %v2582
    %v2607 = vtanh.pop %v2599
    %v2608 = vtanh.pop %v2600
    %v2609 = vtanh.pop %v2601
    %v2610 = vtanh.pop %v2602
    %v2611 = vtanh.pop %v2603
    %v2612 = vtanh.pop %v2604
    %v2613 = vtanh.pop %v2605
    %v2614 = vtanh.pop %v2606
    %v2615 = vsub.f32 1.0, %v2502
    %v2616 = vsub.f32 1.0, %v2504
    %v2617 = vsub.f32 1.0, %v2506
    %v2618 = vsub.f32 1.0, %v2508
    %v2619 = vsub.f32 1.0, %v2510
    %v2620 = vsub.f32 1.0, %v2512
    %v2621 = vsub.f32 1.0, %v2514
    %v2622 = vsub.f32 1.0, %v2516
    %v2623 = vmul.f32 %v2615, %v2607
    %v2624 = vmul.f32 %v2616, %v2608
    %v2625 = vmul.f32 %v2617, %v2609
    %v2626 = vmul.f32 %v2618, %v2610
    %v2627 = vmul.f32 %v2619, %v2611
    %v2628 = vmul.f32 %v2620, %v2612
    %v2629 = vmul.f32 %v2621, %v2613
    %v2630 = vmul.f32 %v2622, %v2614
    %v2631 = vmul.f32 %v2502, %v2043
    %v2632 = vmul.f32 %v2504, %v2057
    %v2633 = vmul.f32 %v2506, %v2065
    %v2634 = vmul.f32 %v2508, %v2067
    %v2635 = vmul.f32 %v2510, %v2050
    %v2636 = vmul.f32 %v2512, %v2064
    %v2637 = vmul.f32 %v2514, %v2066
    %v2638 = vmul.f32 %v2516, %v2068
    %v2639 = vadd.f32 %v2623, %v2631
    %v2640 = vadd.f32 %v2624, %v2632
    %v2641 = vadd.f32 %v2625, %v2633
    %v2642 = vadd.f32 %v2626, %v2634
    %v2643 = vadd.f32 %v2627, %v2635
    %v2644 = vadd.f32 %v2628, %v2636
    %v2645 = vadd.f32 %v2629, %v2637
    %v2646 = vadd.f32 %v2630, %v2638
    %v2647 = vmul.f32 %v919, %v2639
    %v2648 = vmul.f32 %v919, %v2640
    %v2649 = vmul.f32 %v919, %v2641
    %v2650 = vmul.f32 %v919, %v2642
    %v2651 = vmul.f32 %v919, %v2643
    %v2652 = vmul.f32 %v919, %v2644
    %v2653 = vmul.f32 %v919, %v2645
    %v2654 = vmul.f32 %v919, %v2646
    %v2663 = vcombine.low %v2647, %v2648
    %v2664 = vcombine.low %v2649, %v2650
    %v2665 = vcombine.low %v2651, %v2652
    %v2666 = vcombine.low %v2653, %v2654
    %v2668 = vunpack.c.l.s4 1966171168
    %v2669 = vunpack.c.0.s8 %v2668
    %v2670 = vlaneseq
    %v2671 = vshrl.u32 %v2670, 7
    %v2672 = vsub.s32 %v2669, %v2671
    %v2673 = vrot.slane %v2663, %v2672
    %v2675 = vunpack.c.l.s4 1966171168
    %v2676 = vunpack.c.0.s8 %v2675
    %v2677 = vlaneseq
    %v2678 = vshrl.u32 %v2677, 7
    %v2679 = vsub.s32 %v2676, %v2678
    %v2680 = vrot.slane %v2664, %v2679
    %v2682 = vunpack.c.l.s4 1966171168
    %v2683 = vunpack.c.0.s8 %v2682
    %v2684 = vlaneseq
    %v2685 = vshrl.u32 %v2684, 7
    %v2686 = vsub.s32 %v2683, %v2685
    %v2687 = vrot.slane %v2665, %v2686
    %v2689 = vunpack.c.l.s4 1966171168
    %v2690 = vunpack.c.0.s8 %v2689
    %v2691 = vlaneseq
    %v2692 = vshrl.u32 %v2691, 7
    %v2693 = vsub.s32 %v2690, %v2692
    %v2694 = vrot.slane %v2666, %v2693
    %v2695 = vcombine.low %v2673, %v2680
    %v2696 = vcombine.low %v2687, %v2694
    %v2698 = vunpack.c.l.s4 1966171168
    %v2699 = vunpack.c.0.s8 %v2698
    %v2700 = vlaneseq
    %v2701 = vshrl.u32 %v2700, 7
    %v2702 = vsub.s32 %v2699, %v2701
    %v2703 = vrot.slane %v2695, %v2702
    %v2705 = vunpack.c.l.s4 1966171168
    %v2706 = vunpack.c.0.s8 %v2705
    %v2707 = vlaneseq
    %v2708 = vshrl.u32 %v2707, 7
    %v2709 = vsub.s32 %v2706, %v2708
    %v2710 = vrot.slane %v2696, %v2709
    %v2711 = vcombine.low %v2703, %v2710
    %v2713 = vadd.f32 %v2264, %v2711
    %v2714 = vpack.c.bf16 %v2713, %v2713
    %2715 = vmatprep.subr.bf16.mxu0 %v1069
    %2716 = vmatpush1.bf16.msra.mxu0 %v1068
    %2717 = vmatprep.subr.bf16.mxu0 %v1072
    %2718 = vmatpush1.bf16.msra.mxu0 %v1071
    %2719 = vmatprep.subr.bf16.mxu0 %v1075
    %2720 = vmatpush1.bf16.msra.mxu0 %v1074
    %2721 = vmatprep.subr.bf16.mxu0 %v1078
    %2722 = vmatpush1.bf16.msra.mxu0 %v1077
    %2723 = vmatprep.subr.bf16.mxu0 %v1081
    %2724 = vmatpush1.bf16.msra.mxu0 %v1080
    %2725 = vmatprep.subr.bf16.mxu0 %v1084
    %2726 = vmatpush1.bf16.msra.mxu0 %v1083
    %2727 = vmatprep.subr.bf16.mxu0 %v1087
    %2728 = vmatpush1.bf16.msra.mxu0 %v1086
    %2729 = vmatprep.subr.bf16.mxu0 %v1090
    %2730 = vmatpush1.bf16.msra.mxu0 %v1089
    %2731 = vmatprep.subr.bf16.mxu0 0
    %2732 = vmatpush1.bf16.msra.mxu0 0
    %2733 = vmatprep.subr.bf16.mxu0 0
    %2734 = vmatpush1.bf16.msra.mxu0 0
    %2735 = vmatprep.subr.bf16.mxu0 0
    %2736 = vmatpush1.bf16.msra.mxu0 0
    %2737 = vmatprep.subr.bf16.mxu0 0
    %2738 = vmatpush1.bf16.msra.mxu0 0
    %2739 = vmatprep.subr.bf16.mxu0 0
    %2740 = vmatpush1.bf16.msra.mxu0 0
    %2741 = vmatprep.subr.bf16.mxu0 0
    %2742 = vmatpush1.bf16.msra.mxu0 0
    %2743 = vmatprep.subr.bf16.mxu0 0
    %2744 = vmatpush1.bf16.msra.mxu0 0
    %2745 = vmatprep.subr.bf16.mxu0 0
    %2746 = vmatpush1.bf16.msra.mxu0 0
    %2747 = vmatprep.mubr.bf16.mxu0 0
    %2748 = vmatmul.mubr.bf16.gmra.mrb[0].mxu0 %v2714
    %v2749 = vpop.f32.mrb[0].mxu0
    %v2750 = vadd.f32 0.0, %v2749
    %v2751 = vpop.f32.mrb[0].mxu0
    %v2752 = vadd.f32 0.0, %v2751
    %v2753 = vpop.f32.mrb[0].mxu0
    %v2754 = vpop.f32.mrb[0].mxu0
    %2755 = vdwg.mxu0
    %2756 = vmatprep.subr.bf16.mxu0 0
    %2757 = vmatpush1.bf16.msra.mxu0 %v1070
    %2758 = vmatprep.subr.bf16.mxu0 0
    %2759 = vmatpush1.bf16.msra.mxu0 %v1073
    %2760 = vmatprep.subr.bf16.mxu0 0
    %2761 = vmatpush1.bf16.msra.mxu0 %v1076
    %2762 = vmatprep.subr.bf16.mxu0 0
    %2763 = vmatpush1.bf16.msra.mxu0 %v1079
    %2764 = vmatprep.subr.bf16.mxu0 0
    %2765 = vmatpush1.bf16.msra.mxu0 %v1082
    %2766 = vmatprep.subr.bf16.mxu0 0
    %2767 = vmatpush1.bf16.msra.mxu0 %v1085
    %2768 = vmatprep.subr.bf16.mxu0 0
    %2769 = vmatpush1.bf16.msra.mxu0 %v1088
    %2770 = vmatprep.subr.bf16.mxu0 0
    %2771 = vmatpush1.bf16.msra.mxu0 %v1091
    %2772 = vmatprep.subr.bf16.mxu0 0
    %2773 = vmatpush1.bf16.msra.mxu0 0
    %2774 = vmatprep.subr.bf16.mxu0 0
    %2775 = vmatpush1.bf16.msra.mxu0 0
    %2776 = vmatprep.subr.bf16.mxu0 0
    %2777 = vmatpush1.bf16.msra.mxu0 0
    %2778 = vmatprep.subr.bf16.mxu0 0
    %2779 = vmatpush1.bf16.msra.mxu0 0
    %2780 = vmatprep.subr.bf16.mxu0 0
    %2781 = vmatpush1.bf16.msra.mxu0 0
    %2782 = vmatprep.subr.bf16.mxu0 0
    %2783 = vmatpush1.bf16.msra.mxu0 0
    %2784 = vmatprep.subr.bf16.mxu0 0
    %2785 = vmatpush1.bf16.msra.mxu0 0
    %2786 = vmatprep.subr.bf16.mxu0 0
    %2787 = vmatpush1.bf16.msra.mxu0 0
    %2788 = vmatprep.mubr.bf16.mxu0 0
    %2789 = vmatmul.mubr.bf16.gmra.mrb[0].mxu0 %v2714
    %v2790 = vpop.f32.mrb[0].mxu0
    %v2791 = vadd.f32 0.0, %v2790
    %v2792 = vpop.f32.mrb[0].mxu0
    %v2793 = vpop.f32.mrb[0].mxu0
    %v2794 = vpop.f32.mrb[0].mxu0
    %2795 = vdwg.mxu0
    %v2796 = vrot.slane %v2154, 3
    %v2797 = vrot.slane %v2158, 3
    %v2798 = vrot.slane %v2162, 3
    %v2799 = vrot.slane %v2166, 3
    %v2800 = vrot.slane %v2170, 3
    %v2801 = vrot.slane %v2174, 3
    %v2802 = vrot.slane %v2178, 3
    %v2803 = vrot.slane %v2182, 3
    %v2815 = vcombine.low %v2750, %v2752
    %v2816 = vcombine.high %v2750, %v2752
    %v2817 = vcombine.high %v2791, %v2791
    %v2819 = vunpack.c.l.s4 1966171168
    %v2820 = vunpack.c.0.s8 %v2819
    %v2821 = vlaneseq
    %v2822 = vshrl.u32 %v2821, 7
    %v2823 = vsub.s32 %v2820, %v2822
    %v2824 = vrot.slane %v2815, %v2823
    %v2826 = vunpack.c.l.s4 1966171168
    %v2827 = vunpack.c.0.s8 %v2826
    %v2828 = vlaneseq
    %v2829 = vshrl.u32 %v2828, 7
    %v2830 = vsub.s32 %v2827, %v2829
    %v2831 = vrot.slane %v2816, %v2830
    %v2833 = vunpack.c.l.s4 1966171168
    %v2834 = vunpack.c.0.s8 %v2833
    %v2835 = vlaneseq
    %v2836 = vshrl.u32 %v2835, 7
    %v2837 = vsub.s32 %v2834, %v2836
    %v2838 = vrot.slane %v2791, %v2837
    %v2840 = vunpack.c.l.s4 1966171168
    %v2841 = vunpack.c.0.s8 %v2840
    %v2842 = vlaneseq
    %v2843 = vshrl.u32 %v2842, 7
    %v2844 = vsub.s32 %v2841, %v2843
    %v2845 = vrot.slane %v2817, %v2844
    %v2846 = vcombine.low %v2824, %v2838
    %v2847 = vcombine.high %v2824, %v2838
    %v2848 = vcombine.low %v2831, %v2845
    %v2849 = vcombine.high %v2831, %v2845
    %v2851 = vunpack.c.l.s4 1966171168
    %v2852 = vunpack.c.0.s8 %v2851
    %v2853 = vlaneseq
    %v2854 = vshrl.u32 %v2853, 7
    %v2855 = vsub.s32 %v2852, %v2854
    %v2856 = vrot.slane %v2846, %v2855
    %v2858 = vunpack.c.l.s4 1966171168
    %v2859 = vunpack.c.0.s8 %v2858
    %v2860 = vlaneseq
    %v2861 = vshrl.u32 %v2860, 7
    %v2862 = vsub.s32 %v2859, %v2861
    %v2863 = vrot.slane %v2848, %v2862
    %v2865 = vunpack.c.l.s4 1966171168
    %v2866 = vunpack.c.0.s8 %v2865
    %v2867 = vlaneseq
    %v2868 = vshrl.u32 %v2867, 7
    %v2869 = vsub.s32 %v2866, %v2868
    %v2870 = vrot.slane %v2847, %v2869
    %v2872 = vunpack.c.l.s4 1966171168
    %v2873 = vunpack.c.0.s8 %v2872
    %v2874 = vlaneseq
    %v2875 = vshrl.u32 %v2874, 7
    %v2876 = vsub.s32 %v2873, %v2875
    %v2877 = vrot.slane %v2849, %v2876
    %v2878 = vcombine.high %v2856, %v2856
    %v2879 = vcombine.high %v2863, %v2863
    %v2880 = vcombine.high %v2870, %v2870
    %v2881 = vcombine.high %v2877, %v2877
    %v2890 = vadd.f32 %v2796, %v2856
    %v2891 = vadd.f32 %v2797, %v2870
    %v2892 = vadd.f32 %v2798, %v2878
    %v2893 = vadd.f32 %v2799, %v2880
    %v2894 = vadd.f32 %v2800, %v2863
    %v2895 = vadd.f32 %v2801, %v2877
    %v2896 = vadd.f32 %v2802, %v2879
    %v2897 = vadd.f32 %v2803, %v2881
    %v2898 = vpack.c.bf16 %v2018, %v2018
    %2899 = vmatprep.subr.bf16.mxu0 %v1381
    %2900 = vmatpush1.bf16.msra.mxu0 %v1380
    %2901 = vmatprep.subr.bf16.mxu0 %v1384
    %2902 = vmatpush1.bf16.msra.mxu0 %v1383
    %2903 = vmatprep.subr.bf16.mxu0 %v1387
    %2904 = vmatpush1.bf16.msra.mxu0 %v1386
    %2905 = vmatprep.subr.bf16.mxu0 %v1390
    %2906 = vmatpush1.bf16.msra.mxu0 %v1389
    %2907 = vmatprep.subr.bf16.mxu0 %v1393
    %2908 = vmatpush1.bf16.msra.mxu0 %v1392
    %2909 = vmatprep.subr.bf16.mxu0 %v1396
    %2910 = vmatpush1.bf16.msra.mxu0 %v1395
    %2911 = vmatprep.subr.bf16.mxu0 %v1399
    %2912 = vmatpush1.bf16.msra.mxu0 %v1398
    %2913 = vmatprep.subr.bf16.mxu0 %v1402
    %2914 = vmatpush1.bf16.msra.mxu0 %v1401
    %2915 = vmatprep.subr.bf16.mxu0 0
    %2916 = vmatpush1.bf16.msra.mxu0 0
    %2917 = vmatprep.subr.bf16.mxu0 0
    %2918 = vmatpush1.bf16.msra.mxu0 0
    %2919 = vmatprep.subr.bf16.mxu0 0
    %2920 = vmatpush1.bf16.msra.mxu0 0
    %2921 = vmatprep.subr.bf16.mxu0 0
    %2922 = vmatpush1.bf16.msra.mxu0 0
    %2923 = vmatprep.subr.bf16.mxu0 0
    %2924 = vmatpush1.bf16.msra.mxu0 0
    %2925 = vmatprep.subr.bf16.mxu0 0
    %2926 = vmatpush1.bf16.msra.mxu0 0
    %2927 = vmatprep.subr.bf16.mxu0 0
    %2928 = vmatpush1.bf16.msra.mxu0 0
    %2929 = vmatprep.subr.bf16.mxu0 0
    %2930 = vmatpush1.bf16.msra.mxu0 0
    %2931 = vmatprep.mubr.bf16.mxu0 0
    %2932 = vmatmul.mubr.bf16.gmra.mrb[0].mxu0 %v2898
    %v2933 = vpop.f32.mrb[0].mxu0
    %v2934 = vadd.f32 %v222, %v2933
    %v2935 = vpop.f32.mrb[0].mxu0
    %v2936 = vadd.f32 %v226, %v2935
    %v2937 = vpop.f32.mrb[0].mxu0
    %v2938 = vpop.f32.mrb[0].mxu0
    %2939 = vdwg.mxu0
    %2940 = vmatprep.subr.bf16.mxu0 0
    %2941 = vmatpush1.bf16.msra.mxu0 %v1382
    %2942 = vmatprep.subr.bf16.mxu0 0
    %2943 = vmatpush1.bf16.msra.mxu0 %v1385
    %2944 = vmatprep.subr.bf16.mxu0 0
    %2945 = vmatpush1.bf16.msra.mxu0 %v1388
    %2946 = vmatprep.subr.bf16.mxu0 0
    %2947 = vmatpush1.bf16.msra.mxu0 %v1391
    %2948 = vmatprep.subr.bf16.mxu0 0
    %2949 = vmatpush1.bf16.msra.mxu0 %v1394
    %2950 = vmatprep.subr.bf16.mxu0 0
    %2951 = vmatpush1.bf16.msra.mxu0 %v1397
    %2952 = vmatprep.subr.bf16.mxu0 0
    %2953 = vmatpush1.bf16.msra.mxu0 %v1400
    %2954 = vmatprep.subr.bf16.mxu0 0
    %2955 = vmatpush1.bf16.msra.mxu0 %v1403
    %2956 = vmatprep.subr.bf16.mxu0 0
    %2957 = vmatpush1.bf16.msra.mxu0 0
    %2958 = vmatprep.subr.bf16.mxu0 0
    %2959 = vmatpush1.bf16.msra.mxu0 0
    %2960 = vmatprep.subr.bf16.mxu0 0
    %2961 = vmatpush1.bf16.msra.mxu0 0
    %2962 = vmatprep.subr.bf16.mxu0 0
    %2963 = vmatpush1.bf16.msra.mxu0 0
    %2964 = vmatprep.subr.bf16.mxu0 0
    %2965 = vmatpush1.bf16.msra.mxu0 0
    %2966 = vmatprep.subr.bf16.mxu0 0
    %2967 = vmatpush1.bf16.msra.mxu0 0
    %2968 = vmatprep.subr.bf16.mxu0 0
    %2969 = vmatpush1.bf16.msra.mxu0 0
    %2970 = vmatprep.subr.bf16.mxu0 0
    %2971 = vmatpush1.bf16.msra.mxu0 0
    %2972 = vmatprep.mubr.bf16.mxu0 0
    %2973 = vmatmul.mubr.bf16.gmra.mrb[0].mxu0 %v2898
    %v2974 = vpop.f32.mrb[0].mxu0
    %v2975 = vadd.f32 %v230, %v2974
    %v2976 = vpop.f32.mrb[0].mxu0
    %v2977 = vpop.f32.mrb[0].mxu0
    %v2978 = vpop.f32.mrb[0].mxu0
    %2979 = vdwg.mxu0
    %v2980 = vmul.f32 %v1509, %v2018
    %v2982 = vcombine.high %v2934, %v2934
    %v2984 = vunpack.c.l.s4 1966171168
    %v2985 = vunpack.c.0.s8 %v2984
    %v2986 = vlaneseq
    %v2987 = vshrl.u32 %v2986, 7
    %v2988 = vsub.s32 %v2985, %v2987
    %v2989 = vrot.slane %v2934, %v2988
    %v2991 = vunpack.c.l.s4 1966171168
    %v2992 = vunpack.c.0.s8 %v2991
    %v2993 = vlaneseq
    %v2994 = vshrl.u32 %v2993, 7
    %v2995 = vsub.s32 %v2992, %v2994
    %v2996 = vrot.slane %v2982, %v2995
    %v2997 = vcombine.high %v2989, %v2989
    %v2998 = vcombine.high %v2996, %v2996
    %v3000 = vunpack.c.l.s4 1966171168
    %v3001 = vunpack.c.0.s8 %v3000
    %v3002 = vlaneseq
    %v3003 = vshrl.u32 %v3002, 7
    %v3004 = vsub.s32 %v3001, %v3003
    %v3005 = vrot.slane %v2989, %v3004
    %v3007 = vunpack.c.l.s4 1966171168
    %v3008 = vunpack.c.0.s8 %v3007
    %v3009 = vlaneseq
    %v3010 = vshrl.u32 %v3009, 7
    %v3011 = vsub.s32 %v3008, %v3010
    %v3012 = vrot.slane %v2996, %v3011
    %v3014 = vunpack.c.l.s4 1966171168
    %v3015 = vunpack.c.0.s8 %v3014
    %v3016 = vlaneseq
    %v3017 = vshrl.u32 %v3016, 7
    %v3018 = vsub.s32 %v3015, %v3017
    %v3019 = vrot.slane %v2997, %v3018
    %v3021 = vunpack.c.l.s4 1966171168
    %v3022 = vunpack.c.0.s8 %v3021
    %v3023 = vlaneseq
    %v3024 = vshrl.u32 %v3023, 7
    %v3025 = vsub.s32 %v3022, %v3024
    %v3026 = vrot.slane %v2998, %v3025
    %v3027 = vcombine.high %v3005, %v3005
    %v3028 = vcombine.high %v3012, %v3012
    %v3029 = vcombine.high %v3019, %v3019
    %v3030 = vcombine.high %v3026, %v3026
    %v3039 = vadd.f32 %v2890, %v3005
    %v3040 = vadd.f32 %v2891, %v3019
    %v3041 = vadd.f32 %v2892, %v3027
    %v3042 = vadd.f32 %v2893, %v3029
    %v3043 = vadd.f32 %v2894, %v3012
    %v3044 = vadd.f32 %v2895, %v3026
    %v3045 = vadd.f32 %v2896, %v3028
    %v3046 = vadd.f32 %v2897, %v3030
    %v3047 = vxor.u32 %v3039, 2147483648
    %v3048 = vxor.u32 %v3040, 2147483648
    %v3049 = vxor.u32 %v3041, 2147483648
    %v3050 = vxor.u32 %v3042, 2147483648
    %v3051 = vxor.u32 %v3043, 2147483648
    %v3052 = vxor.u32 %v3044, 2147483648
    %v3053 = vxor.u32 %v3045, 2147483648
    %v3054 = vxor.u32 %v3046, 2147483648
    %v3055 = vmul.f32 %v3047, 1.442695
    %v3056 = vpow.pop %v3055
    %v3057 = vmul.f32 %v3048, 1.442695
    %v3058 = vpow.pop %v3057
    %v3059 = vmul.f32 %v3049, 1.442695
    %v3060 = vpow.pop %v3059
    %v3061 = vmul.f32 %v3050, 1.442695
    %v3062 = vpow.pop %v3061
    %v3063 = vmul.f32 %v3051, 1.442695
    %v3064 = vpow.pop %v3063
    %v3065 = vmul.f32 %v3052, 1.442695
    %v3066 = vpow.pop %v3065
    %v3067 = vmul.f32 %v3053, 1.442695
    %v3068 = vpow.pop %v3067
    %v3069 = vmul.f32 %v3054, 1.442695
    %v3070 = vpow.pop %v3069
    %v3071 = vadd.f32 %v3056, 1.0
    %v3072 = vadd.f32 %v3058, 1.0
    %v3073 = vadd.f32 %v3060, 1.0
    %v3074 = vadd.f32 %v3062, 1.0
    %v3075 = vadd.f32 %v3064, 1.0
    %v3076 = vadd.f32 %v3066, 1.0
    %v3077 = vadd.f32 %v3068, 1.0
    %v3078 = vadd.f32 %v3070, 1.0
    %v3079 = vrcp.pop %v3071
    %v3080 = vmul.f32 1.0, %v3079
    %v3081 = vrcp.pop %v3072
    %v3082 = vmul.f32 1.0, %v3081
    %v3083 = vrcp.pop %v3073
    %v3084 = vmul.f32 1.0, %v3083
    %v3085 = vrcp.pop %v3074
    %v3086 = vmul.f32 1.0, %v3085
    %v3087 = vrcp.pop %v3075
    %v3088 = vmul.f32 1.0, %v3087
    %v3089 = vrcp.pop %v3076
    %v3090 = vmul.f32 1.0, %v3089
    %v3091 = vrcp.pop %v3077
    %v3092 = vmul.f32 1.0, %v3091
    %v3093 = vrcp.pop %v3078
    %v3094 = vmul.f32 1.0, %v3093
    %v3103 = vrot.slane %v2890, 1
    %v3104 = vrot.slane %v2891, 1
    %v3105 = vrot.slane %v2892, 1
    %v3106 = vrot.slane %v2893, 1
    %v3107 = vrot.slane %v2894, 1
    %v3108 = vrot.slane %v2895, 1
    %v3109 = vrot.slane %v2896, 1
    %v3110 = vrot.slane %v2897, 1
    %v3120 = vcombine.high %v2936, %v2936
    %v3122 = vunpack.c.l.s4 1966171168
    %v3123 = vunpack.c.0.s8 %v3122
    %v3124 = vlaneseq
    %v3125 = vshrl.u32 %v3124, 7
    %v3126 = vsub.s32 %v3123, %v3125
    %v3127 = vrot.slane %v2936, %v3126
    %v3129 = vunpack.c.l.s4 1966171168
    %v3130 = vunpack.c.0.s8 %v3129
    %v3131 = vlaneseq
    %v3132 = vshrl.u32 %v3131, 7
    %v3133 = vsub.s32 %v3130, %v3132
    %v3134 = vrot.slane %v3120, %v3133
    %v3135 = vcombine.high %v3127, %v3127
    %v3136 = vcombine.high %v3134, %v3134
    %v3138 = vunpack.c.l.s4 1966171168
    %v3139 = vunpack.c.0.s8 %v3138
    %v3140 = vlaneseq
    %v3141 = vshrl.u32 %v3140, 7
    %v3142 = vsub.s32 %v3139, %v3141
    %v3143 = vrot.slane %v3127, %v3142
    %v3145 = vunpack.c.l.s4 1966171168
    %v3146 = vunpack.c.0.s8 %v3145
    %v3147 = vlaneseq
    %v3148 = vshrl.u32 %v3147, 7
    %v3149 = vsub.s32 %v3146, %v3148
    %v3150 = vrot.slane %v3134, %v3149
    %v3152 = vunpack.c.l.s4 1966171168
    %v3153 = vunpack.c.0.s8 %v3152
    %v3154 = vlaneseq
    %v3155 = vshrl.u32 %v3154, 7
    %v3156 = vsub.s32 %v3153, %v3155
    %v3157 = vrot.slane %v3135, %v3156
    %v3159 = vunpack.c.l.s4 1966171168
    %v3160 = vunpack.c.0.s8 %v3159
    %v3161 = vlaneseq
    %v3162 = vshrl.u32 %v3161, 7
    %v3163 = vsub.s32 %v3160, %v3162
    %v3164 = vrot.slane %v3136, %v3163
    %v3165 = vcombine.high %v3143, %v3143
    %v3166 = vcombine.high %v3150, %v3150
    %v3167 = vcombine.high %v3157, %v3157
    %v3168 = vcombine.high %v3164, %v3164
    %v3177 = vadd.f32 %v3103, %v3143
    %v3178 = vadd.f32 %v3104, %v3157
    %v3179 = vadd.f32 %v3105, %v3165
    %v3180 = vadd.f32 %v3106, %v3167
    %v3181 = vadd.f32 %v3107, %v3150
    %v3182 = vadd.f32 %v3108, %v3164
    %v3183 = vadd.f32 %v3109, %v3166
    %v3184 = vadd.f32 %v3110, %v3168
    %v3185 = vxor.u32 %v3177, 2147483648
    %v3186 = vxor.u32 %v3178, 2147483648
    %v3187 = vxor.u32 %v3179, 2147483648
    %v3188 = vxor.u32 %v3180, 2147483648
    %v3189 = vxor.u32 %v3181, 2147483648
    %v3190 = vxor.u32 %v3182, 2147483648
    %v3191 = vxor.u32 %v3183, 2147483648
    %v3192 = vxor.u32 %v3184, 2147483648
    %v3193 = vmul.f32 %v3185, 1.442695
    %v3194 = vpow.pop %v3193
    %v3195 = vmul.f32 %v3186, 1.442695
    %v3196 = vpow.pop %v3195
    %v3197 = vmul.f32 %v3187, 1.442695
    %v3198 = vpow.pop %v3197
    %v3199 = vmul.f32 %v3188, 1.442695
    %v3200 = vpow.pop %v3199
    %v3201 = vmul.f32 %v3189, 1.442695
    %v3202 = vpow.pop %v3201
    %v3203 = vmul.f32 %v3190, 1.442695
    %v3204 = vpow.pop %v3203
    %v3205 = vmul.f32 %v3191, 1.442695
    %v3206 = vpow.pop %v3205
    %v3207 = vmul.f32 %v3192, 1.442695
    %v3208 = vpow.pop %v3207
    %v3209 = vadd.f32 %v3194, 1.0
    %v3210 = vadd.f32 %v3196, 1.0
    %v3211 = vadd.f32 %v3198, 1.0
    %v3212 = vadd.f32 %v3200, 1.0
    %v3213 = vadd.f32 %v3202, 1.0
    %v3214 = vadd.f32 %v3204, 1.0
    %v3215 = vadd.f32 %v3206, 1.0
    %v3216 = vadd.f32 %v3208, 1.0
    %v3217 = vrcp.pop %v3209
    %v3218 = vmul.f32 1.0, %v3217
    %v3219 = vrcp.pop %v3210
    %v3220 = vmul.f32 1.0, %v3219
    %v3221 = vrcp.pop %v3211
    %v3222 = vmul.f32 1.0, %v3221
    %v3223 = vrcp.pop %v3212
    %v3224 = vmul.f32 1.0, %v3223
    %v3225 = vrcp.pop %v3213
    %v3226 = vmul.f32 1.0, %v3225
    %v3227 = vrcp.pop %v3214
    %v3228 = vmul.f32 1.0, %v3227
    %v3229 = vrcp.pop %v3215
    %v3230 = vmul.f32 1.0, %v3229
    %v3231 = vrcp.pop %v3216
    %v3232 = vmul.f32 1.0, %v3231
    %v3234 = vcombine.high %v2975, %v2975
    %v3236 = vunpack.c.l.s4 1966171168
    %v3237 = vunpack.c.0.s8 %v3236
    %v3238 = vlaneseq
    %v3239 = vshrl.u32 %v3238, 7
    %v3240 = vsub.s32 %v3237, %v3239
    %v3241 = vrot.slane %v2975, %v3240
    %v3243 = vunpack.c.l.s4 1966171168
    %v3244 = vunpack.c.0.s8 %v3243
    %v3245 = vlaneseq
    %v3246 = vshrl.u32 %v3245, 7
    %v3247 = vsub.s32 %v3244, %v3246
    %v3248 = vrot.slane %v3234, %v3247
    %v3249 = vcombine.high %v3241, %v3241
    %v3250 = vcombine.high %v3248, %v3248
    %v3252 = vunpack.c.l.s4 1966171168
    %v3253 = vunpack.c.0.s8 %v3252
    %v3254 = vlaneseq
    %v3255 = vshrl.u32 %v3254, 7
    %v3256 = vsub.s32 %v3253, %v3255
    %v3257 = vrot.slane %v3241, %v3256
    %v3259 = vunpack.c.l.s4 1966171168
    %v3260 = vunpack.c.0.s8 %v3259
    %v3261 = vlaneseq
    %v3262 = vshrl.u32 %v3261, 7
    %v3263 = vsub.s32 %v3260, %v3262
    %v3264 = vrot.slane %v3248, %v3263
    %v3266 = vunpack.c.l.s4 1966171168
    %v3267 = vunpack.c.0.s8 %v3266
    %v3268 = vlaneseq
    %v3269 = vshrl.u32 %v3268, 7
    %v3270 = vsub.s32 %v3267, %v3269
    %v3271 = vrot.slane %v3249, %v3270
    %v3273 = vunpack.c.l.s4 1966171168
    %v3274 = vunpack.c.0.s8 %v3273
    %v3275 = vlaneseq
    %v3276 = vshrl.u32 %v3275, 7
    %v3277 = vsub.s32 %v3274, %v3276
    %v3278 = vrot.slane %v3250, %v3277
    %v3279 = vcombine.high %v3257, %v3257
    %v3280 = vcombine.high %v3264, %v3264
    %v3281 = vcombine.high %v3271, %v3271
    %v3282 = vcombine.high %v3278, %v3278
    %v3291 = vmul.f32 %v3080, %v3257
    %v3292 = vmul.f32 %v3082, %v3271
    %v3293 = vmul.f32 %v3084, %v3279
    %v3294 = vmul.f32 %v3086, %v3281
    %v3295 = vmul.f32 %v3088, %v3264
    %v3296 = vmul.f32 %v3090, %v3278
    %v3297 = vmul.f32 %v3092, %v3280
    %v3298 = vmul.f32 %v3094, %v3282
    %v3299 = vrot.slane %v2890, 2
    %v3300 = vrot.slane %v2891, 2
    %v3301 = vrot.slane %v2892, 2
    %v3302 = vrot.slane %v2893, 2
    %v3303 = vrot.slane %v2894, 2
    %v3304 = vrot.slane %v2895, 2
    %v3305 = vrot.slane %v2896, 2
    %v3306 = vrot.slane %v2897, 2
    %v3315 = vadd.f32 %v3299, %v3291
    %v3316 = vadd.f32 %v3300, %v3292
    %v3317 = vadd.f32 %v3301, %v3293
    %v3318 = vadd.f32 %v3302, %v3294
    %v3319 = vadd.f32 %v3303, %v3295
    %v3320 = vadd.f32 %v3304, %v3296
    %v3321 = vadd.f32 %v3305, %v3297
    %v3322 = vadd.f32 %v3306, %v3298
    %v3323 = vtanh.pop %v3315
    %v3324 = vtanh.pop %v3316
    %v3325 = vtanh.pop %v3317
    %v3326 = vtanh.pop %v3318
    %v3327 = vtanh.pop %v3319
    %v3328 = vtanh.pop %v3320
    %v3329 = vtanh.pop %v3321
    %v3330 = vtanh.pop %v3322
    %v3331 = vsub.f32 1.0, %v3218
    %v3332 = vsub.f32 1.0, %v3220
    %v3333 = vsub.f32 1.0, %v3222
    %v3334 = vsub.f32 1.0, %v3224
    %v3335 = vsub.f32 1.0, %v3226
    %v3336 = vsub.f32 1.0, %v3228
    %v3337 = vsub.f32 1.0, %v3230
    %v3338 = vsub.f32 1.0, %v3232
    %v3339 = vmul.f32 %v3331, %v3323
    %v3340 = vmul.f32 %v3332, %v3324
    %v3341 = vmul.f32 %v3333, %v3325
    %v3342 = vmul.f32 %v3334, %v3326
    %v3343 = vmul.f32 %v3335, %v3327
    %v3344 = vmul.f32 %v3336, %v3328
    %v3345 = vmul.f32 %v3337, %v3329
    %v3346 = vmul.f32 %v3338, %v3330
    %v3347 = vmul.f32 %v3218, %v2109
    %v3348 = vmul.f32 %v3220, %v2123
    %v3349 = vmul.f32 %v3222, %v2131
    %v3350 = vmul.f32 %v3224, %v2133
    %v3351 = vmul.f32 %v3226, %v2116
    %v3352 = vmul.f32 %v3228, %v2130
    %v3353 = vmul.f32 %v3230, %v2132
    %v3354 = vmul.f32 %v3232, %v2134
    %v3355 = vadd.f32 %v3339, %v3347
    %v3356 = vadd.f32 %v3340, %v3348
    %v3357 = vadd.f32 %v3341, %v3349
    %v3358 = vadd.f32 %v3342, %v3350
    %v3359 = vadd.f32 %v3343, %v3351
    %v3360 = vadd.f32 %v3344, %v3352
    %v3361 = vadd.f32 %v3345, %v3353
    %v3362 = vadd.f32 %v3346, %v3354
    %v3363 = vmul.f32 %v1951, %v3355
    %v3364 = vmul.f32 %v1951, %v3356
    %v3365 = vmul.f32 %v1951, %v3357
    %v3366 = vmul.f32 %v1951, %v3358
    %v3367 = vmul.f32 %v1951, %v3359
    %v3368 = vmul.f32 %v1951, %v3360
    %v3369 = vmul.f32 %v1951, %v3361
    %v3370 = vmul.f32 %v1951, %v3362
    %v3379 = vcombine.low %v3363, %v3364
    %v3380 = vcombine.low %v3365, %v3366
    %v3381 = vcombine.low %v3367, %v3368
    %v3382 = vcombine.low %v3369, %v3370
    %v3384 = vunpack.c.l.s4 1966171168
    %v3385 = vunpack.c.0.s8 %v3384
    %v3386 = vlaneseq
    %v3387 = vshrl.u32 %v3386, 7
    %v3388 = vsub.s32 %v3385, %v3387
    %v3389 = vrot.slane %v3379, %v3388
    %v3391 = vunpack.c.l.s4 1966171168
    %v3392 = vunpack.c.0.s8 %v3391
    %v3393 = vlaneseq
    %v3394 = vshrl.u32 %v3393, 7
    %v3395 = vsub.s32 %v3392, %v3394
    %v3396 = vrot.slane %v3380, %v3395
    %v3398 = vunpack.c.l.s4 1966171168
    %v3399 = vunpack.c.0.s8 %v3398
    %v3400 = vlaneseq
    %v3401 = vshrl.u32 %v3400, 7
    %v3402 = vsub.s32 %v3399, %v3401
    %v3403 = vrot.slane %v3381, %v3402
    %v3405 = vunpack.c.l.s4 1966171168
    %v3406 = vunpack.c.0.s8 %v3405
    %v3407 = vlaneseq
    %v3408 = vshrl.u32 %v3407, 7
    %v3409 = vsub.s32 %v3406, %v3408
    %v3410 = vrot.slane %v3382, %v3409
    %v3411 = vcombine.low %v3389, %v3396
    %v3412 = vcombine.low %v3403, %v3410
    %v3414 = vunpack.c.l.s4 1966171168
    %v3415 = vunpack.c.0.s8 %v3414
    %v3416 = vlaneseq
    %v3417 = vshrl.u32 %v3416, 7
    %v3418 = vsub.s32 %v3415, %v3417
    %v3419 = vrot.slane %v3411, %v3418
    %v3421 = vunpack.c.l.s4 1966171168
    %v3422 = vunpack.c.0.s8 %v3421
    %v3423 = vlaneseq
    %v3424 = vshrl.u32 %v3423, 7
    %v3425 = vsub.s32 %v3422, %v3424
    %v3426 = vrot.slane %v3412, %v3425
    %v3427 = vcombine.low %v3419, %v3426
    %v3429 = vadd.f32 %v2980, %v3427
    %v3431 = vcombine.high %v2713, %v2713
    %v3433 = vunpack.c.l.s4 1966171168
    %v3434 = vunpack.c.0.s8 %v3433
    %v3435 = vlaneseq
    %v3436 = vshrl.u32 %v3435, 7
    %v3437 = vsub.s32 %v3434, %v3436
    %v3438 = vrot.slane %v2713, %v3437
    %v3440 = vunpack.c.l.s4 1966171168
    %v3441 = vunpack.c.0.s8 %v3440
    %v3442 = vlaneseq
    %v3443 = vshrl.u32 %v3442, 7
    %v3444 = vsub.s32 %v3441, %v3443
    %v3445 = vrot.slane %v3431, %v3444
    %v3446 = vcombine.high %v3438, %v3438
    %v3447 = vcombine.high %v3445, %v3445
    %v3449 = vunpack.c.l.s4 1966171168
    %v3450 = vunpack.c.0.s8 %v3449
    %v3451 = vlaneseq
    %v3452 = vshrl.u32 %v3451, 7
    %v3453 = vsub.s32 %v3450, %v3452
    %v3454 = vrot.slane %v3438, %v3453
    %v3456 = vunpack.c.l.s4 1966171168
    %v3457 = vunpack.c.0.s8 %v3456
    %v3458 = vlaneseq
    %v3459 = vshrl.u32 %v3458, 7
    %v3460 = vsub.s32 %v3457, %v3459
    %v3461 = vrot.slane %v3445, %v3460
    %v3463 = vunpack.c.l.s4 1966171168
    %v3464 = vunpack.c.0.s8 %v3463
    %v3465 = vlaneseq
    %v3466 = vshrl.u32 %v3465, 7
    %v3467 = vsub.s32 %v3464, %v3466
    %v3468 = vrot.slane %v3446, %v3467
    %v3470 = vunpack.c.l.s4 1966171168
    %v3471 = vunpack.c.0.s8 %v3470
    %v3472 = vlaneseq
    %v3473 = vshrl.u32 %v3472, 7
    %v3474 = vsub.s32 %v3471, %v3473
    %v3475 = vrot.slane %v3447, %v3474
    %v3476 = vcombine.high %v3454, %v3454
    %v3477 = vcombine.high %v3461, %v3461
    %v3478 = vcombine.high %v3468, %v3468
    %v3479 = vcombine.high %v3475, %v3475
    %3488 = vst [vmem:[#allocation14 + $0x1] sm:$0x1] %v3454
    %3489 = vst [vmem:[#allocation14 + $0x11] sm:$0x1] %v3468
    %3490 = vst [vmem:[#allocation14 + $0x21] sm:$0x1] %v3476
    %3491 = vst [vmem:[#allocation14 + $0x31] sm:$0x1] %v3478
    %3492 = vst [vmem:[#allocation14 + $0x41] sm:$0x1] %v3461
    %3493 = vst [vmem:[#allocation14 + $0x51] sm:$0x1] %v3475
    %3494 = vst [vmem:[#allocation14 + $0x61] sm:$0x1] %v3477
    %3495 = vst [vmem:[#allocation14 + $0x71] sm:$0x1] %v3479
    %v3497 = vcombine.high %v3429, %v3429
    %v3499 = vunpack.c.l.s4 1966171168
    %v3500 = vunpack.c.0.s8 %v3499
    %v3501 = vlaneseq
    %v3502 = vshrl.u32 %v3501, 7
    %v3503 = vsub.s32 %v3500, %v3502
    %v3504 = vrot.slane %v3429, %v3503
    %v3506 = vunpack.c.l.s4 1966171168
    %v3507 = vunpack.c.0.s8 %v3506
    %v3508 = vlaneseq
    %v3509 = vshrl.u32 %v3508, 7
    %v3510 = vsub.s32 %v3507, %v3509
    %v3511 = vrot.slane %v3497, %v3510
    %v3512 = vcombine.high %v3504, %v3504
    %v3513 = vcombine.high %v3511, %v3511
    %v3515 = vunpack.c.l.s4 1966171168
    %v3516 = vunpack.c.0.s8 %v3515
    %v3517 = vlaneseq
    %v3518 = vshrl.u32 %v3517, 7
    %v3519 = vsub.s32 %v3516, %v3518
    %v3520 = vrot.slane %v3504, %v3519
    %v3522 = vunpack.c.l.s4 1966171168
    %v3523 = vunpack.c.0.s8 %v3522
    %v3524 = vlaneseq
    %v3525 = vshrl.u32 %v3524, 7
    %v3526 = vsub.s32 %v3523, %v3525
    %v3527 = vrot.slane %v3511, %v3526
    %v3529 = vunpack.c.l.s4 1966171168
    %v3530 = vunpack.c.0.s8 %v3529
    %v3531 = vlaneseq
    %v3532 = vshrl.u32 %v3531, 7
    %v3533 = vsub.s32 %v3530, %v3532
    %v3534 = vrot.slane %v3512, %v3533
    %v3536 = vunpack.c.l.s4 1966171168
    %v3537 = vunpack.c.0.s8 %v3536
    %v3538 = vlaneseq
    %v3539 = vshrl.u32 %v3538, 7
    %v3540 = vsub.s32 %v3537, %v3539
    %v3541 = vrot.slane %v3513, %v3540
    %v3542 = vcombine.high %v3520, %v3520
    %v3543 = vcombine.high %v3527, %v3527
    %v3544 = vcombine.high %v3534, %v3534
    %v3545 = vcombine.high %v3541, %v3541
    %3554 = vst [vmem:[#allocation14 + $0x9] sm:$0x1] %v3520
    %3555 = vst [vmem:[#allocation14 + $0x19] sm:$0x1] %v3534
    %3556 = vst [vmem:[#allocation14 + $0x29] sm:$0x1] %v3542
    %3557 = vst [vmem:[#allocation14 + $0x39] sm:$0x1] %v3544
    %3558 = vst [vmem:[#allocation14 + $0x49] sm:$0x1] %v3527
    %3559 = vst [vmem:[#allocation14 + $0x59] sm:$0x1] %v3541
    %3560 = vst [vmem:[#allocation14 + $0x69] sm:$0x1] %v3543
    %3561 = vst [vmem:[#allocation14 + $0x79] sm:$0x1] %v3545
    %s3562 = scalar_lea.vmem [#allocation8], 2
    %v3563 = vld [vmem:[%s3562] ss:$8 sm:$0xf]
    %v3564 = vld [vmem:[%s3562] ss:$8 sm:$0x30]
    %v3565 = vor.u32 %v3563, %v3564
    %s3566 = scalar_lea.vmem [#allocation8], 50
    %v3567 = vld [vmem:[%s3566] ss:$8 sm:$0xf]
    %v3568 = vld [vmem:[%s3566] ss:$8 sm:$0x30]
    %v3569 = vor.u32 %v3567, %v3568
    %s3570 = scalar_lea.vmem [#allocation8], 98
    %v3571 = vld [vmem:[%s3570] ss:$8 sm:$0xf]
    %v3572 = vld [vmem:[%s3570] ss:$8 sm:$0x30]
    %v3573 = vor.u32 %v3571, %v3572
    %s3574 = scalar_lea.vmem [#allocation8], 146
    %v3575 = vld [vmem:[%s3574] ss:$8 sm:$0xf]
    %v3576 = vld [vmem:[%s3574] ss:$8 sm:$0x30]
    %v3577 = vor.u32 %v3575, %v3576
    %s3578 = scalar_lea.vmem [#allocation8], 194
    %v3579 = vld [vmem:[%s3578] ss:$8 sm:$0xf]
    %v3580 = vld [vmem:[%s3578] ss:$8 sm:$0x30]
    %v3581 = vor.u32 %v3579, %v3580
    %s3582 = scalar_lea.vmem [#allocation8], 242
    %v3583 = vld [vmem:[%s3582] ss:$8 sm:$0xf]
    %v3584 = vld [vmem:[%s3582] ss:$8 sm:$0x30]
    %v3585 = vor.u32 %v3583, %v3584
    %s3586 = scalar_lea.vmem [#allocation8], 290
    %v3587 = vld [vmem:[%s3586] ss:$8 sm:$0xf]
    %v3588 = vld [vmem:[%s3586] ss:$8 sm:$0x30]
    %v3589 = vor.u32 %v3587, %v3588
    %s3590 = scalar_lea.vmem [#allocation8], 338
    %v3591 = vld [vmem:[%s3590] ss:$8 sm:$0xf]
    %v3592 = vld [vmem:[%s3590] ss:$8 sm:$0x30]
    %v3593 = vor.u32 %v3591, %v3592
    %3594 = vmatprep.subr.bf16.mxu0 %v349
    %3595 = vmatpush1.bf16.msra.mxu0 %v348
    %3596 = vmatprep.subr.bf16.mxu0 %v352
    %3597 = vmatpush1.bf16.msra.mxu0 %v351
    %3598 = vmatprep.subr.bf16.mxu0 %v355
    %3599 = vmatpush1.bf16.msra.mxu0 %v354
    %3600 = vmatprep.subr.bf16.mxu0 %v358
    %3601 = vmatpush1.bf16.msra.mxu0 %v357
    %3602 = vmatprep.subr.bf16.mxu0 %v361
    %3603 = vmatpush1.bf16.msra.mxu0 %v360
    %3604 = vmatprep.subr.bf16.mxu0 %v364
    %3605 = vmatpush1.bf16.msra.mxu0 %v363
    %3606 = vmatprep.subr.bf16.mxu0 %v367
    %3607 = vmatpush1.bf16.msra.mxu0 %v366
    %3608 = vmatprep.subr.bf16.mxu0 %v370
    %3609 = vmatpush1.bf16.msra.mxu0 %v369
    %3610 = vmatprep.subr.bf16.mxu0 0
    %3611 = vmatpush1.bf16.msra.mxu0 0
    %3612 = vmatprep.subr.bf16.mxu0 0
    %3613 = vmatpush1.bf16.msra.mxu0 0
    %3614 = vmatprep.subr.bf16.mxu0 0
    %3615 = vmatpush1.bf16.msra.mxu0 0
    %3616 = vmatprep.subr.bf16.mxu0 0
    %3617 = vmatpush1.bf16.msra.mxu0 0
    %3618 = vmatprep.subr.bf16.mxu0 0
    %3619 = vmatpush1.bf16.msra.mxu0 0
    %3620 = vmatprep.subr.bf16.mxu0 0
    %3621 = vmatpush1.bf16.msra.mxu0 0
    %3622 = vmatprep.subr.bf16.mxu0 0
    %3623 = vmatpush1.bf16.msra.mxu0 0
    %3624 = vmatprep.subr.bf16.mxu0 0
    %3625 = vmatpush1.bf16.msra.mxu0 0
    %3626 = vmatprep.mubr.bf16.mxu0 0
    %3627 = vmatmul.mubr.bf16.gmra.mrb[0].mxu0 %v2714
    %v3628 = vpop.f32.mrb[0].mxu0
    %v3629 = vadd.f32 %v205, %v3628
    %v3630 = vpop.f32.mrb[0].mxu0
    %v3631 = vadd.f32 %v209, %v3630
    %v3632 = vpop.f32.mrb[0].mxu0
    %v3633 = vpop.f32.mrb[0].mxu0
    %3634 = vdwg.mxu0
    %3635 = vmatprep.subr.bf16.mxu0 0
    %3636 = vmatpush1.bf16.msra.mxu0 %v350
    %3637 = vmatprep.subr.bf16.mxu0 0
    %3638 = vmatpush1.bf16.msra.mxu0 %v353
    %3639 = vmatprep.subr.bf16.mxu0 0
    %3640 = vmatpush1.bf16.msra.mxu0 %v356
    %3641 = vmatprep.subr.bf16.mxu0 0
    %3642 = vmatpush1.bf16.msra.mxu0 %v359
    %3643 = vmatprep.subr.bf16.mxu0 0
    %3644 = vmatpush1.bf16.msra.mxu0 %v362
    %3645 = vmatprep.subr.bf16.mxu0 0
    %3646 = vmatpush1.bf16.msra.mxu0 %v365
    %3647 = vmatprep.subr.bf16.mxu0 0
    %3648 = vmatpush1.bf16.msra.mxu0 %v368
    %3649 = vmatprep.subr.bf16.mxu0 0
    %3650 = vmatpush1.bf16.msra.mxu0 %v371
    %3651 = vmatprep.subr.bf16.mxu0 0
    %3652 = vmatpush1.bf16.msra.mxu0 0
    %3653 = vmatprep.subr.bf16.mxu0 0
    %3654 = vmatpush1.bf16.msra.mxu0 0
    %3655 = vmatprep.subr.bf16.mxu0 0
    %3656 = vmatpush1.bf16.msra.mxu0 0
    %3657 = vmatprep.subr.bf16.mxu0 0
    %3658 = vmatpush1.bf16.msra.mxu0 0
    %3659 = vmatprep.subr.bf16.mxu0 0
    %3660 = vmatpush1.bf16.msra.mxu0 0
    %3661 = vmatprep.subr.bf16.mxu0 0
    %3662 = vmatpush1.bf16.msra.mxu0 0
    %3663 = vmatprep.subr.bf16.mxu0 0
    %3664 = vmatpush1.bf16.msra.mxu0 0
    %3665 = vmatprep.subr.bf16.mxu0 0
    %3666 = vmatpush1.bf16.msra.mxu0 0
    %3667 = vmatprep.mubr.bf16.mxu0 0
    %3668 = vmatmul.mubr.bf16.gmra.mrb[0].mxu0 %v2714
    %v3669 = vpop.f32.mrb[0].mxu0
    %v3670 = vadd.f32 %v213, %v3669
    %v3671 = vpop.f32.mrb[0].mxu0
    %v3672 = vpop.f32.mrb[0].mxu0
    %v3673 = vpop.f32.mrb[0].mxu0
    %3674 = vdwg.mxu0
    %v3675 = vmul.f32 %v477, %v2713
    %v3677 = vcombine.high %v3629, %v3629
    %v3679 = vunpack.c.l.s4 1966171168
    %v3680 = vunpack.c.0.s8 %v3679
    %v3681 = vlaneseq
    %v3682 = vshrl.u32 %v3681, 7
    %v3683 = vsub.s32 %v3680, %v3682
    %v3684 = vrot.slane %v3629, %v3683
    %v3686 = vunpack.c.l.s4 1966171168
    %v3687 = vunpack.c.0.s8 %v3686
    %v3688 = vlaneseq
    %v3689 = vshrl.u32 %v3688, 7
    %v3690 = vsub.s32 %v3687, %v3689
    %v3691 = vrot.slane %v3677, %v3690
    %v3692 = vcombine.high %v3684, %v3684
    %v3693 = vcombine.high %v3691, %v3691
    %v3695 = vunpack.c.l.s4 1966171168
    %v3696 = vunpack.c.0.s8 %v3695
    %v3697 = vlaneseq
    %v3698 = vshrl.u32 %v3697, 7
    %v3699 = vsub.s32 %v3696, %v3698
    %v3700 = vrot.slane %v3684, %v3699
    %v3702 = vunpack.c.l.s4 1966171168
    %v3703 = vunpack.c.0.s8 %v3702
    %v3704 = vlaneseq
    %v3705 = vshrl.u32 %v3704, 7
    %v3706 = vsub.s32 %v3703, %v3705
    %v3707 = vrot.slane %v3691, %v3706
    %v3709 = vunpack.c.l.s4 1966171168
    %v3710 = vunpack.c.0.s8 %v3709
    %v3711 = vlaneseq
    %v3712 = vshrl.u32 %v3711, 7
    %v3713 = vsub.s32 %v3710, %v3712
    %v3714 = vrot.slane %v3692, %v3713
    %v3716 = vunpack.c.l.s4 1966171168
    %v3717 = vunpack.c.0.s8 %v3716
    %v3718 = vlaneseq
    %v3719 = vshrl.u32 %v3718, 7
    %v3720 = vsub.s32 %v3717, %v3719
    %v3721 = vrot.slane %v3693, %v3720
    %v3722 = vcombine.high %v3700, %v3700
    %v3723 = vcombine.high %v3707, %v3707
    %v3724 = vcombine.high %v3714, %v3714
    %v3725 = vcombine.high %v3721, %v3721
    %v3734 = vadd.f32 %v3565, %v3700
    %v3735 = vadd.f32 %v3569, %v3714
    %v3736 = vadd.f32 %v3573, %v3722
    %v3737 = vadd.f32 %v3577, %v3724
    %v3738 = vadd.f32 %v3581, %v3707
    %v3739 = vadd.f32 %v3585, %v3721
    %v3740 = vadd.f32 %v3589, %v3723
    %v3741 = vadd.f32 %v3593, %v3725
    %v3742 = vxor.u32 %v3734, 2147483648
    %v3743 = vxor.u32 %v3735, 2147483648
    %v3744 = vxor.u32 %v3736, 2147483648
    %v3745 = vxor.u32 %v3737, 2147483648
    %v3746 = vxor.u32 %v3738, 2147483648
    %v3747 = vxor.u32 %v3739, 2147483648
    %v3748 = vxor.u32 %v3740, 2147483648
    %v3749 = vxor.u32 %v3741, 2147483648
    %v3750 = vmul.f32 %v3742, 1.442695
    %v3751 = vpow.pop %v3750
    %v3752 = vmul.f32 %v3743, 1.442695
    %v3753 = vpow.pop %v3752
    %v3754 = vmul.f32 %v3744, 1.442695
    %v3755 = vpow.pop %v3754
    %v3756 = vmul.f32 %v3745, 1.442695
    %v3757 = vpow.pop %v3756
    %v3758 = vmul.f32 %v3746, 1.442695
    %v3759 = vpow.pop %v3758
    %v3760 = vmul.f32 %v3747, 1.442695
    %v3761 = vpow.pop %v3760
    %v3762 = vmul.f32 %v3748, 1.442695
    %v3763 = vpow.pop %v3762
    %v3764 = vmul.f32 %v3749, 1.442695
    %v3765 = vpow.pop %v3764
    %v3766 = vadd.f32 %v3751, 1.0
    %v3767 = vadd.f32 %v3753, 1.0
    %v3768 = vadd.f32 %v3755, 1.0
    %v3769 = vadd.f32 %v3757, 1.0
    %v3770 = vadd.f32 %v3759, 1.0
    %v3771 = vadd.f32 %v3761, 1.0
    %v3772 = vadd.f32 %v3763, 1.0
    %v3773 = vadd.f32 %v3765, 1.0
    %v3774 = vrcp.pop %v3766
    %v3775 = vmul.f32 1.0, %v3774
    %v3776 = vrcp.pop %v3767
    %v3777 = vmul.f32 1.0, %v3776
    %v3778 = vrcp.pop %v3768
    %v3779 = vmul.f32 1.0, %v3778
    %v3780 = vrcp.pop %v3769
    %v3781 = vmul.f32 1.0, %v3780
    %v3782 = vrcp.pop %v3770
    %v3783 = vmul.f32 1.0, %v3782
    %v3784 = vrcp.pop %v3771
    %v3785 = vmul.f32 1.0, %v3784
    %v3786 = vrcp.pop %v3772
    %v3787 = vmul.f32 1.0, %v3786
    %v3788 = vrcp.pop %v3773
    %v3789 = vmul.f32 1.0, %v3788
    %v3798 = vrot.slane %v3565, 1
    %v3799 = vrot.slane %v3569, 1
    %v3800 = vrot.slane %v3573, 1
    %v3801 = vrot.slane %v3577, 1
    %v3802 = vrot.slane %v3581, 1
    %v3803 = vrot.slane %v3585, 1
    %v3804 = vrot.slane %v3589, 1
    %v3805 = vrot.slane %v3593, 1
    %v3815 = vcombine.high %v3631, %v3631
    %v3817 = vunpack.c.l.s4 1966171168
    %v3818 = vunpack.c.0.s8 %v3817
    %v3819 = vlaneseq
    %v3820 = vshrl.u32 %v3819, 7
    %v3821 = vsub.s32 %v3818, %v3820
    %v3822 = vrot.slane %v3631, %v3821
    %v3824 = vunpack.c.l.s4 1966171168
    %v3825 = vunpack.c.0.s8 %v3824
    %v3826 = vlaneseq
    %v3827 = vshrl.u32 %v3826, 7
    %v3828 = vsub.s32 %v3825, %v3827
    %v3829 = vrot.slane %v3815, %v3828
    %v3830 = vcombine.high %v3822, %v3822
    %v3831 = vcombine.high %v3829, %v3829
    %v3833 = vunpack.c.l.s4 1966171168
    %v3834 = vunpack.c.0.s8 %v3833
    %v3835 = vlaneseq
    %v3836 = vshrl.u32 %v3835, 7
    %v3837 = vsub.s32 %v3834, %v3836
    %v3838 = vrot.slane %v3822, %v3837
    %v3840 = vunpack.c.l.s4 1966171168
    %v3841 = vunpack.c.0.s8 %v3840
    %v3842 = vlaneseq
    %v3843 = vshrl.u32 %v3842, 7
    %v3844 = vsub.s32 %v3841, %v3843
    %v3845 = vrot.slane %v3829, %v3844
    %v3847 = vunpack.c.l.s4 1966171168
    %v3848 = vunpack.c.0.s8 %v3847
    %v3849 = vlaneseq
    %v3850 = vshrl.u32 %v3849, 7
    %v3851 = vsub.s32 %v3848, %v3850
    %v3852 = vrot.slane %v3830, %v3851
    %v3854 = vunpack.c.l.s4 1966171168
    %v3855 = vunpack.c.0.s8 %v3854
    %v3856 = vlaneseq
    %v3857 = vshrl.u32 %v3856, 7
    %v3858 = vsub.s32 %v3855, %v3857
    %v3859 = vrot.slane %v3831, %v3858
    %v3860 = vcombine.high %v3838, %v3838
    %v3861 = vcombine.high %v3845, %v3845
    %v3862 = vcombine.high %v3852, %v3852
    %v3863 = vcombine.high %v3859, %v3859
    %v3872 = vadd.f32 %v3798, %v3838
    %v3873 = vadd.f32 %v3799, %v3852
    %v3874 = vadd.f32 %v3800, %v3860
    %v3875 = vadd.f32 %v3801, %v3862
    %v3876 = vadd.f32 %v3802, %v3845
    %v3877 = vadd.f32 %v3803, %v3859
    %v3878 = vadd.f32 %v3804, %v3861
    %v3879 = vadd.f32 %v3805, %v3863
    %v3880 = vxor.u32 %v3872, 2147483648
    %v3881 = vxor.u32 %v3873, 2147483648
    %v3882 = vxor.u32 %v3874, 2147483648
    %v3883 = vxor.u32 %v3875, 2147483648
    %v3884 = vxor.u32 %v3876, 2147483648
    %v3885 = vxor.u32 %v3877, 2147483648
    %v3886 = vxor.u32 %v3878, 2147483648
    %v3887 = vxor.u32 %v3879, 2147483648
    %v3888 = vmul.f32 %v3880, 1.442695
    %v3889 = vpow.pop %v3888
    %v3890 = vmul.f32 %v3881, 1.442695
    %v3891 = vpow.pop %v3890
    %v3892 = vmul.f32 %v3882, 1.442695
    %v3893 = vpow.pop %v3892
    %v3894 = vmul.f32 %v3883, 1.442695
    %v3895 = vpow.pop %v3894
    %v3896 = vmul.f32 %v3884, 1.442695
    %v3897 = vpow.pop %v3896
    %v3898 = vmul.f32 %v3885, 1.442695
    %v3899 = vpow.pop %v3898
    %v3900 = vmul.f32 %v3886, 1.442695
    %v3901 = vpow.pop %v3900
    %v3902 = vmul.f32 %v3887, 1.442695
    %v3903 = vpow.pop %v3902
    %v3904 = vadd.f32 %v3889, 1.0
    %v3905 = vadd.f32 %v3891, 1.0
    %v3906 = vadd.f32 %v3893, 1.0
    %v3907 = vadd.f32 %v3895, 1.0
    %v3908 = vadd.f32 %v3897, 1.0
    %v3909 = vadd.f32 %v3899, 1.0
    %v3910 = vadd.f32 %v3901, 1.0
    %v3911 = vadd.f32 %v3903, 1.0
    %v3912 = vrcp.pop %v3904
    %v3913 = vmul.f32 1.0, %v3912
    %v3914 = vrcp.pop %v3905
    %v3915 = vmul.f32 1.0, %v3914
    %v3916 = vrcp.pop %v3906
    %v3917 = vmul.f32 1.0, %v3916
    %v3918 = vrcp.pop %v3907
    %v3919 = vmul.f32 1.0, %v3918
    %v3920 = vrcp.pop %v3908
    %v3921 = vmul.f32 1.0, %v3920
    %v3922 = vrcp.pop %v3909
    %v3923 = vmul.f32 1.0, %v3922
    %v3924 = vrcp.pop %v3910
    %v3925 = vmul.f32 1.0, %v3924
    %v3926 = vrcp.pop %v3911
    %v3927 = vmul.f32 1.0, %v3926
    %v3929 = vcombine.high %v3670, %v3670
    %v3931 = vunpack.c.l.s4 1966171168
    %v3932 = vunpack.c.0.s8 %v3931
    %v3933 = vlaneseq
    %v3934 = vshrl.u32 %v3933, 7
    %v3935 = vsub.s32 %v3932, %v3934
    %v3936 = vrot.slane %v3670, %v3935
    %v3938 = vunpack.c.l.s4 1966171168
    %v3939 = vunpack.c.0.s8 %v3938
    %v3940 = vlaneseq
    %v3941 = vshrl.u32 %v3940, 7
    %v3942 = vsub.s32 %v3939, %v3941
    %v3943 = vrot.slane %v3929, %v3942
    %v3944 = vcombine.high %v3936, %v3936
    %v3945 = vcombine.high %v3943, %v3943
    %v3947 = vunpack.c.l.s4 1966171168
    %v3948 = vunpack.c.0.s8 %v3947
    %v3949 = vlaneseq
    %v3950 = vshrl.u32 %v3949, 7
    %v3951 = vsub.s32 %v3948, %v3950
    %v3952 = vrot.slane %v3936, %v3951
    %v3954 = vunpack.c.l.s4 1966171168
    %v3955 = vunpack.c.0.s8 %v3954
    %v3956 = vlaneseq
    %v3957 = vshrl.u32 %v3956, 7
    %v3958 = vsub.s32 %v3955, %v3957
    %v3959 = vrot.slane %v3943, %v3958
    %v3961 = vunpack.c.l.s4 1966171168
    %v3962 = vunpack.c.0.s8 %v3961
    %v3963 = vlaneseq
    %v3964 = vshrl.u32 %v3963, 7
    %v3965 = vsub.s32 %v3962, %v3964
    %v3966 = vrot.slane %v3944, %v3965
    %v3968 = vunpack.c.l.s4 1966171168
    %v3969 = vunpack.c.0.s8 %v3968
    %v3970 = vlaneseq
    %v3971 = vshrl.u32 %v3970, 7
    %v3972 = vsub.s32 %v3969, %v3971
    %v3973 = vrot.slane %v3945, %v3972
    %v3974 = vcombine.high %v3952, %v3952
    %v3975 = vcombine.high %v3959, %v3959
    %v3976 = vcombine.high %v3966, %v3966
    %v3977 = vcombine.high %v3973, %v3973
    %v3986 = vmul.f32 %v3775, %v3952
    %v3987 = vmul.f32 %v3777, %v3966
    %v3988 = vmul.f32 %v3779, %v3974
    %v3989 = vmul.f32 %v3781, %v3976
    %v3990 = vmul.f32 %v3783, %v3959
    %v3991 = vmul.f32 %v3785, %v3973
    %v3992 = vmul.f32 %v3787, %v3975
    %v3993 = vmul.f32 %v3789, %v3977
    %v3994 = vrot.slane %v3565, 2
    %v3995 = vrot.slane %v3569, 2
    %v3996 = vrot.slane %v3573, 2
    %v3997 = vrot.slane %v3577, 2
    %v3998 = vrot.slane %v3581, 2
    %v3999 = vrot.slane %v3585, 2
    %v4000 = vrot.slane %v3589, 2
    %v4001 = vrot.slane %v3593, 2
    %v4010 = vadd.f32 %v3994, %v3986
    %v4011 = vadd.f32 %v3995, %v3987
    %v4012 = vadd.f32 %v3996, %v3988
    %v4013 = vadd.f32 %v3997, %v3989
    %v4014 = vadd.f32 %v3998, %v3990
    %v4015 = vadd.f32 %v3999, %v3991
    %v4016 = vadd.f32 %v4000, %v3992
    %v4017 = vadd.f32 %v4001, %v3993
    %v4018 = vtanh.pop %v4010
    %v4019 = vtanh.pop %v4011
    %v4020 = vtanh.pop %v4012
    %v4021 = vtanh.pop %v4013
    %v4022 = vtanh.pop %v4014
    %v4023 = vtanh.pop %v4015
    %v4024 = vtanh.pop %v4016
    %v4025 = vtanh.pop %v4017
    %v4026 = vsub.f32 1.0, %v3913
    %v4027 = vsub.f32 1.0, %v3915
    %v4028 = vsub.f32 1.0, %v3917
    %v4029 = vsub.f32 1.0, %v3919
    %v4030 = vsub.f32 1.0, %v3921
    %v4031 = vsub.f32 1.0, %v3923
    %v4032 = vsub.f32 1.0, %v3925
    %v4033 = vsub.f32 1.0, %v3927
    %v4034 = vmul.f32 %v4026, %v4018
    %v4035 = vmul.f32 %v4027, %v4019
    %v4036 = vmul.f32 %v4028, %v4020
    %v4037 = vmul.f32 %v4029, %v4021
    %v4038 = vmul.f32 %v4030, %v4022
    %v4039 = vmul.f32 %v4031, %v4023
    %v4040 = vmul.f32 %v4032, %v4024
    %v4041 = vmul.f32 %v4033, %v4025
    %v4042 = vmul.f32 %v3913, %v3454
    %v4043 = vmul.f32 %v3915, %v3468
    %v4044 = vmul.f32 %v3917, %v3476
    %v4045 = vmul.f32 %v3919, %v3478
    %v4046 = vmul.f32 %v3921, %v3461
    %v4047 = vmul.f32 %v3923, %v3475
    %v4048 = vmul.f32 %v3925, %v3477
    %v4049 = vmul.f32 %v3927, %v3479
    %v4050 = vadd.f32 %v4034, %v4042
    %v4051 = vadd.f32 %v4035, %v4043
    %v4052 = vadd.f32 %v4036, %v4044
    %v4053 = vadd.f32 %v4037, %v4045
    %v4054 = vadd.f32 %v4038, %v4046
    %v4055 = vadd.f32 %v4039, %v4047
    %v4056 = vadd.f32 %v4040, %v4048
    %v4057 = vadd.f32 %v4041, %v4049
    %v4058 = vmul.f32 %v919, %v4050
    %v4059 = vmul.f32 %v919, %v4051
    %v4060 = vmul.f32 %v919, %v4052
    %v4061 = vmul.f32 %v919, %v4053
    %v4062 = vmul.f32 %v919, %v4054
    %v4063 = vmul.f32 %v919, %v4055
    %v4064 = vmul.f32 %v919, %v4056
    %v4065 = vmul.f32 %v919, %v4057
    %v4074 = vcombine.low %v4058, %v4059
    %v4075 = vcombine.low %v4060, %v4061
    %v4076 = vcombine.low %v4062, %v4063
    %v4077 = vcombine.low %v4064, %v4065
    %v4079 = vunpack.c.l.s4 1966171168
    %v4080 = vunpack.c.0.s8 %v4079
    %v4081 = vlaneseq
    %v4082 = vshrl.u32 %v4081, 7
    %v4083 = vsub.s32 %v4080, %v4082
    %v4084 = vrot.slane %v4074, %v4083
    %v4086 = vunpack.c.l.s4 1966171168
    %v4087 = vunpack.c.0.s8 %v4086
    %v4088 = vlaneseq
    %v4089 = vshrl.u32 %v4088, 7
    %v4090 = vsub.s32 %v4087, %v4089
    %v4091 = vrot.slane %v4075, %v4090
    %v4093 = vunpack.c.l.s4 1966171168
    %v4094 = vunpack.c.0.s8 %v4093
    %v4095 = vlaneseq
    %v4096 = vshrl.u32 %v4095, 7
    %v4097 = vsub.s32 %v4094, %v4096
    %v4098 = vrot.slane %v4076, %v4097
    %v4100 = vunpack.c.l.s4 1966171168
    %v4101 = vunpack.c.0.s8 %v4100
    %v4102 = vlaneseq
    %v4103 = vshrl.u32 %v4102, 7
    %v4104 = vsub.s32 %v4101, %v4103
    %v4105 = vrot.slane %v4077, %v4104
    %v4106 = vcombine.low %v4084, %v4091
    %v4107 = vcombine.low %v4098, %v4105
    %v4109 = vunpack.c.l.s4 1966171168
    %v4110 = vunpack.c.0.s8 %v4109
    %v4111 = vlaneseq
    %v4112 = vshrl.u32 %v4111, 7
    %v4113 = vsub.s32 %v4110, %v4112
    %v4114 = vrot.slane %v4106, %v4113
    %v4116 = vunpack.c.l.s4 1966171168
    %v4117 = vunpack.c.0.s8 %v4116
    %v4118 = vlaneseq
    %v4119 = vshrl.u32 %v4118, 7
    %v4120 = vsub.s32 %v4117, %v4119
    %v4121 = vrot.slane %v4107, %v4120
    %v4122 = vcombine.low %v4114, %v4121
    %v4124 = vadd.f32 %v3675, %v4122
    %v4125 = vpack.c.bf16 %v4124, %v4124
    %4126 = vmatprep.subr.bf16.mxu0 %v1069
    %4127 = vmatpush1.bf16.msra.mxu0 %v1068
    %4128 = vmatprep.subr.bf16.mxu0 %v1072
    %4129 = vmatpush1.bf16.msra.mxu0 %v1071
    %4130 = vmatprep.subr.bf16.mxu0 %v1075
    %4131 = vmatpush1.bf16.msra.mxu0 %v1074
    %4132 = vmatprep.subr.bf16.mxu0 %v1078
    %4133 = vmatpush1.bf16.msra.mxu0 %v1077
    %4134 = vmatprep.subr.bf16.mxu0 %v1081
    %4135 = vmatpush1.bf16.msra.mxu0 %v1080
    %4136 = vmatprep.subr.bf16.mxu0 %v1084
    %4137 = vmatpush1.bf16.msra.mxu0 %v1083
    %4138 = vmatprep.subr.bf16.mxu0 %v1087
    %4139 = vmatpush1.bf16.msra.mxu0 %v1086
    %4140 = vmatprep.subr.bf16.mxu0 %v1090
    %4141 = vmatpush1.bf16.msra.mxu0 %v1089
    %4142 = vmatprep.subr.bf16.mxu0 0
    %4143 = vmatpush1.bf16.msra.mxu0 0
    %4144 = vmatprep.subr.bf16.mxu0 0
    %4145 = vmatpush1.bf16.msra.mxu0 0
    %4146 = vmatprep.subr.bf16.mxu0 0
    %4147 = vmatpush1.bf16.msra.mxu0 0
    %4148 = vmatprep.subr.bf16.mxu0 0
    %4149 = vmatpush1.bf16.msra.mxu0 0
    %4150 = vmatprep.subr.bf16.mxu0 0
    %4151 = vmatpush1.bf16.msra.mxu0 0
    %4152 = vmatprep.subr.bf16.mxu0 0
    %4153 = vmatpush1.bf16.msra.mxu0 0
    %4154 = vmatprep.subr.bf16.mxu0 0
    %4155 = vmatpush1.bf16.msra.mxu0 0
    %4156 = vmatprep.subr.bf16.mxu0 0
    %4157 = vmatpush1.bf16.msra.mxu0 0
    %4158 = vmatprep.mubr.bf16.mxu0 0
    %4159 = vmatmul.mubr.bf16.gmra.mrb[0].mxu0 %v4125
    %v4160 = vpop.f32.mrb[0].mxu0
    %v4161 = vadd.f32 0.0, %v4160
    %v4162 = vpop.f32.mrb[0].mxu0
    %v4163 = vadd.f32 0.0, %v4162
    %v4164 = vpop.f32.mrb[0].mxu0
    %v4165 = vpop.f32.mrb[0].mxu0
    %4166 = vdwg.mxu0
    %4167 = vmatprep.subr.bf16.mxu0 0
    %4168 = vmatpush1.bf16.msra.mxu0 %v1070
    %4169 = vmatprep.subr.bf16.mxu0 0
    %4170 = vmatpush1.bf16.msra.mxu0 %v1073
    %4171 = vmatprep.subr.bf16.mxu0 0
    %4172 = vmatpush1.bf16.msra.mxu0 %v1076
    %4173 = vmatprep.subr.bf16.mxu0 0
    %4174 = vmatpush1.bf16.msra.mxu0 %v1079
    %4175 = vmatprep.subr.bf16.mxu0 0
    %4176 = vmatpush1.bf16.msra.mxu0 %v1082
    %4177 = vmatprep.subr.bf16.mxu0 0
    %4178 = vmatpush1.bf16.msra.mxu0 %v1085
    %4179 = vmatprep.subr.bf16.mxu0 0
    %4180 = vmatpush1.bf16.msra.mxu0 %v1088
    %4181 = vmatprep.subr.bf16.mxu0 0
    %4182 = vmatpush1.bf16.msra.mxu0 %v1091
    %4183 = vmatprep.subr.bf16.mxu0 0
    %4184 = vmatpush1.bf16.msra.mxu0 0
    %4185 = vmatprep.subr.bf16.mxu0 0
    %4186 = vmatpush1.bf16.msra.mxu0 0
    %4187 = vmatprep.subr.bf16.mxu0 0
    %4188 = vmatpush1.bf16.msra.mxu0 0
    %4189 = vmatprep.subr.bf16.mxu0 0
    %4190 = vmatpush1.bf16.msra.mxu0 0
    %4191 = vmatprep.subr.bf16.mxu0 0
    %4192 = vmatpush1.bf16.msra.mxu0 0
    %4193 = vmatprep.subr.bf16.mxu0 0
    %4194 = vmatpush1.bf16.msra.mxu0 0
    %4195 = vmatprep.subr.bf16.mxu0 0
    %4196 = vmatpush1.bf16.msra.mxu0 0
    %4197 = vmatprep.subr.bf16.mxu0 0
    %4198 = vmatpush1.bf16.msra.mxu0 0
    %4199 = vmatprep.mubr.bf16.mxu0 0
    %4200 = vmatmul.mubr.bf16.gmra.mrb[0].mxu0 %v4125
    %v4201 = vpop.f32.mrb[0].mxu0
    %v4202 = vadd.f32 0.0, %v4201
    %v4203 = vpop.f32.mrb[0].mxu0
    %v4204 = vpop.f32.mrb[0].mxu0
    %v4205 = vpop.f32.mrb[0].mxu0
    %4206 = vdwg.mxu0
    %v4207 = vrot.slane %v3565, 3
    %v4208 = vrot.slane %v3569, 3
    %v4209 = vrot.slane %v3573, 3
    %v4210 = vrot.slane %v3577, 3
    %v4211 = vrot.slane %v3581, 3
    %v4212 = vrot.slane %v3585, 3
    %v4213 = vrot.slane %v3589, 3
    %v4214 = vrot.slane %v3593, 3
    %v4226 = vcombine.low %v4161, %v4163
    %v4227 = vcombine.high %v4161, %v4163
    %v4228 = vcombine.high %v4202, %v4202
    %v4230 = vunpack.c.l.s4 1966171168
    %v4231 = vunpack.c.0.s8 %v4230
    %v4232 = vlaneseq
    %v4233 = vshrl.u32 %v4232, 7
    %v4234 = vsub.s32 %v4231, %v4233
    %v4235 = vrot.slane %v4226, %v4234
    %v4237 = vunpack.c.l.s4 1966171168
    %v4238 = vunpack.c.0.s8 %v4237
    %v4239 = vlaneseq
    %v4240 = vshrl.u32 %v4239, 7
    %v4241 = vsub.s32 %v4238, %v4240
    %v4242 = vrot.slane %v4227, %v4241
    %v4244 = vunpack.c.l.s4 1966171168
    %v4245 = vunpack.c.0.s8 %v4244
    %v4246 = vlaneseq
    %v4247 = vshrl.u32 %v4246, 7
    %v4248 = vsub.s32 %v4245, %v4247
    %v4249 = vrot.slane %v4202, %v4248
    %v4251 = vunpack.c.l.s4 1966171168
    %v4252 = vunpack.c.0.s8 %v4251
    %v4253 = vlaneseq
    %v4254 = vshrl.u32 %v4253, 7
    %v4255 = vsub.s32 %v4252, %v4254
    %v4256 = vrot.slane %v4228, %v4255
    %v4257 = vcombine.low %v4235, %v4249
    %v4258 = vcombine.high %v4235, %v4249
    %v4259 = vcombine.low %v4242, %v4256
    %v4260 = vcombine.high %v4242, %v4256
    %v4262 = vunpack.c.l.s4 1966171168
    %v4263 = vunpack.c.0.s8 %v4262
    %v4264 = vlaneseq
    %v4265 = vshrl.u32 %v4264, 7
    %v4266 = vsub.s32 %v4263, %v4265
    %v4267 = vrot.slane %v4257, %v4266
    %v4269 = vunpack.c.l.s4 1966171168
    %v4270 = vunpack.c.0.s8 %v4269
    %v4271 = vlaneseq
    %v4272 = vshrl.u32 %v4271, 7
    %v4273 = vsub.s32 %v4270, %v4272
    %v4274 = vrot.slane %v4259, %v4273
    %v4276 = vunpack.c.l.s4 1966171168
    %v4277 = vunpack.c.0.s8 %v4276
    %v4278 = vlaneseq
    %v4279 = vshrl.u32 %v4278, 7
    %v4280 = vsub.s32 %v4277, %v4279
    %v4281 = vrot.slane %v4258, %v4280
    %v4283 = vunpack.c.l.s4 1966171168
    %v4284 = vunpack.c.0.s8 %v4283
    %v4285 = vlaneseq
    %v4286 = vshrl.u32 %v4285, 7
    %v4287 = vsub.s32 %v4284, %v4286
    %v4288 = vrot.slane %v4260, %v4287
    %v4289 = vcombine.high %v4267, %v4267
    %v4290 = vcombine.high %v4274, %v4274
    %v4291 = vcombine.high %v4281, %v4281
    %v4292 = vcombine.high %v4288, %v4288
    %v4301 = vadd.f32 %v4207, %v4267
    %v4302 = vadd.f32 %v4208, %v4281
    %v4303 = vadd.f32 %v4209, %v4289
    %v4304 = vadd.f32 %v4210, %v4291
    %v4305 = vadd.f32 %v4211, %v4274
    %v4306 = vadd.f32 %v4212, %v4288
    %v4307 = vadd.f32 %v4213, %v4290
    %v4308 = vadd.f32 %v4214, %v4292
    %v4309 = vpack.c.bf16 %v3429, %v3429
    %4310 = vmatprep.subr.bf16.mxu0 %v1381
    %4311 = vmatpush1.bf16.msra.mxu0 %v1380
    %4312 = vmatprep.subr.bf16.mxu0 %v1384
    %4313 = vmatpush1.bf16.msra.mxu0 %v1383
    %4314 = vmatprep.subr.bf16.mxu0 %v1387
    %4315 = vmatpush1.bf16.msra.mxu0 %v1386
    %4316 = vmatprep.subr.bf16.mxu0 %v1390
    %4317 = vmatpush1.bf16.msra.mxu0 %v1389
    %4318 = vmatprep.subr.bf16.mxu0 %v1393
    %4319 = vmatpush1.bf16.msra.mxu0 %v1392
    %4320 = vmatprep.subr.bf16.mxu0 %v1396
    %4321 = vmatpush1.bf16.msra.mxu0 %v1395
    %4322 = vmatprep.subr.bf16.mxu0 %v1399
    %4323 = vmatpush1.bf16.msra.mxu0 %v1398
    %4324 = vmatprep.subr.bf16.mxu0 %v1402
    %4325 = vmatpush1.bf16.msra.mxu0 %v1401
    %4326 = vmatprep.subr.bf16.mxu0 0
    %4327 = vmatpush1.bf16.msra.mxu0 0
    %4328 = vmatprep.subr.bf16.mxu0 0
    %4329 = vmatpush1.bf16.msra.mxu0 0
    %4330 = vmatprep.subr.bf16.mxu0 0
    %4331 = vmatpush1.bf16.msra.mxu0 0
    %4332 = vmatprep.subr.bf16.mxu0 0
    %4333 = vmatpush1.bf16.msra.mxu0 0
    %4334 = vmatprep.subr.bf16.mxu0 0
    %4335 = vmatpush1.bf16.msra.mxu0 0
    %4336 = vmatprep.subr.bf16.mxu0 0
    %4337 = vmatpush1.bf16.msra.mxu0 0
    %4338 = vmatprep.subr.bf16.mxu0 0
    %4339 = vmatpush1.bf16.msra.mxu0 0
    %4340 = vmatprep.subr.bf16.mxu0 0
    %4341 = vmatpush1.bf16.msra.mxu0 0
    %4342 = vmatprep.mubr.bf16.mxu0 0
    %4343 = vmatmul.mubr.bf16.gmra.mrb[0].mxu0 %v4309
    %v4344 = vpop.f32.mrb[0].mxu0
    %v4345 = vadd.f32 %v222, %v4344
    %v4346 = vpop.f32.mrb[0].mxu0
    %v4347 = vadd.f32 %v226, %v4346
    %v4348 = vpop.f32.mrb[0].mxu0
    %v4349 = vpop.f32.mrb[0].mxu0
    %4350 = vdwg.mxu0
    %4351 = vmatprep.subr.bf16.mxu0 0
    %4352 = vmatpush1.bf16.msra.mxu0 %v1382
    %4353 = vmatprep.subr.bf16.mxu0 0
    %4354 = vmatpush1.bf16.msra.mxu0 %v1385
    %4355 = vmatprep.subr.bf16.mxu0 0
    %4356 = vmatpush1.bf16.msra.mxu0 %v1388
    %4357 = vmatprep.subr.bf16.mxu0 0
    %4358 = vmatpush1.bf16.msra.mxu0 %v1391
    %4359 = vmatprep.subr.bf16.mxu0 0
    %4360 = vmatpush1.bf16.msra.mxu0 %v1394
    %4361 = vmatprep.subr.bf16.mxu0 0
    %4362 = vmatpush1.bf16.msra.mxu0 %v1397
    %4363 = vmatprep.subr.bf16.mxu0 0
    %4364 = vmatpush1.bf16.msra.mxu0 %v1400
    %4365 = vmatprep.subr.bf16.mxu0 0
    %4366 = vmatpush1.bf16.msra.mxu0 %v1403
    %4367 = vmatprep.subr.bf16.mxu0 0
    %4368 = vmatpush1.bf16.msra.mxu0 0
    %4369 = vmatprep.subr.bf16.mxu0 0
    %4370 = vmatpush1.bf16.msra.mxu0 0
    %4371 = vmatprep.subr.bf16.mxu0 0
    %4372 = vmatpush1.bf16.msra.mxu0 0
    %4373 = vmatprep.subr.bf16.mxu0 0
    %4374 = vmatpush1.bf16.msra.mxu0 0
    %4375 = vmatprep.subr.bf16.mxu0 0
    %4376 = vmatpush1.bf16.msra.mxu0 0
    %4377 = vmatprep.subr.bf16.mxu0 0
    %4378 = vmatpush1.bf16.msra.mxu0 0
    %4379 = vmatprep.subr.bf16.mxu0 0
    %4380 = vmatpush1.bf16.msra.mxu0 0
    %4381 = vmatprep.subr.bf16.mxu0 0
    %4382 = vmatpush1.bf16.msra.mxu0 0
    %4383 = vmatprep.mubr.bf16.mxu0 0
    %4384 = vmatmul.mubr.bf16.gmra.mrb[0].mxu0 %v4309
    %v4385 = vpop.f32.mrb[0].mxu0
    %v4386 = vadd.f32 %v230, %v4385
    %v4387 = vpop.f32.mrb[0].mxu0
    %v4388 = vpop.f32.mrb[0].mxu0
    %v4389 = vpop.f32.mrb[0].mxu0
    %4390 = vdwg.mxu0
    %v4391 = vmul.f32 %v1509, %v3429
    %v4393 = vcombine.high %v4345, %v4345
    %v4395 = vunpack.c.l.s4 1966171168
    %v4396 = vunpack.c.0.s8 %v4395
    %v4397 = vlaneseq
    %v4398 = vshrl.u32 %v4397, 7
    %v4399 = vsub.s32 %v4396, %v4398
    %v4400 = vrot.slane %v4345, %v4399
    %v4402 = vunpack.c.l.s4 1966171168
    %v4403 = vunpack.c.0.s8 %v4402
    %v4404 = vlaneseq
    %v4405 = vshrl.u32 %v4404, 7
    %v4406 = vsub.s32 %v4403, %v4405
    %v4407 = vrot.slane %v4393, %v4406
    %v4408 = vcombine.high %v4400, %v4400
    %v4409 = vcombine.high %v4407, %v4407
    %v4411 = vunpack.c.l.s4 1966171168
    %v4412 = vunpack.c.0.s8 %v4411
    %v4413 = vlaneseq
    %v4414 = vshrl.u32 %v4413, 7
    %v4415 = vsub.s32 %v4412, %v4414
    %v4416 = vrot.slane %v4400, %v4415
    %v4418 = vunpack.c.l.s4 1966171168
    %v4419 = vunpack.c.0.s8 %v4418
    %v4420 = vlaneseq
    %v4421 = vshrl.u32 %v4420, 7
    %v4422 = vsub.s32 %v4419, %v4421
    %v4423 = vrot.slane %v4407, %v4422
    %v4425 = vunpack.c.l.s4 1966171168
    %v4426 = vunpack.c.0.s8 %v4425
    %v4427 = vlaneseq
    %v4428 = vshrl.u32 %v4427, 7
    %v4429 = vsub.s32 %v4426, %v4428
    %v4430 = vrot.slane %v4408, %v4429
    %v4432 = vunpack.c.l.s4 1966171168
    %v4433 = vunpack.c.0.s8 %v4432
    %v4434 = vlaneseq
    %v4435 = vshrl.u32 %v4434, 7
    %v4436 = vsub.s32 %v4433, %v4435
    %v4437 = vrot.slane %v4409, %v4436
    %v4438 = vcombine.high %v4416, %v4416
    %v4439 = vcombine.high %v4423, %v4423
    %v4440 = vcombine.high %v4430, %v4430
    %v4441 = vcombine.high %v4437, %v4437
    %v4450 = vadd.f32 %v4301, %v4416
    %v4451 = vadd.f32 %v4302, %v4430
    %v4452 = vadd.f32 %v4303, %v4438
    %v4453 = vadd.f32 %v4304, %v4440
    %v4454 = vadd.f32 %v4305, %v4423
    %v4455 = vadd.f32 %v4306, %v4437
    %v4456 = vadd.f32 %v4307, %v4439
    %v4457 = vadd.f32 %v4308, %v4441
    %v4458 = vxor.u32 %v4450, 2147483648
    %v4459 = vxor.u32 %v4451, 2147483648
    %v4460 = vxor.u32 %v4452, 2147483648
    %v4461 = vxor.u32 %v4453, 2147483648
    %v4462 = vxor.u32 %v4454, 2147483648
    %v4463 = vxor.u32 %v4455, 2147483648
    %v4464 = vxor.u32 %v4456, 2147483648
    %v4465 = vxor.u32 %v4457, 2147483648
    %v4466 = vmul.f32 %v4458, 1.442695
    %v4467 = vpow.pop %v4466
    %v4468 = vmul.f32 %v4459, 1.442695
    %v4469 = vpow.pop %v4468
    %v4470 = vmul.f32 %v4460, 1.442695
    %v4471 = vpow.pop %v4470
    %v4472 = vmul.f32 %v4461, 1.442695
    %v4473 = vpow.pop %v4472
    %v4474 = vmul.f32 %v4462, 1.442695
    %v4475 = vpow.pop %v4474
    %v4476 = vmul.f32 %v4463, 1.442695
    %v4477 = vpow.pop %v4476
    %v4478 = vmul.f32 %v4464, 1.442695
    %v4479 = vpow.pop %v4478
    %v4480 = vmul.f32 %v4465, 1.442695
    %v4481 = vpow.pop %v4480
    %v4482 = vadd.f32 %v4467, 1.0
    %v4483 = vadd.f32 %v4469, 1.0
    %v4484 = vadd.f32 %v4471, 1.0
    %v4485 = vadd.f32 %v4473, 1.0
    %v4486 = vadd.f32 %v4475, 1.0
    %v4487 = vadd.f32 %v4477, 1.0
    %v4488 = vadd.f32 %v4479, 1.0
    %v4489 = vadd.f32 %v4481, 1.0
    %v4490 = vrcp.pop %v4482
    %v4491 = vmul.f32 1.0, %v4490
    %v4492 = vrcp.pop %v4483
    %v4493 = vmul.f32 1.0, %v4492
    %v4494 = vrcp.pop %v4484
    %v4495 = vmul.f32 1.0, %v4494
    %v4496 = vrcp.pop %v4485
    %v4497 = vmul.f32 1.0, %v4496
    %v4498 = vrcp.pop %v4486
    %v4499 = vmul.f32 1.0, %v4498
    %v4500 = vrcp.pop %v4487
    %v4501 = vmul.f32 1.0, %v4500
    %v4502 = vrcp.pop %v4488
    %v4503 = vmul.f32 1.0, %v4502
    %v4504 = vrcp.pop %v4489
    %v4505 = vmul.f32 1.0, %v4504
    %v4514 = vrot.slane %v4301, 1
    %v4515 = vrot.slane %v4302, 1
    %v4516 = vrot.slane %v4303, 1
    %v4517 = vrot.slane %v4304, 1
    %v4518 = vrot.slane %v4305, 1
    %v4519 = vrot.slane %v4306, 1
    %v4520 = vrot.slane %v4307, 1
    %v4521 = vrot.slane %v4308, 1
    %v4531 = vcombine.high %v4347, %v4347
    %v4533 = vunpack.c.l.s4 1966171168
    %v4534 = vunpack.c.0.s8 %v4533
    %v4535 = vlaneseq
    %v4536 = vshrl.u32 %v4535, 7
    %v4537 = vsub.s32 %v4534, %v4536
    %v4538 = vrot.slane %v4347, %v4537
    %v4540 = vunpack.c.l.s4 1966171168
    %v4541 = vunpack.c.0.s8 %v4540
    %v4542 = vlaneseq
    %v4543 = vshrl.u32 %v4542, 7
    %v4544 = vsub.s32 %v4541, %v4543
    %v4545 = vrot.slane %v4531, %v4544
    %v4546 = vcombine.high %v4538, %v4538
    %v4547 = vcombine.high %v4545, %v4545
    %v4549 = vunpack.c.l.s4 1966171168
    %v4550 = vunpack.c.0.s8 %v4549
    %v4551 = vlaneseq
    %v4552 = vshrl.u32 %v4551, 7
    %v4553 = vsub.s32 %v4550, %v4552
    %v4554 = vrot.slane %v4538, %v4553
    %v4556 = vunpack.c.l.s4 1966171168
    %v4557 = vunpack.c.0.s8 %v4556
    %v4558 = vlaneseq
    %v4559 = vshrl.u32 %v4558, 7
    %v4560 = vsub.s32 %v4557, %v4559
    %v4561 = vrot.slane %v4545, %v4560
    %v4563 = vunpack.c.l.s4 1966171168
    %v4564 = vunpack.c.0.s8 %v4563
    %v4565 = vlaneseq
    %v4566 = vshrl.u32 %v4565, 7
    %v4567 = vsub.s32 %v4564, %v4566
    %v4568 = vrot.slane %v4546, %v4567
    %v4570 = vunpack.c.l.s4 1966171168
    %v4571 = vunpack.c.0.s8 %v4570
    %v4572 = vlaneseq
    %v4573 = vshrl.u32 %v4572, 7
    %v4574 = vsub.s32 %v4571, %v4573
    %v4575 = vrot.slane %v4547, %v4574
    %v4576 = vcombine.high %v4554, %v4554
    %v4577 = vcombine.high %v4561, %v4561
    %v4578 = vcombine.high %v4568, %v4568
    %v4579 = vcombine.high %v4575, %v4575
    %v4588 = vadd.f32 %v4514, %v4554
    %v4589 = vadd.f32 %v4515, %v4568
    %v4590 = vadd.f32 %v4516, %v4576
    %v4591 = vadd.f32 %v4517, %v4578
    %v4592 = vadd.f32 %v4518, %v4561
    %v4593 = vadd.f32 %v4519, %v4575
    %v4594 = vadd.f32 %v4520, %v4577
    %v4595 = vadd.f32 %v4521, %v4579
    %v4596 = vxor.u32 %v4588, 2147483648
    %v4597 = vxor.u32 %v4589, 2147483648
    %v4598 = vxor.u32 %v4590, 2147483648
    %v4599 = vxor.u32 %v4591, 2147483648
    %v4600 = vxor.u32 %v4592, 2147483648
    %v4601 = vxor.u32 %v4593, 2147483648
    %v4602 = vxor.u32 %v4594, 2147483648
    %v4603 = vxor.u32 %v4595, 2147483648
    %v4604 = vmul.f32 %v4596, 1.442695
    %v4605 = vpow.pop %v4604
    %v4606 = vmul.f32 %v4597, 1.442695
    %v4607 = vpow.pop %v4606
    %v4608 = vmul.f32 %v4598, 1.442695
    %v4609 = vpow.pop %v4608
    %v4610 = vmul.f32 %v4599, 1.442695
    %v4611 = vpow.pop %v4610
    %v4612 = vmul.f32 %v4600, 1.442695
    %v4613 = vpow.pop %v4612
    %v4614 = vmul.f32 %v4601, 1.442695
    %v4615 = vpow.pop %v4614
    %v4616 = vmul.f32 %v4602, 1.442695
    %v4617 = vpow.pop %v4616
    %v4618 = vmul.f32 %v4603, 1.442695
    %v4619 = vpow.pop %v4618
    %v4620 = vadd.f32 %v4605, 1.0
    %v4621 = vadd.f32 %v4607, 1.0
    %v4622 = vadd.f32 %v4609, 1.0
    %v4623 = vadd.f32 %v4611, 1.0
    %v4624 = vadd.f32 %v4613, 1.0
    %v4625 = vadd.f32 %v4615, 1.0
    %v4626 = vadd.f32 %v4617, 1.0
    %v4627 = vadd.f32 %v4619, 1.0
    %v4628 = vrcp.pop %v4620
    %v4629 = vmul.f32 1.0, %v4628
    %v4630 = vrcp.pop %v4621
    %v4631 = vmul.f32 1.0, %v4630
    %v4632 = vrcp.pop %v4622
    %v4633 = vmul.f32 1.0, %v4632
    %v4634 = vrcp.pop %v4623
    %v4635 = vmul.f32 1.0, %v4634
    %v4636 = vrcp.pop %v4624
    %v4637 = vmul.f32 1.0, %v4636
    %v4638 = vrcp.pop %v4625
    %v4639 = vmul.f32 1.0, %v4638
    %v4640 = vrcp.pop %v4626
    %v4641 = vmul.f32 1.0, %v4640
    %v4642 = vrcp.pop %v4627
    %v4643 = vmul.f32 1.0, %v4642
    %v4645 = vcombine.high %v4386, %v4386
    %v4647 = vunpack.c.l.s4 1966171168
    %v4648 = vunpack.c.0.s8 %v4647
    %v4649 = vlaneseq
    %v4650 = vshrl.u32 %v4649, 7
    %v4651 = vsub.s32 %v4648, %v4650
    %v4652 = vrot.slane %v4386, %v4651
    %v4654 = vunpack.c.l.s4 1966171168
    %v4655 = vunpack.c.0.s8 %v4654
    %v4656 = vlaneseq
    %v4657 = vshrl.u32 %v4656, 7
    %v4658 = vsub.s32 %v4655, %v4657
    %v4659 = vrot.slane %v4645, %v4658
    %v4660 = vcombine.high %v4652, %v4652
    %v4661 = vcombine.high %v4659, %v4659
    %v4663 = vunpack.c.l.s4 1966171168
    %v4664 = vunpack.c.0.s8 %v4663
    %v4665 = vlaneseq
    %v4666 = vshrl.u32 %v4665, 7
    %v4667 = vsub.s32 %v4664, %v4666
    %v4668 = vrot.slane %v4652, %v4667
    %v4670 = vunpack.c.l.s4 1966171168
    %v4671 = vunpack.c.0.s8 %v4670
    %v4672 = vlaneseq
    %v4673 = vshrl.u32 %v4672, 7
    %v4674 = vsub.s32 %v4671, %v4673
    %v4675 = vrot.slane %v4659, %v4674
    %v4677 = vunpack.c.l.s4 1966171168
    %v4678 = vunpack.c.0.s8 %v4677
    %v4679 = vlaneseq
    %v4680 = vshrl.u32 %v4679, 7
    %v4681 = vsub.s32 %v4678, %v4680
    %v4682 = vrot.slane %v4660, %v4681
    %v4684 = vunpack.c.l.s4 1966171168
    %v4685 = vunpack.c.0.s8 %v4684
    %v4686 = vlaneseq
    %v4687 = vshrl.u32 %v4686, 7
    %v4688 = vsub.s32 %v4685, %v4687
    %v4689 = vrot.slane %v4661, %v4688
    %v4690 = vcombine.high %v4668, %v4668
    %v4691 = vcombine.high %v4675, %v4675
    %v4692 = vcombine.high %v4682, %v4682
    %v4693 = vcombine.high %v4689, %v4689
    %v4702 = vmul.f32 %v4491, %v4668
    %v4703 = vmul.f32 %v4493, %v4682
    %v4704 = vmul.f32 %v4495, %v4690
    %v4705 = vmul.f32 %v4497, %v4692
    %v4706 = vmul.f32 %v4499, %v4675
    %v4707 = vmul.f32 %v4501, %v4689
    %v4708 = vmul.f32 %v4503, %v4691
    %v4709 = vmul.f32 %v4505, %v4693
    %v4710 = vrot.slane %v4301, 2
    %v4711 = vrot.slane %v4302, 2
    %v4712 = vrot.slane %v4303, 2
    %v4713 = vrot.slane %v4304, 2
    %v4714 = vrot.slane %v4305, 2
    %v4715 = vrot.slane %v4306, 2
    %v4716 = vrot.slane %v4307, 2
    %v4717 = vrot.slane %v4308, 2
    %v4726 = vadd.f32 %v4710, %v4702
    %v4727 = vadd.f32 %v4711, %v4703
    %v4728 = vadd.f32 %v4712, %v4704
    %v4729 = vadd.f32 %v4713, %v4705
    %v4730 = vadd.f32 %v4714, %v4706
    %v4731 = vadd.f32 %v4715, %v4707
    %v4732 = vadd.f32 %v4716, %v4708
    %v4733 = vadd.f32 %v4717, %v4709
    %v4734 = vtanh.pop %v4726
    %v4735 = vtanh.pop %v4727
    %v4736 = vtanh.pop %v4728
    %v4737 = vtanh.pop %v4729
    %v4738 = vtanh.pop %v4730
    %v4739 = vtanh.pop %v4731
    %v4740 = vtanh.pop %v4732
    %v4741 = vtanh.pop %v4733
    %v4742 = vsub.f32 1.0, %v4629
    %v4743 = vsub.f32 1.0, %v4631
    %v4744 = vsub.f32 1.0, %v4633
    %v4745 = vsub.f32 1.0, %v4635
    %v4746 = vsub.f32 1.0, %v4637
    %v4747 = vsub.f32 1.0, %v4639
    %v4748 = vsub.f32 1.0, %v4641
    %v4749 = vsub.f32 1.0, %v4643
    %v4750 = vmul.f32 %v4742, %v4734
    %v4751 = vmul.f32 %v4743, %v4735
    %v4752 = vmul.f32 %v4744, %v4736
    %v4753 = vmul.f32 %v4745, %v4737
    %v4754 = vmul.f32 %v4746, %v4738
    %v4755 = vmul.f32 %v4747, %v4739
    %v4756 = vmul.f32 %v4748, %v4740
    %v4757 = vmul.f32 %v4749, %v4741
    %v4758 = vmul.f32 %v4629, %v3520
    %v4759 = vmul.f32 %v4631, %v3534
    %v4760 = vmul.f32 %v4633, %v3542
    %v4761 = vmul.f32 %v4635, %v3544
    %v4762 = vmul.f32 %v4637, %v3527
    %v4763 = vmul.f32 %v4639, %v3541
    %v4764 = vmul.f32 %v4641, %v3543
    %v4765 = vmul.f32 %v4643, %v3545
    %v4766 = vadd.f32 %v4750, %v4758
    %v4767 = vadd.f32 %v4751, %v4759
    %v4768 = vadd.f32 %v4752, %v4760
    %v4769 = vadd.f32 %v4753, %v4761
    %v4770 = vadd.f32 %v4754, %v4762
    %v4771 = vadd.f32 %v4755, %v4763
    %v4772 = vadd.f32 %v4756, %v4764
    %v4773 = vadd.f32 %v4757, %v4765
    %v4774 = vmul.f32 %v1951, %v4766
    %v4775 = vmul.f32 %v1951, %v4767
    %v4776 = vmul.f32 %v1951, %v4768
    %v4777 = vmul.f32 %v1951, %v4769
    %v4778 = vmul.f32 %v1951, %v4770
    %v4779 = vmul.f32 %v1951, %v4771
    %v4780 = vmul.f32 %v1951, %v4772
    %v4781 = vmul.f32 %v1951, %v4773
    %v4790 = vcombine.low %v4774, %v4775
    %v4791 = vcombine.low %v4776, %v4777
    %v4792 = vcombine.low %v4778, %v4779
    %v4793 = vcombine.low %v4780, %v4781
    %v4795 = vunpack.c.l.s4 1966171168
    %v4796 = vunpack.c.0.s8 %v4795
    %v4797 = vlaneseq
    %v4798 = vshrl.u32 %v4797, 7
    %v4799 = vsub.s32 %v4796, %v4798
    %v4800 = vrot.slane %v4790, %v4799
    %v4802 = vunpack.c.l.s4 1966171168
    %v4803 = vunpack.c.0.s8 %v4802
    %v4804 = vlaneseq
    %v4805 = vshrl.u32 %v4804, 7
    %v4806 = vsub.s32 %v4803, %v4805
    %v4807 = vrot.slane %v4791, %v4806
    %v4809 = vunpack.c.l.s4 1966171168
    %v4810 = vunpack.c.0.s8 %v4809
    %v4811 = vlaneseq
    %v4812 = vshrl.u32 %v4811, 7
    %v4813 = vsub.s32 %v4810, %v4812
    %v4814 = vrot.slane %v4792, %v4813
    %v4816 = vunpack.c.l.s4 1966171168
    %v4817 = vunpack.c.0.s8 %v4816
    %v4818 = vlaneseq
    %v4819 = vshrl.u32 %v4818, 7
    %v4820 = vsub.s32 %v4817, %v4819
    %v4821 = vrot.slane %v4793, %v4820
    %v4822 = vcombine.low %v4800, %v4807
    %v4823 = vcombine.low %v4814, %v4821
    %v4825 = vunpack.c.l.s4 1966171168
    %v4826 = vunpack.c.0.s8 %v4825
    %v4827 = vlaneseq
    %v4828 = vshrl.u32 %v4827, 7
    %v4829 = vsub.s32 %v4826, %v4828
    %v4830 = vrot.slane %v4822, %v4829
    %v4832 = vunpack.c.l.s4 1966171168
    %v4833 = vunpack.c.0.s8 %v4832
    %v4834 = vlaneseq
    %v4835 = vshrl.u32 %v4834, 7
    %v4836 = vsub.s32 %v4833, %v4835
    %v4837 = vrot.slane %v4823, %v4836
    %v4838 = vcombine.low %v4830, %v4837
    %v4840 = vadd.f32 %v4391, %v4838
    %v4842 = vcombine.high %v4124, %v4124
    %v4844 = vunpack.c.l.s4 1966171168
    %v4845 = vunpack.c.0.s8 %v4844
    %v4846 = vlaneseq
    %v4847 = vshrl.u32 %v4846, 7
    %v4848 = vsub.s32 %v4845, %v4847
    %v4849 = vrot.slane %v4124, %v4848
    %v4851 = vunpack.c.l.s4 1966171168
    %v4852 = vunpack.c.0.s8 %v4851
    %v4853 = vlaneseq
    %v4854 = vshrl.u32 %v4853, 7
    %v4855 = vsub.s32 %v4852, %v4854
    %v4856 = vrot.slane %v4842, %v4855
    %v4857 = vcombine.high %v4849, %v4849
    %v4858 = vcombine.high %v4856, %v4856
    %v4860 = vunpack.c.l.s4 1966171168
    %v4861 = vunpack.c.0.s8 %v4860
    %v4862 = vlaneseq
    %v4863 = vshrl.u32 %v4862, 7
    %v4864 = vsub.s32 %v4861, %v4863
    %v4865 = vrot.slane %v4849, %v4864
    %v4867 = vunpack.c.l.s4 1966171168
    %v4868 = vunpack.c.0.s8 %v4867
    %v4869 = vlaneseq
    %v4870 = vshrl.u32 %v4869, 7
    %v4871 = vsub.s32 %v4868, %v4870
    %v4872 = vrot.slane %v4856, %v4871
    %v4874 = vunpack.c.l.s4 1966171168
    %v4875 = vunpack.c.0.s8 %v4874
    %v4876 = vlaneseq
    %v4877 = vshrl.u32 %v4876, 7
    %v4878 = vsub.s32 %v4875, %v4877
    %v4879 = vrot.slane %v4857, %v4878
    %v4881 = vunpack.c.l.s4 1966171168
    %v4882 = vunpack.c.0.s8 %v4881
    %v4883 = vlaneseq
    %v4884 = vshrl.u32 %v4883, 7
    %v4885 = vsub.s32 %v4882, %v4884
    %v4886 = vrot.slane %v4858, %v4885
    %v4887 = vcombine.high %v4865, %v4865
    %v4888 = vcombine.high %v4872, %v4872
    %v4889 = vcombine.high %v4879, %v4879
    %v4890 = vcombine.high %v4886, %v4886
    %4899 = vst [vmem:[#allocation14 + $0x2] sm:$0x1] %v4865
    %4900 = vst [vmem:[#allocation14 + $0x12] sm:$0x1] %v4879
    %4901 = vst [vmem:[#allocation14 + $0x22] sm:$0x1] %v4887
    %4902 = vst [vmem:[#allocation14 + $0x32] sm:$0x1] %v4889
    %4903 = vst [vmem:[#allocation14 + $0x42] sm:$0x1] %v4872
    %4904 = vst [vmem:[#allocation14 + $0x52] sm:$0x1] %v4886
    %4905 = vst [vmem:[#allocation14 + $0x62] sm:$0x1] %v4888
    %4906 = vst [vmem:[#allocation14 + $0x72] sm:$0x1] %v4890
    %v4908 = vcombine.high %v4840, %v4840
    %v4910 = vunpack.c.l.s4 1966171168
    %v4911 = vunpack.c.0.s8 %v4910
    %v4912 = vlaneseq
    %v4913 = vshrl.u32 %v4912, 7
    %v4914 = vsub.s32 %v4911, %v4913
    %v4915 = vrot.slane %v4840, %v4914
    %v4917 = vunpack.c.l.s4 1966171168
    %v4918 = vunpack.c.0.s8 %v4917
    %v4919 = vlaneseq
    %v4920 = vshrl.u32 %v4919, 7
    %v4921 = vsub.s32 %v4918, %v4920
    %v4922 = vrot.slane %v4908, %v4921
    %v4923 = vcombine.high %v4915, %v4915
    %v4924 = vcombine.high %v4922, %v4922
    %v4926 = vunpack.c.l.s4 1966171168
    %v4927 = vunpack.c.0.s8 %v4926
    %v4928 = vlaneseq
    %v4929 = vshrl.u32 %v4928, 7
    %v4930 = vsub.s32 %v4927, %v4929
    %v4931 = vrot.slane %v4915, %v4930
    %v4933 = vunpack.c.l.s4 1966171168
    %v4934 = vunpack.c.0.s8 %v4933
    %v4935 = vlaneseq
    %v4936 = vshrl.u32 %v4935, 7
    %v4937 = vsub.s32 %v4934, %v4936
    %v4938 = vrot.slane %v4922, %v4937
    %v4940 = vunpack.c.l.s4 1966171168
    %v4941 = vunpack.c.0.s8 %v4940
    %v4942 = vlaneseq
    %v4943 = vshrl.u32 %v4942, 7
    %v4944 = vsub.s32 %v4941, %v4943
    %v4945 = vrot.slane %v4923, %v4944
    %v4947 = vunpack.c.l.s4 1966171168
    %v4948 = vunpack.c.0.s8 %v4947
    %v4949 = vlaneseq
    %v4950 = vshrl.u32 %v4949, 7
    %v4951 = vsub.s32 %v4948, %v4950
    %v4952 = vrot.slane %v4924, %v4951
    %v4953 = vcombine.high %v4931, %v4931
    %v4954 = vcombine.high %v4938, %v4938
    %v4955 = vcombine.high %v4945, %v4945
    %v4956 = vcombine.high %v4952, %v4952
    %4965 = vst [vmem:[#allocation14 + $0xa] sm:$0x1] %v4931
    %4966 = vst [vmem:[#allocation14 + $0x1a] sm:$0x1] %v4945
    %4967 = vst [vmem:[#allocation14 + $0x2a] sm:$0x1] %v4953
    %4968 = vst [vmem:[#allocation14 + $0x3a] sm:$0x1] %v4955
    %4969 = vst [vmem:[#allocation14 + $0x4a] sm:$0x1] %v4938
    %4970 = vst [vmem:[#allocation14 + $0x5a] sm:$0x1] %v4952
    %4971 = vst [vmem:[#allocation14 + $0x6a] sm:$0x1] %v4954
    %4972 = vst [vmem:[#allocation14 + $0x7a] sm:$0x1] %v4956
    %s4973 = scalar_lea.vmem [#allocation8], 3
    %v4974 = vld [vmem:[%s4973] ss:$8 sm:$0xf]
    %v4975 = vld [vmem:[%s4973] ss:$8 sm:$0x30]
    %v4976 = vor.u32 %v4974, %v4975
    %s4977 = scalar_lea.vmem [#allocation8], 51
    %v4978 = vld [vmem:[%s4977] ss:$8 sm:$0xf]
    %v4979 = vld [vmem:[%s4977] ss:$8 sm:$0x30]
    %v4980 = vor.u32 %v4978, %v4979
    %s4981 = scalar_lea.vmem [#allocation8], 99
    %v4982 = vld [vmem:[%s4981] ss:$8 sm:$0xf]
    %v4983 = vld [vmem:[%s4981] ss:$8 sm:$0x30]
    %v4984 = vor.u32 %v4982, %v4983
    %s4985 = scalar_lea.vmem [#allocation8], 147
    %v4986 = vld [vmem:[%s4985] ss:$8 sm:$0xf]
    %v4987 = vld [vmem:[%s4985] ss:$8 sm:$0x30]
    %v4988 = vor.u32 %v4986, %v4987
    %s4989 = scalar_lea.vmem [#allocation8], 195
    %v4990 = vld [vmem:[%s4989] ss:$8 sm:$0xf]
    %v4991 = vld [vmem:[%s4989] ss:$8 sm:$0x30]
    %v4992 = vor.u32 %v4990, %v4991
    %s4993 = scalar_lea.vmem [#allocation8], 243
    %v4994 = vld [vmem:[%s4993] ss:$8 sm:$0xf]
    %v4995 = vld [vmem:[%s4993] ss:$8 sm:$0x30]
    %v4996 = vor.u32 %v4994, %v4995
    %s4997 = scalar_lea.vmem [#allocation8], 291
    %v4998 = vld [vmem:[%s4997] ss:$8 sm:$0xf]
    %v4999 = vld [vmem:[%s4997] ss:$8 sm:$0x30]
    %v5000 = vor.u32 %v4998, %v4999
    %s5001 = scalar_lea.vmem [#allocation8], 339
    %v5002 = vld [vmem:[%s5001] ss:$8 sm:$0xf]
    %v5003 = vld [vmem:[%s5001] ss:$8 sm:$0x30]
    %v5004 = vor.u32 %v5002, %v5003
    %5005 = vmatprep.subr.bf16.mxu0 %v349
    %5006 = vmatpush1.bf16.msra.mxu0 %v348
    %5007 = vmatprep.subr.bf16.mxu0 %v352
    %5008 = vmatpush1.bf16.msra.mxu0 %v351
    %5009 = vmatprep.subr.bf16.mxu0 %v355
    %5010 = vmatpush1.bf16.msra.mxu0 %v354
    %5011 = vmatprep.subr.bf16.mxu0 %v358
    %5012 = vmatpush1.bf16.msra.mxu0 %v357
    %5013 = vmatprep.subr.bf16.mxu0 %v361
    %5014 = vmatpush1.bf16.msra.mxu0 %v360
    %5015 = vmatprep.subr.bf16.mxu0 %v364
    %5016 = vmatpush1.bf16.msra.mxu0 %v363
    %5017 = vmatprep.subr.bf16.mxu0 %v367
    %5018 = vmatpush1.bf16.msra.mxu0 %v366
    %5019 = vmatprep.subr.bf16.mxu0 %v370
    %5020 = vmatpush1.bf16.msra.mxu0 %v369
    %5021 = vmatprep.subr.bf16.mxu0 0
    %5022 = vmatpush1.bf16.msra.mxu0 0
    %5023 = vmatprep.subr.bf16.mxu0 0
    %5024 = vmatpush1.bf16.msra.mxu0 0
    %5025 = vmatprep.subr.bf16.mxu0 0
    %5026 = vmatpush1.bf16.msra.mxu0 0
    %5027 = vmatprep.subr.bf16.mxu0 0
    %5028 = vmatpush1.bf16.msra.mxu0 0
    %5029 = vmatprep.subr.bf16.mxu0 0
    %5030 = vmatpush1.bf16.msra.mxu0 0
    %5031 = vmatprep.subr.bf16.mxu0 0
    %5032 = vmatpush1.bf16.msra.mxu0 0
    %5033 = vmatprep.subr.bf16.mxu0 0
    %5034 = vmatpush1.bf16.msra.mxu0 0
    %5035 = vmatprep.subr.bf16.mxu0 0
    %5036 = vmatpush1.bf16.msra.mxu0 0
    %5037 = vmatprep.mubr.bf16.mxu0 0
    %5038 = vmatmul.mubr.bf16.gmra.mrb[0].mxu0 %v4125
    %v5039 = vpop.f32.mrb[0].mxu0
    %v5040 = vadd.f32 %v205, %v5039
    %v5041 = vpop.f32.mrb[0].mxu0
    %v5042 = vadd.f32 %v209, %v5041
    %v5043 = vpop.f32.mrb[0].mxu0
    %v5044 = vpop.f32.mrb[0].mxu0
    %5045 = vdwg.mxu0
    %5046 = vmatprep.subr.bf16.mxu0 0
    %5047 = vmatpush1.bf16.msra.mxu0 %v350
    %5048 = vmatprep.subr.bf16.mxu0 0
    %5049 = vmatpush1.bf16.msra.mxu0 %v353
    %5050 = vmatprep.subr.bf16.mxu0 0
    %5051 = vmatpush1.bf16.msra.mxu0 %v356
    %5052 = vmatprep.subr.bf16.mxu0 0
    %5053 = vmatpush1.bf16.msra.mxu0 %v359
    %5054 = vmatprep.subr.bf16.mxu0 0
    %5055 = vmatpush1.bf16.msra.mxu0 %v362
    %5056 = vmatprep.subr.bf16.mxu0 0
    %5057 = vmatpush1.bf16.msra.mxu0 %v365
    %5058 = vmatprep.subr.bf16.mxu0 0
    %5059 = vmatpush1.bf16.msra.mxu0 %v368
    %5060 = vmatprep.subr.bf16.mxu0 0
    %5061 = vmatpush1.bf16.msra.mxu0 %v371
    %5062 = vmatprep.subr.bf16.mxu0 0
    %5063 = vmatpush1.bf16.msra.mxu0 0
    %5064 = vmatprep.subr.bf16.mxu0 0
    %5065 = vmatpush1.bf16.msra.mxu0 0
    %5066 = vmatprep.subr.bf16.mxu0 0
    %5067 = vmatpush1.bf16.msra.mxu0 0
    %5068 = vmatprep.subr.bf16.mxu0 0
    %5069 = vmatpush1.bf16.msra.mxu0 0
    %5070 = vmatprep.subr.bf16.mxu0 0
    %5071 = vmatpush1.bf16.msra.mxu0 0
    %5072 = vmatprep.subr.bf16.mxu0 0
    %5073 = vmatpush1.bf16.msra.mxu0 0
    %5074 = vmatprep.subr.bf16.mxu0 0
    %5075 = vmatpush1.bf16.msra.mxu0 0
    %5076 = vmatprep.subr.bf16.mxu0 0
    %5077 = vmatpush1.bf16.msra.mxu0 0
    %5078 = vmatprep.mubr.bf16.mxu0 0
    %5079 = vmatmul.mubr.bf16.gmra.mrb[0].mxu0 %v4125
    %v5080 = vpop.f32.mrb[0].mxu0
    %v5081 = vadd.f32 %v213, %v5080
    %v5082 = vpop.f32.mrb[0].mxu0
    %v5083 = vpop.f32.mrb[0].mxu0
    %v5084 = vpop.f32.mrb[0].mxu0
    %5085 = vdwg.mxu0
    %v5086 = vmul.f32 %v477, %v4124
    %v5088 = vcombine.high %v5040, %v5040
    %v5090 = vunpack.c.l.s4 1966171168
    %v5091 = vunpack.c.0.s8 %v5090
    %v5092 = vlaneseq
    %v5093 = vshrl.u32 %v5092, 7
    %v5094 = vsub.s32 %v5091, %v5093
    %v5095 = vrot.slane %v5040, %v5094
    %v5097 = vunpack.c.l.s4 1966171168
    %v5098 = vunpack.c.0.s8 %v5097
    %v5099 = vlaneseq
    %v5100 = vshrl.u32 %v5099, 7
    %v5101 = vsub.s32 %v5098, %v5100
    %v5102 = vrot.slane %v5088, %v5101
    %v5103 = vcombine.high %v5095, %v5095
    %v5104 = vcombine.high %v5102, %v5102
    %v5106 = vunpack.c.l.s4 1966171168
    %v5107 = vunpack.c.0.s8 %v5106
    %v5108 = vlaneseq
    %v5109 = vshrl.u32 %v5108, 7
    %v5110 = vsub.s32 %v5107, %v5109
    %v5111 = vrot.slane %v5095, %v5110
    %v5113 = vunpack.c.l.s4 1966171168
    %v5114 = vunpack.c.0.s8 %v5113
    %v5115 = vlaneseq
    %v5116 = vshrl.u32 %v5115, 7
    %v5117 = vsub.s32 %v5114, %v5116
    %v5118 = vrot.slane %v5102, %v5117
    %v5120 = vunpack.c.l.s4 1966171168
    %v5121 = vunpack.c.0.s8 %v5120
    %v5122 = vlaneseq
    %v5123 = vshrl.u32 %v5122, 7
    %v5124 = vsub.s32 %v5121, %v5123
    %v5125 = vrot.slane %v5103, %v5124
    %v5127 = vunpack.c.l.s4 1966171168
    %v5128 = vunpack.c.0.s8 %v5127
    %v5129 = vlaneseq
    %v5130 = vshrl.u32 %v5129, 7
    %v5131 = vsub.s32 %v5128, %v5130
    %v5132 = vrot.slane %v5104, %v5131
    %v5133 = vcombine.high %v5111, %v5111
    %v5134 = vcombine.high %v5118, %v5118
    %v5135 = vcombine.high %v5125, %v5125
    %v5136 = vcombine.high %v5132, %v5132
    %v5145 = vadd.f32 %v4976, %v5111
    %v5146 = vadd.f32 %v4980, %v5125
    %v5147 = vadd.f32 %v4984, %v5133
    %v5148 = vadd.f32 %v4988, %v5135
    %v5149 = vadd.f32 %v4992, %v5118
    %v5150 = vadd.f32 %v4996, %v5132
    %v5151 = vadd.f32 %v5000, %v5134
    %v5152 = vadd.f32 %v5004, %v5136
    %v5153 = vxor.u32 %v5145, 2147483648
    %v5154 = vxor.u32 %v5146, 2147483648
    %v5155 = vxor.u32 %v5147, 2147483648
    %v5156 = vxor.u32 %v5148, 2147483648
    %v5157 = vxor.u32 %v5149, 2147483648
    %v5158 = vxor.u32 %v5150, 2147483648
    %v5159 = vxor.u32 %v5151, 2147483648
    %v5160 = vxor.u32 %v5152, 2147483648
    %v5161 = vmul.f32 %v5153, 1.442695
    %v5162 = vpow.pop %v5161
    %v5163 = vmul.f32 %v5154, 1.442695
    %v5164 = vpow.pop %v5163
    %v5165 = vmul.f32 %v5155, 1.442695
    %v5166 = vpow.pop %v5165
    %v5167 = vmul.f32 %v5156, 1.442695
    %v5168 = vpow.pop %v5167
    %v5169 = vmul.f32 %v5157, 1.442695
    %v5170 = vpow.pop %v5169
    %v5171 = vmul.f32 %v5158, 1.442695
    %v5172 = vpow.pop %v5171
    %v5173 = vmul.f32 %v5159, 1.442695
    %v5174 = vpow.pop %v5173
    %v5175 = vmul.f32 %v5160, 1.442695
    %v5176 = vpow.pop %v5175
    %v5177 = vadd.f32 %v5162, 1.0
    %v5178 = vadd.f32 %v5164, 1.0
    %v5179 = vadd.f32 %v5166, 1.0
    %v5180 = vadd.f32 %v5168, 1.0
    %v5181 = vadd.f32 %v5170, 1.0
    %v5182 = vadd.f32 %v5172, 1.0
    %v5183 = vadd.f32 %v5174, 1.0
    %v5184 = vadd.f32 %v5176, 1.0
    %v5185 = vrcp.pop %v5177
    %v5186 = vmul.f32 1.0, %v5185
    %v5187 = vrcp.pop %v5178
    %v5188 = vmul.f32 1.0, %v5187
    %v5189 = vrcp.pop %v5179
    %v5190 = vmul.f32 1.0, %v5189
    %v5191 = vrcp.pop %v5180
    %v5192 = vmul.f32 1.0, %v5191
    %v5193 = vrcp.pop %v5181
    %v5194 = vmul.f32 1.0, %v5193
    %v5195 = vrcp.pop %v5182
    %v5196 = vmul.f32 1.0, %v5195
    %v5197 = vrcp.pop %v5183
    %v5198 = vmul.f32 1.0, %v5197
    %v5199 = vrcp.pop %v5184
    %v5200 = vmul.f32 1.0, %v5199
    %v5209 = vrot.slane %v4976, 1
    %v5210 = vrot.slane %v4980, 1
    %v5211 = vrot.slane %v4984, 1
    %v5212 = vrot.slane %v4988, 1
    %v5213 = vrot.slane %v4992, 1
    %v5214 = vrot.slane %v4996, 1
    %v5215 = vrot.slane %v5000, 1
    %v5216 = vrot.slane %v5004, 1
    %v5226 = vcombine.high %v5042, %v5042
    %v5228 = vunpack.c.l.s4 1966171168
    %v5229 = vunpack.c.0.s8 %v5228
    %v5230 = vlaneseq
    %v5231 = vshrl.u32 %v5230, 7
    %v5232 = vsub.s32 %v5229, %v5231
    %v5233 = vrot.slane %v5042, %v5232
    %v5235 = vunpack.c.l.s4 1966171168
    %v5236 = vunpack.c.0.s8 %v5235
    %v5237 = vlaneseq
    %v5238 = vshrl.u32 %v5237, 7
    %v5239 = vsub.s32 %v5236, %v5238
    %v5240 = vrot.slane %v5226, %v5239
    %v5241 = vcombine.high %v5233, %v5233
    %v5242 = vcombine.high %v5240, %v5240
    %v5244 = vunpack.c.l.s4 1966171168
    %v5245 = vunpack.c.0.s8 %v5244
    %v5246 = vlaneseq
    %v5247 = vshrl.u32 %v5246, 7
    %v5248 = vsub.s32 %v5245, %v5247
    %v5249 = vrot.slane %v5233, %v5248
    %v5251 = vunpack.c.l.s4 1966171168
    %v5252 = vunpack.c.0.s8 %v5251
    %v5253 = vlaneseq
    %v5254 = vshrl.u32 %v5253, 7
    %v5255 = vsub.s32 %v5252, %v5254
    %v5256 = vrot.slane %v5240, %v5255
    %v5258 = vunpack.c.l.s4 1966171168
    %v5259 = vunpack.c.0.s8 %v5258
    %v5260 = vlaneseq
    %v5261 = vshrl.u32 %v5260, 7
    %v5262 = vsub.s32 %v5259, %v5261
    %v5263 = vrot.slane %v5241, %v5262
    %v5265 = vunpack.c.l.s4 1966171168
    %v5266 = vunpack.c.0.s8 %v5265
    %v5267 = vlaneseq
    %v5268 = vshrl.u32 %v5267, 7
    %v5269 = vsub.s32 %v5266, %v5268
    %v5270 = vrot.slane %v5242, %v5269
    %v5271 = vcombine.high %v5249, %v5249
    %v5272 = vcombine.high %v5256, %v5256
    %v5273 = vcombine.high %v5263, %v5263
    %v5274 = vcombine.high %v5270, %v5270
    %v5283 = vadd.f32 %v5209, %v5249
    %v5284 = vadd.f32 %v5210, %v5263
    %v5285 = vadd.f32 %v5211, %v5271
    %v5286 = vadd.f32 %v5212, %v5273
    %v5287 = vadd.f32 %v5213, %v5256
    %v5288 = vadd.f32 %v5214, %v5270
    %v5289 = vadd.f32 %v5215, %v5272
    %v5290 = vadd.f32 %v5216, %v5274
    %v5291 = vxor.u32 %v5283, 2147483648
    %v5292 = vxor.u32 %v5284, 2147483648
    %v5293 = vxor.u32 %v5285, 2147483648
    %v5294 = vxor.u32 %v5286, 2147483648
    %v5295 = vxor.u32 %v5287, 2147483648
    %v5296 = vxor.u32 %v5288, 2147483648
    %v5297 = vxor.u32 %v5289, 2147483648
    %v5298 = vxor.u32 %v5290, 2147483648
    %v5299 = vmul.f32 %v5291, 1.442695
    %v5300 = vpow.pop %v5299
    %v5301 = vmul.f32 %v5292, 1.442695
    %v5302 = vpow.pop %v5301
    %v5303 = vmul.f32 %v5293, 1.442695
    %v5304 = vpow.pop %v5303
    %v5305 = vmul.f32 %v5294, 1.442695
    %v5306 = vpow.pop %v5305
    %v5307 = vmul.f32 %v5295, 1.442695
    %v5308 = vpow.pop %v5307
    %v5309 = vmul.f32 %v5296, 1.442695
    %v5310 = vpow.pop %v5309
    %v5311 = vmul.f32 %v5297, 1.442695
    %v5312 = vpow.pop %v5311
    %v5313 = vmul.f32 %v5298, 1.442695
    %v5314 = vpow.pop %v5313
    %v5315 = vadd.f32 %v5300, 1.0
    %v5316 = vadd.f32 %v5302, 1.0
    %v5317 = vadd.f32 %v5304, 1.0
    %v5318 = vadd.f32 %v5306, 1.0
    %v5319 = vadd.f32 %v5308, 1.0
    %v5320 = vadd.f32 %v5310, 1.0
    %v5321 = vadd.f32 %v5312, 1.0
    %v5322 = vadd.f32 %v5314, 1.0
    %v5323 = vrcp.pop %v5315
    %v5324 = vmul.f32 1.0, %v5323
    %v5325 = vrcp.pop %v5316
    %v5326 = vmul.f32 1.0, %v5325
    %v5327 = vrcp.pop %v5317
    %v5328 = vmul.f32 1.0, %v5327
    %v5329 = vrcp.pop %v5318
    %v5330 = vmul.f32 1.0, %v5329
    %v5331 = vrcp.pop %v5319
    %v5332 = vmul.f32 1.0, %v5331
    %v5333 = vrcp.pop %v5320
    %v5334 = vmul.f32 1.0, %v5333
    %v5335 = vrcp.pop %v5321
    %v5336 = vmul.f32 1.0, %v5335
    %v5337 = vrcp.pop %v5322
    %v5338 = vmul.f32 1.0, %v5337
    %v5340 = vcombine.high %v5081, %v5081
    %v5342 = vunpack.c.l.s4 1966171168
    %v5343 = vunpack.c.0.s8 %v5342
    %v5344 = vlaneseq
    %v5345 = vshrl.u32 %v5344, 7
    %v5346 = vsub.s32 %v5343, %v5345
    %v5347 = vrot.slane %v5081, %v5346
    %v5349 = vunpack.c.l.s4 1966171168
    %v5350 = vunpack.c.0.s8 %v5349
    %v5351 = vlaneseq
    %v5352 = vshrl.u32 %v5351, 7
    %v5353 = vsub.s32 %v5350, %v5352
    %v5354 = vrot.slane %v5340, %v5353
    %v5355 = vcombine.high %v5347, %v5347
    %v5356 = vcombine.high %v5354, %v5354
    %v5358 = vunpack.c.l.s4 1966171168
    %v5359 = vunpack.c.0.s8 %v5358
    %v5360 = vlaneseq
    %v5361 = vshrl.u32 %v5360, 7
    %v5362 = vsub.s32 %v5359, %v5361
    %v5363 = vrot.slane %v5347, %v5362
    %v5365 = vunpack.c.l.s4 1966171168
    %v5366 = vunpack.c.0.s8 %v5365
    %v5367 = vlaneseq
    %v5368 = vshrl.u32 %v5367, 7
    %v5369 = vsub.s32 %v5366, %v5368
    %v5370 = vrot.slane %v5354, %v5369
    %v5372 = vunpack.c.l.s4 1966171168
    %v5373 = vunpack.c.0.s8 %v5372
    %v5374 = vlaneseq
    %v5375 = vshrl.u32 %v5374, 7
    %v5376 = vsub.s32 %v5373, %v5375
    %v5377 = vrot.slane %v5355, %v5376
    %v5379 = vunpack.c.l.s4 1966171168
    %v5380 = vunpack.c.0.s8 %v5379
    %v5381 = vlaneseq
    %v5382 = vshrl.u32 %v5381, 7
    %v5383 = vsub.s32 %v5380, %v5382
    %v5384 = vrot.slane %v5356, %v5383
    %v5385 = vcombine.high %v5363, %v5363
    %v5386 = vcombine.high %v5370, %v5370
    %v5387 = vcombine.high %v5377, %v5377
    %v5388 = vcombine.high %v5384, %v5384
    %v5397 = vmul.f32 %v5186, %v5363
    %v5398 = vmul.f32 %v5188, %v5377
    %v5399 = vmul.f32 %v5190, %v5385
    %v5400 = vmul.f32 %v5192, %v5387
    %v5401 = vmul.f32 %v5194, %v5370
    %v5402 = vmul.f32 %v5196, %v5384
    %v5403 = vmul.f32 %v5198, %v5386
    %v5404 = vmul.f32 %v5200, %v5388
    %v5405 = vrot.slane %v4976, 2
    %v5406 = vrot.slane %v4980, 2
    %v5407 = vrot.slane %v4984, 2
    %v5408 = vrot.slane %v4988, 2
    %v5409 = vrot.slane %v4992, 2
    %v5410 = vrot.slane %v4996, 2
    %v5411 = vrot.slane %v5000, 2
    %v5412 = vrot.slane %v5004, 2
    %v5421 = vadd.f32 %v5405, %v5397
    %v5422 = vadd.f32 %v5406, %v5398
    %v5423 = vadd.f32 %v5407, %v5399
    %v5424 = vadd.f32 %v5408, %v5400
    %v5425 = vadd.f32 %v5409, %v5401
    %v5426 = vadd.f32 %v5410, %v5402
    %v5427 = vadd.f32 %v5411, %v5403
    %v5428 = vadd.f32 %v5412, %v5404
    %v5429 = vtanh.pop %v5421
    %v5430 = vtanh.pop %v5422
    %v5431 = vtanh.pop %v5423
    %v5432 = vtanh.pop %v5424
    %v5433 = vtanh.pop %v5425
    %v5434 = vtanh.pop %v5426
    %v5435 = vtanh.pop %v5427
    %v5436 = vtanh.pop %v5428
    %v5437 = vsub.f32 1.0, %v5324
    %v5438 = vsub.f32 1.0, %v5326
    %v5439 = vsub.f32 1.0, %v5328
    %v5440 = vsub.f32 1.0, %v5330
    %v5441 = vsub.f32 1.0, %v5332
    %v5442 = vsub.f32 1.0, %v5334
    %v5443 = vsub.f32 1.0, %v5336
    %v5444 = vsub.f32 1.0, %v5338
    %v5445 = vmul.f32 %v5437, %v5429
    %v5446 = vmul.f32 %v5438, %v5430
    %v5447 = vmul.f32 %v5439, %v5431
    %v5448 = vmul.f32 %v5440, %v5432
    %v5449 = vmul.f32 %v5441, %v5433
    %v5450 = vmul.f32 %v5442, %v5434
    %v5451 = vmul.f32 %v5443, %v5435
    %v5452 = vmul.f32 %v5444, %v5436
    %v5453 = vmul.f32 %v5324, %v4865
    %v5454 = vmul.f32 %v5326, %v4879
    %v5455 = vmul.f32 %v5328, %v4887
    %v5456 = vmul.f32 %v5330, %v4889
    %v5457 = vmul.f32 %v5332, %v4872
    %v5458 = vmul.f32 %v5334, %v4886
    %v5459 = vmul.f32 %v5336, %v4888
    %v5460 = vmul.f32 %v5338, %v4890
    %v5461 = vadd.f32 %v5445, %v5453
    %v5462 = vadd.f32 %v5446, %v5454
    %v5463 = vadd.f32 %v5447, %v5455
    %v5464 = vadd.f32 %v5448, %v5456
    %v5465 = vadd.f32 %v5449, %v5457
    %v5466 = vadd.f32 %v5450, %v5458
    %v5467 = vadd.f32 %v5451, %v5459
    %v5468 = vadd.f32 %v5452, %v5460
    %v5469 = vmul.f32 %v919, %v5461
    %v5470 = vmul.f32 %v919, %v5462
    %v5471 = vmul.f32 %v919, %v5463
    %v5472 = vmul.f32 %v919, %v5464
    %v5473 = vmul.f32 %v919, %v5465
    %v5474 = vmul.f32 %v919, %v5466
    %v5475 = vmul.f32 %v919, %v5467
    %v5476 = vmul.f32 %v919, %v5468
    %v5485 = vcombine.low %v5469, %v5470
    %v5486 = vcombine.low %v5471, %v5472
    %v5487 = vcombine.low %v5473, %v5474
    %v5488 = vcombine.low %v5475, %v5476
    %v5490 = vunpack.c.l.s4 1966171168
    %v5491 = vunpack.c.0.s8 %v5490
    %v5492 = vlaneseq
    %v5493 = vshrl.u32 %v5492, 7
    %v5494 = vsub.s32 %v5491, %v5493
    %v5495 = vrot.slane %v5485, %v5494
    %v5497 = vunpack.c.l.s4 1966171168
    %v5498 = vunpack.c.0.s8 %v5497
    %v5499 = vlaneseq
    %v5500 = vshrl.u32 %v5499, 7
    %v5501 = vsub.s32 %v5498, %v5500
    %v5502 = vrot.slane %v5486, %v5501
    %v5504 = vunpack.c.l.s4 1966171168
    %v5505 = vunpack.c.0.s8 %v5504
    %v5506 = vlaneseq
    %v5507 = vshrl.u32 %v5506, 7
    %v5508 = vsub.s32 %v5505, %v5507
    %v5509 = vrot.slane %v5487, %v5508
    %v5511 = vunpack.c.l.s4 1966171168
    %v5512 = vunpack.c.0.s8 %v5511
    %v5513 = vlaneseq
    %v5514 = vshrl.u32 %v5513, 7
    %v5515 = vsub.s32 %v5512, %v5514
    %v5516 = vrot.slane %v5488, %v5515
    %v5517 = vcombine.low %v5495, %v5502
    %v5518 = vcombine.low %v5509, %v5516
    %v5520 = vunpack.c.l.s4 1966171168
    %v5521 = vunpack.c.0.s8 %v5520
    %v5522 = vlaneseq
    %v5523 = vshrl.u32 %v5522, 7
    %v5524 = vsub.s32 %v5521, %v5523
    %v5525 = vrot.slane %v5517, %v5524
    %v5527 = vunpack.c.l.s4 1966171168
    %v5528 = vunpack.c.0.s8 %v5527
    %v5529 = vlaneseq
    %v5530 = vshrl.u32 %v5529, 7
    %v5531 = vsub.s32 %v5528, %v5530
    %v5532 = vrot.slane %v5518, %v5531
    %v5533 = vcombine.low %v5525, %v5532
    %v5535 = vadd.f32 %v5086, %v5533
    %v5536 = vpack.c.bf16 %v5535, %v5535
    %5537 = vmatprep.subr.bf16.mxu0 %v1069
    %5538 = vmatpush1.bf16.msra.mxu0 %v1068
    %5539 = vmatprep.subr.bf16.mxu0 %v1072
    %5540 = vmatpush1.bf16.msra.mxu0 %v1071
    %5541 = vmatprep.subr.bf16.mxu0 %v1075
    %5542 = vmatpush1.bf16.msra.mxu0 %v1074
    %5543 = vmatprep.subr.bf16.mxu0 %v1078
    %5544 = vmatpush1.bf16.msra.mxu0 %v1077
    %5545 = vmatprep.subr.bf16.mxu0 %v1081
    %5546 = vmatpush1.bf16.msra.mxu0 %v1080
    %5547 = vmatprep.subr.bf16.mxu0 %v1084
    %5548 = vmatpush1.bf16.msra.mxu0 %v1083
    %5549 = vmatprep.subr.bf16.mxu0 %v1087
    %5550 = vmatpush1.bf16.msra.mxu0 %v1086
    %5551 = vmatprep.subr.bf16.mxu0 %v1090
    %5552 = vmatpush1.bf16.msra.mxu0 %v1089
    %5553 = vmatprep.subr.bf16.mxu0 0
    %5554 = vmatpush1.bf16.msra.mxu0 0
    %5555 = vmatprep.subr.bf16.mxu0 0
    %5556 = vmatpush1.bf16.msra.mxu0 0
    %5557 = vmatprep.subr.bf16.mxu0 0
    %5558 = vmatpush1.bf16.msra.mxu0 0
    %5559 = vmatprep.subr.bf16.mxu0 0
    %5560 = vmatpush1.bf16.msra.mxu0 0
    %5561 = vmatprep.subr.bf16.mxu0 0
    %5562 = vmatpush1.bf16.msra.mxu0 0
    %5563 = vmatprep.subr.bf16.mxu0 0
    %5564 = vmatpush1.bf16.msra.mxu0 0
    %5565 = vmatprep.subr.bf16.mxu0 0
    %5566 = vmatpush1.bf16.msra.mxu0 0
    %5567 = vmatprep.subr.bf16.mxu0 0
    %5568 = vmatpush1.bf16.msra.mxu0 0
    %5569 = vmatprep.mubr.bf16.mxu0 0
    %5570 = vmatmul.mubr.bf16.gmra.mrb[0].mxu0 %v5536
    %v5571 = vpop.f32.mrb[0].mxu0
    %v5572 = vadd.f32 0.0, %v5571
    %v5573 = vpop.f32.mrb[0].mxu0
    %v5574 = vadd.f32 0.0, %v5573
    %v5575 = vpop.f32.mrb[0].mxu0
    %v5576 = vpop.f32.mrb[0].mxu0
    %5577 = vdwg.mxu0
    %5578 = vmatprep.subr.bf16.mxu0 0
    %5579 = vmatpush1.bf16.msra.mxu0 %v1070
    %5580 = vmatprep.subr.bf16.mxu0 0
    %5581 = vmatpush1.bf16.msra.mxu0 %v1073
    %5582 = vmatprep.subr.bf16.mxu0 0
    %5583 = vmatpush1.bf16.msra.mxu0 %v1076
    %5584 = vmatprep.subr.bf16.mxu0 0
    %5585 = vmatpush1.bf16.msra.mxu0 %v1079
    %5586 = vmatprep.subr.bf16.mxu0 0
    %5587 = vmatpush1.bf16.msra.mxu0 %v1082
    %5588 = vmatprep.subr.bf16.mxu0 0
    %5589 = vmatpush1.bf16.msra.mxu0 %v1085
    %5590 = vmatprep.subr.bf16.mxu0 0
    %5591 = vmatpush1.bf16.msra.mxu0 %v1088
    %5592 = vmatprep.subr.bf16.mxu0 0
    %5593 = vmatpush1.bf16.msra.mxu0 %v1091
    %5594 = vmatprep.subr.bf16.mxu0 0
    %5595 = vmatpush1.bf16.msra.mxu0 0
    %5596 = vmatprep.subr.bf16.mxu0 0
    %5597 = vmatpush1.bf16.msra.mxu0 0
    %5598 = vmatprep.subr.bf16.mxu0 0
    %5599 = vmatpush1.bf16.msra.mxu0 0
    %5600 = vmatprep.subr.bf16.mxu0 0
    %5601 = vmatpush1.bf16.msra.mxu0 0
    %5602 = vmatprep.subr.bf16.mxu0 0
    %5603 = vmatpush1.bf16.msra.mxu0 0
    %5604 = vmatprep.subr.bf16.mxu0 0
    %5605 = vmatpush1.bf16.msra.mxu0 0
    %5606 = vmatprep.subr.bf16.mxu0 0
    %5607 = vmatpush1.bf16.msra.mxu0 0
    %5608 = vmatprep.subr.bf16.mxu0 0
    %5609 = vmatpush1.bf16.msra.mxu0 0
    %5610 = vmatprep.mubr.bf16.mxu0 0
    %5611 = vmatmul.mubr.bf16.gmra.mrb[0].mxu0 %v5536
    %v5612 = vpop.f32.mrb[0].mxu0
    %v5613 = vadd.f32 0.0, %v5612
    %v5614 = vpop.f32.mrb[0].mxu0
    %v5615 = vpop.f32.mrb[0].mxu0
    %v5616 = vpop.f32.mrb[0].mxu0
    %5617 = vdwg.mxu0
    %v5618 = vrot.slane %v4976, 3
    %v5619 = vrot.slane %v4980, 3
    %v5620 = vrot.slane %v4984, 3
    %v5621 = vrot.slane %v4988, 3
    %v5622 = vrot.slane %v4992, 3
    %v5623 = vrot.slane %v4996, 3
    %v5624 = vrot.slane %v5000, 3
    %v5625 = vrot.slane %v5004, 3
    %v5637 = vcombine.low %v5572, %v5574
    %v5638 = vcombine.high %v5572, %v5574
    %v5639 = vcombine.high %v5613, %v5613
    %v5641 = vunpack.c.l.s4 1966171168
    %v5642 = vunpack.c.0.s8 %v5641
    %v5643 = vlaneseq
    %v5644 = vshrl.u32 %v5643, 7
    %v5645 = vsub.s32 %v5642, %v5644
    %v5646 = vrot.slane %v5637, %v5645
    %v5648 = vunpack.c.l.s4 1966171168
    %v5649 = vunpack.c.0.s8 %v5648
    %v5650 = vlaneseq
    %v5651 = vshrl.u32 %v5650, 7
    %v5652 = vsub.s32 %v5649, %v5651
    %v5653 = vrot.slane %v5638, %v5652
    %v5655 = vunpack.c.l.s4 1966171168
    %v5656 = vunpack.c.0.s8 %v5655
    %v5657 = vlaneseq
    %v5658 = vshrl.u32 %v5657, 7
    %v5659 = vsub.s32 %v5656, %v5658
    %v5660 = vrot.slane %v5613, %v5659
    %v5662 = vunpack.c.l.s4 1966171168
    %v5663 = vunpack.c.0.s8 %v5662
    %v5664 = vlaneseq
    %v5665 = vshrl.u32 %v5664, 7
    %v5666 = vsub.s32 %v5663, %v5665
    %v5667 = vrot.slane %v5639, %v5666
    %v5668 = vcombine.low %v5646, %v5660
    %v5669 = vcombine.high %v5646, %v5660
    %v5670 = vcombine.low %v5653, %v5667
    %v5671 = vcombine.high %v5653, %v5667
    %v5673 = vunpack.c.l.s4 1966171168
    %v5674 = vunpack.c.0.s8 %v5673
    %v5675 = vlaneseq
    %v5676 = vshrl.u32 %v5675, 7
    %v5677 = vsub.s32 %v5674, %v5676
    %v5678 = vrot.slane %v5668, %v5677
    %v5680 = vunpack.c.l.s4 1966171168
    %v5681 = vunpack.c.0.s8 %v5680
    %v5682 = vlaneseq
    %v5683 = vshrl.u32 %v5682, 7
    %v5684 = vsub.s32 %v5681, %v5683
    %v5685 = vrot.slane %v5670, %v5684
    %v5687 = vunpack.c.l.s4 1966171168
    %v5688 = vunpack.c.0.s8 %v5687
    %v5689 = vlaneseq
    %v5690 = vshrl.u32 %v5689, 7
    %v5691 = vsub.s32 %v5688, %v5690
    %v5692 = vrot.slane %v5669, %v5691
    %v5694 = vunpack.c.l.s4 1966171168
    %v5695 = vunpack.c.0.s8 %v5694
    %v5696 = vlaneseq
    %v5697 = vshrl.u32 %v5696, 7
    %v5698 = vsub.s32 %v5695, %v5697
    %v5699 = vrot.slane %v5671, %v5698
    %v5700 = vcombine.high %v5678, %v5678
    %v5701 = vcombine.high %v5685, %v5685
    %v5702 = vcombine.high %v5692, %v5692
    %v5703 = vcombine.high %v5699, %v5699
    %v5712 = vadd.f32 %v5618, %v5678
    %v5713 = vadd.f32 %v5619, %v5692
    %v5714 = vadd.f32 %v5620, %v5700
    %v5715 = vadd.f32 %v5621, %v5702
    %v5716 = vadd.f32 %v5622, %v5685
    %v5717 = vadd.f32 %v5623, %v5699
    %v5718 = vadd.f32 %v5624, %v5701
    %v5719 = vadd.f32 %v5625, %v5703
    %v5720 = vpack.c.bf16 %v4840, %v4840
    %5721 = vmatprep.subr.bf16.mxu0 %v1381
    %5722 = vmatpush1.bf16.msra.mxu0 %v1380
    %5723 = vmatprep.subr.bf16.mxu0 %v1384
    %5724 = vmatpush1.bf16.msra.mxu0 %v1383
    %5725 = vmatprep.subr.bf16.mxu0 %v1387
    %5726 = vmatpush1.bf16.msra.mxu0 %v1386
    %5727 = vmatprep.subr.bf16.mxu0 %v1390
    %5728 = vmatpush1.bf16.msra.mxu0 %v1389
    %5729 = vmatprep.subr.bf16.mxu0 %v1393
    %5730 = vmatpush1.bf16.msra.mxu0 %v1392
    %5731 = vmatprep.subr.bf16.mxu0 %v1396
    %5732 = vmatpush1.bf16.msra.mxu0 %v1395
    %5733 = vmatprep.subr.bf16.mxu0 %v1399
    %5734 = vmatpush1.bf16.msra.mxu0 %v1398
    %5735 = vmatprep.subr.bf16.mxu0 %v1402
    %5736 = vmatpush1.bf16.msra.mxu0 %v1401
    %5737 = vmatprep.subr.bf16.mxu0 0
    %5738 = vmatpush1.bf16.msra.mxu0 0
    %5739 = vmatprep.subr.bf16.mxu0 0
    %5740 = vmatpush1.bf16.msra.mxu0 0
    %5741 = vmatprep.subr.bf16.mxu0 0
    %5742 = vmatpush1.bf16.msra.mxu0 0
    %5743 = vmatprep.subr.bf16.mxu0 0
    %5744 = vmatpush1.bf16.msra.mxu0 0
    %5745 = vmatprep.subr.bf16.mxu0 0
    %5746 = vmatpush1.bf16.msra.mxu0 0
    %5747 = vmatprep.subr.bf16.mxu0 0
    %5748 = vmatpush1.bf16.msra.mxu0 0
    %5749 = vmatprep.subr.bf16.mxu0 0
    %5750 = vmatpush1.bf16.msra.mxu0 0
    %5751 = vmatprep.subr.bf16.mxu0 0
    %5752 = vmatpush1.bf16.msra.mxu0 0
    %5753 = vmatprep.mubr.bf16.mxu0 0
    %5754 = vmatmul.mubr.bf16.gmra.mrb[0].mxu0 %v5720
    %v5755 = vpop.f32.mrb[0].mxu0
    %v5756 = vadd.f32 %v222, %v5755
    %v5757 = vpop.f32.mrb[0].mxu0
    %v5758 = vadd.f32 %v226, %v5757
    %v5759 = vpop.f32.mrb[0].mxu0
    %v5760 = vpop.f32.mrb[0].mxu0
    %5761 = vdwg.mxu0
    %5762 = vmatprep.subr.bf16.mxu0 0
    %5763 = vmatpush1.bf16.msra.mxu0 %v1382
    %5764 = vmatprep.subr.bf16.mxu0 0
    %5765 = vmatpush1.bf16.msra.mxu0 %v1385
    %5766 = vmatprep.subr.bf16.mxu0 0
    %5767 = vmatpush1.bf16.msra.mxu0 %v1388
    %5768 = vmatprep.subr.bf16.mxu0 0
    %5769 = vmatpush1.bf16.msra.mxu0 %v1391
    %5770 = vmatprep.subr.bf16.mxu0 0
    %5771 = vmatpush1.bf16.msra.mxu0 %v1394
    %5772 = vmatprep.subr.bf16.mxu0 0
    %5773 = vmatpush1.bf16.msra.mxu0 %v1397
    %5774 = vmatprep.subr.bf16.mxu0 0
    %5775 = vmatpush1.bf16.msra.mxu0 %v1400
    %5776 = vmatprep.subr.bf16.mxu0 0
    %5777 = vmatpush1.bf16.msra.mxu0 %v1403
    %5778 = vmatprep.subr.bf16.mxu0 0
    %5779 = vmatpush1.bf16.msra.mxu0 0
    %5780 = vmatprep.subr.bf16.mxu0 0
    %5781 = vmatpush1.bf16.msra.mxu0 0
    %5782 = vmatprep.subr.bf16.mxu0 0
    %5783 = vmatpush1.bf16.msra.mxu0 0
    %5784 = vmatprep.subr.bf16.mxu0 0
    %5785 = vmatpush1.bf16.msra.mxu0 0
    %5786 = vmatprep.subr.bf16.mxu0 0
    %5787 = vmatpush1.bf16.msra.mxu0 0
    %5788 = vmatprep.subr.bf16.mxu0 0
    %5789 = vmatpush1.bf16.msra.mxu0 0
    %5790 = vmatprep.subr.bf16.mxu0 0
    %5791 = vmatpush1.bf16.msra.mxu0 0
    %5792 = vmatprep.subr.bf16.mxu0 0
    %5793 = vmatpush1.bf16.msra.mxu0 0
    %5794 = vmatprep.mubr.bf16.mxu0 0
    %5795 = vmatmul.mubr.bf16.gmra.mrb[0].mxu0 %v5720
    %v5796 = vpop.f32.mrb[0].mxu0
    %v5797 = vadd.f32 %v230, %v5796
    %v5798 = vpop.f32.mrb[0].mxu0
    %v5799 = vpop.f32.mrb[0].mxu0
    %v5800 = vpop.f32.mrb[0].mxu0
    %5801 = vdwg.mxu0
    %v5802 = vmul.f32 %v1509, %v4840
    %v5804 = vcombine.high %v5756, %v5756
    %v5806 = vunpack.c.l.s4 1966171168
    %v5807 = vunpack.c.0.s8 %v5806
    %v5808 = vlaneseq
    %v5809 = vshrl.u32 %v5808, 7
    %v5810 = vsub.s32 %v5807, %v5809
    %v5811 = vrot.slane %v5756, %v5810
    %v5813 = vunpack.c.l.s4 1966171168
    %v5814 = vunpack.c.0.s8 %v5813
    %v5815 = vlaneseq
    %v5816 = vshrl.u32 %v5815, 7
    %v5817 = vsub.s32 %v5814, %v5816
    %v5818 = vrot.slane %v5804, %v5817
    %v5819 = vcombine.high %v5811, %v5811
    %v5820 = vcombine.high %v5818, %v5818
    %v5822 = vunpack.c.l.s4 1966171168
    %v5823 = vunpack.c.0.s8 %v5822
    %v5824 = vlaneseq
    %v5825 = vshrl.u32 %v5824, 7
    %v5826 = vsub.s32 %v5823, %v5825
    %v5827 = vrot.slane %v5811, %v5826
    %v5829 = vunpack.c.l.s4 1966171168
    %v5830 = vunpack.c.0.s8 %v5829
    %v5831 = vlaneseq
    %v5832 = vshrl.u32 %v5831, 7
    %v5833 = vsub.s32 %v5830, %v5832
    %v5834 = vrot.slane %v5818, %v5833
    %v5836 = vunpack.c.l.s4 1966171168
    %v5837 = vunpack.c.0.s8 %v5836
    %v5838 = vlaneseq
    %v5839 = vshrl.u32 %v5838, 7
    %v5840 = vsub.s32 %v5837, %v5839
    %v5841 = vrot.slane %v5819, %v5840
    %v5843 = vunpack.c.l.s4 1966171168
    %v5844 = vunpack.c.0.s8 %v5843
    %v5845 = vlaneseq
    %v5846 = vshrl.u32 %v5845, 7
    %v5847 = vsub.s32 %v5844, %v5846
    %v5848 = vrot.slane %v5820, %v5847
    %v5849 = vcombine.high %v5827, %v5827
    %v5850 = vcombine.high %v5834, %v5834
    %v5851 = vcombine.high %v5841, %v5841
    %v5852 = vcombine.high %v5848, %v5848
    %v5861 = vadd.f32 %v5712, %v5827
    %v5862 = vadd.f32 %v5713, %v5841
    %v5863 = vadd.f32 %v5714, %v5849
    %v5864 = vadd.f32 %v5715, %v5851
    %v5865 = vadd.f32 %v5716, %v5834
    %v5866 = vadd.f32 %v5717, %v5848
    %v5867 = vadd.f32 %v5718, %v5850
    %v5868 = vadd.f32 %v5719, %v5852
    %v5869 = vxor.u32 %v5861, 2147483648
    %v5870 = vxor.u32 %v5862, 2147483648
    %v5871 = vxor.u32 %v5863, 2147483648
    %v5872 = vxor.u32 %v5864, 2147483648
    %v5873 = vxor.u32 %v5865, 2147483648
    %v5874 = vxor.u32 %v5866, 2147483648
    %v5875 = vxor.u32 %v5867, 2147483648
    %v5876 = vxor.u32 %v5868, 2147483648
    %v5877 = vmul.f32 %v5869, 1.442695
    %v5878 = vpow.pop %v5877
    %v5879 = vmul.f32 %v5870, 1.442695
    %v5880 = vpow.pop %v5879
    %v5881 = vmul.f32 %v5871, 1.442695
    %v5882 = vpow.pop %v5881
    %v5883 = vmul.f32 %v5872, 1.442695
    %v5884 = vpow.pop %v5883
    %v5885 = vmul.f32 %v5873, 1.442695
    %v5886 = vpow.pop %v5885
    %v5887 = vmul.f32 %v5874, 1.442695
    %v5888 = vpow.pop %v5887
    %v5889 = vmul.f32 %v5875, 1.442695
    %v5890 = vpow.pop %v5889
    %v5891 = vmul.f32 %v5876, 1.442695
    %v5892 = vpow.pop %v5891
    %v5893 = vadd.f32 %v5878, 1.0
    %v5894 = vadd.f32 %v5880, 1.0
    %v5895 = vadd.f32 %v5882, 1.0
    %v5896 = vadd.f32 %v5884, 1.0
    %v5897 = vadd.f32 %v5886, 1.0
    %v5898 = vadd.f32 %v5888, 1.0
    %v5899 = vadd.f32 %v5890, 1.0
    %v5900 = vadd.f32 %v5892, 1.0
    %v5901 = vrcp.pop %v5893
    %v5902 = vmul.f32 1.0, %v5901
    %v5903 = vrcp.pop %v5894
    %v5904 = vmul.f32 1.0, %v5903
    %v5905 = vrcp.pop %v5895
    %v5906 = vmul.f32 1.0, %v5905
    %v5907 = vrcp.pop %v5896
    %v5908 = vmul.f32 1.0, %v5907
    %v5909 = vrcp.pop %v5897
    %v5910 = vmul.f32 1.0, %v5909
    %v5911 = vrcp.pop %v5898
    %v5912 = vmul.f32 1.0, %v5911
    %v5913 = vrcp.pop %v5899
    %v5914 = vmul.f32 1.0, %v5913
    %v5915 = vrcp.pop %v5900
    %v5916 = vmul.f32 1.0, %v5915
    %v5925 = vrot.slane %v5712, 1
    %v5926 = vrot.slane %v5713, 1
    %v5927 = vrot.slane %v5714, 1
    %v5928 = vrot.slane %v5715, 1
    %v5929 = vrot.slane %v5716, 1
    %v5930 = vrot.slane %v5717, 1
    %v5931 = vrot.slane %v5718, 1
    %v5932 = vrot.slane %v5719, 1
    %v5942 = vcombine.high %v5758, %v5758
    %v5944 = vunpack.c.l.s4 1966171168
    %v5945 = vunpack.c.0.s8 %v5944
    %v5946 = vlaneseq
    %v5947 = vshrl.u32 %v5946, 7
    %v5948 = vsub.s32 %v5945, %v5947
    %v5949 = vrot.slane %v5758, %v5948
    %v5951 = vunpack.c.l.s4 1966171168
    %v5952 = vunpack.c.0.s8 %v5951
    %v5953 = vlaneseq
    %v5954 = vshrl.u32 %v5953, 7
    %v5955 = vsub.s32 %v5952, %v5954
    %v5956 = vrot.slane %v5942, %v5955
    %v5957 = vcombine.high %v5949, %v5949
    %v5958 = vcombine.high %v5956, %v5956
    %v5960 = vunpack.c.l.s4 1966171168
    %v5961 = vunpack.c.0.s8 %v5960
    %v5962 = vlaneseq
    %v5963 = vshrl.u32 %v5962, 7
    %v5964 = vsub.s32 %v5961, %v5963
    %v5965 = vrot.slane %v5949, %v5964
    %v5967 = vunpack.c.l.s4 1966171168
    %v5968 = vunpack.c.0.s8 %v5967
    %v5969 = vlaneseq
    %v5970 = vshrl.u32 %v5969, 7
    %v5971 = vsub.s32 %v5968, %v5970
    %v5972 = vrot.slane %v5956, %v5971
    %v5974 = vunpack.c.l.s4 1966171168
    %v5975 = vunpack.c.0.s8 %v5974
    %v5976 = vlaneseq
    %v5977 = vshrl.u32 %v5976, 7
    %v5978 = vsub.s32 %v5975, %v5977
    %v5979 = vrot.slane %v5957, %v5978
    %v5981 = vunpack.c.l.s4 1966171168
    %v5982 = vunpack.c.0.s8 %v5981
    %v5983 = vlaneseq
    %v5984 = vshrl.u32 %v5983, 7
    %v5985 = vsub.s32 %v5982, %v5984
    %v5986 = vrot.slane %v5958, %v5985
    %v5987 = vcombine.high %v5965, %v5965
    %v5988 = vcombine.high %v5972, %v5972
    %v5989 = vcombine.high %v5979, %v5979
    %v5990 = vcombine.high %v5986, %v5986
    %v5999 = vadd.f32 %v5925, %v5965
    %v6000 = vadd.f32 %v5926, %v5979
    %v6001 = vadd.f32 %v5927, %v5987
    %v6002 = vadd.f32 %v5928, %v5989
    %v6003 = vadd.f32 %v5929, %v5972
    %v6004 = vadd.f32 %v5930, %v5986
    %v6005 = vadd.f32 %v5931, %v5988
    %v6006 = vadd.f32 %v5932, %v5990
    %v6007 = vxor.u32 %v5999, 2147483648
    %v6008 = vxor.u32 %v6000, 2147483648
    %v6009 = vxor.u32 %v6001, 2147483648
    %v6010 = vxor.u32 %v6002, 2147483648
    %v6011 = vxor.u32 %v6003, 2147483648
    %v6012 = vxor.u32 %v6004, 2147483648
    %v6013 = vxor.u32 %v6005, 2147483648
    %v6014 = vxor.u32 %v6006, 2147483648
    %v6015 = vmul.f32 %v6007, 1.442695
    %v6016 = vpow.pop %v6015
    %v6017 = vmul.f32 %v6008, 1.442695
    %v6018 = vpow.pop %v6017
    %v6019 = vmul.f32 %v6009, 1.442695
    %v6020 = vpow.pop %v6019
    %v6021 = vmul.f32 %v6010, 1.442695
    %v6022 = vpow.pop %v6021
    %v6023 = vmul.f32 %v6011, 1.442695
    %v6024 = vpow.pop %v6023
    %v6025 = vmul.f32 %v6012, 1.442695
    %v6026 = vpow.pop %v6025
    %v6027 = vmul.f32 %v6013, 1.442695
    %v6028 = vpow.pop %v6027
    %v6029 = vmul.f32 %v6014, 1.442695
    %v6030 = vpow.pop %v6029
    %v6031 = vadd.f32 %v6016, 1.0
    %v6032 = vadd.f32 %v6018, 1.0
    %v6033 = vadd.f32 %v6020, 1.0
    %v6034 = vadd.f32 %v6022, 1.0
    %v6035 = vadd.f32 %v6024, 1.0
    %v6036 = vadd.f32 %v6026, 1.0
    %v6037 = vadd.f32 %v6028, 1.0
    %v6038 = vadd.f32 %v6030, 1.0
    %v6039 = vrcp.pop %v6031
    %v6040 = vmul.f32 1.0, %v6039
    %v6041 = vrcp.pop %v6032
    %v6042 = vmul.f32 1.0, %v6041
    %v6043 = vrcp.pop %v6033
    %v6044 = vmul.f32 1.0, %v6043
    %v6045 = vrcp.pop %v6034
    %v6046 = vmul.f32 1.0, %v6045
    %v6047 = vrcp.pop %v6035
    %v6048 = vmul.f32 1.0, %v6047
    %v6049 = vrcp.pop %v6036
    %v6050 = vmul.f32 1.0, %v6049
    %v6051 = vrcp.pop %v6037
    %v6052 = vmul.f32 1.0, %v6051
    %v6053 = vrcp.pop %v6038
    %v6054 = vmul.f32 1.0, %v6053
    %v6056 = vcombine.high %v5797, %v5797
    %v6058 = vunpack.c.l.s4 1966171168
    %v6059 = vunpack.c.0.s8 %v6058
    %v6060 = vlaneseq
    %v6061 = vshrl.u32 %v6060, 7
    %v6062 = vsub.s32 %v6059, %v6061
    %v6063 = vrot.slane %v5797, %v6062
    %v6065 = vunpack.c.l.s4 1966171168
    %v6066 = vunpack.c.0.s8 %v6065
    %v6067 = vlaneseq
    %v6068 = vshrl.u32 %v6067, 7
    %v6069 = vsub.s32 %v6066, %v6068
    %v6070 = vrot.slane %v6056, %v6069
    %v6071 = vcombine.high %v6063, %v6063
    %v6072 = vcombine.high %v6070, %v6070
    %v6074 = vunpack.c.l.s4 1966171168
    %v6075 = vunpack.c.0.s8 %v6074
    %v6076 = vlaneseq
    %v6077 = vshrl.u32 %v6076, 7
    %v6078 = vsub.s32 %v6075, %v6077
    %v6079 = vrot.slane %v6063, %v6078
    %v6081 = vunpack.c.l.s4 1966171168
    %v6082 = vunpack.c.0.s8 %v6081
    %v6083 = vlaneseq
    %v6084 = vshrl.u32 %v6083, 7
    %v6085 = vsub.s32 %v6082, %v6084
    %v6086 = vrot.slane %v6070, %v6085
    %v6088 = vunpack.c.l.s4 1966171168
    %v6089 = vunpack.c.0.s8 %v6088
    %v6090 = vlaneseq
    %v6091 = vshrl.u32 %v6090, 7
    %v6092 = vsub.s32 %v6089, %v6091
    %v6093 = vrot.slane %v6071, %v6092
    %v6095 = vunpack.c.l.s4 1966171168
    %v6096 = vunpack.c.0.s8 %v6095
    %v6097 = vlaneseq
    %v6098 = vshrl.u32 %v6097, 7
    %v6099 = vsub.s32 %v6096, %v6098
    %v6100 = vrot.slane %v6072, %v6099
    %v6101 = vcombine.high %v6079, %v6079
    %v6102 = vcombine.high %v6086, %v6086
    %v6103 = vcombine.high %v6093, %v6093
    %v6104 = vcombine.high %v6100, %v6100
    %v6113 = vmul.f32 %v5902, %v6079
    %v6114 = vmul.f32 %v5904, %v6093
    %v6115 = vmul.f32 %v5906, %v6101
    %v6116 = vmul.f32 %v5908, %v6103
    %v6117 = vmul.f32 %v5910, %v6086
    %v6118 = vmul.f32 %v5912, %v6100
    %v6119 = vmul.f32 %v5914, %v6102
    %v6120 = vmul.f32 %v5916, %v6104
    %v6121 = vrot.slane %v5712, 2
    %v6122 = vrot.slane %v5713, 2
    %v6123 = vrot.slane %v5714, 2
    %v6124 = vrot.slane %v5715, 2
    %v6125 = vrot.slane %v5716, 2
    %v6126 = vrot.slane %v5717, 2
    %v6127 = vrot.slane %v5718, 2
    %v6128 = vrot.slane %v5719, 2
    %v6137 = vadd.f32 %v6121, %v6113
    %v6138 = vadd.f32 %v6122, %v6114
    %v6139 = vadd.f32 %v6123, %v6115
    %v6140 = vadd.f32 %v6124, %v6116
    %v6141 = vadd.f32 %v6125, %v6117
    %v6142 = vadd.f32 %v6126, %v6118
    %v6143 = vadd.f32 %v6127, %v6119
    %v6144 = vadd.f32 %v6128, %v6120
    %v6145 = vtanh.pop %v6137
    %v6146 = vtanh.pop %v6138
    %v6147 = vtanh.pop %v6139
    %v6148 = vtanh.pop %v6140
    %v6149 = vtanh.pop %v6141
    %v6150 = vtanh.pop %v6142
    %v6151 = vtanh.pop %v6143
    %v6152 = vtanh.pop %v6144
    %v6153 = vsub.f32 1.0, %v6040
    %v6154 = vsub.f32 1.0, %v6042
    %v6155 = vsub.f32 1.0, %v6044
    %v6156 = vsub.f32 1.0, %v6046
    %v6157 = vsub.f32 1.0, %v6048
    %v6158 = vsub.f32 1.0, %v6050
    %v6159 = vsub.f32 1.0, %v6052
    %v6160 = vsub.f32 1.0, %v6054
    %v6161 = vmul.f32 %v6153, %v6145
    %v6162 = vmul.f32 %v6154, %v6146
    %v6163 = vmul.f32 %v6155, %v6147
    %v6164 = vmul.f32 %v6156, %v6148
    %v6165 = vmul.f32 %v6157, %v6149
    %v6166 = vmul.f32 %v6158, %v6150
    %v6167 = vmul.f32 %v6159, %v6151
    %v6168 = vmul.f32 %v6160, %v6152
    %v6169 = vmul.f32 %v6040, %v4931
    %v6170 = vmul.f32 %v6042, %v4945
    %v6171 = vmul.f32 %v6044, %v4953
    %v6172 = vmul.f32 %v6046, %v4955
    %v6173 = vmul.f32 %v6048, %v4938
    %v6174 = vmul.f32 %v6050, %v4952
    %v6175 = vmul.f32 %v6052, %v4954
    %v6176 = vmul.f32 %v6054, %v4956
    %v6177 = vadd.f32 %v6161, %v6169
    %v6178 = vadd.f32 %v6162, %v6170
    %v6179 = vadd.f32 %v6163, %v6171
    %v6180 = vadd.f32 %v6164, %v6172
    %v6181 = vadd.f32 %v6165, %v6173
    %v6182 = vadd.f32 %v6166, %v6174
    %v6183 = vadd.f32 %v6167, %v6175
    %v6184 = vadd.f32 %v6168, %v6176
    %v6185 = vmul.f32 %v1951, %v6177
    %v6186 = vmul.f32 %v1951, %v6178
    %v6187 = vmul.f32 %v1951, %v6179
    %v6188 = vmul.f32 %v1951, %v6180
    %v6189 = vmul.f32 %v1951, %v6181
    %v6190 = vmul.f32 %v1951, %v6182
    %v6191 = vmul.f32 %v1951, %v6183
    %v6192 = vmul.f32 %v1951, %v6184
    %v6201 = vcombine.low %v6185, %v6186
    %v6202 = vcombine.low %v6187, %v6188
    %v6203 = vcombine.low %v6189, %v6190
    %v6204 = vcombine.low %v6191, %v6192
    %v6206 = vunpack.c.l.s4 1966171168
    %v6207 = vunpack.c.0.s8 %v6206
    %v6208 = vlaneseq
    %v6209 = vshrl.u32 %v6208, 7
    %v6210 = vsub.s32 %v6207, %v6209
    %v6211 = vrot.slane %v6201, %v6210
    %v6213 = vunpack.c.l.s4 1966171168
    %v6214 = vunpack.c.0.s8 %v6213
    %v6215 = vlaneseq
    %v6216 = vshrl.u32 %v6215, 7
    %v6217 = vsub.s32 %v6214, %v6216
    %v6218 = vrot.slane %v6202, %v6217
    %v6220 = vunpack.c.l.s4 1966171168
    %v6221 = vunpack.c.0.s8 %v6220
    %v6222 = vlaneseq
    %v6223 = vshrl.u32 %v6222, 7
    %v6224 = vsub.s32 %v6221, %v6223
    %v6225 = vrot.slane %v6203, %v6224
    %v6227 = vunpack.c.l.s4 1966171168
    %v6228 = vunpack.c.0.s8 %v6227
    %v6229 = vlaneseq
    %v6230 = vshrl.u32 %v6229, 7
    %v6231 = vsub.s32 %v6228, %v6230
    %v6232 = vrot.slane %v6204, %v6231
    %v6233 = vcombine.low %v6211, %v6218
    %v6234 = vcombine.low %v6225, %v6232
    %v6236 = vunpack.c.l.s4 1966171168
    %v6237 = vunpack.c.0.s8 %v6236
    %v6238 = vlaneseq
    %v6239 = vshrl.u32 %v6238, 7
    %v6240 = vsub.s32 %v6237, %v6239
    %v6241 = vrot.slane %v6233, %v6240
    %v6243 = vunpack.c.l.s4 1966171168
    %v6244 = vunpack.c.0.s8 %v6243
    %v6245 = vlaneseq
    %v6246 = vshrl.u32 %v6245, 7
    %v6247 = vsub.s32 %v6244, %v6246
    %v6248 = vrot.slane %v6234, %v6247
    %v6249 = vcombine.low %v6241, %v6248
    %v6251 = vadd.f32 %v5802, %v6249
    %v6253 = vcombine.high %v5535, %v5535
    %v6255 = vunpack.c.l.s4 1966171168
    %v6256 = vunpack.c.0.s8 %v6255
    %v6257 = vlaneseq
    %v6258 = vshrl.u32 %v6257, 7
    %v6259 = vsub.s32 %v6256, %v6258
    %v6260 = vrot.slane %v5535, %v6259
    %v6262 = vunpack.c.l.s4 1966171168
    %v6263 = vunpack.c.0.s8 %v6262
    %v6264 = vlaneseq
    %v6265 = vshrl.u32 %v6264, 7
    %v6266 = vsub.s32 %v6263, %v6265
    %v6267 = vrot.slane %v6253, %v6266
    %v6268 = vcombine.high %v6260, %v6260
    %v6269 = vcombine.high %v6267, %v6267
    %v6271 = vunpack.c.l.s4 1966171168
    %v6272 = vunpack.c.0.s8 %v6271
    %v6273 = vlaneseq
    %v6274 = vshrl.u32 %v6273, 7
    %v6275 = vsub.s32 %v6272, %v6274
    %v6276 = vrot.slane %v6260, %v6275
    %v6278 = vunpack.c.l.s4 1966171168
    %v6279 = vunpack.c.0.s8 %v6278
    %v6280 = vlaneseq
    %v6281 = vshrl.u32 %v6280, 7
    %v6282 = vsub.s32 %v6279, %v6281
    %v6283 = vrot.slane %v6267, %v6282
    %v6285 = vunpack.c.l.s4 1966171168
    %v6286 = vunpack.c.0.s8 %v6285
    %v6287 = vlaneseq
    %v6288 = vshrl.u32 %v6287, 7
    %v6289 = vsub.s32 %v6286, %v6288
    %v6290 = vrot.slane %v6268, %v6289
    %v6292 = vunpack.c.l.s4 1966171168
    %v6293 = vunpack.c.0.s8 %v6292
    %v6294 = vlaneseq
    %v6295 = vshrl.u32 %v6294, 7
    %v6296 = vsub.s32 %v6293, %v6295
    %v6297 = vrot.slane %v6269, %v6296
    %v6298 = vcombine.high %v6276, %v6276
    %v6299 = vcombine.high %v6283, %v6283
    %v6300 = vcombine.high %v6290, %v6290
    %v6301 = vcombine.high %v6297, %v6297
    %6310 = vst [vmem:[#allocation14 + $0x3] sm:$0x1] %v6276
    %6311 = vst [vmem:[#allocation14 + $0x13] sm:$0x1] %v6290
    %6312 = vst [vmem:[#allocation14 + $0x23] sm:$0x1] %v6298
    %6313 = vst [vmem:[#allocation14 + $0x33] sm:$0x1] %v6300
    %6314 = vst [vmem:[#allocation14 + $0x43] sm:$0x1] %v6283
    %6315 = vst [vmem:[#allocation14 + $0x53] sm:$0x1] %v6297
    %6316 = vst [vmem:[#allocation14 + $0x63] sm:$0x1] %v6299
    %6317 = vst [vmem:[#allocation14 + $0x73] sm:$0x1] %v6301
    %v6319 = vcombine.high %v6251, %v6251
    %v6321 = vunpack.c.l.s4 1966171168
    %v6322 = vunpack.c.0.s8 %v6321
    %v6323 = vlaneseq
    %v6324 = vshrl.u32 %v6323, 7
    %v6325 = vsub.s32 %v6322, %v6324
    %v6326 = vrot.slane %v6251, %v6325
    %v6328 = vunpack.c.l.s4 1966171168
    %v6329 = vunpack.c.0.s8 %v6328
    %v6330 = vlaneseq
    %v6331 = vshrl.u32 %v6330, 7
    %v6332 = vsub.s32 %v6329, %v6331
    %v6333 = vrot.slane %v6319, %v6332
    %v6334 = vcombine.high %v6326, %v6326
    %v6335 = vcombine.high %v6333, %v6333
    %v6337 = vunpack.c.l.s4 1966171168
    %v6338 = vunpack.c.0.s8 %v6337
    %v6339 = vlaneseq
    %v6340 = vshrl.u32 %v6339, 7
    %v6341 = vsub.s32 %v6338, %v6340
    %v6342 = vrot.slane %v6326, %v6341
    %v6344 = vunpack.c.l.s4 1966171168
    %v6345 = vunpack.c.0.s8 %v6344
    %v6346 = vlaneseq
    %v6347 = vshrl.u32 %v6346, 7
    %v6348 = vsub.s32 %v6345, %v6347
    %v6349 = vrot.slane %v6333, %v6348
    %v6351 = vunpack.c.l.s4 1966171168
    %v6352 = vunpack.c.0.s8 %v6351
    %v6353 = vlaneseq
    %v6354 = vshrl.u32 %v6353, 7
    %v6355 = vsub.s32 %v6352, %v6354
    %v6356 = vrot.slane %v6334, %v6355
    %v6358 = vunpack.c.l.s4 1966171168
    %v6359 = vunpack.c.0.s8 %v6358
    %v6360 = vlaneseq
    %v6361 = vshrl.u32 %v6360, 7
    %v6362 = vsub.s32 %v6359, %v6361
    %v6363 = vrot.slane %v6335, %v6362
    %v6364 = vcombine.high %v6342, %v6342
    %v6365 = vcombine.high %v6349, %v6349
    %v6366 = vcombine.high %v6356, %v6356
    %v6367 = vcombine.high %v6363, %v6363
    %6376 = vst [vmem:[#allocation14 + $0xb] sm:$0x1] %v6342
    %6377 = vst [vmem:[#allocation14 + $0x1b] sm:$0x1] %v6356
    %6378 = vst [vmem:[#allocation14 + $0x2b] sm:$0x1] %v6364
    %6379 = vst [vmem:[#allocation14 + $0x3b] sm:$0x1] %v6366
    %6380 = vst [vmem:[#allocation14 + $0x4b] sm:$0x1] %v6349
    %6381 = vst [vmem:[#allocation14 + $0x5b] sm:$0x1] %v6363
    %6382 = vst [vmem:[#allocation14 + $0x6b] sm:$0x1] %v6365
    %6383 = vst [vmem:[#allocation14 + $0x7b] sm:$0x1] %v6367
    %s6384 = scalar_lea.vmem [#allocation8], 4
    %v6385 = vld [vmem:[%s6384] ss:$8 sm:$0xf]
    %v6386 = vld [vmem:[%s6384] ss:$8 sm:$0x30]
    %v6387 = vor.u32 %v6385, %v6386
    %s6388 = scalar_lea.vmem [#allocation8], 52
    %v6389 = vld [vmem:[%s6388] ss:$8 sm:$0xf]
    %v6390 = vld [vmem:[%s6388] ss:$8 sm:$0x30]
    %v6391 = vor.u32 %v6389, %v6390
    %s6392 = scalar_lea.vmem [#allocation8], 100
    %v6393 = vld [vmem:[%s6392] ss:$8 sm:$0xf]
    %v6394 = vld [vmem:[%s6392] ss:$8 sm:$0x30]
    %v6395 = vor.u32 %v6393, %v6394
    %s6396 = scalar_lea.vmem [#allocation8], 148
    %v6397 = vld [vmem:[%s6396] ss:$8 sm:$0xf]
    %v6398 = vld [vmem:[%s6396] ss:$8 sm:$0x30]
    %v6399 = vor.u32 %v6397, %v6398
    %s6400 = scalar_lea.vmem [#allocation8], 196
    %v6401 = vld [vmem:[%s6400] ss:$8 sm:$0xf]
    %v6402 = vld [vmem:[%s6400] ss:$8 sm:$0x30]
    %v6403 = vor.u32 %v6401, %v6402
    %s6404 = scalar_lea.vmem [#allocation8], 244
    %v6405 = vld [vmem:[%s6404] ss:$8 sm:$0xf]
    %v6406 = vld [vmem:[%s6404] ss:$8 sm:$0x30]
    %v6407 = vor.u32 %v6405, %v6406
    %s6408 = scalar_lea.vmem [#allocation8], 292
    %v6409 = vld [vmem:[%s6408] ss:$8 sm:$0xf]
    %v6410 = vld [vmem:[%s6408] ss:$8 sm:$0x30]
    %v6411 = vor.u32 %v6409, %v6410
    %s6412 = scalar_lea.vmem [#allocation8], 340
    %v6413 = vld [vmem:[%s6412] ss:$8 sm:$0xf]
    %v6414 = vld [vmem:[%s6412] ss:$8 sm:$0x30]
    %v6415 = vor.u32 %v6413, %v6414
    %6416 = vmatprep.subr.bf16.mxu0 %v349
    %6417 = vmatpush1.bf16.msra.mxu0 %v348
    %6418 = vmatprep.subr.bf16.mxu0 %v352
    %6419 = vmatpush1.bf16.msra.mxu0 %v351
    %6420 = vmatprep.subr.bf16.mxu0 %v355
    %6421 = vmatpush1.bf16.msra.mxu0 %v354
    %6422 = vmatprep.subr.bf16.mxu0 %v358
    %6423 = vmatpush1.bf16.msra.mxu0 %v357
    %6424 = vmatprep.subr.bf16.mxu0 %v361
    %6425 = vmatpush1.bf16.msra.mxu0 %v360
    %6426 = vmatprep.subr.bf16.mxu0 %v364
    %6427 = vmatpush1.bf16.msra.mxu0 %v363
    %6428 = vmatprep.subr.bf16.mxu0 %v367
    %6429 = vmatpush1.bf16.msra.mxu0 %v366
    %6430 = vmatprep.subr.bf16.mxu0 %v370
    %6431 = vmatpush1.bf16.msra.mxu0 %v369
    %6432 = vmatprep.subr.bf16.mxu0 0
    %6433 = vmatpush1.bf16.msra.mxu0 0
    %6434 = vmatprep.subr.bf16.mxu0 0
    %6435 = vmatpush1.bf16.msra.mxu0 0
    %6436 = vmatprep.subr.bf16.mxu0 0
    %6437 = vmatpush1.bf16.msra.mxu0 0
    %6438 = vmatprep.subr.bf16.mxu0 0
    %6439 = vmatpush1.bf16.msra.mxu0 0
    %6440 = vmatprep.subr.bf16.mxu0 0
    %6441 = vmatpush1.bf16.msra.mxu0 0
    %6442 = vmatprep.subr.bf16.mxu0 0
    %6443 = vmatpush1.bf16.msra.mxu0 0
    %6444 = vmatprep.subr.bf16.mxu0 0
    %6445 = vmatpush1.bf16.msra.mxu0 0
    %6446 = vmatprep.subr.bf16.mxu0 0
    %6447 = vmatpush1.bf16.msra.mxu0 0
    %6448 = vmatprep.mubr.bf16.mxu0 0
    %6449 = vmatmul.mubr.bf16.gmra.mrb[0].mxu0 %v5536
    %v6450 = vpop.f32.mrb[0].mxu0
    %v6451 = vadd.f32 %v205, %v6450
    %v6452 = vpop.f32.mrb[0].mxu0
    %v6453 = vadd.f32 %v209, %v6452
    %v6454 = vpop.f32.mrb[0].mxu0
    %v6455 = vpop.f32.mrb[0].mxu0
    %6456 = vdwg.mxu0
    %6457 = vmatprep.subr.bf16.mxu0 0
    %6458 = vmatpush1.bf16.msra.mxu0 %v350
    %6459 = vmatprep.subr.bf16.mxu0 0
    %6460 = vmatpush1.bf16.msra.mxu0 %v353
    %6461 = vmatprep.subr.bf16.mxu0 0
    %6462 = vmatpush1.bf16.msra.mxu0 %v356
    %6463 = vmatprep.subr.bf16.mxu0 0
    %6464 = vmatpush1.bf16.msra.mxu0 %v359
    %6465 = vmatprep.subr.bf16.mxu0 0
    %6466 = vmatpush1.bf16.msra.mxu0 %v362
    %6467 = vmatprep.subr.bf16.mxu0 0
    %6468 = vmatpush1.bf16.msra.mxu0 %v365
    %6469 = vmatprep.subr.bf16.mxu0 0
    %6470 = vmatpush1.bf16.msra.mxu0 %v368
    %6471 = vmatprep.subr.bf16.mxu0 0
    %6472 = vmatpush1.bf16.msra.mxu0 %v371
    %6473 = vmatprep.subr.bf16.mxu0 0
    %6474 = vmatpush1.bf16.msra.mxu0 0
    %6475 = vmatprep.subr.bf16.mxu0 0
    %6476 = vmatpush1.bf16.msra.mxu0 0
    %6477 = vmatprep.subr.bf16.mxu0 0
    %6478 = vmatpush1.bf16.msra.mxu0 0
    %6479 = vmatprep.subr.bf16.mxu0 0
    %6480 = vmatpush1.bf16.msra.mxu0 0
    %6481 = vmatprep.subr.bf16.mxu0 0
    %6482 = vmatpush1.bf16.msra.mxu0 0
    %6483 = vmatprep.subr.bf16.mxu0 0
    %6484 = vmatpush1.bf16.msra.mxu0 0
    %6485 = vmatprep.subr.bf16.mxu0 0
    %6486 = vmatpush1.bf16.msra.mxu0 0
    %6487 = vmatprep.subr.bf16.mxu0 0
    %6488 = vmatpush1.bf16.msra.mxu0 0
    %6489 = vmatprep.mubr.bf16.mxu0 0
    %6490 = vmatmul.mubr.bf16.gmra.mrb[0].mxu0 %v5536
    %v6491 = vpop.f32.mrb[0].mxu0
    %v6492 = vadd.f32 %v213, %v6491
    %v6493 = vpop.f32.mrb[0].mxu0
    %v6494 = vpop.f32.mrb[0].mxu0
    %v6495 = vpop.f32.mrb[0].mxu0
    %6496 = vdwg.mxu0
    %v6497 = vmul.f32 %v477, %v5535
    %v6499 = vcombine.high %v6451, %v6451
    %v6501 = vunpack.c.l.s4 1966171168
    %v6502 = vunpack.c.0.s8 %v6501
    %v6503 = vlaneseq
    %v6504 = vshrl.u32 %v6503, 7
    %v6505 = vsub.s32 %v6502, %v6504
    %v6506 = vrot.slane %v6451, %v6505
    %v6508 = vunpack.c.l.s4 1966171168
    %v6509 = vunpack.c.0.s8 %v6508
    %v6510 = vlaneseq
    %v6511 = vshrl.u32 %v6510, 7
    %v6512 = vsub.s32 %v6509, %v6511
    %v6513 = vrot.slane %v6499, %v6512
    %v6514 = vcombine.high %v6506, %v6506
    %v6515 = vcombine.high %v6513, %v6513
    %v6517 = vunpack.c.l.s4 1966171168
    %v6518 = vunpack.c.0.s8 %v6517
    %v6519 = vlaneseq
    %v6520 = vshrl.u32 %v6519, 7
    %v6521 = vsub.s32 %v6518, %v6520
    %v6522 = vrot.slane %v6506, %v6521
    %v6524 = vunpack.c.l.s4 1966171168
    %v6525 = vunpack.c.0.s8 %v6524
    %v6526 = vlaneseq
    %v6527 = vshrl.u32 %v6526, 7
    %v6528 = vsub.s32 %v6525, %v6527
    %v6529 = vrot.slane %v6513, %v6528
    %v6531 = vunpack.c.l.s4 1966171168
    %v6532 = vunpack.c.0.s8 %v6531
    %v6533 = vlaneseq
    %v6534 = vshrl.u32 %v6533, 7
    %v6535 = vsub.s32 %v6532, %v6534
    %v6536 = vrot.slane %v6514, %v6535
    %v6538 = vunpack.c.l.s4 1966171168
    %v6539 = vunpack.c.0.s8 %v6538
    %v6540 = vlaneseq
    %v6541 = vshrl.u32 %v6540, 7
    %v6542 = vsub.s32 %v6539, %v6541
    %v6543 = vrot.slane %v6515, %v6542
    %v6544 = vcombine.high %v6522, %v6522
    %v6545 = vcombine.high %v6529, %v6529
    %v6546 = vcombine.high %v6536, %v6536
    %v6547 = vcombine.high %v6543, %v6543
    %v6556 = vadd.f32 %v6387, %v6522
    %v6557 = vadd.f32 %v6391, %v6536
    %v6558 = vadd.f32 %v6395, %v6544
    %v6559 = vadd.f32 %v6399, %v6546
    %v6560 = vadd.f32 %v6403, %v6529
    %v6561 = vadd.f32 %v6407, %v6543
    %v6562 = vadd.f32 %v6411, %v6545
    %v6563 = vadd.f32 %v6415, %v6547
    %v6564 = vxor.u32 %v6556, 2147483648
    %v6565 = vxor.u32 %v6557, 2147483648
    %v6566 = vxor.u32 %v6558, 2147483648
    %v6567 = vxor.u32 %v6559, 2147483648
    %v6568 = vxor.u32 %v6560, 2147483648
    %v6569 = vxor.u32 %v6561, 2147483648
    %v6570 = vxor.u32 %v6562, 2147483648
    %v6571 = vxor.u32 %v6563, 2147483648
    %v6572 = vmul.f32 %v6564, 1.442695
    %v6573 = vpow.pop %v6572
    %v6574 = vmul.f32 %v6565, 1.442695
    %v6575 = vpow.pop %v6574
    %v6576 = vmul.f32 %v6566, 1.442695
    %v6577 = vpow.pop %v6576
    %v6578 = vmul.f32 %v6567, 1.442695
    %v6579 = vpow.pop %v6578
    %v6580 = vmul.f32 %v6568, 1.442695
    %v6581 = vpow.pop %v6580
    %v6582 = vmul.f32 %v6569, 1.442695
    %v6583 = vpow.pop %v6582
    %v6584 = vmul.f32 %v6570, 1.442695
    %v6585 = vpow.pop %v6584
    %v6586 = vmul.f32 %v6571, 1.442695
    %v6587 = vpow.pop %v6586
    %v6588 = vadd.f32 %v6573, 1.0
    %v6589 = vadd.f32 %v6575, 1.0
    %v6590 = vadd.f32 %v6577, 1.0
    %v6591 = vadd.f32 %v6579, 1.0
    %v6592 = vadd.f32 %v6581, 1.0
    %v6593 = vadd.f32 %v6583, 1.0
    %v6594 = vadd.f32 %v6585, 1.0
    %v6595 = vadd.f32 %v6587, 1.0
    %v6596 = vrcp.pop %v6588
    %v6597 = vmul.f32 1.0, %v6596
    %v6598 = vrcp.pop %v6589
    %v6599 = vmul.f32 1.0, %v6598
    %v6600 = vrcp.pop %v6590
    %v6601 = vmul.f32 1.0, %v6600
    %v6602 = vrcp.pop %v6591
    %v6603 = vmul.f32 1.0, %v6602
    %v6604 = vrcp.pop %v6592
    %v6605 = vmul.f32 1.0, %v6604
    %v6606 = vrcp.pop %v6593
    %v6607 = vmul.f32 1.0, %v6606
    %v6608 = vrcp.pop %v6594
    %v6609 = vmul.f32 1.0, %v6608
    %v6610 = vrcp.pop %v6595
    %v6611 = vmul.f32 1.0, %v6610
    %v6620 = vrot.slane %v6387, 1
    %v6621 = vrot.slane %v6391, 1
    %v6622 = vrot.slane %v6395, 1
    %v6623 = vrot.slane %v6399, 1
    %v6624 = vrot.slane %v6403, 1
    %v6625 = vrot.slane %v6407, 1
    %v6626 = vrot.slane %v6411, 1
    %v6627 = vrot.slane %v6415, 1
    %v6637 = vcombine.high %v6453, %v6453
    %v6639 = vunpack.c.l.s4 1966171168
    %v6640 = vunpack.c.0.s8 %v6639
    %v6641 = vlaneseq
    %v6642 = vshrl.u32 %v6641, 7
    %v6643 = vsub.s32 %v6640, %v6642
    %v6644 = vrot.slane %v6453, %v6643
    %v6646 = vunpack.c.l.s4 1966171168
    %v6647 = vunpack.c.0.s8 %v6646
    %v6648 = vlaneseq
    %v6649 = vshrl.u32 %v6648, 7
    %v6650 = vsub.s32 %v6647, %v6649
    %v6651 = vrot.slane %v6637, %v6650
    %v6652 = vcombine.high %v6644, %v6644
    %v6653 = vcombine.high %v6651, %v6651
    %v6655 = vunpack.c.l.s4 1966171168
    %v6656 = vunpack.c.0.s8 %v6655
    %v6657 = vlaneseq
    %v6658 = vshrl.u32 %v6657, 7
    %v6659 = vsub.s32 %v6656, %v6658
    %v6660 = vrot.slane %v6644, %v6659
    %v6662 = vunpack.c.l.s4 1966171168
    %v6663 = vunpack.c.0.s8 %v6662
    %v6664 = vlaneseq
    %v6665 = vshrl.u32 %v6664, 7
    %v6666 = vsub.s32 %v6663, %v6665
    %v6667 = vrot.slane %v6651, %v6666
    %v6669 = vunpack.c.l.s4 1966171168
    %v6670 = vunpack.c.0.s8 %v6669
    %v6671 = vlaneseq
    %v6672 = vshrl.u32 %v6671, 7
    %v6673 = vsub.s32 %v6670, %v6672
    %v6674 = vrot.slane %v6652, %v6673
    %v6676 = vunpack.c.l.s4 1966171168
    %v6677 = vunpack.c.0.s8 %v6676
    %v6678 = vlaneseq
    %v6679 = vshrl.u32 %v6678, 7
    %v6680 = vsub.s32 %v6677, %v6679
    %v6681 = vrot.slane %v6653, %v6680
    %v6682 = vcombine.high %v6660, %v6660
    %v6683 = vcombine.high %v6667, %v6667
    %v6684 = vcombine.high %v6674, %v6674
    %v6685 = vcombine.high %v6681, %v6681
    %v6694 = vadd.f32 %v6620, %v6660
    %v6695 = vadd.f32 %v6621, %v6674
    %v6696 = vadd.f32 %v6622, %v6682
    %v6697 = vadd.f32 %v6623, %v6684
    %v6698 = vadd.f32 %v6624, %v6667
    %v6699 = vadd.f32 %v6625, %v6681
    %v6700 = vadd.f32 %v6626, %v6683
    %v6701 = vadd.f32 %v6627, %v6685
    %v6702 = vxor.u32 %v6694, 2147483648
    %v6703 = vxor.u32 %v6695, 2147483648
    %v6704 = vxor.u32 %v6696, 2147483648
    %v6705 = vxor.u32 %v6697, 2147483648
    %v6706 = vxor.u32 %v6698, 2147483648
    %v6707 = vxor.u32 %v6699, 2147483648
    %v6708 = vxor.u32 %v6700, 2147483648
    %v6709 = vxor.u32 %v6701, 2147483648
    %v6710 = vmul.f32 %v6702, 1.442695
    %v6711 = vpow.pop %v6710
    %v6712 = vmul.f32 %v6703, 1.442695
    %v6713 = vpow.pop %v6712
    %v6714 = vmul.f32 %v6704, 1.442695
    %v6715 = vpow.pop %v6714
    %v6716 = vmul.f32 %v6705, 1.442695
    %v6717 = vpow.pop %v6716
    %v6718 = vmul.f32 %v6706, 1.442695
    %v6719 = vpow.pop %v6718
    %v6720 = vmul.f32 %v6707, 1.442695
    %v6721 = vpow.pop %v6720
    %v6722 = vmul.f32 %v6708, 1.442695
    %v6723 = vpow.pop %v6722
    %v6724 = vmul.f32 %v6709, 1.442695
    %v6725 = vpow.pop %v6724
    %v6726 = vadd.f32 %v6711, 1.0
    %v6727 = vadd.f32 %v6713, 1.0
    %v6728 = vadd.f32 %v6715, 1.0
    %v6729 = vadd.f32 %v6717, 1.0
    %v6730 = vadd.f32 %v6719, 1.0
    %v6731 = vadd.f32 %v6721, 1.0
    %v6732 = vadd.f32 %v6723, 1.0
    %v6733 = vadd.f32 %v6725, 1.0
    %v6734 = vrcp.pop %v6726
    %v6735 = vmul.f32 1.0, %v6734
    %v6736 = vrcp.pop %v6727
    %v6737 = vmul.f32 1.0, %v6736
    %v6738 = vrcp.pop %v6728
    %v6739 = vmul.f32 1.0, %v6738
    %v6740 = vrcp.pop %v6729
    %v6741 = vmul.f32 1.0, %v6740
    %v6742 = vrcp.pop %v6730
    %v6743 = vmul.f32 1.0, %v6742
    %v6744 = vrcp.pop %v6731
    %v6745 = vmul.f32 1.0, %v6744
    %v6746 = vrcp.pop %v6732
    %v6747 = vmul.f32 1.0, %v6746
    %v6748 = vrcp.pop %v6733
    %v6749 = vmul.f32 1.0, %v6748
    %v6751 = vcombine.high %v6492, %v6492
    %v6753 = vunpack.c.l.s4 1966171168
    %v6754 = vunpack.c.0.s8 %v6753
    %v6755 = vlaneseq
    %v6756 = vshrl.u32 %v6755, 7
    %v6757 = vsub.s32 %v6754, %v6756
    %v6758 = vrot.slane %v6492, %v6757
    %v6760 = vunpack.c.l.s4 1966171168
    %v6761 = vunpack.c.0.s8 %v6760
    %v6762 = vlaneseq
    %v6763 = vshrl.u32 %v6762, 7
    %v6764 = vsub.s32 %v6761, %v6763
    %v6765 = vrot.slane %v6751, %v6764
    %v6766 = vcombine.high %v6758, %v6758
    %v6767 = vcombine.high %v6765, %v6765
    %v6769 = vunpack.c.l.s4 1966171168
    %v6770 = vunpack.c.0.s8 %v6769
    %v6771 = vlaneseq
    %v6772 = vshrl.u32 %v6771, 7
    %v6773 = vsub.s32 %v6770, %v6772
    %v6774 = vrot.slane %v6758, %v6773
    %v6776 = vunpack.c.l.s4 1966171168
    %v6777 = vunpack.c.0.s8 %v6776
    %v6778 = vlaneseq
    %v6779 = vshrl.u32 %v6778, 7
    %v6780 = vsub.s32 %v6777, %v6779
    %v6781 = vrot.slane %v6765, %v6780
    %v6783 = vunpack.c.l.s4 1966171168
    %v6784 = vunpack.c.0.s8 %v6783
    %v6785 = vlaneseq
    %v6786 = vshrl.u32 %v6785, 7
    %v6787 = vsub.s32 %v6784, %v6786
    %v6788 = vrot.slane %v6766, %v6787
    %v6790 = vunpack.c.l.s4 1966171168
    %v6791 = vunpack.c.0.s8 %v6790
    %v6792 = vlaneseq
    %v6793 = vshrl.u32 %v6792, 7
    %v6794 = vsub.s32 %v6791, %v6793
    %v6795 = vrot.slane %v6767, %v6794
    %v6796 = vcombine.high %v6774, %v6774
    %v6797 = vcombine.high %v6781, %v6781
    %v6798 = vcombine.high %v6788, %v6788
    %v6799 = vcombine.high %v6795, %v6795
    %v6808 = vmul.f32 %v6597, %v6774
    %v6809 = vmul.f32 %v6599, %v6788
    %v6810 = vmul.f32 %v6601, %v6796
    %v6811 = vmul.f32 %v6603, %v6798
    %v6812 = vmul.f32 %v6605, %v6781
    %v6813 = vmul.f32 %v6607, %v6795
    %v6814 = vmul.f32 %v6609, %v6797
    %v6815 = vmul.f32 %v6611, %v6799
    %v6816 = vrot.slane %v6387, 2
    %v6817 = vrot.slane %v6391, 2
    %v6818 = vrot.slane %v6395, 2
    %v6819 = vrot.slane %v6399, 2
    %v6820 = vrot.slane %v6403, 2
    %v6821 = vrot.slane %v6407, 2
    %v6822 = vrot.slane %v6411, 2
    %v6823 = vrot.slane %v6415, 2
    %v6832 = vadd.f32 %v6816, %v6808
    %v6833 = vadd.f32 %v6817, %v6809
    %v6834 = vadd.f32 %v6818, %v6810
    %v6835 = vadd.f32 %v6819, %v6811
    %v6836 = vadd.f32 %v6820, %v6812
    %v6837 = vadd.f32 %v6821, %v6813
    %v6838 = vadd.f32 %v6822, %v6814
    %v6839 = vadd.f32 %v6823, %v6815
    %v6840 = vtanh.pop %v6832
    %v6841 = vtanh.pop %v6833
    %v6842 = vtanh.pop %v6834
    %v6843 = vtanh.pop %v6835
    %v6844 = vtanh.pop %v6836
    %v6845 = vtanh.pop %v6837
    %v6846 = vtanh.pop %v6838
    %v6847 = vtanh.pop %v6839
    %v6848 = vsub.f32 1.0, %v6735
    %v6849 = vsub.f32 1.0, %v6737
    %v6850 = vsub.f32 1.0, %v6739
    %v6851 = vsub.f32 1.0, %v6741
    %v6852 = vsub.f32 1.0, %v6743
    %v6853 = vsub.f32 1.0, %v6745
    %v6854 = vsub.f32 1.0, %v6747
    %v6855 = vsub.f32 1.0, %v6749
    %v6856 = vmul.f32 %v6848, %v6840
    %v6857 = vmul.f32 %v6849, %v6841
    %v6858 = vmul.f32 %v6850, %v6842
    %v6859 = vmul.f32 %v6851, %v6843
    %v6860 = vmul.f32 %v6852, %v6844
    %v6861 = vmul.f32 %v6853, %v6845
    %v6862 = vmul.f32 %v6854, %v6846
    %v6863 = vmul.f32 %v6855, %v6847
    %v6864 = vmul.f32 %v6735, %v6276
    %v6865 = vmul.f32 %v6737, %v6290
    %v6866 = vmul.f32 %v6739, %v6298
    %v6867 = vmul.f32 %v6741, %v6300
    %v6868 = vmul.f32 %v6743, %v6283
    %v6869 = vmul.f32 %v6745, %v6297
    %v6870 = vmul.f32 %v6747, %v6299
    %v6871 = vmul.f32 %v6749, %v6301
    %v6872 = vadd.f32 %v6856, %v6864
    %v6873 = vadd.f32 %v6857, %v6865
    %v6874 = vadd.f32 %v6858, %v6866
    %v6875 = vadd.f32 %v6859, %v6867
    %v6876 = vadd.f32 %v6860, %v6868
    %v6877 = vadd.f32 %v6861, %v6869
    %v6878 = vadd.f32 %v6862, %v6870
    %v6879 = vadd.f32 %v6863, %v6871
    %v6880 = vmul.f32 %v919, %v6872
    %v6881 = vmul.f32 %v919, %v6873
    %v6882 = vmul.f32 %v919, %v6874
    %v6883 = vmul.f32 %v919, %v6875
    %v6884 = vmul.f32 %v919, %v6876
    %v6885 = vmul.f32 %v919, %v6877
    %v6886 = vmul.f32 %v919, %v6878
    %v6887 = vmul.f32 %v919, %v6879
    %v6896 = vcombine.low %v6880, %v6881
    %v6897 = vcombine.low %v6882, %v6883
    %v6898 = vcombine.low %v6884, %v6885
    %v6899 = vcombine.low %v6886, %v6887
    %v6901 = vunpack.c.l.s4 1966171168
    %v6902 = vunpack.c.0.s8 %v6901
    %v6903 = vlaneseq
    %v6904 = vshrl.u32 %v6903, 7
    %v6905 = vsub.s32 %v6902, %v6904
    %v6906 = vrot.slane %v6896, %v6905
    %v6908 = vunpack.c.l.s4 1966171168
    %v6909 = vunpack.c.0.s8 %v6908
    %v6910 = vlaneseq
    %v6911 = vshrl.u32 %v6910, 7
    %v6912 = vsub.s32 %v6909, %v6911
    %v6913 = vrot.slane %v6897, %v6912
    %v6915 = vunpack.c.l.s4 1966171168
    %v6916 = vunpack.c.0.s8 %v6915
    %v6917 = vlaneseq
    %v6918 = vshrl.u32 %v6917, 7
    %v6919 = vsub.s32 %v6916, %v6918
    %v6920 = vrot.slane %v6898, %v6919
    %v6922 = vunpack.c.l.s4 1966171168
    %v6923 = vunpack.c.0.s8 %v6922
    %v6924 = vlaneseq
    %v6925 = vshrl.u32 %v6924, 7
    %v6926 = vsub.s32 %v6923, %v6925
    %v6927 = vrot.slane %v6899, %v6926
    %v6928 = vcombine.low %v6906, %v6913
    %v6929 = vcombine.low %v6920, %v6927
    %v6931 = vunpack.c.l.s4 1966171168
    %v6932 = vunpack.c.0.s8 %v6931
    %v6933 = vlaneseq
    %v6934 = vshrl.u32 %v6933, 7
    %v6935 = vsub.s32 %v6932, %v6934
    %v6936 = vrot.slane %v6928, %v6935
    %v6938 = vunpack.c.l.s4 1966171168
    %v6939 = vunpack.c.0.s8 %v6938
    %v6940 = vlaneseq
    %v6941 = vshrl.u32 %v6940, 7
    %v6942 = vsub.s32 %v6939, %v6941
    %v6943 = vrot.slane %v6929, %v6942
    %v6944 = vcombine.low %v6936, %v6943
    %v6946 = vadd.f32 %v6497, %v6944
    %v6947 = vpack.c.bf16 %v6946, %v6946
    %6948 = vmatprep.subr.bf16.mxu0 %v1069
    %6949 = vmatpush1.bf16.msra.mxu0 %v1068
    %6950 = vmatprep.subr.bf16.mxu0 %v1072
    %6951 = vmatpush1.bf16.msra.mxu0 %v1071
    %6952 = vmatprep.subr.bf16.mxu0 %v1075
    %6953 = vmatpush1.bf16.msra.mxu0 %v1074
    %6954 = vmatprep.subr.bf16.mxu0 %v1078
    %6955 = vmatpush1.bf16.msra.mxu0 %v1077
    %6956 = vmatprep.subr.bf16.mxu0 %v1081
    %6957 = vmatpush1.bf16.msra.mxu0 %v1080
    %6958 = vmatprep.subr.bf16.mxu0 %v1084
    %6959 = vmatpush1.bf16.msra.mxu0 %v1083
    %6960 = vmatprep.subr.bf16.mxu0 %v1087
    %6961 = vmatpush1.bf16.msra.mxu0 %v1086
    %6962 = vmatprep.subr.bf16.mxu0 %v1090
    %6963 = vmatpush1.bf16.msra.mxu0 %v1089
    %6964 = vmatprep.subr.bf16.mxu0 0
    %6965 = vmatpush1.bf16.msra.mxu0 0
    %6966 = vmatprep.subr.bf16.mxu0 0
    %6967 = vmatpush1.bf16.msra.mxu0 0
    %6968 = vmatprep.subr.bf16.mxu0 0
    %6969 = vmatpush1.bf16.msra.mxu0 0
    %6970 = vmatprep.subr.bf16.mxu0 0
    %6971 = vmatpush1.bf16.msra.mxu0 0
    %6972 = vmatprep.subr.bf16.mxu0 0
    %6973 = vmatpush1.bf16.msra.mxu0 0
    %6974 = vmatprep.subr.bf16.mxu0 0
    %6975 = vmatpush1.bf16.msra.mxu0 0
    %6976 = vmatprep.subr.bf16.mxu0 0
    %6977 = vmatpush1.bf16.msra.mxu0 0
    %6978 = vmatprep.subr.bf16.mxu0 0
    %6979 = vmatpush1.bf16.msra.mxu0 0
    %6980 = vmatprep.mubr.bf16.mxu0 0
    %6981 = vmatmul.mubr.bf16.gmra.mrb[0].mxu0 %v6947
    %v6982 = vpop.f32.mrb[0].mxu0
    %v6983 = vadd.f32 0.0, %v6982
    %v6984 = vpop.f32.mrb[0].mxu0
    %v6985 = vadd.f32 0.0, %v6984
    %v6986 = vpop.f32.mrb[0].mxu0
    %v6987 = vpop.f32.mrb[0].mxu0
    %6988 = vdwg.mxu0
    %6989 = vmatprep.subr.bf16.mxu0 0
    %6990 = vmatpush1.bf16.msra.mxu0 %v1070
    %6991 = vmatprep.subr.bf16.mxu0 0
    %6992 = vmatpush1.bf16.msra.mxu0 %v1073
    %6993 = vmatprep.subr.bf16.mxu0 0
    %6994 = vmatpush1.bf16.msra.mxu0 %v1076
    %6995 = vmatprep.subr.bf16.mxu0 0
    %6996 = vmatpush1.bf16.msra.mxu0 %v1079
    %6997 = vmatprep.subr.bf16.mxu0 0
    %6998 = vmatpush1.bf16.msra.mxu0 %v1082
    %6999 = vmatprep.subr.bf16.mxu0 0
    %7000 = vmatpush1.bf16.msra.mxu0 %v1085
    %7001 = vmatprep.subr.bf16.mxu0 0
    %7002 = vmatpush1.bf16.msra.mxu0 %v1088
    %7003 = vmatprep.subr.bf16.mxu0 0
    %7004 = vmatpush1.bf16.msra.mxu0 %v1091
    %7005 = vmatprep.subr.bf16.mxu0 0
    %7006 = vmatpush1.bf16.msra.mxu0 0
    %7007 = vmatprep.subr.bf16.mxu0 0
    %7008 = vmatpush1.bf16.msra.mxu0 0
    %7009 = vmatprep.subr.bf16.mxu0 0
    %7010 = vmatpush1.bf16.msra.mxu0 0
    %7011 = vmatprep.subr.bf16.mxu0 0
    %7012 = vmatpush1.bf16.msra.mxu0 0
    %7013 = vmatprep.subr.bf16.mxu0 0
    %7014 = vmatpush1.bf16.msra.mxu0 0
    %7015 = vmatprep.subr.bf16.mxu0 0
    %7016 = vmatpush1.bf16.msra.mxu0 0
    %7017 = vmatprep.subr.bf16.mxu0 0
    %7018 = vmatpush1.bf16.msra.mxu0 0
    %7019 = vmatprep.subr.bf16.mxu0 0
    %7020 = vmatpush1.bf16.msra.mxu0 0
    %7021 = vmatprep.mubr.bf16.mxu0 0
    %7022 = vmatmul.mubr.bf16.gmra.mrb[0].mxu0 %v6947
    %v7023 = vpop.f32.mrb[0].mxu0
    %v7024 = vadd.f32 0.0, %v7023
    %v7025 = vpop.f32.mrb[0].mxu0
    %v7026 = vpop.f32.mrb[0].mxu0
    %v7027 = vpop.f32.mrb[0].mxu0
    %7028 = vdwg.mxu0
    %v7029 = vrot.slane %v6387, 3
    %v7030 = vrot.slane %v6391, 3
    %v7031 = vrot.slane %v6395, 3
    %v7032 = vrot.slane %v6399, 3
    %v7033 = vrot.slane %v6403, 3
    %v7034 = vrot.slane %v6407, 3
    %v7035 = vrot.slane %v6411, 3
    %v7036 = vrot.slane %v6415, 3
    %v7048 = vcombine.low %v6983, %v6985
    %v7049 = vcombine.high %v6983, %v6985
    %v7050 = vcombine.high %v7024, %v7024
    %v7052 = vunpack.c.l.s4 1966171168
    %v7053 = vunpack.c.0.s8 %v7052
    %v7054 = vlaneseq
    %v7055 = vshrl.u32 %v7054, 7
    %v7056 = vsub.s32 %v7053, %v7055
    %v7057 = vrot.slane %v7048, %v7056
    %v7059 = vunpack.c.l.s4 1966171168
    %v7060 = vunpack.c.0.s8 %v7059
    %v7061 = vlaneseq
    %v7062 = vshrl.u32 %v7061, 7
    %v7063 = vsub.s32 %v7060, %v7062
    %v7064 = vrot.slane %v7049, %v7063
    %v7066 = vunpack.c.l.s4 1966171168
    %v7067 = vunpack.c.0.s8 %v7066
    %v7068 = vlaneseq
    %v7069 = vshrl.u32 %v7068, 7
    %v7070 = vsub.s32 %v7067, %v7069
    %v7071 = vrot.slane %v7024, %v7070
    %v7073 = vunpack.c.l.s4 1966171168
    %v7074 = vunpack.c.0.s8 %v7073
    %v7075 = vlaneseq
    %v7076 = vshrl.u32 %v7075, 7
    %v7077 = vsub.s32 %v7074, %v7076
    %v7078 = vrot.slane %v7050, %v7077
    %v7079 = vcombine.low %v7057, %v7071
    %v7080 = vcombine.high %v7057, %v7071
    %v7081 = vcombine.low %v7064, %v7078
    %v7082 = vcombine.high %v7064, %v7078
    %v7084 = vunpack.c.l.s4 1966171168
    %v7085 = vunpack.c.0.s8 %v7084
    %v7086 = vlaneseq
    %v7087 = vshrl.u32 %v7086, 7
    %v7088 = vsub.s32 %v7085, %v7087
    %v7089 = vrot.slane %v7079, %v7088
    %v7091 = vunpack.c.l.s4 1966171168
    %v7092 = vunpack.c.0.s8 %v7091
    %v7093 = vlaneseq
    %v7094 = vshrl.u32 %v7093, 7
    %v7095 = vsub.s32 %v7092, %v7094
    %v7096 = vrot.slane %v7081, %v7095
    %v7098 = vunpack.c.l.s4 1966171168
    %v7099 = vunpack.c.0.s8 %v7098
    %v7100 = vlaneseq
    %v7101 = vshrl.u32 %v7100, 7
    %v7102 = vsub.s32 %v7099, %v7101
    %v7103 = vrot.slane %v7080, %v7102
    %v7105 = vunpack.c.l.s4 1966171168
    %v7106 = vunpack.c.0.s8 %v7105
    %v7107 = vlaneseq
    %v7108 = vshrl.u32 %v7107, 7
    %v7109 = vsub.s32 %v7106, %v7108
    %v7110 = vrot.slane %v7082, %v7109
    %v7111 = vcombine.high %v7089, %v7089
    %v7112 = vcombine.high %v7096, %v7096
    %v7113 = vcombine.high %v7103, %v7103
    %v7114 = vcombine.high %v7110, %v7110
    %v7123 = vadd.f32 %v7029, %v7089
    %v7124 = vadd.f32 %v7030, %v7103
    %v7125 = vadd.f32 %v7031, %v7111
    %v7126 = vadd.f32 %v7032, %v7113
    %v7127 = vadd.f32 %v7033, %v7096
    %v7128 = vadd.f32 %v7034, %v7110
    %v7129 = vadd.f32 %v7035, %v7112
    %v7130 = vadd.f32 %v7036, %v7114
    %v7131 = vpack.c.bf16 %v6251, %v6251
    %7132 = vmatprep.subr.bf16.mxu0 %v1381
    %7133 = vmatpush1.bf16.msra.mxu0 %v1380
    %7134 = vmatprep.subr.bf16.mxu0 %v1384
    %7135 = vmatpush1.bf16.msra.mxu0 %v1383
    %7136 = vmatprep.subr.bf16.mxu0 %v1387
    %7137 = vmatpush1.bf16.msra.mxu0 %v1386
    %7138 = vmatprep.subr.bf16.mxu0 %v1390
    %7139 = vmatpush1.bf16.msra.mxu0 %v1389
    %7140 = vmatprep.subr.bf16.mxu0 %v1393
    %7141 = vmatpush1.bf16.msra.mxu0 %v1392
    %7142 = vmatprep.subr.bf16.mxu0 %v1396
    %7143 = vmatpush1.bf16.msra.mxu0 %v1395
    %7144 = vmatprep.subr.bf16.mxu0 %v1399
    %7145 = vmatpush1.bf16.msra.mxu0 %v1398
    %7146 = vmatprep.subr.bf16.mxu0 %v1402
    %7147 = vmatpush1.bf16.msra.mxu0 %v1401
    %7148 = vmatprep.subr.bf16.mxu0 0
    %7149 = vmatpush1.bf16.msra.mxu0 0
    %7150 = vmatprep.subr.bf16.mxu0 0
    %7151 = vmatpush1.bf16.msra.mxu0 0
    %7152 = vmatprep.subr.bf16.mxu0 0
    %7153 = vmatpush1.bf16.msra.mxu0 0
    %7154 = vmatprep.subr.bf16.mxu0 0
    %7155 = vmatpush1.bf16.msra.mxu0 0
    %7156 = vmatprep.subr.bf16.mxu0 0
    %7157 = vmatpush1.bf16.msra.mxu0 0
    %7158 = vmatprep.subr.bf16.mxu0 0
    %7159 = vmatpush1.bf16.msra.mxu0 0
    %7160 = vmatprep.subr.bf16.mxu0 0
    %7161 = vmatpush1.bf16.msra.mxu0 0
    %7162 = vmatprep.subr.bf16.mxu0 0
    %7163 = vmatpush1.bf16.msra.mxu0 0
    %7164 = vmatprep.mubr.bf16.mxu0 0
    %7165 = vmatmul.mubr.bf16.gmra.mrb[0].mxu0 %v7131
    %v7166 = vpop.f32.mrb[0].mxu0
    %v7167 = vadd.f32 %v222, %v7166
    %v7168 = vpop.f32.mrb[0].mxu0
    %v7169 = vadd.f32 %v226, %v7168
    %v7170 = vpop.f32.mrb[0].mxu0
    %v7171 = vpop.f32.mrb[0].mxu0
    %7172 = vdwg.mxu0
    %7173 = vmatprep.subr.bf16.mxu0 0
    %7174 = vmatpush1.bf16.msra.mxu0 %v1382
    %7175 = vmatprep.subr.bf16.mxu0 0
    %7176 = vmatpush1.bf16.msra.mxu0 %v1385
    %7177 = vmatprep.subr.bf16.mxu0 0
    %7178 = vmatpush1.bf16.msra.mxu0 %v1388
    %7179 = vmatprep.subr.bf16.mxu0 0
    %7180 = vmatpush1.bf16.msra.mxu0 %v1391
    %7181 = vmatprep.subr.bf16.mxu0 0
    %7182 = vmatpush1.bf16.msra.mxu0 %v1394
    %7183 = vmatprep.subr.bf16.mxu0 0
    %7184 = vmatpush1.bf16.msra.mxu0 %v1397
    %7185 = vmatprep.subr.bf16.mxu0 0
    %7186 = vmatpush1.bf16.msra.mxu0 %v1400
    %7187 = vmatprep.subr.bf16.mxu0 0
    %7188 = vmatpush1.bf16.msra.mxu0 %v1403
    %7189 = vmatprep.subr.bf16.mxu0 0
    %7190 = vmatpush1.bf16.msra.mxu0 0
    %7191 = vmatprep.subr.bf16.mxu0 0
    %7192 = vmatpush1.bf16.msra.mxu0 0
    %7193 = vmatprep.subr.bf16.mxu0 0
    %7194 = vmatpush1.bf16.msra.mxu0 0
    %7195 = vmatprep.subr.bf16.mxu0 0
    %7196 = vmatpush1.bf16.msra.mxu0 0
    %7197 = vmatprep.subr.bf16.mxu0 0
    %7198 = vmatpush1.bf16.msra.mxu0 0
    %7199 = vmatprep.subr.bf16.mxu0 0
    %7200 = vmatpush1.bf16.msra.mxu0 0
    %7201 = vmatprep.subr.bf16.mxu0 0
    %7202 = vmatpush1.bf16.msra.mxu0 0
    %7203 = vmatprep.subr.bf16.mxu0 0
    %7204 = vmatpush1.bf16.msra.mxu0 0
    %7205 = vmatprep.mubr.bf16.mxu0 0
    %7206 = vmatmul.mubr.bf16.gmra.mrb[0].mxu0 %v7131
    %v7207 = vpop.f32.mrb[0].mxu0
    %v7208 = vadd.f32 %v230, %v7207
    %v7209 = vpop.f32.mrb[0].mxu0
    %v7210 = vpop.f32.mrb[0].mxu0
    %v7211 = vpop.f32.mrb[0].mxu0
    %7212 = vdwg.mxu0
    %v7213 = vmul.f32 %v1509, %v6251
    %v7215 = vcombine.high %v7167, %v7167
    %v7217 = vunpack.c.l.s4 1966171168
    %v7218 = vunpack.c.0.s8 %v7217
    %v7219 = vlaneseq
    %v7220 = vshrl.u32 %v7219, 7
    %v7221 = vsub.s32 %v7218, %v7220
    %v7222 = vrot.slane %v7167, %v7221
    %v7224 = vunpack.c.l.s4 1966171168
    %v7225 = vunpack.c.0.s8 %v7224
    %v7226 = vlaneseq
    %v7227 = vshrl.u32 %v7226, 7
    %v7228 = vsub.s32 %v7225, %v7227
    %v7229 = vrot.slane %v7215, %v7228
    %v7230 = vcombine.high %v7222, %v7222
    %v7231 = vcombine.high %v7229, %v7229
    %v7233 = vunpack.c.l.s4 1966171168
    %v7234 = vunpack.c.0.s8 %v7233
    %v7235 = vlaneseq
    %v7236 = vshrl.u32 %v7235, 7
    %v7237 = vsub.s32 %v7234, %v7236
    %v7238 = vrot.slane %v7222, %v7237
    %v7240 = vunpack.c.l.s4 1966171168
    %v7241 = vunpack.c.0.s8 %v7240
    %v7242 = vlaneseq
    %v7243 = vshrl.u32 %v7242, 7
    %v7244 = vsub.s32 %v7241, %v7243
    %v7245 = vrot.slane %v7229, %v7244
    %v7247 = vunpack.c.l.s4 1966171168
    %v7248 = vunpack.c.0.s8 %v7247
    %v7249 = vlaneseq
    %v7250 = vshrl.u32 %v7249, 7
    %v7251 = vsub.s32 %v7248, %v7250
    %v7252 = vrot.slane %v7230, %v7251
    %v7254 = vunpack.c.l.s4 1966171168
    %v7255 = vunpack.c.0.s8 %v7254
    %v7256 = vlaneseq
    %v7257 = vshrl.u32 %v7256, 7
    %v7258 = vsub.s32 %v7255, %v7257
    %v7259 = vrot.slane %v7231, %v7258
    %v7260 = vcombine.high %v7238, %v7238
    %v7261 = vcombine.high %v7245, %v7245
    %v7262 = vcombine.high %v7252, %v7252
    %v7263 = vcombine.high %v7259, %v7259
    %v7272 = vadd.f32 %v7123, %v7238
    %v7273 = vadd.f32 %v7124, %v7252
    %v7274 = vadd.f32 %v7125, %v7260
    %v7275 = vadd.f32 %v7126, %v7262
    %v7276 = vadd.f32 %v7127, %v7245
    %v7277 = vadd.f32 %v7128, %v7259
    %v7278 = vadd.f32 %v7129, %v7261
    %v7279 = vadd.f32 %v7130, %v7263
    %v7280 = vxor.u32 %v7272, 2147483648
    %v7281 = vxor.u32 %v7273, 2147483648
    %v7282 = vxor.u32 %v7274, 2147483648
    %v7283 = vxor.u32 %v7275, 2147483648
    %v7284 = vxor.u32 %v7276, 2147483648
    %v7285 = vxor.u32 %v7277, 2147483648
    %v7286 = vxor.u32 %v7278, 2147483648
    %v7287 = vxor.u32 %v7279, 2147483648
    %v7288 = vmul.f32 %v7280, 1.442695
    %v7289 = vpow.pop %v7288
    %v7290 = vmul.f32 %v7281, 1.442695
    %v7291 = vpow.pop %v7290
    %v7292 = vmul.f32 %v7282, 1.442695
    %v7293 = vpow.pop %v7292
    %v7294 = vmul.f32 %v7283, 1.442695
    %v7295 = vpow.pop %v7294
    %v7296 = vmul.f32 %v7284, 1.442695
    %v7297 = vpow.pop %v7296
    %v7298 = vmul.f32 %v7285, 1.442695
    %v7299 = vpow.pop %v7298
    %v7300 = vmul.f32 %v7286, 1.442695
    %v7301 = vpow.pop %v7300
    %v7302 = vmul.f32 %v7287, 1.442695
    %v7303 = vpow.pop %v7302
    %v7304 = vadd.f32 %v7289, 1.0
    %v7305 = vadd.f32 %v7291, 1.0
    %v7306 = vadd.f32 %v7293, 1.0
    %v7307 = vadd.f32 %v7295, 1.0
    %v7308 = vadd.f32 %v7297, 1.0
    %v7309 = vadd.f32 %v7299, 1.0
    %v7310 = vadd.f32 %v7301, 1.0
    %v7311 = vadd.f32 %v7303, 1.0
    %v7312 = vrcp.pop %v7304
    %v7313 = vmul.f32 1.0, %v7312
    %v7314 = vrcp.pop %v7305
    %v7315 = vmul.f32 1.0, %v7314
    %v7316 = vrcp.pop %v7306
    %v7317 = vmul.f32 1.0, %v7316
    %v7318 = vrcp.pop %v7307
    %v7319 = vmul.f32 1.0, %v7318
    %v7320 = vrcp.pop %v7308
    %v7321 = vmul.f32 1.0, %v7320
    %v7322 = vrcp.pop %v7309
    %v7323 = vmul.f32 1.0, %v7322
    %v7324 = vrcp.pop %v7310
    %v7325 = vmul.f32 1.0, %v7324
    %v7326 = vrcp.pop %v7311
    %v7327 = vmul.f32 1.0, %v7326
    %v7336 = vrot.slane %v7123, 1
    %v7337 = vrot.slane %v7124, 1
    %v7338 = vrot.slane %v7125, 1
    %v7339 = vrot.slane %v7126, 1
    %v7340 = vrot.slane %v7127, 1
    %v7341 = vrot.slane %v7128, 1
    %v7342 = vrot.slane %v7129, 1
    %v7343 = vrot.slane %v7130, 1
    %v7353 = vcombine.high %v7169, %v7169
    %v7355 = vunpack.c.l.s4 1966171168
    %v7356 = vunpack.c.0.s8 %v7355
    %v7357 = vlaneseq
    %v7358 = vshrl.u32 %v7357, 7
    %v7359 = vsub.s32 %v7356, %v7358
    %v7360 = vrot.slane %v7169, %v7359
    %v7362 = vunpack.c.l.s4 1966171168
    %v7363 = vunpack.c.0.s8 %v7362
    %v7364 = vlaneseq
    %v7365 = vshrl.u32 %v7364, 7
    %v7366 = vsub.s32 %v7363, %v7365
    %v7367 = vrot.slane %v7353, %v7366
    %v7368 = vcombine.high %v7360, %v7360
    %v7369 = vcombine.high %v7367, %v7367
    %v7371 = vunpack.c.l.s4 1966171168
    %v7372 = vunpack.c.0.s8 %v7371
    %v7373 = vlaneseq
    %v7374 = vshrl.u32 %v7373, 7
    %v7375 = vsub.s32 %v7372, %v7374
    %v7376 = vrot.slane %v7360, %v7375
    %v7378 = vunpack.c.l.s4 1966171168
    %v7379 = vunpack.c.0.s8 %v7378
    %v7380 = vlaneseq
    %v7381 = vshrl.u32 %v7380, 7
    %v7382 = vsub.s32 %v7379, %v7381
    %v7383 = vrot.slane %v7367, %v7382
    %v7385 = vunpack.c.l.s4 1966171168
    %v7386 = vunpack.c.0.s8 %v7385
    %v7387 = vlaneseq
    %v7388 = vshrl.u32 %v7387, 7
    %v7389 = vsub.s32 %v7386, %v7388
    %v7390 = vrot.slane %v7368, %v7389
    %v7392 = vunpack.c.l.s4 1966171168
    %v7393 = vunpack.c.0.s8 %v7392
    %v7394 = vlaneseq
    %v7395 = vshrl.u32 %v7394, 7
    %v7396 = vsub.s32 %v7393, %v7395
    %v7397 = vrot.slane %v7369, %v7396
    %v7398 = vcombine.high %v7376, %v7376
    %v7399 = vcombine.high %v7383, %v7383
    %v7400 = vcombine.high %v7390, %v7390
    %v7401 = vcombine.high %v7397, %v7397
    %v7410 = vadd.f32 %v7336, %v7376
    %v7411 = vadd.f32 %v7337, %v7390
    %v7412 = vadd.f32 %v7338, %v7398
    %v7413 = vadd.f32 %v7339, %v7400
    %v7414 = vadd.f32 %v7340, %v7383
    %v7415 = vadd.f32 %v7341, %v7397
    %v7416 = vadd.f32 %v7342, %v7399
    %v7417 = vadd.f32 %v7343, %v7401
    %v7418 = vxor.u32 %v7410, 2147483648
    %v7419 = vxor.u32 %v7411, 2147483648
    %v7420 = vxor.u32 %v7412, 2147483648
    %v7421 = vxor.u32 %v7413, 2147483648
    %v7422 = vxor.u32 %v7414, 2147483648
    %v7423 = vxor.u32 %v7415, 2147483648
    %v7424 = vxor.u32 %v7416, 2147483648
    %v7425 = vxor.u32 %v7417, 2147483648
    %v7426 = vmul.f32 %v7418, 1.442695
    %v7427 = vpow.pop %v7426
    %v7428 = vmul.f32 %v7419, 1.442695
    %v7429 = vpow.pop %v7428
    %v7430 = vmul.f32 %v7420, 1.442695
    %v7431 = vpow.pop %v7430
    %v7432 = vmul.f32 %v7421, 1.442695
    %v7433 = vpow.pop %v7432
    %v7434 = vmul.f32 %v7422, 1.442695
    %v7435 = vpow.pop %v7434
    %v7436 = vmul.f32 %v7423, 1.442695
    %v7437 = vpow.pop %v7436
    %v7438 = vmul.f32 %v7424, 1.442695
    %v7439 = vpow.pop %v7438
    %v7440 = vmul.f32 %v7425, 1.442695
    %v7441 = vpow.pop %v7440
    %v7442 = vadd.f32 %v7427, 1.0
    %v7443 = vadd.f32 %v7429, 1.0
    %v7444 = vadd.f32 %v7431, 1.0
    %v7445 = vadd.f32 %v7433, 1.0
    %v7446 = vadd.f32 %v7435, 1.0
    %v7447 = vadd.f32 %v7437, 1.0
    %v7448 = vadd.f32 %v7439, 1.0
    %v7449 = vadd.f32 %v7441, 1.0
    %v7450 = vrcp.pop %v7442
    %v7451 = vmul.f32 1.0, %v7450
    %v7452 = vrcp.pop %v7443
    %v7453 = vmul.f32 1.0, %v7452
    %v7454 = vrcp.pop %v7444
    %v7455 = vmul.f32 1.0, %v7454
    %v7456 = vrcp.pop %v7445
    %v7457 = vmul.f32 1.0, %v7456
    %v7458 = vrcp.pop %v7446
    %v7459 = vmul.f32 1.0, %v7458
    %v7460 = vrcp.pop %v7447
    %v7461 = vmul.f32 1.0, %v7460
    %v7462 = vrcp.pop %v7448
    %v7463 = vmul.f32 1.0, %v7462
    %v7464 = vrcp.pop %v7449
    %v7465 = vmul.f32 1.0, %v7464
    %v7467 = vcombine.high %v7208, %v7208
    %v7469 = vunpack.c.l.s4 1966171168
    %v7470 = vunpack.c.0.s8 %v7469
    %v7471 = vlaneseq
    %v7472 = vshrl.u32 %v7471, 7
    %v7473 = vsub.s32 %v7470, %v7472
    %v7474 = vrot.slane %v7208, %v7473
    %v7476 = vunpack.c.l.s4 1966171168
    %v7477 = vunpack.c.0.s8 %v7476
    %v7478 = vlaneseq
    %v7479 = vshrl.u32 %v7478, 7
    %v7480 = vsub.s32 %v7477, %v7479
    %v7481 = vrot.slane %v7467, %v7480
    %v7482 = vcombine.high %v7474, %v7474
    %v7483 = vcombine.high %v7481, %v7481
    %v7485 = vunpack.c.l.s4 1966171168
    %v7486 = vunpack.c.0.s8 %v7485
    %v7487 = vlaneseq
    %v7488 = vshrl.u32 %v7487, 7
    %v7489 = vsub.s32 %v7486, %v7488
    %v7490 = vrot.slane %v7474, %v7489
    %v7492 = vunpack.c.l.s4 1966171168
    %v7493 = vunpack.c.0.s8 %v7492
    %v7494 = vlaneseq
    %v7495 = vshrl.u32 %v7494, 7
    %v7496 = vsub.s32 %v7493, %v7495
    %v7497 = vrot.slane %v7481, %v7496
    %v7499 = vunpack.c.l.s4 1966171168
    %v7500 = vunpack.c.0.s8 %v7499
    %v7501 = vlaneseq
    %v7502 = vshrl.u32 %v7501, 7
    %v7503 = vsub.s32 %v7500, %v7502
    %v7504 = vrot.slane %v7482, %v7503
    %v7506 = vunpack.c.l.s4 1966171168
    %v7507 = vunpack.c.0.s8 %v7506
    %v7508 = vlaneseq
    %v7509 = vshrl.u32 %v7508, 7
    %v7510 = vsub.s32 %v7507, %v7509
    %v7511 = vrot.slane %v7483, %v7510
    %v7512 = vcombine.high %v7490, %v7490
    %v7513 = vcombine.high %v7497, %v7497
    %v7514 = vcombine.high %v7504, %v7504
    %v7515 = vcombine.high %v7511, %v7511
    %v7524 = vmul.f32 %v7313, %v7490
    %v7525 = vmul.f32 %v7315, %v7504
    %v7526 = vmul.f32 %v7317, %v7512
    %v7527 = vmul.f32 %v7319, %v7514
    %v7528 = vmul.f32 %v7321, %v7497
    %v7529 = vmul.f32 %v7323, %v7511
    %v7530 = vmul.f32 %v7325, %v7513
    %v7531 = vmul.f32 %v7327, %v7515
    %v7532 = vrot.slane %v7123, 2
    %v7533 = vrot.slane %v7124, 2
    %v7534 = vrot.slane %v7125, 2
    %v7535 = vrot.slane %v7126, 2
    %v7536 = vrot.slane %v7127, 2
    %v7537 = vrot.slane %v7128, 2
    %v7538 = vrot.slane %v7129, 2
    %v7539 = vrot.slane %v7130, 2
    %v7548 = vadd.f32 %v7532, %v7524
    %v7549 = vadd.f32 %v7533, %v7525
    %v7550 = vadd.f32 %v7534, %v7526
    %v7551 = vadd.f32 %v7535, %v7527
    %v7552 = vadd.f32 %v7536, %v7528
    %v7553 = vadd.f32 %v7537, %v7529
    %v7554 = vadd.f32 %v7538, %v7530
    %v7555 = vadd.f32 %v7539, %v7531
    %v7556 = vtanh.pop %v7548
    %v7557 = vtanh.pop %v7549
    %v7558 = vtanh.pop %v7550
    %v7559 = vtanh.pop %v7551
    %v7560 = vtanh.pop %v7552
    %v7561 = vtanh.pop %v7553
    %v7562 = vtanh.pop %v7554
    %v7563 = vtanh.pop %v7555
    %v7564 = vsub.f32 1.0, %v7451
    %v7565 = vsub.f32 1.0, %v7453
    %v7566 = vsub.f32 1.0, %v7455
    %v7567 = vsub.f32 1.0, %v7457
    %v7568 = vsub.f32 1.0, %v7459
    %v7569 = vsub.f32 1.0, %v7461
    %v7570 = vsub.f32 1.0, %v7463
    %v7571 = vsub.f32 1.0, %v7465
    %v7572 = vmul.f32 %v7564, %v7556
    %v7573 = vmul.f32 %v7565, %v7557
    %v7574 = vmul.f32 %v7566, %v7558
    %v7575 = vmul.f32 %v7567, %v7559
    %v7576 = vmul.f32 %v7568, %v7560
    %v7577 = vmul.f32 %v7569, %v7561
    %v7578 = vmul.f32 %v7570, %v7562
    %v7579 = vmul.f32 %v7571, %v7563
    %v7580 = vmul.f32 %v7451, %v6342
    %v7581 = vmul.f32 %v7453, %v6356
    %v7582 = vmul.f32 %v7455, %v6364
    %v7583 = vmul.f32 %v7457, %v6366
    %v7584 = vmul.f32 %v7459, %v6349
    %v7585 = vmul.f32 %v7461, %v6363
    %v7586 = vmul.f32 %v7463, %v6365
    %v7587 = vmul.f32 %v7465, %v6367
    %v7588 = vadd.f32 %v7572, %v7580
    %v7589 = vadd.f32 %v7573, %v7581
    %v7590 = vadd.f32 %v7574, %v7582
    %v7591 = vadd.f32 %v7575, %v7583
    %v7592 = vadd.f32 %v7576, %v7584
    %v7593 = vadd.f32 %v7577, %v7585
    %v7594 = vadd.f32 %v7578, %v7586
    %v7595 = vadd.f32 %v7579, %v7587
    %v7596 = vmul.f32 %v1951, %v7588
    %v7597 = vmul.f32 %v1951, %v7589
    %v7598 = vmul.f32 %v1951, %v7590
    %v7599 = vmul.f32 %v1951, %v7591
    %v7600 = vmul.f32 %v1951, %v7592
    %v7601 = vmul.f32 %v1951, %v7593
    %v7602 = vmul.f32 %v1951, %v7594
    %v7603 = vmul.f32 %v1951, %v7595
    %v7612 = vcombine.low %v7596, %v7597
    %v7613 = vcombine.low %v7598, %v7599
    %v7614 = vcombine.low %v7600, %v7601
    %v7615 = vcombine.low %v7602, %v7603
    %v7617 = vunpack.c.l.s4 1966171168
    %v7618 = vunpack.c.0.s8 %v7617
    %v7619 = vlaneseq
    %v7620 = vshrl.u32 %v7619, 7
    %v7621 = vsub.s32 %v7618, %v7620
    %v7622 = vrot.slane %v7612, %v7621
    %v7624 = vunpack.c.l.s4 1966171168
    %v7625 = vunpack.c.0.s8 %v7624
    %v7626 = vlaneseq
    %v7627 = vshrl.u32 %v7626, 7
    %v7628 = vsub.s32 %v7625, %v7627
    %v7629 = vrot.slane %v7613, %v7628
    %v7631 = vunpack.c.l.s4 1966171168
    %v7632 = vunpack.c.0.s8 %v7631
    %v7633 = vlaneseq
    %v7634 = vshrl.u32 %v7633, 7
    %v7635 = vsub.s32 %v7632, %v7634
    %v7636 = vrot.slane %v7614, %v7635
    %v7638 = vunpack.c.l.s4 1966171168
    %v7639 = vunpack.c.0.s8 %v7638
    %v7640 = vlaneseq
    %v7641 = vshrl.u32 %v7640, 7
    %v7642 = vsub.s32 %v7639, %v7641
    %v7643 = vrot.slane %v7615, %v7642
    %v7644 = vcombine.low %v7622, %v7629
    %v7645 = vcombine.low %v7636, %v7643
    %v7647 = vunpack.c.l.s4 1966171168
    %v7648 = vunpack.c.0.s8 %v7647
    %v7649 = vlaneseq
    %v7650 = vshrl.u32 %v7649, 7
    %v7651 = vsub.s32 %v7648, %v7650
    %v7652 = vrot.slane %v7644, %v7651
    %v7654 = vunpack.c.l.s4 1966171168
    %v7655 = vunpack.c.0.s8 %v7654
    %v7656 = vlaneseq
    %v7657 = vshrl.u32 %v7656, 7
    %v7658 = vsub.s32 %v7655, %v7657
    %v7659 = vrot.slane %v7645, %v7658
    %v7660 = vcombine.low %v7652, %v7659
    %v7662 = vadd.f32 %v7213, %v7660
    %v7664 = vcombine.high %v6946, %v6946
    %v7666 = vunpack.c.l.s4 1966171168
    %v7667 = vunpack.c.0.s8 %v7666
    %v7668 = vlaneseq
    %v7669 = vshrl.u32 %v7668, 7
    %v7670 = vsub.s32 %v7667, %v7669
    %v7671 = vrot.slane %v6946, %v7670
    %v7673 = vunpack.c.l.s4 1966171168
    %v7674 = vunpack.c.0.s8 %v7673
    %v7675 = vlaneseq
    %v7676 = vshrl.u32 %v7675, 7
    %v7677 = vsub.s32 %v7674, %v7676
    %v7678 = vrot.slane %v7664, %v7677
    %v7679 = vcombine.high %v7671, %v7671
    %v7680 = vcombine.high %v7678, %v7678
    %v7682 = vunpack.c.l.s4 1966171168
    %v7683 = vunpack.c.0.s8 %v7682
    %v7684 = vlaneseq
    %v7685 = vshrl.u32 %v7684, 7
    %v7686 = vsub.s32 %v7683, %v7685
    %v7687 = vrot.slane %v7671, %v7686
    %v7689 = vunpack.c.l.s4 1966171168
    %v7690 = vunpack.c.0.s8 %v7689
    %v7691 = vlaneseq
    %v7692 = vshrl.u32 %v7691, 7
    %v7693 = vsub.s32 %v7690, %v7692
    %v7694 = vrot.slane %v7678, %v7693
    %v7696 = vunpack.c.l.s4 1966171168
    %v7697 = vunpack.c.0.s8 %v7696
    %v7698 = vlaneseq
    %v7699 = vshrl.u32 %v7698, 7
    %v7700 = vsub.s32 %v7697, %v7699
    %v7701 = vrot.slane %v7679, %v7700
    %v7703 = vunpack.c.l.s4 1966171168
    %v7704 = vunpack.c.0.s8 %v7703
    %v7705 = vlaneseq
    %v7706 = vshrl.u32 %v7705, 7
    %v7707 = vsub.s32 %v7704, %v7706
    %v7708 = vrot.slane %v7680, %v7707
    %v7709 = vcombine.high %v7687, %v7687
    %v7710 = vcombine.high %v7694, %v7694
    %v7711 = vcombine.high %v7701, %v7701
    %v7712 = vcombine.high %v7708, %v7708
    %7721 = vst [vmem:[#allocation14 + $0x4] sm:$0x1] %v7687
    %7722 = vst [vmem:[#allocation14 + $0x14] sm:$0x1] %v7701
    %7723 = vst [vmem:[#allocation14 + $0x24] sm:$0x1] %v7709
    %7724 = vst [vmem:[#allocation14 + $0x34] sm:$0x1] %v7711
    %7725 = vst [vmem:[#allocation14 + $0x44] sm:$0x1] %v7694
    %7726 = vst [vmem:[#allocation14 + $0x54] sm:$0x1] %v7708
    %7727 = vst [vmem:[#allocation14 + $0x64] sm:$0x1] %v7710
    %7728 = vst [vmem:[#allocation14 + $0x74] sm:$0x1] %v7712
    %v7730 = vcombine.high %v7662, %v7662
    %v7732 = vunpack.c.l.s4 1966171168
    %v7733 = vunpack.c.0.s8 %v7732
    %v7734 = vlaneseq
    %v7735 = vshrl.u32 %v7734, 7
    %v7736 = vsub.s32 %v7733, %v7735
    %v7737 = vrot.slane %v7662, %v7736
    %v7739 = vunpack.c.l.s4 1966171168
    %v7740 = vunpack.c.0.s8 %v7739
    %v7741 = vlaneseq
    %v7742 = vshrl.u32 %v7741, 7
    %v7743 = vsub.s32 %v7740, %v7742
    %v7744 = vrot.slane %v7730, %v7743
    %v7745 = vcombine.high %v7737, %v7737
    %v7746 = vcombine.high %v7744, %v7744
    %v7748 = vunpack.c.l.s4 1966171168
    %v7749 = vunpack.c.0.s8 %v7748
    %v7750 = vlaneseq
    %v7751 = vshrl.u32 %v7750, 7
    %v7752 = vsub.s32 %v7749, %v7751
    %v7753 = vrot.slane %v7737, %v7752
    %v7755 = vunpack.c.l.s4 1966171168
    %v7756 = vunpack.c.0.s8 %v7755
    %v7757 = vlaneseq
    %v7758 = vshrl.u32 %v7757, 7
    %v7759 = vsub.s32 %v7756, %v7758
    %v7760 = vrot.slane %v7744, %v7759
    %v7762 = vunpack.c.l.s4 1966171168
    %v7763 = vunpack.c.0.s8 %v7762
    %v7764 = vlaneseq
    %v7765 = vshrl.u32 %v7764, 7
    %v7766 = vsub.s32 %v7763, %v7765
    %v7767 = vrot.slane %v7745, %v7766
    %v7769 = vunpack.c.l.s4 1966171168
    %v7770 = vunpack.c.0.s8 %v7769
    %v7771 = vlaneseq
    %v7772 = vshrl.u32 %v7771, 7
    %v7773 = vsub.s32 %v7770, %v7772
    %v7774 = vrot.slane %v7746, %v7773
    %v7775 = vcombine.high %v7753, %v7753
    %v7776 = vcombine.high %v7760, %v7760
    %v7777 = vcombine.high %v7767, %v7767
    %v7778 = vcombine.high %v7774, %v7774
    %7787 = vst [vmem:[#allocation14 + $0xc] sm:$0x1] %v7753
    %7788 = vst [vmem:[#allocation14 + $0x1c] sm:$0x1] %v7767
    %7789 = vst [vmem:[#allocation14 + $0x2c] sm:$0x1] %v7775
    %7790 = vst [vmem:[#allocation14 + $0x3c] sm:$0x1] %v7777
    %7791 = vst [vmem:[#allocation14 + $0x4c] sm:$0x1] %v7760
    %7792 = vst [vmem:[#allocation14 + $0x5c] sm:$0x1] %v7774
    %7793 = vst [vmem:[#allocation14 + $0x6c] sm:$0x1] %v7776
    %7794 = vst [vmem:[#allocation14 + $0x7c] sm:$0x1] %v7778
    %s7795 = scalar_lea.vmem [#allocation8], 5
    %v7796 = vld [vmem:[%s7795] ss:$8 sm:$0xf]
    %v7797 = vld [vmem:[%s7795] ss:$8 sm:$0x30]
    %v7798 = vor.u32 %v7796, %v7797
    %s7799 = scalar_lea.vmem [#allocation8], 53
    %v7800 = vld [vmem:[%s7799] ss:$8 sm:$0xf]
    %v7801 = vld [vmem:[%s7799] ss:$8 sm:$0x30]
    %v7802 = vor.u32 %v7800, %v7801
    %s7803 = scalar_lea.vmem [#allocation8], 101
    %v7804 = vld [vmem:[%s7803] ss:$8 sm:$0xf]
    %v7805 = vld [vmem:[%s7803] ss:$8 sm:$0x30]
    %v7806 = vor.u32 %v7804, %v7805
    %s7807 = scalar_lea.vmem [#allocation8], 149
    %v7808 = vld [vmem:[%s7807] ss:$8 sm:$0xf]
    %v7809 = vld [vmem:[%s7807] ss:$8 sm:$0x30]
    %v7810 = vor.u32 %v7808, %v7809
    %s7811 = scalar_lea.vmem [#allocation8], 197
    %v7812 = vld [vmem:[%s7811] ss:$8 sm:$0xf]
    %v7813 = vld [vmem:[%s7811] ss:$8 sm:$0x30]
    %v7814 = vor.u32 %v7812, %v7813
    %s7815 = scalar_lea.vmem [#allocation8], 245
    %v7816 = vld [vmem:[%s7815] ss:$8 sm:$0xf]
    %v7817 = vld [vmem:[%s7815] ss:$8 sm:$0x30]
    %v7818 = vor.u32 %v7816, %v7817
    %s7819 = scalar_lea.vmem [#allocation8], 293
    %v7820 = vld [vmem:[%s7819] ss:$8 sm:$0xf]
    %v7821 = vld [vmem:[%s7819] ss:$8 sm:$0x30]
    %v7822 = vor.u32 %v7820, %v7821
    %s7823 = scalar_lea.vmem [#allocation8], 341
    %v7824 = vld [vmem:[%s7823] ss:$8 sm:$0xf]
    %v7825 = vld [vmem:[%s7823] ss:$8 sm:$0x30]
    %v7826 = vor.u32 %v7824, %v7825
    %7827 = vmatprep.subr.bf16.mxu0 %v349
    %7828 = vmatpush1.bf16.msra.mxu0 %v348
    %7829 = vmatprep.subr.bf16.mxu0 %v352
    %7830 = vmatpush1.bf16.msra.mxu0 %v351
    %7831 = vmatprep.subr.bf16.mxu0 %v355
    %7832 = vmatpush1.bf16.msra.mxu0 %v354
    %7833 = vmatprep.subr.bf16.mxu0 %v358
    %7834 = vmatpush1.bf16.msra.mxu0 %v357
    %7835 = vmatprep.subr.bf16.mxu0 %v361
    %7836 = vmatpush1.bf16.msra.mxu0 %v360
    %7837 = vmatprep.subr.bf16.mxu0 %v364
    %7838 = vmatpush1.bf16.msra.mxu0 %v363
    %7839 = vmatprep.subr.bf16.mxu0 %v367
    %7840 = vmatpush1.bf16.msra.mxu0 %v366
    %7841 = vmatprep.subr.bf16.mxu0 %v370
    %7842 = vmatpush1.bf16.msra.mxu0 %v369
    %7843 = vmatprep.subr.bf16.mxu0 0
    %7844 = vmatpush1.bf16.msra.mxu0 0
    %7845 = vmatprep.subr.bf16.mxu0 0
    %7846 = vmatpush1.bf16.msra.mxu0 0
    %7847 = vmatprep.subr.bf16.mxu0 0
    %7848 = vmatpush1.bf16.msra.mxu0 0
    %7849 = vmatprep.subr.bf16.mxu0 0
    %7850 = vmatpush1.bf16.msra.mxu0 0
    %7851 = vmatprep.subr.bf16.mxu0 0
    %7852 = vmatpush1.bf16.msra.mxu0 0
    %7853 = vmatprep.subr.bf16.mxu0 0
    %7854 = vmatpush1.bf16.msra.mxu0 0
    %7855 = vmatprep.subr.bf16.mxu0 0
    %7856 = vmatpush1.bf16.msra.mxu0 0
    %7857 = vmatprep.subr.bf16.mxu0 0
    %7858 = vmatpush1.bf16.msra.mxu0 0
    %7859 = vmatprep.mubr.bf16.mxu0 0
    %7860 = vmatmul.mubr.bf16.gmra.mrb[0].mxu0 %v6947
    %v7861 = vpop.f32.mrb[0].mxu0
    %v7862 = vadd.f32 %v205, %v7861
    %v7863 = vpop.f32.mrb[0].mxu0
    %v7864 = vadd.f32 %v209, %v7863
    %v7865 = vpop.f32.mrb[0].mxu0
    %v7866 = vpop.f32.mrb[0].mxu0
    %7867 = vdwg.mxu0
    %7868 = vmatprep.subr.bf16.mxu0 0
    %7869 = vmatpush1.bf16.msra.mxu0 %v350
    %7870 = vmatprep.subr.bf16.mxu0 0
    %7871 = vmatpush1.bf16.msra.mxu0 %v353
    %7872 = vmatprep.subr.bf16.mxu0 0
    %7873 = vmatpush1.bf16.msra.mxu0 %v356
    %7874 = vmatprep.subr.bf16.mxu0 0
    %7875 = vmatpush1.bf16.msra.mxu0 %v359
    %7876 = vmatprep.subr.bf16.mxu0 0
    %7877 = vmatpush1.bf16.msra.mxu0 %v362
    %7878 = vmatprep.subr.bf16.mxu0 0
    %7879 = vmatpush1.bf16.msra.mxu0 %v365
    %7880 = vmatprep.subr.bf16.mxu0 0
    %7881 = vmatpush1.bf16.msra.mxu0 %v368
    %7882 = vmatprep.subr.bf16.mxu0 0
    %7883 = vmatpush1.bf16.msra.mxu0 %v371
    %7884 = vmatprep.subr.bf16.mxu0 0
    %7885 = vmatpush1.bf16.msra.mxu0 0
    %7886 = vmatprep.subr.bf16.mxu0 0
    %7887 = vmatpush1.bf16.msra.mxu0 0
    %7888 = vmatprep.subr.bf16.mxu0 0
    %7889 = vmatpush1.bf16.msra.mxu0 0
    %7890 = vmatprep.subr.bf16.mxu0 0
    %7891 = vmatpush1.bf16.msra.mxu0 0
    %7892 = vmatprep.subr.bf16.mxu0 0
    %7893 = vmatpush1.bf16.msra.mxu0 0
    %7894 = vmatprep.subr.bf16.mxu0 0
    %7895 = vmatpush1.bf16.msra.mxu0 0
    %7896 = vmatprep.subr.bf16.mxu0 0
    %7897 = vmatpush1.bf16.msra.mxu0 0
    %7898 = vmatprep.subr.bf16.mxu0 0
    %7899 = vmatpush1.bf16.msra.mxu0 0
    %7900 = vmatprep.mubr.bf16.mxu0 0
    %7901 = vmatmul.mubr.bf16.gmra.mrb[0].mxu0 %v6947
    %v7902 = vpop.f32.mrb[0].mxu0
    %v7903 = vadd.f32 %v213, %v7902
    %v7904 = vpop.f32.mrb[0].mxu0
    %v7905 = vpop.f32.mrb[0].mxu0
    %v7906 = vpop.f32.mrb[0].mxu0
    %7907 = vdwg.mxu0
    %v7908 = vmul.f32 %v477, %v6946
    %v7910 = vcombine.high %v7862, %v7862
    %v7912 = vunpack.c.l.s4 1966171168
    %v7913 = vunpack.c.0.s8 %v7912
    %v7914 = vlaneseq
    %v7915 = vshrl.u32 %v7914, 7
    %v7916 = vsub.s32 %v7913, %v7915
    %v7917 = vrot.slane %v7862, %v7916
    %v7919 = vunpack.c.l.s4 1966171168
    %v7920 = vunpack.c.0.s8 %v7919
    %v7921 = vlaneseq
    %v7922 = vshrl.u32 %v7921, 7
    %v7923 = vsub.s32 %v7920, %v7922
    %v7924 = vrot.slane %v7910, %v7923
    %v7925 = vcombine.high %v7917, %v7917
    %v7926 = vcombine.high %v7924, %v7924
    %v7928 = vunpack.c.l.s4 1966171168
    %v7929 = vunpack.c.0.s8 %v7928
    %v7930 = vlaneseq
    %v7931 = vshrl.u32 %v7930, 7
    %v7932 = vsub.s32 %v7929, %v7931
    %v7933 = vrot.slane %v7917, %v7932
    %v7935 = vunpack.c.l.s4 1966171168
    %v7936 = vunpack.c.0.s8 %v7935
    %v7937 = vlaneseq
    %v7938 = vshrl.u32 %v7937, 7
    %v7939 = vsub.s32 %v7936, %v7938
    %v7940 = vrot.slane %v7924, %v7939
    %v7942 = vunpack.c.l.s4 1966171168
    %v7943 = vunpack.c.0.s8 %v7942
    %v7944 = vlaneseq
    %v7945 = vshrl.u32 %v7944, 7
    %v7946 = vsub.s32 %v7943, %v7945
    %v7947 = vrot.slane %v7925, %v7946
    %v7949 = vunpack.c.l.s4 1966171168
    %v7950 = vunpack.c.0.s8 %v7949
    %v7951 = vlaneseq
    %v7952 = vshrl.u32 %v7951, 7
    %v7953 = vsub.s32 %v7950, %v7952
    %v7954 = vrot.slane %v7926, %v7953
    %v7955 = vcombine.high %v7933, %v7933
    %v7956 = vcombine.high %v7940, %v7940
    %v7957 = vcombine.high %v7947, %v7947
    %v7958 = vcombine.high %v7954, %v7954
    %v7967 = vadd.f32 %v7798, %v7933
    %v7968 = vadd.f32 %v7802, %v7947
    %v7969 = vadd.f32 %v7806, %v7955
    %v7970 = vadd.f32 %v7810, %v7957
    %v7971 = vadd.f32 %v7814, %v7940
    %v7972 = vadd.f32 %v7818, %v7954
    %v7973 = vadd.f32 %v7822, %v7956
    %v7974 = vadd.f32 %v7826, %v7958
    %v7975 = vxor.u32 %v7967, 2147483648
    %v7976 = vxor.u32 %v7968, 2147483648
    %v7977 = vxor.u32 %v7969, 2147483648
    %v7978 = vxor.u32 %v7970, 2147483648
    %v7979 = vxor.u32 %v7971, 2147483648
    %v7980 = vxor.u32 %v7972, 2147483648
    %v7981 = vxor.u32 %v7973, 2147483648
    %v7982 = vxor.u32 %v7974, 2147483648
    %v7983 = vmul.f32 %v7975, 1.442695
    %v7984 = vpow.pop %v7983
    %v7985 = vmul.f32 %v7976, 1.442695
    %v7986 = vpow.pop %v7985
    %v7987 = vmul.f32 %v7977, 1.442695
    %v7988 = vpow.pop %v7987
    %v7989 = vmul.f32 %v7978, 1.442695
    %v7990 = vpow.pop %v7989
    %v7991 = vmul.f32 %v7979, 1.442695
    %v7992 = vpow.pop %v7991
    %v7993 = vmul.f32 %v7980, 1.442695
    %v7994 = vpow.pop %v7993
    %v7995 = vmul.f32 %v7981, 1.442695
    %v7996 = vpow.pop %v7995
    %v7997 = vmul.f32 %v7982, 1.442695
    %v7998 = vpow.pop %v7997
    %v7999 = vadd.f32 %v7984, 1.0
    %v8000 = vadd.f32 %v7986, 1.0
    %v8001 = vadd.f32 %v7988, 1.0
    %v8002 = vadd.f32 %v7990, 1.0
    %v8003 = vadd.f32 %v7992, 1.0
    %v8004 = vadd.f32 %v7994, 1.0
    %v8005 = vadd.f32 %v7996, 1.0
    %v8006 = vadd.f32 %v7998, 1.0
    %v8007 = vrcp.pop %v7999
    %v8008 = vmul.f32 1.0, %v8007
    %v8009 = vrcp.pop %v8000
    %v8010 = vmul.f32 1.0, %v8009
    %v8011 = vrcp.pop %v8001
    %v8012 = vmul.f32 1.0, %v8011
    %v8013 = vrcp.pop %v8002
    %v8014 = vmul.f32 1.0, %v8013
    %v8015 = vrcp.pop %v8003
    %v8016 = vmul.f32 1.0, %v8015
    %v8017 = vrcp.pop %v8004
    %v8018 = vmul.f32 1.0, %v8017
    %v8019 = vrcp.pop %v8005
    %v8020 = vmul.f32 1.0, %v8019
    %v8021 = vrcp.pop %v8006
    %v8022 = vmul.f32 1.0, %v8021
    %v8031 = vrot.slane %v7798, 1
    %v8032 = vrot.slane %v7802, 1
    %v8033 = vrot.slane %v7806, 1
    %v8034 = vrot.slane %v7810, 1
    %v8035 = vrot.slane %v7814, 1
    %v8036 = vrot.slane %v7818, 1
    %v8037 = vrot.slane %v7822, 1
    %v8038 = vrot.slane %v7826, 1
    %v8048 = vcombine.high %v7864, %v7864
    %v8050 = vunpack.c.l.s4 1966171168
    %v8051 = vunpack.c.0.s8 %v8050
    %v8052 = vlaneseq
    %v8053 = vshrl.u32 %v8052, 7
    %v8054 = vsub.s32 %v8051, %v8053
    %v8055 = vrot.slane %v7864, %v8054
    %v8057 = vunpack.c.l.s4 1966171168
    %v8058 = vunpack.c.0.s8 %v8057
    %v8059 = vlaneseq
    %v8060 = vshrl.u32 %v8059, 7
    %v8061 = vsub.s32 %v8058, %v8060
    %v8062 = vrot.slane %v8048, %v8061
    %v8063 = vcombine.high %v8055, %v8055
    %v8064 = vcombine.high %v8062, %v8062
    %v8066 = vunpack.c.l.s4 1966171168
    %v8067 = vunpack.c.0.s8 %v8066
    %v8068 = vlaneseq
    %v8069 = vshrl.u32 %v8068, 7
    %v8070 = vsub.s32 %v8067, %v8069
    %v8071 = vrot.slane %v8055, %v8070
    %v8073 = vunpack.c.l.s4 1966171168
    %v8074 = vunpack.c.0.s8 %v8073
    %v8075 = vlaneseq
    %v8076 = vshrl.u32 %v8075, 7
    %v8077 = vsub.s32 %v8074, %v8076
    %v8078 = vrot.slane %v8062, %v8077
    %v8080 = vunpack.c.l.s4 1966171168
    %v8081 = vunpack.c.0.s8 %v8080
    %v8082 = vlaneseq
    %v8083 = vshrl.u32 %v8082, 7
    %v8084 = vsub.s32 %v8081, %v8083
    %v8085 = vrot.slane %v8063, %v8084
    %v8087 = vunpack.c.l.s4 1966171168
    %v8088 = vunpack.c.0.s8 %v8087
    %v8089 = vlaneseq
    %v8090 = vshrl.u32 %v8089, 7
    %v8091 = vsub.s32 %v8088, %v8090
    %v8092 = vrot.slane %v8064, %v8091
    %v8093 = vcombine.high %v8071, %v8071
    %v8094 = vcombine.high %v8078, %v8078
    %v8095 = vcombine.high %v8085, %v8085
    %v8096 = vcombine.high %v8092, %v8092
    %v8105 = vadd.f32 %v8031, %v8071
    %v8106 = vadd.f32 %v8032, %v8085
    %v8107 = vadd.f32 %v8033, %v8093
    %v8108 = vadd.f32 %v8034, %v8095
    %v8109 = vadd.f32 %v8035, %v8078
    %v8110 = vadd.f32 %v8036, %v8092
    %v8111 = vadd.f32 %v8037, %v8094
    %v8112 = vadd.f32 %v8038, %v8096
    %v8113 = vxor.u32 %v8105, 2147483648
    %v8114 = vxor.u32 %v8106, 2147483648
    %v8115 = vxor.u32 %v8107, 2147483648
    %v8116 = vxor.u32 %v8108, 2147483648
    %v8117 = vxor.u32 %v8109, 2147483648
    %v8118 = vxor.u32 %v8110, 2147483648
    %v8119 = vxor.u32 %v8111, 2147483648
    %v8120 = vxor.u32 %v8112, 2147483648
    %v8121 = vmul.f32 %v8113, 1.442695
    %v8122 = vpow.pop %v8121
    %v8123 = vmul.f32 %v8114, 1.442695
    %v8124 = vpow.pop %v8123
    %v8125 = vmul.f32 %v8115, 1.442695
    %v8126 = vpow.pop %v8125
    %v8127 = vmul.f32 %v8116, 1.442695
    %v8128 = vpow.pop %v8127
    %v8129 = vmul.f32 %v8117, 1.442695
    %v8130 = vpow.pop %v8129
    %v8131 = vmul.f32 %v8118, 1.442695
    %v8132 = vpow.pop %v8131
    %v8133 = vmul.f32 %v8119, 1.442695
    %v8134 = vpow.pop %v8133
    %v8135 = vmul.f32 %v8120, 1.442695
    %v8136 = vpow.pop %v8135
    %v8137 = vadd.f32 %v8122, 1.0
    %v8138 = vadd.f32 %v8124, 1.0
    %v8139 = vadd.f32 %v8126, 1.0
    %v8140 = vadd.f32 %v8128, 1.0
    %v8141 = vadd.f32 %v8130, 1.0
    %v8142 = vadd.f32 %v8132, 1.0
    %v8143 = vadd.f32 %v8134, 1.0
    %v8144 = vadd.f32 %v8136, 1.0
    %v8145 = vrcp.pop %v8137
    %v8146 = vmul.f32 1.0, %v8145
    %v8147 = vrcp.pop %v8138
    %v8148 = vmul.f32 1.0, %v8147
    %v8149 = vrcp.pop %v8139
    %v8150 = vmul.f32 1.0, %v8149
    %v8151 = vrcp.pop %v8140
    %v8152 = vmul.f32 1.0, %v8151
    %v8153 = vrcp.pop %v8141
    %v8154 = vmul.f32 1.0, %v8153
    %v8155 = vrcp.pop %v8142
    %v8156 = vmul.f32 1.0, %v8155
    %v8157 = vrcp.pop %v8143
    %v8158 = vmul.f32 1.0, %v8157
    %v8159 = vrcp.pop %v8144
    %v8160 = vmul.f32 1.0, %v8159
    %v8162 = vcombine.high %v7903, %v7903
    %v8164 = vunpack.c.l.s4 1966171168
    %v8165 = vunpack.c.0.s8 %v8164
    %v8166 = vlaneseq
    %v8167 = vshrl.u32 %v8166, 7
    %v8168 = vsub.s32 %v8165, %v8167
    %v8169 = vrot.slane %v7903, %v8168
    %v8171 = vunpack.c.l.s4 1966171168
    %v8172 = vunpack.c.0.s8 %v8171
    %v8173 = vlaneseq
    %v8174 = vshrl.u32 %v8173, 7
    %v8175 = vsub.s32 %v8172, %v8174
    %v8176 = vrot.slane %v8162, %v8175
    %v8177 = vcombine.high %v8169, %v8169
    %v8178 = vcombine.high %v8176, %v8176
    %v8180 = vunpack.c.l.s4 1966171168
    %v8181 = vunpack.c.0.s8 %v8180
    %v8182 = vlaneseq
    %v8183 = vshrl.u32 %v8182, 7
    %v8184 = vsub.s32 %v8181, %v8183
    %v8185 = vrot.slane %v8169, %v8184
    %v8187 = vunpack.c.l.s4 1966171168
    %v8188 = vunpack.c.0.s8 %v8187
    %v8189 = vlaneseq
    %v8190 = vshrl.u32 %v8189, 7
    %v8191 = vsub.s32 %v8188, %v8190
    %v8192 = vrot.slane %v8176, %v8191
    %v8194 = vunpack.c.l.s4 1966171168
    %v8195 = vunpack.c.0.s8 %v8194
    %v8196 = vlaneseq
    %v8197 = vshrl.u32 %v8196, 7
    %v8198 = vsub.s32 %v8195, %v8197
    %v8199 = vrot.slane %v8177, %v8198
    %v8201 = vunpack.c.l.s4 1966171168
    %v8202 = vunpack.c.0.s8 %v8201
    %v8203 = vlaneseq
    %v8204 = vshrl.u32 %v8203, 7
    %v8205 = vsub.s32 %v8202, %v8204
    %v8206 = vrot.slane %v8178, %v8205
    %v8207 = vcombine.high %v8185, %v8185
    %v8208 = vcombine.high %v8192, %v8192
    %v8209 = vcombine.high %v8199, %v8199
    %v8210 = vcombine.high %v8206, %v8206
    %v8219 = vmul.f32 %v8008, %v8185
    %v8220 = vmul.f32 %v8010, %v8199
    %v8221 = vmul.f32 %v8012, %v8207
    %v8222 = vmul.f32 %v8014, %v8209
    %v8223 = vmul.f32 %v8016, %v8192
    %v8224 = vmul.f32 %v8018, %v8206
    %v8225 = vmul.f32 %v8020, %v8208
    %v8226 = vmul.f32 %v8022, %v8210
    %v8227 = vrot.slane %v7798, 2
    %v8228 = vrot.slane %v7802, 2
    %v8229 = vrot.slane %v7806, 2
    %v8230 = vrot.slane %v7810, 2
    %v8231 = vrot.slane %v7814, 2
    %v8232 = vrot.slane %v7818, 2
    %v8233 = vrot.slane %v7822, 2
    %v8234 = vrot.slane %v7826, 2
    %v8243 = vadd.f32 %v8227, %v8219
    %v8244 = vadd.f32 %v8228, %v8220
    %v8245 = vadd.f32 %v8229, %v8221
    %v8246 = vadd.f32 %v8230, %v8222
    %v8247 = vadd.f32 %v8231, %v8223
    %v8248 = vadd.f32 %v8232, %v8224
    %v8249 = vadd.f32 %v8233, %v8225
    %v8250 = vadd.f32 %v8234, %v8226
    %v8251 = vtanh.pop %v8243
    %v8252 = vtanh.pop %v8244
    %v8253 = vtanh.pop %v8245
    %v8254 = vtanh.pop %v8246
    %v8255 = vtanh.pop %v8247
    %v8256 = vtanh.pop %v8248
    %v8257 = vtanh.pop %v8249
    %v8258 = vtanh.pop %v8250
    %v8259 = vsub.f32 1.0, %v8146
    %v8260 = vsub.f32 1.0, %v8148
    %v8261 = vsub.f32 1.0, %v8150
    %v8262 = vsub.f32 1.0, %v8152
    %v8263 = vsub.f32 1.0, %v8154
    %v8264 = vsub.f32 1.0, %v8156
    %v8265 = vsub.f32 1.0, %v8158
    %v8266 = vsub.f32 1.0, %v8160
    %v8267 = vmul.f32 %v8259, %v8251
    %v8268 = vmul.f32 %v8260, %v8252
    %v8269 = vmul.f32 %v8261, %v8253
    %v8270 = vmul.f32 %v8262, %v8254
    %v8271 = vmul.f32 %v8263, %v8255
    %v8272 = vmul.f32 %v8264, %v8256
    %v8273 = vmul.f32 %v8265, %v8257
    %v8274 = vmul.f32 %v8266, %v8258
    %v8275 = vmul.f32 %v8146, %v7687
    %v8276 = vmul.f32 %v8148, %v7701
    %v8277 = vmul.f32 %v8150, %v7709
    %v8278 = vmul.f32 %v8152, %v7711
    %v8279 = vmul.f32 %v8154, %v7694
    %v8280 = vmul.f32 %v8156, %v7708
    %v8281 = vmul.f32 %v8158, %v7710
    %v8282 = vmul.f32 %v8160, %v7712
    %v8283 = vadd.f32 %v8267, %v8275
    %v8284 = vadd.f32 %v8268, %v8276
    %v8285 = vadd.f32 %v8269, %v8277
    %v8286 = vadd.f32 %v8270, %v8278
    %v8287 = vadd.f32 %v8271, %v8279
    %v8288 = vadd.f32 %v8272, %v8280
    %v8289 = vadd.f32 %v8273, %v8281
    %v8290 = vadd.f32 %v8274, %v8282
    %v8291 = vmul.f32 %v919, %v8283
    %v8292 = vmul.f32 %v919, %v8284
    %v8293 = vmul.f32 %v919, %v8285
    %v8294 = vmul.f32 %v919, %v8286
    %v8295 = vmul.f32 %v919, %v8287
    %v8296 = vmul.f32 %v919, %v8288
    %v8297 = vmul.f32 %v919, %v8289
    %v8298 = vmul.f32 %v919, %v8290
    %v8307 = vcombine.low %v8291, %v8292
    %v8308 = vcombine.low %v8293, %v8294
    %v8309 = vcombine.low %v8295, %v8296
    %v8310 = vcombine.low %v8297, %v8298
    %v8312 = vunpack.c.l.s4 1966171168
    %v8313 = vunpack.c.0.s8 %v8312
    %v8314 = vlaneseq
    %v8315 = vshrl.u32 %v8314, 7
    %v8316 = vsub.s32 %v8313, %v8315
    %v8317 = vrot.slane %v8307, %v8316
    %v8319 = vunpack.c.l.s4 1966171168
    %v8320 = vunpack.c.0.s8 %v8319
    %v8321 = vlaneseq
    %v8322 = vshrl.u32 %v8321, 7
    %v8323 = vsub.s32 %v8320, %v8322
    %v8324 = vrot.slane %v8308, %v8323
    %v8326 = vunpack.c.l.s4 1966171168
    %v8327 = vunpack.c.0.s8 %v8326
    %v8328 = vlaneseq
    %v8329 = vshrl.u32 %v8328, 7
    %v8330 = vsub.s32 %v8327, %v8329
    %v8331 = vrot.slane %v8309, %v8330
    %v8333 = vunpack.c.l.s4 1966171168
    %v8334 = vunpack.c.0.s8 %v8333
    %v8335 = vlaneseq
    %v8336 = vshrl.u32 %v8335, 7
    %v8337 = vsub.s32 %v8334, %v8336
    %v8338 = vrot.slane %v8310, %v8337
    %v8339 = vcombine.low %v8317, %v8324
    %v8340 = vcombine.low %v8331, %v8338
    %v8342 = vunpack.c.l.s4 1966171168
    %v8343 = vunpack.c.0.s8 %v8342
    %v8344 = vlaneseq
    %v8345 = vshrl.u32 %v8344, 7
    %v8346 = vsub.s32 %v8343, %v8345
    %v8347 = vrot.slane %v8339, %v8346
    %v8349 = vunpack.c.l.s4 1966171168
    %v8350 = vunpack.c.0.s8 %v8349
    %v8351 = vlaneseq
    %v8352 = vshrl.u32 %v8351, 7
    %v8353 = vsub.s32 %v8350, %v8352
    %v8354 = vrot.slane %v8340, %v8353
    %v8355 = vcombine.low %v8347, %v8354
    %v8357 = vadd.f32 %v7908, %v8355
    %v8358 = vpack.c.bf16 %v8357, %v8357
    %8359 = vmatprep.subr.bf16.mxu0 %v1069
    %8360 = vmatpush1.bf16.msra.mxu0 %v1068
    %8361 = vmatprep.subr.bf16.mxu0 %v1072
    %8362 = vmatpush1.bf16.msra.mxu0 %v1071
    %8363 = vmatprep.subr.bf16.mxu0 %v1075
    %8364 = vmatpush1.bf16.msra.mxu0 %v1074
    %8365 = vmatprep.subr.bf16.mxu0 %v1078
    %8366 = vmatpush1.bf16.msra.mxu0 %v1077
    %8367 = vmatprep.subr.bf16.mxu0 %v1081
    %8368 = vmatpush1.bf16.msra.mxu0 %v1080
    %8369 = vmatprep.subr.bf16.mxu0 %v1084
    %8370 = vmatpush1.bf16.msra.mxu0 %v1083
    %8371 = vmatprep.subr.bf16.mxu0 %v1087
    %8372 = vmatpush1.bf16.msra.mxu0 %v1086
    %8373 = vmatprep.subr.bf16.mxu0 %v1090
    %8374 = vmatpush1.bf16.msra.mxu0 %v1089
    %8375 = vmatprep.subr.bf16.mxu0 0
    %8376 = vmatpush1.bf16.msra.mxu0 0
    %8377 = vmatprep.subr.bf16.mxu0 0
    %8378 = vmatpush1.bf16.msra.mxu0 0
    %8379 = vmatprep.subr.bf16.mxu0 0
    %8380 = vmatpush1.bf16.msra.mxu0 0
    %8381 = vmatprep.subr.bf16.mxu0 0
    %8382 = vmatpush1.bf16.msra.mxu0 0
    %8383 = vmatprep.subr.bf16.mxu0 0
    %8384 = vmatpush1.bf16.msra.mxu0 0
    %8385 = vmatprep.subr.bf16.mxu0 0
    %8386 = vmatpush1.bf16.msra.mxu0 0
    %8387 = vmatprep.subr.bf16.mxu0 0
    %8388 = vmatpush1.bf16.msra.mxu0 0
    %8389 = vmatprep.subr.bf16.mxu0 0
    %8390 = vmatpush1.bf16.msra.mxu0 0
    %8391 = vmatprep.mubr.bf16.mxu0 0
    %8392 = vmatmul.mubr.bf16.gmra.mrb[0].mxu0 %v8358
    %v8393 = vpop.f32.mrb[0].mxu0
    %v8394 = vadd.f32 0.0, %v8393
    %v8395 = vpop.f32.mrb[0].mxu0
    %v8396 = vadd.f32 0.0, %v8395
    %v8397 = vpop.f32.mrb[0].mxu0
    %v8398 = vpop.f32.mrb[0].mxu0
    %8399 = vdwg.mxu0
    %8400 = vmatprep.subr.bf16.mxu0 0
    %8401 = vmatpush1.bf16.msra.mxu0 %v1070
    %8402 = vmatprep.subr.bf16.mxu0 0
    %8403 = vmatpush1.bf16.msra.mxu0 %v1073
    %8404 = vmatprep.subr.bf16.mxu0 0
    %8405 = vmatpush1.bf16.msra.mxu0 %v1076
    %8406 = vmatprep.subr.bf16.mxu0 0
    %8407 = vmatpush1.bf16.msra.mxu0 %v1079
    %8408 = vmatprep.subr.bf16.mxu0 0
    %8409 = vmatpush1.bf16.msra.mxu0 %v1082
    %8410 = vmatprep.subr.bf16.mxu0 0
    %8411 = vmatpush1.bf16.msra.mxu0 %v1085
    %8412 = vmatprep.subr.bf16.mxu0 0
    %8413 = vmatpush1.bf16.msra.mxu0 %v1088
    %8414 = vmatprep.subr.bf16.mxu0 0
    %8415 = vmatpush1.bf16.msra.mxu0 %v1091
    %8416 = vmatprep.subr.bf16.mxu0 0
    %8417 = vmatpush1.bf16.msra.mxu0 0
    %8418 = vmatprep.subr.bf16.mxu0 0
    %8419 = vmatpush1.bf16.msra.mxu0 0
    %8420 = vmatprep.subr.bf16.mxu0 0
    %8421 = vmatpush1.bf16.msra.mxu0 0
    %8422 = vmatprep.subr.bf16.mxu0 0
    %8423 = vmatpush1.bf16.msra.mxu0 0
    %8424 = vmatprep.subr.bf16.mxu0 0
    %8425 = vmatpush1.bf16.msra.mxu0 0
    %8426 = vmatprep.subr.bf16.mxu0 0
    %8427 = vmatpush1.bf16.msra.mxu0 0
    %8428 = vmatprep.subr.bf16.mxu0 0
    %8429 = vmatpush1.bf16.msra.mxu0 0
    %8430 = vmatprep.subr.bf16.mxu0 0
    %8431 = vmatpush1.bf16.msra.mxu0 0
    %8432 = vmatprep.mubr.bf16.mxu0 0
    %8433 = vmatmul.mubr.bf16.gmra.mrb[0].mxu0 %v8358
    %v8434 = vpop.f32.mrb[0].mxu0
    %v8435 = vadd.f32 0.0, %v8434
    %v8436 = vpop.f32.mrb[0].mxu0
    %v8437 = vpop.f32.mrb[0].mxu0
    %v8438 = vpop.f32.mrb[0].mxu0
    %8439 = vdwg.mxu0
    %v8440 = vrot.slane %v7798, 3
    %v8441 = vrot.slane %v7802, 3
    %v8442 = vrot.slane %v7806, 3
    %v8443 = vrot.slane %v7810, 3
    %v8444 = vrot.slane %v7814, 3
    %v8445 = vrot.slane %v7818, 3
    %v8446 = vrot.slane %v7822, 3
    %v8447 = vrot.slane %v7826, 3
    %v8459 = vcombine.low %v8394, %v8396
    %v8460 = vcombine.high %v8394, %v8396
    %v8461 = vcombine.high %v8435, %v8435
    %v8463 = vunpack.c.l.s4 1966171168
    %v8464 = vunpack.c.0.s8 %v8463
    %v8465 = vlaneseq
    %v8466 = vshrl.u32 %v8465, 7
    %v8467 = vsub.s32 %v8464, %v8466
    %v8468 = vrot.slane %v8459, %v8467
    %v8470 = vunpack.c.l.s4 1966171168
    %v8471 = vunpack.c.0.s8 %v8470
    %v8472 = vlaneseq
    %v8473 = vshrl.u32 %v8472, 7
    %v8474 = vsub.s32 %v8471, %v8473
    %v8475 = vrot.slane %v8460, %v8474
    %v8477 = vunpack.c.l.s4 1966171168
    %v8478 = vunpack.c.0.s8 %v8477
    %v8479 = vlaneseq
    %v8480 = vshrl.u32 %v8479, 7
    %v8481 = vsub.s32 %v8478, %v8480
    %v8482 = vrot.slane %v8435, %v8481
    %v8484 = vunpack.c.l.s4 1966171168
    %v8485 = vunpack.c.0.s8 %v8484
    %v8486 = vlaneseq
    %v8487 = vshrl.u32 %v8486, 7
    %v8488 = vsub.s32 %v8485, %v8487
    %v8489 = vrot.slane %v8461, %v8488
    %v8490 = vcombine.low %v8468, %v8482
    %v8491 = vcombine.high %v8468, %v8482
    %v8492 = vcombine.low %v8475, %v8489
    %v8493 = vcombine.high %v8475, %v8489
    %v8495 = vunpack.c.l.s4 1966171168
    %v8496 = vunpack.c.0.s8 %v8495
    %v8497 = vlaneseq
    %v8498 = vshrl.u32 %v8497, 7
    %v8499 = vsub.s32 %v8496, %v8498
    %v8500 = vrot.slane %v8490, %v8499
    %v8502 = vunpack.c.l.s4 1966171168
    %v8503 = vunpack.c.0.s8 %v8502
    %v8504 = vlaneseq
    %v8505 = vshrl.u32 %v8504, 7
    %v8506 = vsub.s32 %v8503, %v8505
    %v8507 = vrot.slane %v8492, %v8506
    %v8509 = vunpack.c.l.s4 1966171168
    %v8510 = vunpack.c.0.s8 %v8509
    %v8511 = vlaneseq
    %v8512 = vshrl.u32 %v8511, 7
    %v8513 = vsub.s32 %v8510, %v8512
    %v8514 = vrot.slane %v8491, %v8513
    %v8516 = vunpack.c.l.s4 1966171168
    %v8517 = vunpack.c.0.s8 %v8516
    %v8518 = vlaneseq
    %v8519 = vshrl.u32 %v8518, 7
    %v8520 = vsub.s32 %v8517, %v8519
    %v8521 = vrot.slane %v8493, %v8520
    %v8522 = vcombine.high %v8500, %v8500
    %v8523 = vcombine.high %v8507, %v8507
    %v8524 = vcombine.high %v8514, %v8514
    %v8525 = vcombine.high %v8521, %v8521
    %v8534 = vadd.f32 %v8440, %v8500
    %v8535 = vadd.f32 %v8441, %v8514
    %v8536 = vadd.f32 %v8442, %v8522
    %v8537 = vadd.f32 %v8443, %v8524
    %v8538 = vadd.f32 %v8444, %v8507
    %v8539 = vadd.f32 %v8445, %v8521
    %v8540 = vadd.f32 %v8446, %v8523
    %v8541 = vadd.f32 %v8447, %v8525
    %v8542 = vpack.c.bf16 %v7662, %v7662
    %8543 = vmatprep.subr.bf16.mxu0 %v1381
    %8544 = vmatpush1.bf16.msra.mxu0 %v1380
    %8545 = vmatprep.subr.bf16.mxu0 %v1384
    %8546 = vmatpush1.bf16.msra.mxu0 %v1383
    %8547 = vmatprep.subr.bf16.mxu0 %v1387
    %8548 = vmatpush1.bf16.msra.mxu0 %v1386
    %8549 = vmatprep.subr.bf16.mxu0 %v1390
    %8550 = vmatpush1.bf16.msra.mxu0 %v1389
    %8551 = vmatprep.subr.bf16.mxu0 %v1393
    %8552 = vmatpush1.bf16.msra.mxu0 %v1392
    %8553 = vmatprep.subr.bf16.mxu0 %v1396
    %8554 = vmatpush1.bf16.msra.mxu0 %v1395
    %8555 = vmatprep.subr.bf16.mxu0 %v1399
    %8556 = vmatpush1.bf16.msra.mxu0 %v1398
    %8557 = vmatprep.subr.bf16.mxu0 %v1402
    %8558 = vmatpush1.bf16.msra.mxu0 %v1401
    %8559 = vmatprep.subr.bf16.mxu0 0
    %8560 = vmatpush1.bf16.msra.mxu0 0
    %8561 = vmatprep.subr.bf16.mxu0 0
    %8562 = vmatpush1.bf16.msra.mxu0 0
    %8563 = vmatprep.subr.bf16.mxu0 0
    %8564 = vmatpush1.bf16.msra.mxu0 0
    %8565 = vmatprep.subr.bf16.mxu0 0
    %8566 = vmatpush1.bf16.msra.mxu0 0
    %8567 = vmatprep.subr.bf16.mxu0 0
    %8568 = vmatpush1.bf16.msra.mxu0 0
    %8569 = vmatprep.subr.bf16.mxu0 0
    %8570 = vmatpush1.bf16.msra.mxu0 0
    %8571 = vmatprep.subr.bf16.mxu0 0
    %8572 = vmatpush1.bf16.msra.mxu0 0
    %8573 = vmatprep.subr.bf16.mxu0 0
    %8574 = vmatpush1.bf16.msra.mxu0 0
    %8575 = vmatprep.mubr.bf16.mxu0 0
    %8576 = vmatmul.mubr.bf16.gmra.mrb[0].mxu0 %v8542
    %v8577 = vpop.f32.mrb[0].mxu0
    %v8578 = vadd.f32 %v222, %v8577
    %v8579 = vpop.f32.mrb[0].mxu0
    %v8580 = vadd.f32 %v226, %v8579
    %v8581 = vpop.f32.mrb[0].mxu0
    %v8582 = vpop.f32.mrb[0].mxu0
    %8583 = vdwg.mxu0
    %8584 = vmatprep.subr.bf16.mxu0 0
    %8585 = vmatpush1.bf16.msra.mxu0 %v1382
    %8586 = vmatprep.subr.bf16.mxu0 0
    %8587 = vmatpush1.bf16.msra.mxu0 %v1385
    %8588 = vmatprep.subr.bf16.mxu0 0
    %8589 = vmatpush1.bf16.msra.mxu0 %v1388
    %8590 = vmatprep.subr.bf16.mxu0 0
    %8591 = vmatpush1.bf16.msra.mxu0 %v1391
    %8592 = vmatprep.subr.bf16.mxu0 0
    %8593 = vmatpush1.bf16.msra.mxu0 %v1394
    %8594 = vmatprep.subr.bf16.mxu0 0
    %8595 = vmatpush1.bf16.msra.mxu0 %v1397
    %8596 = vmatprep.subr.bf16.mxu0 0
    %8597 = vmatpush1.bf16.msra.mxu0 %v1400
    %8598 = vmatprep.subr.bf16.mxu0 0
    %8599 = vmatpush1.bf16.msra.mxu0 %v1403
    %8600 = vmatprep.subr.bf16.mxu0 0
    %8601 = vmatpush1.bf16.msra.mxu0 0
    %8602 = vmatprep.subr.bf16.mxu0 0
    %8603 = vmatpush1.bf16.msra.mxu0 0
    %8604 = vmatprep.subr.bf16.mxu0 0
    %8605 = vmatpush1.bf16.msra.mxu0 0
    %8606 = vmatprep.subr.bf16.mxu0 0
    %8607 = vmatpush1.bf16.msra.mxu0 0
    %8608 = vmatprep.subr.bf16.mxu0 0
    %8609 = vmatpush1.bf16.msra.mxu0 0
    %8610 = vmatprep.subr.bf16.mxu0 0
    %8611 = vmatpush1.bf16.msra.mxu0 0
    %8612 = vmatprep.subr.bf16.mxu0 0
    %8613 = vmatpush1.bf16.msra.mxu0 0
    %8614 = vmatprep.subr.bf16.mxu0 0
    %8615 = vmatpush1.bf16.msra.mxu0 0
    %8616 = vmatprep.mubr.bf16.mxu0 0
    %8617 = vmatmul.mubr.bf16.gmra.mrb[0].mxu0 %v8542
    %v8618 = vpop.f32.mrb[0].mxu0
    %v8619 = vadd.f32 %v230, %v8618
    %v8620 = vpop.f32.mrb[0].mxu0
    %v8621 = vpop.f32.mrb[0].mxu0
    %v8622 = vpop.f32.mrb[0].mxu0
    %8623 = vdwg.mxu0
    %v8624 = vmul.f32 %v1509, %v7662
    %v8626 = vcombine.high %v8578, %v8578
    %v8628 = vunpack.c.l.s4 1966171168
    %v8629 = vunpack.c.0.s8 %v8628
    %v8630 = vlaneseq
    %v8631 = vshrl.u32 %v8630, 7
    %v8632 = vsub.s32 %v8629, %v8631
    %v8633 = vrot.slane %v8578, %v8632
    %v8635 = vunpack.c.l.s4 1966171168
    %v8636 = vunpack.c.0.s8 %v8635
    %v8637 = vlaneseq
    %v8638 = vshrl.u32 %v8637, 7
    %v8639 = vsub.s32 %v8636, %v8638
    %v8640 = vrot.slane %v8626, %v8639
    %v8641 = vcombine.high %v8633, %v8633
    %v8642 = vcombine.high %v8640, %v8640
    %v8644 = vunpack.c.l.s4 1966171168
    %v8645 = vunpack.c.0.s8 %v8644
    %v8646 = vlaneseq
    %v8647 = vshrl.u32 %v8646, 7
    %v8648 = vsub.s32 %v8645, %v8647
    %v8649 = vrot.slane %v8633, %v8648
    %v8651 = vunpack.c.l.s4 1966171168
    %v8652 = vunpack.c.0.s8 %v8651
    %v8653 = vlaneseq
    %v8654 = vshrl.u32 %v8653, 7
    %v8655 = vsub.s32 %v8652, %v8654
    %v8656 = vrot.slane %v8640, %v8655
    %v8658 = vunpack.c.l.s4 1966171168
    %v8659 = vunpack.c.0.s8 %v8658
    %v8660 = vlaneseq
    %v8661 = vshrl.u32 %v8660, 7
    %v8662 = vsub.s32 %v8659, %v8661
    %v8663 = vrot.slane %v8641, %v8662
    %v8665 = vunpack.c.l.s4 1966171168
    %v8666 = vunpack.c.0.s8 %v8665
    %v8667 = vlaneseq
    %v8668 = vshrl.u32 %v8667, 7
    %v8669 = vsub.s32 %v8666, %v8668
    %v8670 = vrot.slane %v8642, %v8669
    %v8671 = vcombine.high %v8649, %v8649
    %v8672 = vcombine.high %v8656, %v8656
    %v8673 = vcombine.high %v8663, %v8663
    %v8674 = vcombine.high %v8670, %v8670
    %v8683 = vadd.f32 %v8534, %v8649
    %v8684 = vadd.f32 %v8535, %v8663
    %v8685 = vadd.f32 %v8536, %v8671
    %v8686 = vadd.f32 %v8537, %v8673
    %v8687 = vadd.f32 %v8538, %v8656
    %v8688 = vadd.f32 %v8539, %v8670
    %v8689 = vadd.f32 %v8540, %v8672
    %v8690 = vadd.f32 %v8541, %v8674
    %v8691 = vxor.u32 %v8683, 2147483648
    %v8692 = vxor.u32 %v8684, 2147483648
    %v8693 = vxor.u32 %v8685, 2147483648
    %v8694 = vxor.u32 %v8686, 2147483648
    %v8695 = vxor.u32 %v8687, 2147483648
    %v8696 = vxor.u32 %v8688, 2147483648
    %v8697 = vxor.u32 %v8689, 2147483648
    %v8698 = vxor.u32 %v8690, 2147483648
    %v8699 = vmul.f32 %v8691, 1.442695
    %v8700 = vpow.pop %v8699
    %v8701 = vmul.f32 %v8692, 1.442695
    %v8702 = vpow.pop %v8701
    %v8703 = vmul.f32 %v8693, 1.442695
    %v8704 = vpow.pop %v8703
    %v8705 = vmul.f32 %v8694, 1.442695
    %v8706 = vpow.pop %v8705
    %v8707 = vmul.f32 %v8695, 1.442695
    %v8708 = vpow.pop %v8707
    %v8709 = vmul.f32 %v8696, 1.442695
    %v8710 = vpow.pop %v8709
    %v8711 = vmul.f32 %v8697, 1.442695
    %v8712 = vpow.pop %v8711
    %v8713 = vmul.f32 %v8698, 1.442695
    %v8714 = vpow.pop %v8713
    %v8715 = vadd.f32 %v8700, 1.0
    %v8716 = vadd.f32 %v8702, 1.0
    %v8717 = vadd.f32 %v8704, 1.0
    %v8718 = vadd.f32 %v8706, 1.0
    %v8719 = vadd.f32 %v8708, 1.0
    %v8720 = vadd.f32 %v8710, 1.0
    %v8721 = vadd.f32 %v8712, 1.0
    %v8722 = vadd.f32 %v8714, 1.0
    %v8723 = vrcp.pop %v8715
    %v8724 = vmul.f32 1.0, %v8723
    %v8725 = vrcp.pop %v8716
    %v8726 = vmul.f32 1.0, %v8725
    %v8727 = vrcp.pop %v8717
    %v8728 = vmul.f32 1.0, %v8727
    %v8729 = vrcp.pop %v8718
    %v8730 = vmul.f32 1.0, %v8729
    %v8731 = vrcp.pop %v8719
    %v8732 = vmul.f32 1.0, %v8731
    %v8733 = vrcp.pop %v8720
    %v8734 = vmul.f32 1.0, %v8733
    %v8735 = vrcp.pop %v8721
    %v8736 = vmul.f32 1.0, %v8735
    %v8737 = vrcp.pop %v8722
    %v8738 = vmul.f32 1.0, %v8737
    %v8747 = vrot.slane %v8534, 1
    %v8748 = vrot.slane %v8535, 1
    %v8749 = vrot.slane %v8536, 1
    %v8750 = vrot.slane %v8537, 1
    %v8751 = vrot.slane %v8538, 1
    %v8752 = vrot.slane %v8539, 1
    %v8753 = vrot.slane %v8540, 1
    %v8754 = vrot.slane %v8541, 1
    %v8764 = vcombine.high %v8580, %v8580
    %v8766 = vunpack.c.l.s4 1966171168
    %v8767 = vunpack.c.0.s8 %v8766
    %v8768 = vlaneseq
    %v8769 = vshrl.u32 %v8768, 7
    %v8770 = vsub.s32 %v8767, %v8769
    %v8771 = vrot.slane %v8580, %v8770
    %v8773 = vunpack.c.l.s4 1966171168
    %v8774 = vunpack.c.0.s8 %v8773
    %v8775 = vlaneseq
    %v8776 = vshrl.u32 %v8775, 7
    %v8777 = vsub.s32 %v8774, %v8776
    %v8778 = vrot.slane %v8764, %v8777
    %v8779 = vcombine.high %v8771, %v8771
    %v8780 = vcombine.high %v8778, %v8778
    %v8782 = vunpack.c.l.s4 1966171168
    %v8783 = vunpack.c.0.s8 %v8782
    %v8784 = vlaneseq
    %v8785 = vshrl.u32 %v8784, 7
    %v8786 = vsub.s32 %v8783, %v8785
    %v8787 = vrot.slane %v8771, %v8786
    %v8789 = vunpack.c.l.s4 1966171168
    %v8790 = vunpack.c.0.s8 %v8789
    %v8791 = vlaneseq
    %v8792 = vshrl.u32 %v8791, 7
    %v8793 = vsub.s32 %v8790, %v8792
    %v8794 = vrot.slane %v8778, %v8793
    %v8796 = vunpack.c.l.s4 1966171168
    %v8797 = vunpack.c.0.s8 %v8796
    %v8798 = vlaneseq
    %v8799 = vshrl.u32 %v8798, 7
    %v8800 = vsub.s32 %v8797, %v8799
    %v8801 = vrot.slane %v8779, %v8800
    %v8803 = vunpack.c.l.s4 1966171168
    %v8804 = vunpack.c.0.s8 %v8803
    %v8805 = vlaneseq
    %v8806 = vshrl.u32 %v8805, 7
    %v8807 = vsub.s32 %v8804, %v8806
    %v8808 = vrot.slane %v8780, %v8807
    %v8809 = vcombine.high %v8787, %v8787
    %v8810 = vcombine.high %v8794, %v8794
    %v8811 = vcombine.high %v8801, %v8801
    %v8812 = vcombine.high %v8808, %v8808
    %v8821 = vadd.f32 %v8747, %v8787
    %v8822 = vadd.f32 %v8748, %v8801
    %v8823 = vadd.f32 %v8749, %v8809
    %v8824 = vadd.f32 %v8750, %v8811
    %v8825 = vadd.f32 %v8751, %v8794
    %v8826 = vadd.f32 %v8752, %v8808
    %v8827 = vadd.f32 %v8753, %v8810
    %v8828 = vadd.f32 %v8754, %v8812
    %v8829 = vxor.u32 %v8821, 2147483648
    %v8830 = vxor.u32 %v8822, 2147483648
    %v8831 = vxor.u32 %v8823, 2147483648
    %v8832 = vxor.u32 %v8824, 2147483648
    %v8833 = vxor.u32 %v8825, 2147483648
    %v8834 = vxor.u32 %v8826, 2147483648
    %v8835 = vxor.u32 %v8827, 2147483648
    %v8836 = vxor.u32 %v8828, 2147483648
    %v8837 = vmul.f32 %v8829, 1.442695
    %v8838 = vpow.pop %v8837
    %v8839 = vmul.f32 %v8830, 1.442695
    %v8840 = vpow.pop %v8839
    %v8841 = vmul.f32 %v8831, 1.442695
    %v8842 = vpow.pop %v8841
    %v8843 = vmul.f32 %v8832, 1.442695
    %v8844 = vpow.pop %v8843
    %v8845 = vmul.f32 %v8833, 1.442695
    %v8846 = vpow.pop %v8845
    %v8847 = vmul.f32 %v8834, 1.442695
    %v8848 = vpow.pop %v8847
    %v8849 = vmul.f32 %v8835, 1.442695
    %v8850 = vpow.pop %v8849
    %v8851 = vmul.f32 %v8836, 1.442695
    %v8852 = vpow.pop %v8851
    %v8853 = vadd.f32 %v8838, 1.0
    %v8854 = vadd.f32 %v8840, 1.0
    %v8855 = vadd.f32 %v8842, 1.0
    %v8856 = vadd.f32 %v8844, 1.0
    %v8857 = vadd.f32 %v8846, 1.0
    %v8858 = vadd.f32 %v8848, 1.0
    %v8859 = vadd.f32 %v8850, 1.0
    %v8860 = vadd.f32 %v8852, 1.0
    %v8861 = vrcp.pop %v8853
    %v8862 = vmul.f32 1.0, %v8861
    %v8863 = vrcp.pop %v8854
    %v8864 = vmul.f32 1.0, %v8863
    %v8865 = vrcp.pop %v8855
    %v8866 = vmul.f32 1.0, %v8865
    %v8867 = vrcp.pop %v8856
    %v8868 = vmul.f32 1.0, %v8867
    %v8869 = vrcp.pop %v8857
    %v8870 = vmul.f32 1.0, %v8869
    %v8871 = vrcp.pop %v8858
    %v8872 = vmul.f32 1.0, %v8871
    %v8873 = vrcp.pop %v8859
    %v8874 = vmul.f32 1.0, %v8873
    %v8875 = vrcp.pop %v8860
    %v8876 = vmul.f32 1.0, %v8875
    %v8878 = vcombine.high %v8619, %v8619
    %v8880 = vunpack.c.l.s4 1966171168
    %v8881 = vunpack.c.0.s8 %v8880
    %v8882 = vlaneseq
    %v8883 = vshrl.u32 %v8882, 7
    %v8884 = vsub.s32 %v8881, %v8883
    %v8885 = vrot.slane %v8619, %v8884
    %v8887 = vunpack.c.l.s4 1966171168
    %v8888 = vunpack.c.0.s8 %v8887
    %v8889 = vlaneseq
    %v8890 = vshrl.u32 %v8889, 7
    %v8891 = vsub.s32 %v8888, %v8890
    %v8892 = vrot.slane %v8878, %v8891
    %v8893 = vcombine.high %v8885, %v8885
    %v8894 = vcombine.high %v8892, %v8892
    %v8896 = vunpack.c.l.s4 1966171168
    %v8897 = vunpack.c.0.s8 %v8896
    %v8898 = vlaneseq
    %v8899 = vshrl.u32 %v8898, 7
    %v8900 = vsub.s32 %v8897, %v8899
    %v8901 = vrot.slane %v8885, %v8900
    %v8903 = vunpack.c.l.s4 1966171168
    %v8904 = vunpack.c.0.s8 %v8903
    %v8905 = vlaneseq
    %v8906 = vshrl.u32 %v8905, 7
    %v8907 = vsub.s32 %v8904, %v8906
    %v8908 = vrot.slane %v8892, %v8907
    %v8910 = vunpack.c.l.s4 1966171168
    %v8911 = vunpack.c.0.s8 %v8910
    %v8912 = vlaneseq
    %v8913 = vshrl.u32 %v8912, 7
    %v8914 = vsub.s32 %v8911, %v8913
    %v8915 = vrot.slane %v8893, %v8914
    %v8917 = vunpack.c.l.s4 1966171168
    %v8918 = vunpack.c.0.s8 %v8917
    %v8919 = vlaneseq
    %v8920 = vshrl.u32 %v8919, 7
    %v8921 = vsub.s32 %v8918, %v8920
    %v8922 = vrot.slane %v8894, %v8921
    %v8923 = vcombine.high %v8901, %v8901
    %v8924 = vcombine.high %v8908, %v8908
    %v8925 = vcombine.high %v8915, %v8915
    %v8926 = vcombine.high %v8922, %v8922
    %v8935 = vmul.f32 %v8724, %v8901
    %v8936 = vmul.f32 %v8726, %v8915
    %v8937 = vmul.f32 %v8728, %v8923
    %v8938 = vmul.f32 %v8730, %v8925
    %v8939 = vmul.f32 %v8732, %v8908
    %v8940 = vmul.f32 %v8734, %v8922
    %v8941 = vmul.f32 %v8736, %v8924
    %v8942 = vmul.f32 %v8738, %v8926
    %v8943 = vrot.slane %v8534, 2
    %v8944 = vrot.slane %v8535, 2
    %v8945 = vrot.slane %v8536, 2
    %v8946 = vrot.slane %v8537, 2
    %v8947 = vrot.slane %v8538, 2
    %v8948 = vrot.slane %v8539, 2
    %v8949 = vrot.slane %v8540, 2
    %v8950 = vrot.slane %v8541, 2
    %v8959 = vadd.f32 %v8943, %v8935
    %v8960 = vadd.f32 %v8944, %v8936
    %v8961 = vadd.f32 %v8945, %v8937
    %v8962 = vadd.f32 %v8946, %v8938
    %v8963 = vadd.f32 %v8947, %v8939
    %v8964 = vadd.f32 %v8948, %v8940
    %v8965 = vadd.f32 %v8949, %v8941
    %v8966 = vadd.f32 %v8950, %v8942
    %v8967 = vtanh.pop %v8959
    %v8968 = vtanh.pop %v8960
    %v8969 = vtanh.pop %v8961
    %v8970 = vtanh.pop %v8962
    %v8971 = vtanh.pop %v8963
    %v8972 = vtanh.pop %v8964
    %v8973 = vtanh.pop %v8965
    %v8974 = vtanh.pop %v8966
    %v8975 = vsub.f32 1.0, %v8862
    %v8976 = vsub.f32 1.0, %v8864
    %v8977 = vsub.f32 1.0, %v8866
    %v8978 = vsub.f32 1.0, %v8868
    %v8979 = vsub.f32 1.0, %v8870
    %v8980 = vsub.f32 1.0, %v8872
    %v8981 = vsub.f32 1.0, %v8874
    %v8982 = vsub.f32 1.0, %v8876
    %v8983 = vmul.f32 %v8975, %v8967
    %v8984 = vmul.f32 %v8976, %v8968
    %v8985 = vmul.f32 %v8977, %v8969
    %v8986 = vmul.f32 %v8978, %v8970
    %v8987 = vmul.f32 %v8979, %v8971
    %v8988 = vmul.f32 %v8980, %v8972
    %v8989 = vmul.f32 %v8981, %v8973
    %v8990 = vmul.f32 %v8982, %v8974
    %v8991 = vmul.f32 %v8862, %v7753
    %v8992 = vmul.f32 %v8864, %v7767
    %v8993 = vmul.f32 %v8866, %v7775
    %v8994 = vmul.f32 %v8868, %v7777
    %v8995 = vmul.f32 %v8870, %v7760
    %v8996 = vmul.f32 %v8872, %v7774
    %v8997 = vmul.f32 %v8874, %v7776
    %v8998 = vmul.f32 %v8876, %v7778
    %v8999 = vadd.f32 %v8983, %v8991
    %v9000 = vadd.f32 %v8984, %v8992
    %v9001 = vadd.f32 %v8985, %v8993
    %v9002 = vadd.f32 %v8986, %v8994
    %v9003 = vadd.f32 %v8987, %v8995
    %v9004 = vadd.f32 %v8988, %v8996
    %v9005 = vadd.f32 %v8989, %v8997
    %v9006 = vadd.f32 %v8990, %v8998
    %v9007 = vmul.f32 %v1951, %v8999
    %v9008 = vmul.f32 %v1951, %v9000
    %v9009 = vmul.f32 %v1951, %v9001
    %v9010 = vmul.f32 %v1951, %v9002
    %v9011 = vmul.f32 %v1951, %v9003
    %v9012 = vmul.f32 %v1951, %v9004
    %v9013 = vmul.f32 %v1951, %v9005
    %v9014 = vmul.f32 %v1951, %v9006
    %v9023 = vcombine.low %v9007, %v9008
    %v9024 = vcombine.low %v9009, %v9010
    %v9025 = vcombine.low %v9011, %v9012
    %v9026 = vcombine.low %v9013, %v9014
    %v9028 = vunpack.c.l.s4 1966171168
    %v9029 = vunpack.c.0.s8 %v9028
    %v9030 = vlaneseq
    %v9031 = vshrl.u32 %v9030, 7
    %v9032 = vsub.s32 %v9029, %v9031
    %v9033 = vrot.slane %v9023, %v9032
    %v9035 = vunpack.c.l.s4 1966171168
    %v9036 = vunpack.c.0.s8 %v9035
    %v9037 = vlaneseq
    %v9038 = vshrl.u32 %v9037, 7
    %v9039 = vsub.s32 %v9036, %v9038
    %v9040 = vrot.slane %v9024, %v9039
    %v9042 = vunpack.c.l.s4 1966171168
    %v9043 = vunpack.c.0.s8 %v9042
    %v9044 = vlaneseq
    %v9045 = vshrl.u32 %v9044, 7
    %v9046 = vsub.s32 %v9043, %v9045
    %v9047 = vrot.slane %v9025, %v9046
    %v9049 = vunpack.c.l.s4 1966171168
    %v9050 = vunpack.c.0.s8 %v9049
    %v9051 = vlaneseq
    %v9052 = vshrl.u32 %v9051, 7
    %v9053 = vsub.s32 %v9050, %v9052
    %v9054 = vrot.slane %v9026, %v9053
    %v9055 = vcombine.low %v9033, %v9040
    %v9056 = vcombine.low %v9047, %v9054
    %v9058 = vunpack.c.l.s4 1966171168
    %v9059 = vunpack.c.0.s8 %v9058
    %v9060 = vlaneseq
    %v9061 = vshrl.u32 %v9060, 7
    %v9062 = vsub.s32 %v9059, %v9061
    %v9063 = vrot.slane %v9055, %v9062
    %v9065 = vunpack.c.l.s4 1966171168
    %v9066 = vunpack.c.0.s8 %v9065
    %v9067 = vlaneseq
    %v9068 = vshrl.u32 %v9067, 7
    %v9069 = vsub.s32 %v9066, %v9068
    %v9070 = vrot.slane %v9056, %v9069
    %v9071 = vcombine.low %v9063, %v9070
    %v9073 = vadd.f32 %v8624, %v9071
    %v9075 = vcombine.high %v8357, %v8357
    %v9077 = vunpack.c.l.s4 1966171168
    %v9078 = vunpack.c.0.s8 %v9077
    %v9079 = vlaneseq
    %v9080 = vshrl.u32 %v9079, 7
    %v9081 = vsub.s32 %v9078, %v9080
    %v9082 = vrot.slane %v8357, %v9081
    %v9084 = vunpack.c.l.s4 1966171168
    %v9085 = vunpack.c.0.s8 %v9084
    %v9086 = vlaneseq
    %v9087 = vshrl.u32 %v9086, 7
    %v9088 = vsub.s32 %v9085, %v9087
    %v9089 = vrot.slane %v9075, %v9088
    %v9090 = vcombine.high %v9082, %v9082
    %v9091 = vcombine.high %v9089, %v9089
    %v9093 = vunpack.c.l.s4 1966171168
    %v9094 = vunpack.c.0.s8 %v9093
    %v9095 = vlaneseq
    %v9096 = vshrl.u32 %v9095, 7
    %v9097 = vsub.s32 %v9094, %v9096
    %v9098 = vrot.slane %v9082, %v9097
    %v9100 = vunpack.c.l.s4 1966171168
    %v9101 = vunpack.c.0.s8 %v9100
    %v9102 = vlaneseq
    %v9103 = vshrl.u32 %v9102, 7
    %v9104 = vsub.s32 %v9101, %v9103
    %v9105 = vrot.slane %v9089, %v9104
    %v9107 = vunpack.c.l.s4 1966171168
    %v9108 = vunpack.c.0.s8 %v9107
    %v9109 = vlaneseq
    %v9110 = vshrl.u32 %v9109, 7
    %v9111 = vsub.s32 %v9108, %v9110
    %v9112 = vrot.slane %v9090, %v9111
    %v9114 = vunpack.c.l.s4 1966171168
    %v9115 = vunpack.c.0.s8 %v9114
    %v9116 = vlaneseq
    %v9117 = vshrl.u32 %v9116, 7
    %v9118 = vsub.s32 %v9115, %v9117
    %v9119 = vrot.slane %v9091, %v9118
    %v9120 = vcombine.high %v9098, %v9098
    %v9121 = vcombine.high %v9105, %v9105
    %v9122 = vcombine.high %v9112, %v9112
    %v9123 = vcombine.high %v9119, %v9119
    %9132 = vst [vmem:[#allocation14 + $0x5] sm:$0x1] %v9098
    %9133 = vst [vmem:[#allocation14 + $0x15] sm:$0x1] %v9112
    %9134 = vst [vmem:[#allocation14 + $0x25] sm:$0x1] %v9120
    %9135 = vst [vmem:[#allocation14 + $0x35] sm:$0x1] %v9122
    %9136 = vst [vmem:[#allocation14 + $0x45] sm:$0x1] %v9105
    %9137 = vst [vmem:[#allocation14 + $0x55] sm:$0x1] %v9119
    %9138 = vst [vmem:[#allocation14 + $0x65] sm:$0x1] %v9121
    %9139 = vst [vmem:[#allocation14 + $0x75] sm:$0x1] %v9123
    %v9141 = vcombine.high %v9073, %v9073
    %v9143 = vunpack.c.l.s4 1966171168
    %v9144 = vunpack.c.0.s8 %v9143
    %v9145 = vlaneseq
    %v9146 = vshrl.u32 %v9145, 7
    %v9147 = vsub.s32 %v9144, %v9146
    %v9148 = vrot.slane %v9073, %v9147
    %v9150 = vunpack.c.l.s4 1966171168
    %v9151 = vunpack.c.0.s8 %v9150
    %v9152 = vlaneseq
    %v9153 = vshrl.u32 %v9152, 7
    %v9154 = vsub.s32 %v9151, %v9153
    %v9155 = vrot.slane %v9141, %v9154
    %v9156 = vcombine.high %v9148, %v9148
    %v9157 = vcombine.high %v9155, %v9155
    %v9159 = vunpack.c.l.s4 1966171168
    %v9160 = vunpack.c.0.s8 %v9159
    %v9161 = vlaneseq
    %v9162 = vshrl.u32 %v9161, 7
    %v9163 = vsub.s32 %v9160, %v9162
    %v9164 = vrot.slane %v9148, %v9163
    %v9166 = vunpack.c.l.s4 1966171168
    %v9167 = vunpack.c.0.s8 %v9166
    %v9168 = vlaneseq
    %v9169 = vshrl.u32 %v9168, 7
    %v9170 = vsub.s32 %v9167, %v9169
    %v9171 = vrot.slane %v9155, %v9170
    %v9173 = vunpack.c.l.s4 1966171168
    %v9174 = vunpack.c.0.s8 %v9173
    %v9175 = vlaneseq
    %v9176 = vshrl.u32 %v9175, 7
    %v9177 = vsub.s32 %v9174, %v9176
    %v9178 = vrot.slane %v9156, %v9177
    %v9180 = vunpack.c.l.s4 1966171168
    %v9181 = vunpack.c.0.s8 %v9180
    %v9182 = vlaneseq
    %v9183 = vshrl.u32 %v9182, 7
    %v9184 = vsub.s32 %v9181, %v9183
    %v9185 = vrot.slane %v9157, %v9184
    %v9186 = vcombine.high %v9164, %v9164
    %v9187 = vcombine.high %v9171, %v9171
    %v9188 = vcombine.high %v9178, %v9178
    %v9189 = vcombine.high %v9185, %v9185
    %9198 = vst [vmem:[#allocation14 + $0xd] sm:$0x1] %v9164
    %9199 = vst [vmem:[#allocation14 + $0x1d] sm:$0x1] %v9178
    %9200 = vst [vmem:[#allocation14 + $0x2d] sm:$0x1] %v9186
    %9201 = vst [vmem:[#allocation14 + $0x3d] sm:$0x1] %v9188
    %9202 = vst [vmem:[#allocation14 + $0x4d] sm:$0x1] %v9171
    %9203 = vst [vmem:[#allocation14 + $0x5d] sm:$0x1] %v9185
    %9204 = vst [vmem:[#allocation14 + $0x6d] sm:$0x1] %v9187
    %9205 = vst [vmem:[#allocation14 + $0x7d] sm:$0x1] %v9189
    %s9206 = scalar_lea.vmem [#allocation8], 6
    %v9207 = vld [vmem:[%s9206] ss:$8 sm:$0xf]
    %v9208 = vld [vmem:[%s9206] ss:$8 sm:$0x30]
    %v9209 = vor.u32 %v9207, %v9208
    %s9210 = scalar_lea.vmem [#allocation8], 54
    %v9211 = vld [vmem:[%s9210] ss:$8 sm:$0xf]
    %v9212 = vld [vmem:[%s9210] ss:$8 sm:$0x30]
    %v9213 = vor.u32 %v9211, %v9212
    %s9214 = scalar_lea.vmem [#allocation8], 102
    %v9215 = vld [vmem:[%s9214] ss:$8 sm:$0xf]
    %v9216 = vld [vmem:[%s9214] ss:$8 sm:$0x30]
    %v9217 = vor.u32 %v9215, %v9216
    %s9218 = scalar_lea.vmem [#allocation8], 150
    %v9219 = vld [vmem:[%s9218] ss:$8 sm:$0xf]
    %v9220 = vld [vmem:[%s9218] ss:$8 sm:$0x30]
    %v9221 = vor.u32 %v9219, %v9220
    %s9222 = scalar_lea.vmem [#allocation8], 198
    %v9223 = vld [vmem:[%s9222] ss:$8 sm:$0xf]
    %v9224 = vld [vmem:[%s9222] ss:$8 sm:$0x30]
    %v9225 = vor.u32 %v9223, %v9224
    %s9226 = scalar_lea.vmem [#allocation8], 246
    %v9227 = vld [vmem:[%s9226] ss:$8 sm:$0xf]
    %v9228 = vld [vmem:[%s9226] ss:$8 sm:$0x30]
    %v9229 = vor.u32 %v9227, %v9228
    %s9230 = scalar_lea.vmem [#allocation8], 294
    %v9231 = vld [vmem:[%s9230] ss:$8 sm:$0xf]
    %v9232 = vld [vmem:[%s9230] ss:$8 sm:$0x30]
    %v9233 = vor.u32 %v9231, %v9232
    %s9234 = scalar_lea.vmem [#allocation8], 342
    %v9235 = vld [vmem:[%s9234] ss:$8 sm:$0xf]
    %v9236 = vld [vmem:[%s9234] ss:$8 sm:$0x30]
    %v9237 = vor.u32 %v9235, %v9236
    %9238 = vmatprep.subr.bf16.mxu0 %v349
    %9239 = vmatpush1.bf16.msra.mxu0 %v348
    %9240 = vmatprep.subr.bf16.mxu0 %v352
    %9241 = vmatpush1.bf16.msra.mxu0 %v351
    %9242 = vmatprep.subr.bf16.mxu0 %v355
    %9243 = vmatpush1.bf16.msra.mxu0 %v354
    %9244 = vmatprep.subr.bf16.mxu0 %v358
    %9245 = vmatpush1.bf16.msra.mxu0 %v357
    %9246 = vmatprep.subr.bf16.mxu0 %v361
    %9247 = vmatpush1.bf16.msra.mxu0 %v360
    %9248 = vmatprep.subr.bf16.mxu0 %v364
    %9249 = vmatpush1.bf16.msra.mxu0 %v363
    %9250 = vmatprep.subr.bf16.mxu0 %v367
    %9251 = vmatpush1.bf16.msra.mxu0 %v366
    %9252 = vmatprep.subr.bf16.mxu0 %v370
    %9253 = vmatpush1.bf16.msra.mxu0 %v369
    %9254 = vmatprep.subr.bf16.mxu0 0
    %9255 = vmatpush1.bf16.msra.mxu0 0
    %9256 = vmatprep.subr.bf16.mxu0 0
    %9257 = vmatpush1.bf16.msra.mxu0 0
    %9258 = vmatprep.subr.bf16.mxu0 0
    %9259 = vmatpush1.bf16.msra.mxu0 0
    %9260 = vmatprep.subr.bf16.mxu0 0
    %9261 = vmatpush1.bf16.msra.mxu0 0
    %9262 = vmatprep.subr.bf16.mxu0 0
    %9263 = vmatpush1.bf16.msra.mxu0 0
    %9264 = vmatprep.subr.bf16.mxu0 0
    %9265 = vmatpush1.bf16.msra.mxu0 0
    %9266 = vmatprep.subr.bf16.mxu0 0
    %9267 = vmatpush1.bf16.msra.mxu0 0
    %9268 = vmatprep.subr.bf16.mxu0 0
    %9269 = vmatpush1.bf16.msra.mxu0 0
    %9270 = vmatprep.mubr.bf16.mxu0 0
    %9271 = vmatmul.mubr.bf16.gmra.mrb[0].mxu0 %v8358
    %v9272 = vpop.f32.mrb[0].mxu0
    %v9273 = vadd.f32 %v205, %v9272
    %v9274 = vpop.f32.mrb[0].mxu0
    %v9275 = vadd.f32 %v209, %v9274
    %v9276 = vpop.f32.mrb[0].mxu0
    %v9277 = vpop.f32.mrb[0].mxu0
    %9278 = vdwg.mxu0
    %9279 = vmatprep.subr.bf16.mxu0 0
    %9280 = vmatpush1.bf16.msra.mxu0 %v350
    %9281 = vmatprep.subr.bf16.mxu0 0
    %9282 = vmatpush1.bf16.msra.mxu0 %v353
    %9283 = vmatprep.subr.bf16.mxu0 0
    %9284 = vmatpush1.bf16.msra.mxu0 %v356
    %9285 = vmatprep.subr.bf16.mxu0 0
    %9286 = vmatpush1.bf16.msra.mxu0 %v359
    %9287 = vmatprep.subr.bf16.mxu0 0
    %9288 = vmatpush1.bf16.msra.mxu0 %v362
    %9289 = vmatprep.subr.bf16.mxu0 0
    %9290 = vmatpush1.bf16.msra.mxu0 %v365
    %9291 = vmatprep.subr.bf16.mxu0 0
    %9292 = vmatpush1.bf16.msra.mxu0 %v368
    %9293 = vmatprep.subr.bf16.mxu0 0
    %9294 = vmatpush1.bf16.msra.mxu0 %v371
    %9295 = vmatprep.subr.bf16.mxu0 0
    %9296 = vmatpush1.bf16.msra.mxu0 0
    %9297 = vmatprep.subr.bf16.mxu0 0
    %9298 = vmatpush1.bf16.msra.mxu0 0
    %9299 = vmatprep.subr.bf16.mxu0 0
    %9300 = vmatpush1.bf16.msra.mxu0 0
    %9301 = vmatprep.subr.bf16.mxu0 0
    %9302 = vmatpush1.bf16.msra.mxu0 0
    %9303 = vmatprep.subr.bf16.mxu0 0
    %9304 = vmatpush1.bf16.msra.mxu0 0
    %9305 = vmatprep.subr.bf16.mxu0 0
    %9306 = vmatpush1.bf16.msra.mxu0 0
    %9307 = vmatprep.subr.bf16.mxu0 0
    %9308 = vmatpush1.bf16.msra.mxu0 0
    %9309 = vmatprep.subr.bf16.mxu0 0
    %9310 = vmatpush1.bf16.msra.mxu0 0
    %9311 = vmatprep.mubr.bf16.mxu0 0
    %9312 = vmatmul.mubr.bf16.gmra.mrb[0].mxu0 %v8358
    %v9313 = vpop.f32.mrb[0].mxu0
    %v9314 = vadd.f32 %v213, %v9313
    %v9315 = vpop.f32.mrb[0].mxu0
    %v9316 = vpop.f32.mrb[0].mxu0
    %v9317 = vpop.f32.mrb[0].mxu0
    %9318 = vdwg.mxu0
    %v9319 = vmul.f32 %v477, %v8357
    %v9321 = vcombine.high %v9273, %v9273
    %v9323 = vunpack.c.l.s4 1966171168
    %v9324 = vunpack.c.0.s8 %v9323
    %v9325 = vlaneseq
    %v9326 = vshrl.u32 %v9325, 7
    %v9327 = vsub.s32 %v9324, %v9326
    %v9328 = vrot.slane %v9273, %v9327
    %v9330 = vunpack.c.l.s4 1966171168
    %v9331 = vunpack.c.0.s8 %v9330
    %v9332 = vlaneseq
    %v9333 = vshrl.u32 %v9332, 7
    %v9334 = vsub.s32 %v9331, %v9333
    %v9335 = vrot.slane %v9321, %v9334
    %v9336 = vcombine.high %v9328, %v9328
    %v9337 = vcombine.high %v9335, %v9335
    %v9339 = vunpack.c.l.s4 1966171168
    %v9340 = vunpack.c.0.s8 %v9339
    %v9341 = vlaneseq
    %v9342 = vshrl.u32 %v9341, 7
    %v9343 = vsub.s32 %v9340, %v9342
    %v9344 = vrot.slane %v9328, %v9343
    %v9346 = vunpack.c.l.s4 1966171168
    %v9347 = vunpack.c.0.s8 %v9346
    %v9348 = vlaneseq
    %v9349 = vshrl.u32 %v9348, 7
    %v9350 = vsub.s32 %v9347, %v9349
    %v9351 = vrot.slane %v9335, %v9350
    %v9353 = vunpack.c.l.s4 1966171168
    %v9354 = vunpack.c.0.s8 %v9353
    %v9355 = vlaneseq
    %v9356 = vshrl.u32 %v9355, 7
    %v9357 = vsub.s32 %v9354, %v9356
    %v9358 = vrot.slane %v9336, %v9357
    %v9360 = vunpack.c.l.s4 1966171168
    %v9361 = vunpack.c.0.s8 %v9360
    %v9362 = vlaneseq
    %v9363 = vshrl.u32 %v9362, 7
    %v9364 = vsub.s32 %v9361, %v9363
    %v9365 = vrot.slane %v9337, %v9364
    %v9366 = vcombine.high %v9344, %v9344
    %v9367 = vcombine.high %v9351, %v9351
    %v9368 = vcombine.high %v9358, %v9358
    %v9369 = vcombine.high %v9365, %v9365
    %v9378 = vadd.f32 %v9209, %v9344
    %v9379 = vadd.f32 %v9213, %v9358
    %v9380 = vadd.f32 %v9217, %v9366
    %v9381 = vadd.f32 %v9221, %v9368
    %v9382 = vadd.f32 %v9225, %v9351
    %v9383 = vadd.f32 %v9229, %v9365
    %v9384 = vadd.f32 %v9233, %v9367
    %v9385 = vadd.f32 %v9237, %v9369
    %v9386 = vxor.u32 %v9378, 2147483648
    %v9387 = vxor.u32 %v9379, 2147483648
    %v9388 = vxor.u32 %v9380, 2147483648
    %v9389 = vxor.u32 %v9381, 2147483648
    %v9390 = vxor.u32 %v9382, 2147483648
    %v9391 = vxor.u32 %v9383, 2147483648
    %v9392 = vxor.u32 %v9384, 2147483648
    %v9393 = vxor.u32 %v9385, 2147483648
    %v9394 = vmul.f32 %v9386, 1.442695
    %v9395 = vpow.pop %v9394
    %v9396 = vmul.f32 %v9387, 1.442695
    %v9397 = vpow.pop %v9396
    %v9398 = vmul.f32 %v9388, 1.442695
    %v9399 = vpow.pop %v9398
    %v9400 = vmul.f32 %v9389, 1.442695
    %v9401 = vpow.pop %v9400
    %v9402 = vmul.f32 %v9390, 1.442695
    %v9403 = vpow.pop %v9402
    %v9404 = vmul.f32 %v9391, 1.442695
    %v9405 = vpow.pop %v9404
    %v9406 = vmul.f32 %v9392, 1.442695
    %v9407 = vpow.pop %v9406
    %v9408 = vmul.f32 %v9393, 1.442695
    %v9409 = vpow.pop %v9408
    %v9410 = vadd.f32 %v9395, 1.0
    %v9411 = vadd.f32 %v9397, 1.0
    %v9412 = vadd.f32 %v9399, 1.0
    %v9413 = vadd.f32 %v9401, 1.0
    %v9414 = vadd.f32 %v9403, 1.0
    %v9415 = vadd.f32 %v9405, 1.0
    %v9416 = vadd.f32 %v9407, 1.0
    %v9417 = vadd.f32 %v9409, 1.0
    %v9418 = vrcp.pop %v9410
    %v9419 = vmul.f32 1.0, %v9418
    %v9420 = vrcp.pop %v9411
    %v9421 = vmul.f32 1.0, %v9420
    %v9422 = vrcp.pop %v9412
    %v9423 = vmul.f32 1.0, %v9422
    %v9424 = vrcp.pop %v9413
    %v9425 = vmul.f32 1.0, %v9424
    %v9426 = vrcp.pop %v9414
    %v9427 = vmul.f32 1.0, %v9426
    %v9428 = vrcp.pop %v9415
    %v9429 = vmul.f32 1.0, %v9428
    %v9430 = vrcp.pop %v9416
    %v9431 = vmul.f32 1.0, %v9430
    %v9432 = vrcp.pop %v9417
    %v9433 = vmul.f32 1.0, %v9432
    %v9442 = vrot.slane %v9209, 1
    %v9443 = vrot.slane %v9213, 1
    %v9444 = vrot.slane %v9217, 1
    %v9445 = vrot.slane %v9221, 1
    %v9446 = vrot.slane %v9225, 1
    %v9447 = vrot.slane %v9229, 1
    %v9448 = vrot.slane %v9233, 1
    %v9449 = vrot.slane %v9237, 1
    %v9459 = vcombine.high %v9275, %v9275
    %v9461 = vunpack.c.l.s4 1966171168
    %v9462 = vunpack.c.0.s8 %v9461
    %v9463 = vlaneseq
    %v9464 = vshrl.u32 %v9463, 7
    %v9465 = vsub.s32 %v9462, %v9464
    %v9466 = vrot.slane %v9275, %v9465
    %v9468 = vunpack.c.l.s4 1966171168
    %v9469 = vunpack.c.0.s8 %v9468
    %v9470 = vlaneseq
    %v9471 = vshrl.u32 %v9470, 7
    %v9472 = vsub.s32 %v9469, %v9471
    %v9473 = vrot.slane %v9459, %v9472
    %v9474 = vcombine.high %v9466, %v9466
    %v9475 = vcombine.high %v9473, %v9473
    %v9477 = vunpack.c.l.s4 1966171168
    %v9478 = vunpack.c.0.s8 %v9477
    %v9479 = vlaneseq
    %v9480 = vshrl.u32 %v9479, 7
    %v9481 = vsub.s32 %v9478, %v9480
    %v9482 = vrot.slane %v9466, %v9481
    %v9484 = vunpack.c.l.s4 1966171168
    %v9485 = vunpack.c.0.s8 %v9484
    %v9486 = vlaneseq
    %v9487 = vshrl.u32 %v9486, 7
    %v9488 = vsub.s32 %v9485, %v9487
    %v9489 = vrot.slane %v9473, %v9488
    %v9491 = vunpack.c.l.s4 1966171168
    %v9492 = vunpack.c.0.s8 %v9491
    %v9493 = vlaneseq
    %v9494 = vshrl.u32 %v9493, 7
    %v9495 = vsub.s32 %v9492, %v9494
    %v9496 = vrot.slane %v9474, %v9495
    %v9498 = vunpack.c.l.s4 1966171168
    %v9499 = vunpack.c.0.s8 %v9498
    %v9500 = vlaneseq
    %v9501 = vshrl.u32 %v9500, 7
    %v9502 = vsub.s32 %v9499, %v9501
    %v9503 = vrot.slane %v9475, %v9502
    %v9504 = vcombine.high %v9482, %v9482
    %v9505 = vcombine.high %v9489, %v9489
    %v9506 = vcombine.high %v9496, %v9496
    %v9507 = vcombine.high %v9503, %v9503
    %v9516 = vadd.f32 %v9442, %v9482
    %v9517 = vadd.f32 %v9443, %v9496
    %v9518 = vadd.f32 %v9444, %v9504
    %v9519 = vadd.f32 %v9445, %v9506
    %v9520 = vadd.f32 %v9446, %v9489
    %v9521 = vadd.f32 %v9447, %v9503
    %v9522 = vadd.f32 %v9448, %v9505
    %v9523 = vadd.f32 %v9449, %v9507
    %v9524 = vxor.u32 %v9516, 2147483648
    %v9525 = vxor.u32 %v9517, 2147483648
    %v9526 = vxor.u32 %v9518, 2147483648
    %v9527 = vxor.u32 %v9519, 2147483648
    %v9528 = vxor.u32 %v9520, 2147483648
    %v9529 = vxor.u32 %v9521, 2147483648
    %v9530 = vxor.u32 %v9522, 2147483648
    %v9531 = vxor.u32 %v9523, 2147483648
    %v9532 = vmul.f32 %v9524, 1.442695
    %v9533 = vpow.pop %v9532
    %v9534 = vmul.f32 %v9525, 1.442695
    %v9535 = vpow.pop %v9534
    %v9536 = vmul.f32 %v9526, 1.442695
    %v9537 = vpow.pop %v9536
    %v9538 = vmul.f32 %v9527, 1.442695
    %v9539 = vpow.pop %v9538
    %v9540 = vmul.f32 %v9528, 1.442695
    %v9541 = vpow.pop %v9540
    %v9542 = vmul.f32 %v9529, 1.442695
    %v9543 = vpow.pop %v9542
    %v9544 = vmul.f32 %v9530, 1.442695
    %v9545 = vpow.pop %v9544
    %v9546 = vmul.f32 %v9531, 1.442695
    %v9547 = vpow.pop %v9546
    %v9548 = vadd.f32 %v9533, 1.0
    %v9549 = vadd.f32 %v9535, 1.0
    %v9550 = vadd.f32 %v9537, 1.0
    %v9551 = vadd.f32 %v9539, 1.0
    %v9552 = vadd.f32 %v9541, 1.0
    %v9553 = vadd.f32 %v9543, 1.0
    %v9554 = vadd.f32 %v9545, 1.0
    %v9555 = vadd.f32 %v9547, 1.0
    %v9556 = vrcp.pop %v9548
    %v9557 = vmul.f32 1.0, %v9556
    %v9558 = vrcp.pop %v9549
    %v9559 = vmul.f32 1.0, %v9558
    %v9560 = vrcp.pop %v9550
    %v9561 = vmul.f32 1.0, %v9560
    %v9562 = vrcp.pop %v9551
    %v9563 = vmul.f32 1.0, %v9562
    %v9564 = vrcp.pop %v9552
    %v9565 = vmul.f32 1.0, %v9564
    %v9566 = vrcp.pop %v9553
    %v9567 = vmul.f32 1.0, %v9566
    %v9568 = vrcp.pop %v9554
    %v9569 = vmul.f32 1.0, %v9568
    %v9570 = vrcp.pop %v9555
    %v9571 = vmul.f32 1.0, %v9570
    %v9573 = vcombine.high %v9314, %v9314
    %v9575 = vunpack.c.l.s4 1966171168
    %v9576 = vunpack.c.0.s8 %v9575
    %v9577 = vlaneseq
    %v9578 = vshrl.u32 %v9577, 7
    %v9579 = vsub.s32 %v9576, %v9578
    %v9580 = vrot.slane %v9314, %v9579
    %v9582 = vunpack.c.l.s4 1966171168
    %v9583 = vunpack.c.0.s8 %v9582
    %v9584 = vlaneseq
    %v9585 = vshrl.u32 %v9584, 7
    %v9586 = vsub.s32 %v9583, %v9585
    %v9587 = vrot.slane %v9573, %v9586
    %v9588 = vcombine.high %v9580, %v9580
    %v9589 = vcombine.high %v9587, %v9587
    %v9591 = vunpack.c.l.s4 1966171168
    %v9592 = vunpack.c.0.s8 %v9591
    %v9593 = vlaneseq
    %v9594 = vshrl.u32 %v9593, 7
    %v9595 = vsub.s32 %v9592, %v9594
    %v9596 = vrot.slane %v9580, %v9595
    %v9598 = vunpack.c.l.s4 1966171168
    %v9599 = vunpack.c.0.s8 %v9598
    %v9600 = vlaneseq
    %v9601 = vshrl.u32 %v9600, 7
    %v9602 = vsub.s32 %v9599, %v9601
    %v9603 = vrot.slane %v9587, %v9602
    %v9605 = vunpack.c.l.s4 1966171168
    %v9606 = vunpack.c.0.s8 %v9605
    %v9607 = vlaneseq
    %v9608 = vshrl.u32 %v9607, 7
    %v9609 = vsub.s32 %v9606, %v9608
    %v9610 = vrot.slane %v9588, %v9609
    %v9612 = vunpack.c.l.s4 1966171168
    %v9613 = vunpack.c.0.s8 %v9612
    %v9614 = vlaneseq
    %v9615 = vshrl.u32 %v9614, 7
    %v9616 = vsub.s32 %v9613, %v9615
    %v9617 = vrot.slane %v9589, %v9616
    %v9618 = vcombine.high %v9596, %v9596
    %v9619 = vcombine.high %v9603, %v9603
    %v9620 = vcombine.high %v9610, %v9610
    %v9621 = vcombine.high %v9617, %v9617
    %v9630 = vmul.f32 %v9419, %v9596
    %v9631 = vmul.f32 %v9421, %v9610
    %v9632 = vmul.f32 %v9423, %v9618
    %v9633 = vmul.f32 %v9425, %v9620
    %v9634 = vmul.f32 %v9427, %v9603
    %v9635 = vmul.f32 %v9429, %v9617
    %v9636 = vmul.f32 %v9431, %v9619
    %v9637 = vmul.f32 %v9433, %v9621
    %v9638 = vrot.slane %v9209, 2
    %v9639 = vrot.slane %v9213, 2
    %v9640 = vrot.slane %v9217, 2
    %v9641 = vrot.slane %v9221, 2
    %v9642 = vrot.slane %v9225, 2
    %v9643 = vrot.slane %v9229, 2
    %v9644 = vrot.slane %v9233, 2
    %v9645 = vrot.slane %v9237, 2
    %v9654 = vadd.f32 %v9638, %v9630
    %v9655 = vadd.f32 %v9639, %v9631
    %v9656 = vadd.f32 %v9640, %v9632
    %v9657 = vadd.f32 %v9641, %v9633
    %v9658 = vadd.f32 %v9642, %v9634
    %v9659 = vadd.f32 %v9643, %v9635
    %v9660 = vadd.f32 %v9644, %v9636
    %v9661 = vadd.f32 %v9645, %v9637
    %v9662 = vtanh.pop %v9654
    %v9663 = vtanh.pop %v9655
    %v9664 = vtanh.pop %v9656
    %v9665 = vtanh.pop %v9657
    %v9666 = vtanh.pop %v9658
    %v9667 = vtanh.pop %v9659
    %v9668 = vtanh.pop %v9660
    %v9669 = vtanh.pop %v9661
    %v9670 = vsub.f32 1.0, %v9557
    %v9671 = vsub.f32 1.0, %v9559
    %v9672 = vsub.f32 1.0, %v9561
    %v9673 = vsub.f32 1.0, %v9563
    %v9674 = vsub.f32 1.0, %v9565
    %v9675 = vsub.f32 1.0, %v9567
    %v9676 = vsub.f32 1.0, %v9569
    %v9677 = vsub.f32 1.0, %v9571
    %v9678 = vmul.f32 %v9670, %v9662
    %v9679 = vmul.f32 %v9671, %v9663
    %v9680 = vmul.f32 %v9672, %v9664
    %v9681 = vmul.f32 %v9673, %v9665
    %v9682 = vmul.f32 %v9674, %v9666
    %v9683 = vmul.f32 %v9675, %v9667
    %v9684 = vmul.f32 %v9676, %v9668
    %v9685 = vmul.f32 %v9677, %v9669
    %v9686 = vmul.f32 %v9557, %v9098
    %v9687 = vmul.f32 %v9559, %v9112
    %v9688 = vmul.f32 %v9561, %v9120
    %v9689 = vmul.f32 %v9563, %v9122
    %v9690 = vmul.f32 %v9565, %v9105
    %v9691 = vmul.f32 %v9567, %v9119
    %v9692 = vmul.f32 %v9569, %v9121
    %v9693 = vmul.f32 %v9571, %v9123
    %v9694 = vadd.f32 %v9678, %v9686
    %v9695 = vadd.f32 %v9679, %v9687
    %v9696 = vadd.f32 %v9680, %v9688
    %v9697 = vadd.f32 %v9681, %v9689
    %v9698 = vadd.f32 %v9682, %v9690
    %v9699 = vadd.f32 %v9683, %v9691
    %v9700 = vadd.f32 %v9684, %v9692
    %v9701 = vadd.f32 %v9685, %v9693
    %v9702 = vmul.f32 %v919, %v9694
    %v9703 = vmul.f32 %v919, %v9695
    %v9704 = vmul.f32 %v919, %v9696
    %v9705 = vmul.f32 %v919, %v9697
    %v9706 = vmul.f32 %v919, %v9698
    %v9707 = vmul.f32 %v919, %v9699
    %v9708 = vmul.f32 %v919, %v9700
    %v9709 = vmul.f32 %v919, %v9701
    %v9718 = vcombine.low %v9702, %v9703
    %v9719 = vcombine.low %v9704, %v9705
    %v9720 = vcombine.low %v9706, %v9707
    %v9721 = vcombine.low %v9708, %v9709
    %v9723 = vunpack.c.l.s4 1966171168
    %v9724 = vunpack.c.0.s8 %v9723
    %v9725 = vlaneseq
    %v9726 = vshrl.u32 %v9725, 7
    %v9727 = vsub.s32 %v9724, %v9726
    %v9728 = vrot.slane %v9718, %v9727
    %v9730 = vunpack.c.l.s4 1966171168
    %v9731 = vunpack.c.0.s8 %v9730
    %v9732 = vlaneseq
    %v9733 = vshrl.u32 %v9732, 7
    %v9734 = vsub.s32 %v9731, %v9733
    %v9735 = vrot.slane %v9719, %v9734
    %v9737 = vunpack.c.l.s4 1966171168
    %v9738 = vunpack.c.0.s8 %v9737
    %v9739 = vlaneseq
    %v9740 = vshrl.u32 %v9739, 7
    %v9741 = vsub.s32 %v9738, %v9740
    %v9742 = vrot.slane %v9720, %v9741
    %v9744 = vunpack.c.l.s4 1966171168
    %v9745 = vunpack.c.0.s8 %v9744
    %v9746 = vlaneseq
    %v9747 = vshrl.u32 %v9746, 7
    %v9748 = vsub.s32 %v9745, %v9747
    %v9749 = vrot.slane %v9721, %v9748
    %v9750 = vcombine.low %v9728, %v9735
    %v9751 = vcombine.low %v9742, %v9749
    %v9753 = vunpack.c.l.s4 1966171168
    %v9754 = vunpack.c.0.s8 %v9753
    %v9755 = vlaneseq
    %v9756 = vshrl.u32 %v9755, 7
    %v9757 = vsub.s32 %v9754, %v9756
    %v9758 = vrot.slane %v9750, %v9757
    %v9760 = vunpack.c.l.s4 1966171168
    %v9761 = vunpack.c.0.s8 %v9760
    %v9762 = vlaneseq
    %v9763 = vshrl.u32 %v9762, 7
    %v9764 = vsub.s32 %v9761, %v9763
    %v9765 = vrot.slane %v9751, %v9764
    %v9766 = vcombine.low %v9758, %v9765
    %v9768 = vadd.f32 %v9319, %v9766
    %v9769 = vpack.c.bf16 %v9768, %v9768
    %9770 = vmatprep.subr.bf16.mxu0 %v1069
    %9771 = vmatpush1.bf16.msra.mxu0 %v1068
    %9772 = vmatprep.subr.bf16.mxu0 %v1072
    %9773 = vmatpush1.bf16.msra.mxu0 %v1071
    %9774 = vmatprep.subr.bf16.mxu0 %v1075
    %9775 = vmatpush1.bf16.msra.mxu0 %v1074
    %9776 = vmatprep.subr.bf16.mxu0 %v1078
    %9777 = vmatpush1.bf16.msra.mxu0 %v1077
    %9778 = vmatprep.subr.bf16.mxu0 %v1081
    %9779 = vmatpush1.bf16.msra.mxu0 %v1080
    %9780 = vmatprep.subr.bf16.mxu0 %v1084
    %9781 = vmatpush1.bf16.msra.mxu0 %v1083
    %9782 = vmatprep.subr.bf16.mxu0 %v1087
    %9783 = vmatpush1.bf16.msra.mxu0 %v1086
    %9784 = vmatprep.subr.bf16.mxu0 %v1090
    %9785 = vmatpush1.bf16.msra.mxu0 %v1089
    %9786 = vmatprep.subr.bf16.mxu0 0
    %9787 = vmatpush1.bf16.msra.mxu0 0
    %9788 = vmatprep.subr.bf16.mxu0 0
    %9789 = vmatpush1.bf16.msra.mxu0 0
    %9790 = vmatprep.subr.bf16.mxu0 0
    %9791 = vmatpush1.bf16.msra.mxu0 0
    %9792 = vmatprep.subr.bf16.mxu0 0
    %9793 = vmatpush1.bf16.msra.mxu0 0
    %9794 = vmatprep.subr.bf16.mxu0 0
    %9795 = vmatpush1.bf16.msra.mxu0 0
    %9796 = vmatprep.subr.bf16.mxu0 0
    %9797 = vmatpush1.bf16.msra.mxu0 0
    %9798 = vmatprep.subr.bf16.mxu0 0
    %9799 = vmatpush1.bf16.msra.mxu0 0
    %9800 = vmatprep.subr.bf16.mxu0 0
    %9801 = vmatpush1.bf16.msra.mxu0 0
    %9802 = vmatprep.mubr.bf16.mxu0 0
    %9803 = vmatmul.mubr.bf16.gmra.mrb[0].mxu0 %v9769
    %v9804 = vpop.f32.mrb[0].mxu0
    %v9805 = vadd.f32 0.0, %v9804
    %v9806 = vpop.f32.mrb[0].mxu0
    %v9807 = vadd.f32 0.0, %v9806
    %v9808 = vpop.f32.mrb[0].mxu0
    %v9809 = vpop.f32.mrb[0].mxu0
    %9810 = vdwg.mxu0
    %9811 = vmatprep.subr.bf16.mxu0 0
    %9812 = vmatpush1.bf16.msra.mxu0 %v1070
    %9813 = vmatprep.subr.bf16.mxu0 0
    %9814 = vmatpush1.bf16.msra.mxu0 %v1073
    %9815 = vmatprep.subr.bf16.mxu0 0
    %9816 = vmatpush1.bf16.msra.mxu0 %v1076
    %9817 = vmatprep.subr.bf16.mxu0 0
    %9818 = vmatpush1.bf16.msra.mxu0 %v1079
    %9819 = vmatprep.subr.bf16.mxu0 0
    %9820 = vmatpush1.bf16.msra.mxu0 %v1082
    %9821 = vmatprep.subr.bf16.mxu0 0
    %9822 = vmatpush1.bf16.msra.mxu0 %v1085
    %9823 = vmatprep.subr.bf16.mxu0 0
    %9824 = vmatpush1.bf16.msra.mxu0 %v1088
    %9825 = vmatprep.subr.bf16.mxu0 0
    %9826 = vmatpush1.bf16.msra.mxu0 %v1091
    %9827 = vmatprep.subr.bf16.mxu0 0
    %9828 = vmatpush1.bf16.msra.mxu0 0
    %9829 = vmatprep.subr.bf16.mxu0 0
    %9830 = vmatpush1.bf16.msra.mxu0 0
    %9831 = vmatprep.subr.bf16.mxu0 0
    %9832 = vmatpush1.bf16.msra.mxu0 0
    %9833 = vmatprep.subr.bf16.mxu0 0
    %9834 = vmatpush1.bf16.msra.mxu0 0
    %9835 = vmatprep.subr.bf16.mxu0 0
    %9836 = vmatpush1.bf16.msra.mxu0 0
    %9837 = vmatprep.subr.bf16.mxu0 0
    %9838 = vmatpush1.bf16.msra.mxu0 0
    %9839 = vmatprep.subr.bf16.mxu0 0
    %9840 = vmatpush1.bf16.msra.mxu0 0
    %9841 = vmatprep.subr.bf16.mxu0 0
    %9842 = vmatpush1.bf16.msra.mxu0 0
    %9843 = vmatprep.mubr.bf16.mxu0 0
    %9844 = vmatmul.mubr.bf16.gmra.mrb[0].mxu0 %v9769
    %v9845 = vpop.f32.mrb[0].mxu0
    %v9846 = vadd.f32 0.0, %v9845
    %v9847 = vpop.f32.mrb[0].mxu0
    %v9848 = vpop.f32.mrb[0].mxu0
    %v9849 = vpop.f32.mrb[0].mxu0
    %9850 = vdwg.mxu0
    %v9851 = vrot.slane %v9209, 3
    %v9852 = vrot.slane %v9213, 3
    %v9853 = vrot.slane %v9217, 3
    %v9854 = vrot.slane %v9221, 3
    %v9855 = vrot.slane %v9225, 3
    %v9856 = vrot.slane %v9229, 3
    %v9857 = vrot.slane %v9233, 3
    %v9858 = vrot.slane %v9237, 3
    %v9870 = vcombine.low %v9805, %v9807
    %v9871 = vcombine.high %v9805, %v9807
    %v9872 = vcombine.high %v9846, %v9846
    %v9874 = vunpack.c.l.s4 1966171168
    %v9875 = vunpack.c.0.s8 %v9874
    %v9876 = vlaneseq
    %v9877 = vshrl.u32 %v9876, 7
    %v9878 = vsub.s32 %v9875, %v9877
    %v9879 = vrot.slane %v9870, %v9878
    %v9881 = vunpack.c.l.s4 1966171168
    %v9882 = vunpack.c.0.s8 %v9881
    %v9883 = vlaneseq
    %v9884 = vshrl.u32 %v9883, 7
    %v9885 = vsub.s32 %v9882, %v9884
    %v9886 = vrot.slane %v9871, %v9885
    %v9888 = vunpack.c.l.s4 1966171168
    %v9889 = vunpack.c.0.s8 %v9888
    %v9890 = vlaneseq
    %v9891 = vshrl.u32 %v9890, 7
    %v9892 = vsub.s32 %v9889, %v9891
    %v9893 = vrot.slane %v9846, %v9892
    %v9895 = vunpack.c.l.s4 1966171168
    %v9896 = vunpack.c.0.s8 %v9895
    %v9897 = vlaneseq
    %v9898 = vshrl.u32 %v9897, 7
    %v9899 = vsub.s32 %v9896, %v9898
    %v9900 = vrot.slane %v9872, %v9899
    %v9901 = vcombine.low %v9879, %v9893
    %v9902 = vcombine.high %v9879, %v9893
    %v9903 = vcombine.low %v9886, %v9900
    %v9904 = vcombine.high %v9886, %v9900
    %v9906 = vunpack.c.l.s4 1966171168
    %v9907 = vunpack.c.0.s8 %v9906
    %v9908 = vlaneseq
    %v9909 = vshrl.u32 %v9908, 7
    %v9910 = vsub.s32 %v9907, %v9909
    %v9911 = vrot.slane %v9901, %v9910
    %v9913 = vunpack.c.l.s4 1966171168
    %v9914 = vunpack.c.0.s8 %v9913
    %v9915 = vlaneseq
    %v9916 = vshrl.u32 %v9915, 7
    %v9917 = vsub.s32 %v9914, %v9916
    %v9918 = vrot.slane %v9903, %v9917
    %v9920 = vunpack.c.l.s4 1966171168
    %v9921 = vunpack.c.0.s8 %v9920
    %v9922 = vlaneseq
    %v9923 = vshrl.u32 %v9922, 7
    %v9924 = vsub.s32 %v9921, %v9923
    %v9925 = vrot.slane %v9902, %v9924
    %v9927 = vunpack.c.l.s4 1966171168
    %v9928 = vunpack.c.0.s8 %v9927
    %v9929 = vlaneseq
    %v9930 = vshrl.u32 %v9929, 7
    %v9931 = vsub.s32 %v9928, %v9930
    %v9932 = vrot.slane %v9904, %v9931
    %v9933 = vcombine.high %v9911, %v9911
    %v9934 = vcombine.high %v9918, %v9918
    %v9935 = vcombine.high %v9925, %v9925
    %v9936 = vcombine.high %v9932, %v9932
    %v9945 = vadd.f32 %v9851, %v9911
    %v9946 = vadd.f32 %v9852, %v9925
    %v9947 = vadd.f32 %v9853, %v9933
    %v9948 = vadd.f32 %v9854, %v9935
    %v9949 = vadd.f32 %v9855, %v9918
    %v9950 = vadd.f32 %v9856, %v9932
    %v9951 = vadd.f32 %v9857, %v9934
    %v9952 = vadd.f32 %v9858, %v9936
    %v9953 = vpack.c.bf16 %v9073, %v9073
    %9954 = vmatprep.subr.bf16.mxu0 %v1381
    %9955 = vmatpush1.bf16.msra.mxu0 %v1380
    %9956 = vmatprep.subr.bf16.mxu0 %v1384
    %9957 = vmatpush1.bf16.msra.mxu0 %v1383
    %9958 = vmatprep.subr.bf16.mxu0 %v1387
    %9959 = vmatpush1.bf16.msra.mxu0 %v1386
    %9960 = vmatprep.subr.bf16.mxu0 %v1390
    %9961 = vmatpush1.bf16.msra.mxu0 %v1389
    %9962 = vmatprep.subr.bf16.mxu0 %v1393
    %9963 = vmatpush1.bf16.msra.mxu0 %v1392
    %9964 = vmatprep.subr.bf16.mxu0 %v1396
    %9965 = vmatpush1.bf16.msra.mxu0 %v1395
    %9966 = vmatprep.subr.bf16.mxu0 %v1399
    %9967 = vmatpush1.bf16.msra.mxu0 %v1398
    %9968 = vmatprep.subr.bf16.mxu0 %v1402
    %9969 = vmatpush1.bf16.msra.mxu0 %v1401
    %9970 = vmatprep.subr.bf16.mxu0 0
    %9971 = vmatpush1.bf16.msra.mxu0 0
    %9972 = vmatprep.subr.bf16.mxu0 0
    %9973 = vmatpush1.bf16.msra.mxu0 0
    %9974 = vmatprep.subr.bf16.mxu0 0
    %9975 = vmatpush1.bf16.msra.mxu0 0
    %9976 = vmatprep.subr.bf16.mxu0 0
    %9977 = vmatpush1.bf16.msra.mxu0 0
    %9978 = vmatprep.subr.bf16.mxu0 0
    %9979 = vmatpush1.bf16.msra.mxu0 0
    %9980 = vmatprep.subr.bf16.mxu0 0
    %9981 = vmatpush1.bf16.msra.mxu0 0
    %9982 = vmatprep.subr.bf16.mxu0 0
    %9983 = vmatpush1.bf16.msra.mxu0 0
    %9984 = vmatprep.subr.bf16.mxu0 0
    %9985 = vmatpush1.bf16.msra.mxu0 0
    %9986 = vmatprep.mubr.bf16.mxu0 0
    %9987 = vmatmul.mubr.bf16.gmra.mrb[0].mxu0 %v9953
    %v9988 = vpop.f32.mrb[0].mxu0
    %v9989 = vadd.f32 %v222, %v9988
    %v9990 = vpop.f32.mrb[0].mxu0
    %v9991 = vadd.f32 %v226, %v9990
    %v9992 = vpop.f32.mrb[0].mxu0
    %v9993 = vpop.f32.mrb[0].mxu0
    %9994 = vdwg.mxu0
    %9995 = vmatprep.subr.bf16.mxu0 0
    %9996 = vmatpush1.bf16.msra.mxu0 %v1382
    %9997 = vmatprep.subr.bf16.mxu0 0
    %9998 = vmatpush1.bf16.msra.mxu0 %v1385
    %9999 = vmatprep.subr.bf16.mxu0 0
    %10000 = vmatpush1.bf16.msra.mxu0 %v1388
    %10001 = vmatprep.subr.bf16.mxu0 0
    %10002 = vmatpush1.bf16.msra.mxu0 %v1391
    %10003 = vmatprep.subr.bf16.mxu0 0
    %10004 = vmatpush1.bf16.msra.mxu0 %v1394
    %10005 = vmatprep.subr.bf16.mxu0 0
    %10006 = vmatpush1.bf16.msra.mxu0 %v1397
    %10007 = vmatprep.subr.bf16.mxu0 0
    %10008 = vmatpush1.bf16.msra.mxu0 %v1400
    %10009 = vmatprep.subr.bf16.mxu0 0
    %10010 = vmatpush1.bf16.msra.mxu0 %v1403
    %10011 = vmatprep.subr.bf16.mxu0 0
    %10012 = vmatpush1.bf16.msra.mxu0 0
    %10013 = vmatprep.subr.bf16.mxu0 0
    %10014 = vmatpush1.bf16.msra.mxu0 0
    %10015 = vmatprep.subr.bf16.mxu0 0
    %10016 = vmatpush1.bf16.msra.mxu0 0
    %10017 = vmatprep.subr.bf16.mxu0 0
    %10018 = vmatpush1.bf16.msra.mxu0 0
    %10019 = vmatprep.subr.bf16.mxu0 0
    %10020 = vmatpush1.bf16.msra.mxu0 0
    %10021 = vmatprep.subr.bf16.mxu0 0
    %10022 = vmatpush1.bf16.msra.mxu0 0
    %10023 = vmatprep.subr.bf16.mxu0 0
    %10024 = vmatpush1.bf16.msra.mxu0 0
    %10025 = vmatprep.subr.bf16.mxu0 0
    %10026 = vmatpush1.bf16.msra.mxu0 0
    %10027 = vmatprep.mubr.bf16.mxu0 0
    %10028 = vmatmul.mubr.bf16.gmra.mrb[0].mxu0 %v9953
    %v10029 = vpop.f32.mrb[0].mxu0
    %v10030 = vadd.f32 %v230, %v10029
    %v10031 = vpop.f32.mrb[0].mxu0
    %v10032 = vpop.f32.mrb[0].mxu0
    %v10033 = vpop.f32.mrb[0].mxu0
    %10034 = vdwg.mxu0
    %v10035 = vmul.f32 %v1509, %v9073
    %v10037 = vcombine.high %v9989, %v9989
    %v10039 = vunpack.c.l.s4 1966171168
    %v10040 = vunpack.c.0.s8 %v10039
    %v10041 = vlaneseq
    %v10042 = vshrl.u32 %v10041, 7
    %v10043 = vsub.s32 %v10040, %v10042
    %v10044 = vrot.slane %v9989, %v10043
    %v10046 = vunpack.c.l.s4 1966171168
    %v10047 = vunpack.c.0.s8 %v10046
    %v10048 = vlaneseq
    %v10049 = vshrl.u32 %v10048, 7
    %v10050 = vsub.s32 %v10047, %v10049
    %v10051 = vrot.slane %v10037, %v10050
    %v10052 = vcombine.high %v10044, %v10044
    %v10053 = vcombine.high %v10051, %v10051
    %v10055 = vunpack.c.l.s4 1966171168
    %v10056 = vunpack.c.0.s8 %v10055
    %v10057 = vlaneseq
    %v10058 = vshrl.u32 %v10057, 7
    %v10059 = vsub.s32 %v10056, %v10058
    %v10060 = vrot.slane %v10044, %v10059
    %v10062 = vunpack.c.l.s4 1966171168
    %v10063 = vunpack.c.0.s8 %v10062
    %v10064 = vlaneseq
    %v10065 = vshrl.u32 %v10064, 7
    %v10066 = vsub.s32 %v10063, %v10065
    %v10067 = vrot.slane %v10051, %v10066
    %v10069 = vunpack.c.l.s4 1966171168
    %v10070 = vunpack.c.0.s8 %v10069
    %v10071 = vlaneseq
    %v10072 = vshrl.u32 %v10071, 7
    %v10073 = vsub.s32 %v10070, %v10072
    %v10074 = vrot.slane %v10052, %v10073
    %v10076 = vunpack.c.l.s4 1966171168
    %v10077 = vunpack.c.0.s8 %v10076
    %v10078 = vlaneseq
    %v10079 = vshrl.u32 %v10078, 7
    %v10080 = vsub.s32 %v10077, %v10079
    %v10081 = vrot.slane %v10053, %v10080
    %v10082 = vcombine.high %v10060, %v10060
    %v10083 = vcombine.high %v10067, %v10067
    %v10084 = vcombine.high %v10074, %v10074
    %v10085 = vcombine.high %v10081, %v10081
    %v10094 = vadd.f32 %v9945, %v10060
    %v10095 = vadd.f32 %v9946, %v10074
    %v10096 = vadd.f32 %v9947, %v10082
    %v10097 = vadd.f32 %v9948, %v10084
    %v10098 = vadd.f32 %v9949, %v10067
    %v10099 = vadd.f32 %v9950, %v10081
    %v10100 = vadd.f32 %v9951, %v10083
    %v10101 = vadd.f32 %v9952, %v10085
    %v10102 = vxor.u32 %v10094, 2147483648
    %v10103 = vxor.u32 %v10095, 2147483648
    %v10104 = vxor.u32 %v10096, 2147483648
    %v10105 = vxor.u32 %v10097, 2147483648
    %v10106 = vxor.u32 %v10098, 2147483648
    %v10107 = vxor.u32 %v10099, 2147483648
    %v10108 = vxor.u32 %v10100, 2147483648
    %v10109 = vxor.u32 %v10101, 2147483648
    %v10110 = vmul.f32 %v10102, 1.442695
    %v10111 = vpow.pop %v10110
    %v10112 = vmul.f32 %v10103, 1.442695
    %v10113 = vpow.pop %v10112
    %v10114 = vmul.f32 %v10104, 1.442695
    %v10115 = vpow.pop %v10114
    %v10116 = vmul.f32 %v10105, 1.442695
    %v10117 = vpow.pop %v10116
    %v10118 = vmul.f32 %v10106, 1.442695
    %v10119 = vpow.pop %v10118
    %v10120 = vmul.f32 %v10107, 1.442695
    %v10121 = vpow.pop %v10120
    %v10122 = vmul.f32 %v10108, 1.442695
    %v10123 = vpow.pop %v10122
    %v10124 = vmul.f32 %v10109, 1.442695
    %v10125 = vpow.pop %v10124
    %v10126 = vadd.f32 %v10111, 1.0
    %v10127 = vadd.f32 %v10113, 1.0
    %v10128 = vadd.f32 %v10115, 1.0
    %v10129 = vadd.f32 %v10117, 1.0
    %v10130 = vadd.f32 %v10119, 1.0
    %v10131 = vadd.f32 %v10121, 1.0
    %v10132 = vadd.f32 %v10123, 1.0
    %v10133 = vadd.f32 %v10125, 1.0
    %v10134 = vrcp.pop %v10126
    %v10135 = vmul.f32 1.0, %v10134
    %v10136 = vrcp.pop %v10127
    %v10137 = vmul.f32 1.0, %v10136
    %v10138 = vrcp.pop %v10128
    %v10139 = vmul.f32 1.0, %v10138
    %v10140 = vrcp.pop %v10129
    %v10141 = vmul.f32 1.0, %v10140
    %v10142 = vrcp.pop %v10130
    %v10143 = vmul.f32 1.0, %v10142
    %v10144 = vrcp.pop %v10131
    %v10145 = vmul.f32 1.0, %v10144
    %v10146 = vrcp.pop %v10132
    %v10147 = vmul.f32 1.0, %v10146
    %v10148 = vrcp.pop %v10133
    %v10149 = vmul.f32 1.0, %v10148
    %v10158 = vrot.slane %v9945, 1
    %v10159 = vrot.slane %v9946, 1
    %v10160 = vrot.slane %v9947, 1
    %v10161 = vrot.slane %v9948, 1
    %v10162 = vrot.slane %v9949, 1
    %v10163 = vrot.slane %v9950, 1
    %v10164 = vrot.slane %v9951, 1
    %v10165 = vrot.slane %v9952, 1
    %v10175 = vcombine.high %v9991, %v9991
    %v10177 = vunpack.c.l.s4 1966171168
    %v10178 = vunpack.c.0.s8 %v10177
    %v10179 = vlaneseq
    %v10180 = vshrl.u32 %v10179, 7
    %v10181 = vsub.s32 %v10178, %v10180
    %v10182 = vrot.slane %v9991, %v10181
    %v10184 = vunpack.c.l.s4 1966171168
    %v10185 = vunpack.c.0.s8 %v10184
    %v10186 = vlaneseq
    %v10187 = vshrl.u32 %v10186, 7
    %v10188 = vsub.s32 %v10185, %v10187
    %v10189 = vrot.slane %v10175, %v10188
    %v10190 = vcombine.high %v10182, %v10182
    %v10191 = vcombine.high %v10189, %v10189
    %v10193 = vunpack.c.l.s4 1966171168
    %v10194 = vunpack.c.0.s8 %v10193
    %v10195 = vlaneseq
    %v10196 = vshrl.u32 %v10195, 7
    %v10197 = vsub.s32 %v10194, %v10196
    %v10198 = vrot.slane %v10182, %v10197
    %v10200 = vunpack.c.l.s4 1966171168
    %v10201 = vunpack.c.0.s8 %v10200
    %v10202 = vlaneseq
    %v10203 = vshrl.u32 %v10202, 7
    %v10204 = vsub.s32 %v10201, %v10203
    %v10205 = vrot.slane %v10189, %v10204
    %v10207 = vunpack.c.l.s4 1966171168
    %v10208 = vunpack.c.0.s8 %v10207
    %v10209 = vlaneseq
    %v10210 = vshrl.u32 %v10209, 7
    %v10211 = vsub.s32 %v10208, %v10210
    %v10212 = vrot.slane %v10190, %v10211
    %v10214 = vunpack.c.l.s4 1966171168
    %v10215 = vunpack.c.0.s8 %v10214
    %v10216 = vlaneseq
    %v10217 = vshrl.u32 %v10216, 7
    %v10218 = vsub.s32 %v10215, %v10217
    %v10219 = vrot.slane %v10191, %v10218
    %v10220 = vcombine.high %v10198, %v10198
    %v10221 = vcombine.high %v10205, %v10205
    %v10222 = vcombine.high %v10212, %v10212
    %v10223 = vcombine.high %v10219, %v10219
    %v10232 = vadd.f32 %v10158, %v10198
    %v10233 = vadd.f32 %v10159, %v10212
    %v10234 = vadd.f32 %v10160, %v10220
    %v10235 = vadd.f32 %v10161, %v10222
    %v10236 = vadd.f32 %v10162, %v10205
    %v10237 = vadd.f32 %v10163, %v10219
    %v10238 = vadd.f32 %v10164, %v10221
    %v10239 = vadd.f32 %v10165, %v10223
    %v10240 = vxor.u32 %v10232, 2147483648
    %v10241 = vxor.u32 %v10233, 2147483648
    %v10242 = vxor.u32 %v10234, 2147483648
    %v10243 = vxor.u32 %v10235, 2147483648
    %v10244 = vxor.u32 %v10236, 2147483648
    %v10245 = vxor.u32 %v10237, 2147483648
    %v10246 = vxor.u32 %v10238, 2147483648
    %v10247 = vxor.u32 %v10239, 2147483648
    %v10248 = vmul.f32 %v10240, 1.442695
    %v10249 = vpow.pop %v10248
    %v10250 = vmul.f32 %v10241, 1.442695
    %v10251 = vpow.pop %v10250
    %v10252 = vmul.f32 %v10242, 1.442695
    %v10253 = vpow.pop %v10252
    %v10254 = vmul.f32 %v10243, 1.442695
    %v10255 = vpow.pop %v10254
    %v10256 = vmul.f32 %v10244, 1.442695
    %v10257 = vpow.pop %v10256
    %v10258 = vmul.f32 %v10245, 1.442695
    %v10259 = vpow.pop %v10258
    %v10260 = vmul.f32 %v10246, 1.442695
    %v10261 = vpow.pop %v10260
    %v10262 = vmul.f32 %v10247, 1.442695
    %v10263 = vpow.pop %v10262
    %v10264 = vadd.f32 %v10249, 1.0
    %v10265 = vadd.f32 %v10251, 1.0
    %v10266 = vadd.f32 %v10253, 1.0
    %v10267 = vadd.f32 %v10255, 1.0
    %v10268 = vadd.f32 %v10257, 1.0
    %v10269 = vadd.f32 %v10259, 1.0
    %v10270 = vadd.f32 %v10261, 1.0
    %v10271 = vadd.f32 %v10263, 1.0
    %v10272 = vrcp.pop %v10264
    %v10273 = vmul.f32 1.0, %v10272
    %v10274 = vrcp.pop %v10265
    %v10275 = vmul.f32 1.0, %v10274
    %v10276 = vrcp.pop %v10266
    %v10277 = vmul.f32 1.0, %v10276
    %v10278 = vrcp.pop %v10267
    %v10279 = vmul.f32 1.0, %v10278
    %v10280 = vrcp.pop %v10268
    %v10281 = vmul.f32 1.0, %v10280
    %v10282 = vrcp.pop %v10269
    %v10283 = vmul.f32 1.0, %v10282
    %v10284 = vrcp.pop %v10270
    %v10285 = vmul.f32 1.0, %v10284
    %v10286 = vrcp.pop %v10271
    %v10287 = vmul.f32 1.0, %v10286
    %v10289 = vcombine.high %v10030, %v10030
    %v10291 = vunpack.c.l.s4 1966171168
    %v10292 = vunpack.c.0.s8 %v10291
    %v10293 = vlaneseq
    %v10294 = vshrl.u32 %v10293, 7
    %v10295 = vsub.s32 %v10292, %v10294
    %v10296 = vrot.slane %v10030, %v10295
    %v10298 = vunpack.c.l.s4 1966171168
    %v10299 = vunpack.c.0.s8 %v10298
    %v10300 = vlaneseq
    %v10301 = vshrl.u32 %v10300, 7
    %v10302 = vsub.s32 %v10299, %v10301
    %v10303 = vrot.slane %v10289, %v10302
    %v10304 = vcombine.high %v10296, %v10296
    %v10305 = vcombine.high %v10303, %v10303
    %v10307 = vunpack.c.l.s4 1966171168
    %v10308 = vunpack.c.0.s8 %v10307
    %v10309 = vlaneseq
    %v10310 = vshrl.u32 %v10309, 7
    %v10311 = vsub.s32 %v10308, %v10310
    %v10312 = vrot.slane %v10296, %v10311
    %v10314 = vunpack.c.l.s4 1966171168
    %v10315 = vunpack.c.0.s8 %v10314
    %v10316 = vlaneseq
    %v10317 = vshrl.u32 %v10316, 7
    %v10318 = vsub.s32 %v10315, %v10317
    %v10319 = vrot.slane %v10303, %v10318
    %v10321 = vunpack.c.l.s4 1966171168
    %v10322 = vunpack.c.0.s8 %v10321
    %v10323 = vlaneseq
    %v10324 = vshrl.u32 %v10323, 7
    %v10325 = vsub.s32 %v10322, %v10324
    %v10326 = vrot.slane %v10304, %v10325
    %v10328 = vunpack.c.l.s4 1966171168
    %v10329 = vunpack.c.0.s8 %v10328
    %v10330 = vlaneseq
    %v10331 = vshrl.u32 %v10330, 7
    %v10332 = vsub.s32 %v10329, %v10331
    %v10333 = vrot.slane %v10305, %v10332
    %v10334 = vcombine.high %v10312, %v10312
    %v10335 = vcombine.high %v10319, %v10319
    %v10336 = vcombine.high %v10326, %v10326
    %v10337 = vcombine.high %v10333, %v10333
    %v10346 = vmul.f32 %v10135, %v10312
    %v10347 = vmul.f32 %v10137, %v10326
    %v10348 = vmul.f32 %v10139, %v10334
    %v10349 = vmul.f32 %v10141, %v10336
    %v10350 = vmul.f32 %v10143, %v10319
    %v10351 = vmul.f32 %v10145, %v10333
    %v10352 = vmul.f32 %v10147, %v10335
    %v10353 = vmul.f32 %v10149, %v10337
    %v10354 = vrot.slane %v9945, 2
    %v10355 = vrot.slane %v9946, 2
    %v10356 = vrot.slane %v9947, 2
    %v10357 = vrot.slane %v9948, 2
    %v10358 = vrot.slane %v9949, 2
    %v10359 = vrot.slane %v9950, 2
    %v10360 = vrot.slane %v9951, 2
    %v10361 = vrot.slane %v9952, 2
    %v10370 = vadd.f32 %v10354, %v10346
    %v10371 = vadd.f32 %v10355, %v10347
    %v10372 = vadd.f32 %v10356, %v10348
    %v10373 = vadd.f32 %v10357, %v10349
    %v10374 = vadd.f32 %v10358, %v10350
    %v10375 = vadd.f32 %v10359, %v10351
    %v10376 = vadd.f32 %v10360, %v10352
    %v10377 = vadd.f32 %v10361, %v10353
    %v10378 = vtanh.pop %v10370
    %v10379 = vtanh.pop %v10371
    %v10380 = vtanh.pop %v10372
    %v10381 = vtanh.pop %v10373
    %v10382 = vtanh.pop %v10374
    %v10383 = vtanh.pop %v10375
    %v10384 = vtanh.pop %v10376
    %v10385 = vtanh.pop %v10377
    %v10386 = vsub.f32 1.0, %v10273
    %v10387 = vsub.f32 1.0, %v10275
    %v10388 = vsub.f32 1.0, %v10277
    %v10389 = vsub.f32 1.0, %v10279
    %v10390 = vsub.f32 1.0, %v10281
    %v10391 = vsub.f32 1.0, %v10283
    %v10392 = vsub.f32 1.0, %v10285
    %v10393 = vsub.f32 1.0, %v10287
    %v10394 = vmul.f32 %v10386, %v10378
    %v10395 = vmul.f32 %v10387, %v10379
    %v10396 = vmul.f32 %v10388, %v10380
    %v10397 = vmul.f32 %v10389, %v10381
    %v10398 = vmul.f32 %v10390, %v10382
    %v10399 = vmul.f32 %v10391, %v10383
    %v10400 = vmul.f32 %v10392, %v10384
    %v10401 = vmul.f32 %v10393, %v10385
    %v10402 = vmul.f32 %v10273, %v9164
    %v10403 = vmul.f32 %v10275, %v9178
    %v10404 = vmul.f32 %v10277, %v9186
    %v10405 = vmul.f32 %v10279, %v9188
    %v10406 = vmul.f32 %v10281, %v9171
    %v10407 = vmul.f32 %v10283, %v9185
    %v10408 = vmul.f32 %v10285, %v9187
    %v10409 = vmul.f32 %v10287, %v9189
    %v10410 = vadd.f32 %v10394, %v10402
    %v10411 = vadd.f32 %v10395, %v10403
    %v10412 = vadd.f32 %v10396, %v10404
    %v10413 = vadd.f32 %v10397, %v10405
    %v10414 = vadd.f32 %v10398, %v10406
    %v10415 = vadd.f32 %v10399, %v10407
    %v10416 = vadd.f32 %v10400, %v10408
    %v10417 = vadd.f32 %v10401, %v10409
    %v10418 = vmul.f32 %v1951, %v10410
    %v10419 = vmul.f32 %v1951, %v10411
    %v10420 = vmul.f32 %v1951, %v10412
    %v10421 = vmul.f32 %v1951, %v10413
    %v10422 = vmul.f32 %v1951, %v10414
    %v10423 = vmul.f32 %v1951, %v10415
    %v10424 = vmul.f32 %v1951, %v10416
    %v10425 = vmul.f32 %v1951, %v10417
    %v10434 = vcombine.low %v10418, %v10419
    %v10435 = vcombine.low %v10420, %v10421
    %v10436 = vcombine.low %v10422, %v10423
    %v10437 = vcombine.low %v10424, %v10425
    %v10439 = vunpack.c.l.s4 1966171168
    %v10440 = vunpack.c.0.s8 %v10439
    %v10441 = vlaneseq
    %v10442 = vshrl.u32 %v10441, 7
    %v10443 = vsub.s32 %v10440, %v10442
    %v10444 = vrot.slane %v10434, %v10443
    %v10446 = vunpack.c.l.s4 1966171168
    %v10447 = vunpack.c.0.s8 %v10446
    %v10448 = vlaneseq
    %v10449 = vshrl.u32 %v10448, 7
    %v10450 = vsub.s32 %v10447, %v10449
    %v10451 = vrot.slane %v10435, %v10450
    %v10453 = vunpack.c.l.s4 1966171168
    %v10454 = vunpack.c.0.s8 %v10453
    %v10455 = vlaneseq
    %v10456 = vshrl.u32 %v10455, 7
    %v10457 = vsub.s32 %v10454, %v10456
    %v10458 = vrot.slane %v10436, %v10457
    %v10460 = vunpack.c.l.s4 1966171168
    %v10461 = vunpack.c.0.s8 %v10460
    %v10462 = vlaneseq
    %v10463 = vshrl.u32 %v10462, 7
    %v10464 = vsub.s32 %v10461, %v10463
    %v10465 = vrot.slane %v10437, %v10464
    %v10466 = vcombine.low %v10444, %v10451
    %v10467 = vcombine.low %v10458, %v10465
    %v10469 = vunpack.c.l.s4 1966171168
    %v10470 = vunpack.c.0.s8 %v10469
    %v10471 = vlaneseq
    %v10472 = vshrl.u32 %v10471, 7
    %v10473 = vsub.s32 %v10470, %v10472
    %v10474 = vrot.slane %v10466, %v10473
    %v10476 = vunpack.c.l.s4 1966171168
    %v10477 = vunpack.c.0.s8 %v10476
    %v10478 = vlaneseq
    %v10479 = vshrl.u32 %v10478, 7
    %v10480 = vsub.s32 %v10477, %v10479
    %v10481 = vrot.slane %v10467, %v10480
    %v10482 = vcombine.low %v10474, %v10481
    %v10484 = vadd.f32 %v10035, %v10482
    %v10486 = vcombine.high %v9768, %v9768
    %v10488 = vunpack.c.l.s4 1966171168
    %v10489 = vunpack.c.0.s8 %v10488
    %v10490 = vlaneseq
    %v10491 = vshrl.u32 %v10490, 7
    %v10492 = vsub.s32 %v10489, %v10491
    %v10493 = vrot.slane %v9768, %v10492
    %v10495 = vunpack.c.l.s4 1966171168
    %v10496 = vunpack.c.0.s8 %v10495
    %v10497 = vlaneseq
    %v10498 = vshrl.u32 %v10497, 7
    %v10499 = vsub.s32 %v10496, %v10498
    %v10500 = vrot.slane %v10486, %v10499
    %v10501 = vcombine.high %v10493, %v10493
    %v10502 = vcombine.high %v10500, %v10500
    %v10504 = vunpack.c.l.s4 1966171168
    %v10505 = vunpack.c.0.s8 %v10504
    %v10506 = vlaneseq
    %v10507 = vshrl.u32 %v10506, 7
    %v10508 = vsub.s32 %v10505, %v10507
    %v10509 = vrot.slane %v10493, %v10508
    %v10511 = vunpack.c.l.s4 1966171168
    %v10512 = vunpack.c.0.s8 %v10511
    %v10513 = vlaneseq
    %v10514 = vshrl.u32 %v10513, 7
    %v10515 = vsub.s32 %v10512, %v10514
    %v10516 = vrot.slane %v10500, %v10515
    %v10518 = vunpack.c.l.s4 1966171168
    %v10519 = vunpack.c.0.s8 %v10518
    %v10520 = vlaneseq
    %v10521 = vshrl.u32 %v10520, 7
    %v10522 = vsub.s32 %v10519, %v10521
    %v10523 = vrot.slane %v10501, %v10522
    %v10525 = vunpack.c.l.s4 1966171168
    %v10526 = vunpack.c.0.s8 %v10525
    %v10527 = vlaneseq
    %v10528 = vshrl.u32 %v10527, 7
    %v10529 = vsub.s32 %v10526, %v10528
    %v10530 = vrot.slane %v10502, %v10529
    %v10531 = vcombine.high %v10509, %v10509
    %v10532 = vcombine.high %v10516, %v10516
    %v10533 = vcombine.high %v10523, %v10523
    %v10534 = vcombine.high %v10530, %v10530
    %10543 = vst [vmem:[#allocation14 + $0x6] sm:$0x1] %v10509
    %10544 = vst [vmem:[#allocation14 + $0x16] sm:$0x1] %v10523
    %10545 = vst [vmem:[#allocation14 + $0x26] sm:$0x1] %v10531
    %10546 = vst [vmem:[#allocation14 + $0x36] sm:$0x1] %v10533
    %10547 = vst [vmem:[#allocation14 + $0x46] sm:$0x1] %v10516
    %10548 = vst [vmem:[#allocation14 + $0x56] sm:$0x1] %v10530
    %10549 = vst [vmem:[#allocation14 + $0x66] sm:$0x1] %v10532
    %10550 = vst [vmem:[#allocation14 + $0x76] sm:$0x1] %v10534
    %v10552 = vcombine.high %v10484, %v10484
    %v10554 = vunpack.c.l.s4 1966171168
    %v10555 = vunpack.c.0.s8 %v10554
    %v10556 = vlaneseq
    %v10557 = vshrl.u32 %v10556, 7
    %v10558 = vsub.s32 %v10555, %v10557
    %v10559 = vrot.slane %v10484, %v10558
    %v10561 = vunpack.c.l.s4 1966171168
    %v10562 = vunpack.c.0.s8 %v10561
    %v10563 = vlaneseq
    %v10564 = vshrl.u32 %v10563, 7
    %v10565 = vsub.s32 %v10562, %v10564
    %v10566 = vrot.slane %v10552, %v10565
    %v10567 = vcombine.high %v10559, %v10559
    %v10568 = vcombine.high %v10566, %v10566
    %v10570 = vunpack.c.l.s4 1966171168
    %v10571 = vunpack.c.0.s8 %v10570
    %v10572 = vlaneseq
    %v10573 = vshrl.u32 %v10572, 7
    %v10574 = vsub.s32 %v10571, %v10573
    %v10575 = vrot.slane %v10559, %v10574
    %v10577 = vunpack.c.l.s4 1966171168
    %v10578 = vunpack.c.0.s8 %v10577
    %v10579 = vlaneseq
    %v10580 = vshrl.u32 %v10579, 7
    %v10581 = vsub.s32 %v10578, %v10580
    %v10582 = vrot.slane %v10566, %v10581
    %v10584 = vunpack.c.l.s4 1966171168
    %v10585 = vunpack.c.0.s8 %v10584
    %v10586 = vlaneseq
    %v10587 = vshrl.u32 %v10586, 7
    %v10588 = vsub.s32 %v10585, %v10587
    %v10589 = vrot.slane %v10567, %v10588
    %v10591 = vunpack.c.l.s4 1966171168
    %v10592 = vunpack.c.0.s8 %v10591
    %v10593 = vlaneseq
    %v10594 = vshrl.u32 %v10593, 7
    %v10595 = vsub.s32 %v10592, %v10594
    %v10596 = vrot.slane %v10568, %v10595
    %v10597 = vcombine.high %v10575, %v10575
    %v10598 = vcombine.high %v10582, %v10582
    %v10599 = vcombine.high %v10589, %v10589
    %v10600 = vcombine.high %v10596, %v10596
    %10609 = vst [vmem:[#allocation14 + $0xe] sm:$0x1] %v10575
    %10610 = vst [vmem:[#allocation14 + $0x1e] sm:$0x1] %v10589
    %10611 = vst [vmem:[#allocation14 + $0x2e] sm:$0x1] %v10597
    %10612 = vst [vmem:[#allocation14 + $0x3e] sm:$0x1] %v10599
    %10613 = vst [vmem:[#allocation14 + $0x4e] sm:$0x1] %v10582
    %10614 = vst [vmem:[#allocation14 + $0x5e] sm:$0x1] %v10596
    %10615 = vst [vmem:[#allocation14 + $0x6e] sm:$0x1] %v10598
    %10616 = vst [vmem:[#allocation14 + $0x7e] sm:$0x1] %v10600
    %s10617 = scalar_lea.vmem [#allocation8], 7
    %v10618 = vld [vmem:[%s10617] ss:$8 sm:$0xf]
    %v10619 = vld [vmem:[%s10617] ss:$8 sm:$0x30]
    %v10620 = vor.u32 %v10618, %v10619
    %s10621 = scalar_lea.vmem [#allocation8], 55
    %v10622 = vld [vmem:[%s10621] ss:$8 sm:$0xf]
    %v10623 = vld [vmem:[%s10621] ss:$8 sm:$0x30]
    %v10624 = vor.u32 %v10622, %v10623
    %s10625 = scalar_lea.vmem [#allocation8], 103
    %v10626 = vld [vmem:[%s10625] ss:$8 sm:$0xf]
    %v10627 = vld [vmem:[%s10625] ss:$8 sm:$0x30]
    %v10628 = vor.u32 %v10626, %v10627
    %s10629 = scalar_lea.vmem [#allocation8], 151
    %v10630 = vld [vmem:[%s10629] ss:$8 sm:$0xf]
    %v10631 = vld [vmem:[%s10629] ss:$8 sm:$0x30]
    %v10632 = vor.u32 %v10630, %v10631
    %s10633 = scalar_lea.vmem [#allocation8], 199
    %v10634 = vld [vmem:[%s10633] ss:$8 sm:$0xf]
    %v10635 = vld [vmem:[%s10633] ss:$8 sm:$0x30]
    %v10636 = vor.u32 %v10634, %v10635
    %s10637 = scalar_lea.vmem [#allocation8], 247
    %v10638 = vld [vmem:[%s10637] ss:$8 sm:$0xf]
    %v10639 = vld [vmem:[%s10637] ss:$8 sm:$0x30]
    %v10640 = vor.u32 %v10638, %v10639
    %s10641 = scalar_lea.vmem [#allocation8], 295
    %v10642 = vld [vmem:[%s10641] ss:$8 sm:$0xf]
    %v10643 = vld [vmem:[%s10641] ss:$8 sm:$0x30]
    %v10644 = vor.u32 %v10642, %v10643
    %s10645 = scalar_lea.vmem [#allocation8], 343
    %v10646 = vld [vmem:[%s10645] ss:$8 sm:$0xf]
    %v10647 = vld [vmem:[%s10645] ss:$8 sm:$0x30]
    %v10648 = vor.u32 %v10646, %v10647
    %10649 = vmatprep.subr.bf16.mxu0 %v349
    %10650 = vmatpush1.bf16.msra.mxu0 %v348
    %10651 = vmatprep.subr.bf16.mxu0 %v352
    %10652 = vmatpush1.bf16.msra.mxu0 %v351
    %10653 = vmatprep.subr.bf16.mxu0 %v355
    %10654 = vmatpush1.bf16.msra.mxu0 %v354
    %10655 = vmatprep.subr.bf16.mxu0 %v358
    %10656 = vmatpush1.bf16.msra.mxu0 %v357
    %10657 = vmatprep.subr.bf16.mxu0 %v361
    %10658 = vmatpush1.bf16.msra.mxu0 %v360
    %10659 = vmatprep.subr.bf16.mxu0 %v364
    %10660 = vmatpush1.bf16.msra.mxu0 %v363
    %10661 = vmatprep.subr.bf16.mxu0 %v367
    %10662 = vmatpush1.bf16.msra.mxu0 %v366
    %10663 = vmatprep.subr.bf16.mxu0 %v370
    %10664 = vmatpush1.bf16.msra.mxu0 %v369
    %10665 = vmatprep.subr.bf16.mxu0 0
    %10666 = vmatpush1.bf16.msra.mxu0 0
    %10667 = vmatprep.subr.bf16.mxu0 0
    %10668 = vmatpush1.bf16.msra.mxu0 0
    %10669 = vmatprep.subr.bf16.mxu0 0
    %10670 = vmatpush1.bf16.msra.mxu0 0
    %10671 = vmatprep.subr.bf16.mxu0 0
    %10672 = vmatpush1.bf16.msra.mxu0 0
    %10673 = vmatprep.subr.bf16.mxu0 0
    %10674 = vmatpush1.bf16.msra.mxu0 0
    %10675 = vmatprep.subr.bf16.mxu0 0
    %10676 = vmatpush1.bf16.msra.mxu0 0
    %10677 = vmatprep.subr.bf16.mxu0 0
    %10678 = vmatpush1.bf16.msra.mxu0 0
    %10679 = vmatprep.subr.bf16.mxu0 0
    %10680 = vmatpush1.bf16.msra.mxu0 0
    %10681 = vmatprep.mubr.bf16.mxu0 0
    %10682 = vmatmul.mubr.bf16.gmra.mrb[0].mxu0 %v9769
    %v10683 = vpop.f32.mrb[0].mxu0
    %v10684 = vadd.f32 %v205, %v10683
    %v10685 = vpop.f32.mrb[0].mxu0
    %v10686 = vadd.f32 %v209, %v10685
    %v10687 = vpop.f32.mrb[0].mxu0
    %v10688 = vpop.f32.mrb[0].mxu0
    %10689 = vdwg.mxu0
    %10690 = vmatprep.subr.bf16.mxu0 0
    %10691 = vmatpush1.bf16.msra.mxu0 %v350
    %10692 = vmatprep.subr.bf16.mxu0 0
    %10693 = vmatpush1.bf16.msra.mxu0 %v353
    %10694 = vmatprep.subr.bf16.mxu0 0
    %10695 = vmatpush1.bf16.msra.mxu0 %v356
    %10696 = vmatprep.subr.bf16.mxu0 0
    %10697 = vmatpush1.bf16.msra.mxu0 %v359
    %10698 = vmatprep.subr.bf16.mxu0 0
    %10699 = vmatpush1.bf16.msra.mxu0 %v362
    %10700 = vmatprep.subr.bf16.mxu0 0
    %10701 = vmatpush1.bf16.msra.mxu0 %v365
    %10702 = vmatprep.subr.bf16.mxu0 0
    %10703 = vmatpush1.bf16.msra.mxu0 %v368
    %10704 = vmatprep.subr.bf16.mxu0 0
    %10705 = vmatpush1.bf16.msra.mxu0 %v371
    %10706 = vmatprep.subr.bf16.mxu0 0
    %10707 = vmatpush1.bf16.msra.mxu0 0
    %10708 = vmatprep.subr.bf16.mxu0 0
    %10709 = vmatpush1.bf16.msra.mxu0 0
    %10710 = vmatprep.subr.bf16.mxu0 0
    %10711 = vmatpush1.bf16.msra.mxu0 0
    %10712 = vmatprep.subr.bf16.mxu0 0
    %10713 = vmatpush1.bf16.msra.mxu0 0
    %10714 = vmatprep.subr.bf16.mxu0 0
    %10715 = vmatpush1.bf16.msra.mxu0 0
    %10716 = vmatprep.subr.bf16.mxu0 0
    %10717 = vmatpush1.bf16.msra.mxu0 0
    %10718 = vmatprep.subr.bf16.mxu0 0
    %10719 = vmatpush1.bf16.msra.mxu0 0
    %10720 = vmatprep.subr.bf16.mxu0 0
    %10721 = vmatpush1.bf16.msra.mxu0 0
    %10722 = vmatprep.mubr.bf16.mxu0 0
    %10723 = vmatmul.mubr.bf16.gmra.mrb[0].mxu0 %v9769
    %v10724 = vpop.f32.mrb[0].mxu0
    %v10725 = vadd.f32 %v213, %v10724
    %v10726 = vpop.f32.mrb[0].mxu0
    %v10727 = vpop.f32.mrb[0].mxu0
    %v10728 = vpop.f32.mrb[0].mxu0
    %10729 = vdwg.mxu0
    %v10730 = vmul.f32 %v477, %v9768
    %v10732 = vcombine.high %v10684, %v10684
    %v10734 = vunpack.c.l.s4 1966171168
    %v10735 = vunpack.c.0.s8 %v10734
    %v10736 = vlaneseq
    %v10737 = vshrl.u32 %v10736, 7
    %v10738 = vsub.s32 %v10735, %v10737
    %v10739 = vrot.slane %v10684, %v10738
    %v10741 = vunpack.c.l.s4 1966171168
    %v10742 = vunpack.c.0.s8 %v10741
    %v10743 = vlaneseq
    %v10744 = vshrl.u32 %v10743, 7
    %v10745 = vsub.s32 %v10742, %v10744
    %v10746 = vrot.slane %v10732, %v10745
    %v10747 = vcombine.high %v10739, %v10739
    %v10748 = vcombine.high %v10746, %v10746
    %v10750 = vunpack.c.l.s4 1966171168
    %v10751 = vunpack.c.0.s8 %v10750
    %v10752 = vlaneseq
    %v10753 = vshrl.u32 %v10752, 7
    %v10754 = vsub.s32 %v10751, %v10753
    %v10755 = vrot.slane %v10739, %v10754
    %v10757 = vunpack.c.l.s4 1966171168
    %v10758 = vunpack.c.0.s8 %v10757
    %v10759 = vlaneseq
    %v10760 = vshrl.u32 %v10759, 7
    %v10761 = vsub.s32 %v10758, %v10760
    %v10762 = vrot.slane %v10746, %v10761
    %v10764 = vunpack.c.l.s4 1966171168
    %v10765 = vunpack.c.0.s8 %v10764
    %v10766 = vlaneseq
    %v10767 = vshrl.u32 %v10766, 7
    %v10768 = vsub.s32 %v10765, %v10767
    %v10769 = vrot.slane %v10747, %v10768
    %v10771 = vunpack.c.l.s4 1966171168
    %v10772 = vunpack.c.0.s8 %v10771
    %v10773 = vlaneseq
    %v10774 = vshrl.u32 %v10773, 7
    %v10775 = vsub.s32 %v10772, %v10774
    %v10776 = vrot.slane %v10748, %v10775
    %v10777 = vcombine.high %v10755, %v10755
    %v10778 = vcombine.high %v10762, %v10762
    %v10779 = vcombine.high %v10769, %v10769
    %v10780 = vcombine.high %v10776, %v10776
    %v10789 = vadd.f32 %v10620, %v10755
    %v10790 = vadd.f32 %v10624, %v10769
    %v10791 = vadd.f32 %v10628, %v10777
    %v10792 = vadd.f32 %v10632, %v10779
    %v10793 = vadd.f32 %v10636, %v10762
    %v10794 = vadd.f32 %v10640, %v10776
    %v10795 = vadd.f32 %v10644, %v10778
    %v10796 = vadd.f32 %v10648, %v10780
    %v10797 = vxor.u32 %v10789, 2147483648
    %v10798 = vxor.u32 %v10790, 2147483648
    %v10799 = vxor.u32 %v10791, 2147483648
    %v10800 = vxor.u32 %v10792, 2147483648
    %v10801 = vxor.u32 %v10793, 2147483648
    %v10802 = vxor.u32 %v10794, 2147483648
    %v10803 = vxor.u32 %v10795, 2147483648
    %v10804 = vxor.u32 %v10796, 2147483648
    %v10805 = vmul.f32 %v10797, 1.442695
    %v10806 = vpow.pop %v10805
    %v10807 = vmul.f32 %v10798, 1.442695
    %v10808 = vpow.pop %v10807
    %v10809 = vmul.f32 %v10799, 1.442695
    %v10810 = vpow.pop %v10809
    %v10811 = vmul.f32 %v10800, 1.442695
    %v10812 = vpow.pop %v10811
    %v10813 = vmul.f32 %v10801, 1.442695
    %v10814 = vpow.pop %v10813
    %v10815 = vmul.f32 %v10802, 1.442695
    %v10816 = vpow.pop %v10815
    %v10817 = vmul.f32 %v10803, 1.442695
    %v10818 = vpow.pop %v10817
    %v10819 = vmul.f32 %v10804, 1.442695
    %v10820 = vpow.pop %v10819
    %v10821 = vadd.f32 %v10806, 1.0
    %v10822 = vadd.f32 %v10808, 1.0
    %v10823 = vadd.f32 %v10810, 1.0
    %v10824 = vadd.f32 %v10812, 1.0
    %v10825 = vadd.f32 %v10814, 1.0
    %v10826 = vadd.f32 %v10816, 1.0
    %v10827 = vadd.f32 %v10818, 1.0
    %v10828 = vadd.f32 %v10820, 1.0
    %v10829 = vrcp.pop %v10821
    %v10830 = vmul.f32 1.0, %v10829
    %v10831 = vrcp.pop %v10822
    %v10832 = vmul.f32 1.0, %v10831
    %v10833 = vrcp.pop %v10823
    %v10834 = vmul.f32 1.0, %v10833
    %v10835 = vrcp.pop %v10824
    %v10836 = vmul.f32 1.0, %v10835
    %v10837 = vrcp.pop %v10825
    %v10838 = vmul.f32 1.0, %v10837
    %v10839 = vrcp.pop %v10826
    %v10840 = vmul.f32 1.0, %v10839
    %v10841 = vrcp.pop %v10827
    %v10842 = vmul.f32 1.0, %v10841
    %v10843 = vrcp.pop %v10828
    %v10844 = vmul.f32 1.0, %v10843
    %v10853 = vrot.slane %v10620, 1
    %v10854 = vrot.slane %v10624, 1
    %v10855 = vrot.slane %v10628, 1
    %v10856 = vrot.slane %v10632, 1
    %v10857 = vrot.slane %v10636, 1
    %v10858 = vrot.slane %v10640, 1
    %v10859 = vrot.slane %v10644, 1
    %v10860 = vrot.slane %v10648, 1
    %v10870 = vcombine.high %v10686, %v10686
    %v10872 = vunpack.c.l.s4 1966171168
    %v10873 = vunpack.c.0.s8 %v10872
    %v10874 = vlaneseq
    %v10875 = vshrl.u32 %v10874, 7
    %v10876 = vsub.s32 %v10873, %v10875
    %v10877 = vrot.slane %v10686, %v10876
    %v10879 = vunpack.c.l.s4 1966171168
    %v10880 = vunpack.c.0.s8 %v10879
    %v10881 = vlaneseq
    %v10882 = vshrl.u32 %v10881, 7
    %v10883 = vsub.s32 %v10880, %v10882
    %v10884 = vrot.slane %v10870, %v10883
    %v10885 = vcombine.high %v10877, %v10877
    %v10886 = vcombine.high %v10884, %v10884
    %v10888 = vunpack.c.l.s4 1966171168
    %v10889 = vunpack.c.0.s8 %v10888
    %v10890 = vlaneseq
    %v10891 = vshrl.u32 %v10890, 7
    %v10892 = vsub.s32 %v10889, %v10891
    %v10893 = vrot.slane %v10877, %v10892
    %v10895 = vunpack.c.l.s4 1966171168
    %v10896 = vunpack.c.0.s8 %v10895
    %v10897 = vlaneseq
    %v10898 = vshrl.u32 %v10897, 7
    %v10899 = vsub.s32 %v10896, %v10898
    %v10900 = vrot.slane %v10884, %v10899
    %v10902 = vunpack.c.l.s4 1966171168
    %v10903 = vunpack.c.0.s8 %v10902
    %v10904 = vlaneseq
    %v10905 = vshrl.u32 %v10904, 7
    %v10906 = vsub.s32 %v10903, %v10905
    %v10907 = vrot.slane %v10885, %v10906
    %v10909 = vunpack.c.l.s4 1966171168
    %v10910 = vunpack.c.0.s8 %v10909
    %v10911 = vlaneseq
    %v10912 = vshrl.u32 %v10911, 7
    %v10913 = vsub.s32 %v10910, %v10912
    %v10914 = vrot.slane %v10886, %v10913
    %v10915 = vcombine.high %v10893, %v10893
    %v10916 = vcombine.high %v10900, %v10900
    %v10917 = vcombine.high %v10907, %v10907
    %v10918 = vcombine.high %v10914, %v10914
    %v10927 = vadd.f32 %v10853, %v10893
    %v10928 = vadd.f32 %v10854, %v10907
    %v10929 = vadd.f32 %v10855, %v10915
    %v10930 = vadd.f32 %v10856, %v10917
    %v10931 = vadd.f32 %v10857, %v10900
    %v10932 = vadd.f32 %v10858, %v10914
    %v10933 = vadd.f32 %v10859, %v10916
    %v10934 = vadd.f32 %v10860, %v10918
    %v10935 = vxor.u32 %v10927, 2147483648
    %v10936 = vxor.u32 %v10928, 2147483648
    %v10937 = vxor.u32 %v10929, 2147483648
    %v10938 = vxor.u32 %v10930, 2147483648
    %v10939 = vxor.u32 %v10931, 2147483648
    %v10940 = vxor.u32 %v10932, 2147483648
    %v10941 = vxor.u32 %v10933, 2147483648
    %v10942 = vxor.u32 %v10934, 2147483648
    %v10943 = vmul.f32 %v10935, 1.442695
    %v10944 = vpow.pop %v10943
    %v10945 = vmul.f32 %v10936, 1.442695
    %v10946 = vpow.pop %v10945
    %v10947 = vmul.f32 %v10937, 1.442695
    %v10948 = vpow.pop %v10947
    %v10949 = vmul.f32 %v10938, 1.442695
    %v10950 = vpow.pop %v10949
    %v10951 = vmul.f32 %v10939, 1.442695
    %v10952 = vpow.pop %v10951
    %v10953 = vmul.f32 %v10940, 1.442695
    %v10954 = vpow.pop %v10953
    %v10955 = vmul.f32 %v10941, 1.442695
    %v10956 = vpow.pop %v10955
    %v10957 = vmul.f32 %v10942, 1.442695
    %v10958 = vpow.pop %v10957
    %v10959 = vadd.f32 %v10944, 1.0
    %v10960 = vadd.f32 %v10946, 1.0
    %v10961 = vadd.f32 %v10948, 1.0
    %v10962 = vadd.f32 %v10950, 1.0
    %v10963 = vadd.f32 %v10952, 1.0
    %v10964 = vadd.f32 %v10954, 1.0
    %v10965 = vadd.f32 %v10956, 1.0
    %v10966 = vadd.f32 %v10958, 1.0
    %v10967 = vrcp.pop %v10959
    %v10968 = vmul.f32 1.0, %v10967
    %v10969 = vrcp.pop %v10960
    %v10970 = vmul.f32 1.0, %v10969
    %v10971 = vrcp.pop %v10961
    %v10972 = vmul.f32 1.0, %v10971
    %v10973 = vrcp.pop %v10962
    %v10974 = vmul.f32 1.0, %v10973
    %v10975 = vrcp.pop %v10963
    %v10976 = vmul.f32 1.0, %v10975
    %v10977 = vrcp.pop %v10964
    %v10978 = vmul.f32 1.0, %v10977
    %v10979 = vrcp.pop %v10965
    %v10980 = vmul.f32 1.0, %v10979
    %v10981 = vrcp.pop %v10966
    %v10982 = vmul.f32 1.0, %v10981
    %v10984 = vcombine.high %v10725, %v10725
    %v10986 = vunpack.c.l.s4 1966171168
    %v10987 = vunpack.c.0.s8 %v10986
    %v10988 = vlaneseq
    %v10989 = vshrl.u32 %v10988, 7
    %v10990 = vsub.s32 %v10987, %v10989
    %v10991 = vrot.slane %v10725, %v10990
    %v10993 = vunpack.c.l.s4 1966171168
    %v10994 = vunpack.c.0.s8 %v10993
    %v10995 = vlaneseq
    %v10996 = vshrl.u32 %v10995, 7
    %v10997 = vsub.s32 %v10994, %v10996
    %v10998 = vrot.slane %v10984, %v10997
    %v10999 = vcombine.high %v10991, %v10991
    %v11000 = vcombine.high %v10998, %v10998
    %v11002 = vunpack.c.l.s4 1966171168
    %v11003 = vunpack.c.0.s8 %v11002
    %v11004 = vlaneseq
    %v11005 = vshrl.u32 %v11004, 7
    %v11006 = vsub.s32 %v11003, %v11005
    %v11007 = vrot.slane %v10991, %v11006
    %v11009 = vunpack.c.l.s4 1966171168
    %v11010 = vunpack.c.0.s8 %v11009
    %v11011 = vlaneseq
    %v11012 = vshrl.u32 %v11011, 7
    %v11013 = vsub.s32 %v11010, %v11012
    %v11014 = vrot.slane %v10998, %v11013
    %v11016 = vunpack.c.l.s4 1966171168
    %v11017 = vunpack.c.0.s8 %v11016
    %v11018 = vlaneseq
    %v11019 = vshrl.u32 %v11018, 7
    %v11020 = vsub.s32 %v11017, %v11019
    %v11021 = vrot.slane %v10999, %v11020
    %v11023 = vunpack.c.l.s4 1966171168
    %v11024 = vunpack.c.0.s8 %v11023
    %v11025 = vlaneseq
    %v11026 = vshrl.u32 %v11025, 7
    %v11027 = vsub.s32 %v11024, %v11026
    %v11028 = vrot.slane %v11000, %v11027
    %v11029 = vcombine.high %v11007, %v11007
    %v11030 = vcombine.high %v11014, %v11014
    %v11031 = vcombine.high %v11021, %v11021
    %v11032 = vcombine.high %v11028, %v11028
    %v11041 = vmul.f32 %v10830, %v11007
    %v11042 = vmul.f32 %v10832, %v11021
    %v11043 = vmul.f32 %v10834, %v11029
    %v11044 = vmul.f32 %v10836, %v11031
    %v11045 = vmul.f32 %v10838, %v11014
    %v11046 = vmul.f32 %v10840, %v11028
    %v11047 = vmul.f32 %v10842, %v11030
    %v11048 = vmul.f32 %v10844, %v11032
    %v11049 = vrot.slane %v10620, 2
    %v11050 = vrot.slane %v10624, 2
    %v11051 = vrot.slane %v10628, 2
    %v11052 = vrot.slane %v10632, 2
    %v11053 = vrot.slane %v10636, 2
    %v11054 = vrot.slane %v10640, 2
    %v11055 = vrot.slane %v10644, 2
    %v11056 = vrot.slane %v10648, 2
    %v11065 = vadd.f32 %v11049, %v11041
    %v11066 = vadd.f32 %v11050, %v11042
    %v11067 = vadd.f32 %v11051, %v11043
    %v11068 = vadd.f32 %v11052, %v11044
    %v11069 = vadd.f32 %v11053, %v11045
    %v11070 = vadd.f32 %v11054, %v11046
    %v11071 = vadd.f32 %v11055, %v11047
    %v11072 = vadd.f32 %v11056, %v11048
    %v11073 = vtanh.pop %v11065
    %v11074 = vtanh.pop %v11066
    %v11075 = vtanh.pop %v11067
    %v11076 = vtanh.pop %v11068
    %v11077 = vtanh.pop %v11069
    %v11078 = vtanh.pop %v11070
    %v11079 = vtanh.pop %v11071
    %v11080 = vtanh.pop %v11072
    %v11081 = vsub.f32 1.0, %v10968
    %v11082 = vsub.f32 1.0, %v10970
    %v11083 = vsub.f32 1.0, %v10972
    %v11084 = vsub.f32 1.0, %v10974
    %v11085 = vsub.f32 1.0, %v10976
    %v11086 = vsub.f32 1.0, %v10978
    %v11087 = vsub.f32 1.0, %v10980
    %v11088 = vsub.f32 1.0, %v10982
    %v11089 = vmul.f32 %v11081, %v11073
    %v11090 = vmul.f32 %v11082, %v11074
    %v11091 = vmul.f32 %v11083, %v11075
    %v11092 = vmul.f32 %v11084, %v11076
    %v11093 = vmul.f32 %v11085, %v11077
    %v11094 = vmul.f32 %v11086, %v11078
    %v11095 = vmul.f32 %v11087, %v11079
    %v11096 = vmul.f32 %v11088, %v11080
    %v11097 = vmul.f32 %v10968, %v10509
    %v11098 = vmul.f32 %v10970, %v10523
    %v11099 = vmul.f32 %v10972, %v10531
    %v11100 = vmul.f32 %v10974, %v10533
    %v11101 = vmul.f32 %v10976, %v10516
    %v11102 = vmul.f32 %v10978, %v10530
    %v11103 = vmul.f32 %v10980, %v10532
    %v11104 = vmul.f32 %v10982, %v10534
    %v11105 = vadd.f32 %v11089, %v11097
    %v11106 = vadd.f32 %v11090, %v11098
    %v11107 = vadd.f32 %v11091, %v11099
    %v11108 = vadd.f32 %v11092, %v11100
    %v11109 = vadd.f32 %v11093, %v11101
    %v11110 = vadd.f32 %v11094, %v11102
    %v11111 = vadd.f32 %v11095, %v11103
    %v11112 = vadd.f32 %v11096, %v11104
    %v11113 = vmul.f32 %v919, %v11105
    %v11114 = vmul.f32 %v919, %v11106
    %v11115 = vmul.f32 %v919, %v11107
    %v11116 = vmul.f32 %v919, %v11108
    %v11117 = vmul.f32 %v919, %v11109
    %v11118 = vmul.f32 %v919, %v11110
    %v11119 = vmul.f32 %v919, %v11111
    %v11120 = vmul.f32 %v919, %v11112
    %v11129 = vcombine.low %v11113, %v11114
    %v11130 = vcombine.low %v11115, %v11116
    %v11131 = vcombine.low %v11117, %v11118
    %v11132 = vcombine.low %v11119, %v11120
    %v11134 = vunpack.c.l.s4 1966171168
    %v11135 = vunpack.c.0.s8 %v11134
    %v11136 = vlaneseq
    %v11137 = vshrl.u32 %v11136, 7
    %v11138 = vsub.s32 %v11135, %v11137
    %v11139 = vrot.slane %v11129, %v11138
    %v11141 = vunpack.c.l.s4 1966171168
    %v11142 = vunpack.c.0.s8 %v11141
    %v11143 = vlaneseq
    %v11144 = vshrl.u32 %v11143, 7
    %v11145 = vsub.s32 %v11142, %v11144
    %v11146 = vrot.slane %v11130, %v11145
    %v11148 = vunpack.c.l.s4 1966171168
    %v11149 = vunpack.c.0.s8 %v11148
    %v11150 = vlaneseq
    %v11151 = vshrl.u32 %v11150, 7
    %v11152 = vsub.s32 %v11149, %v11151
    %v11153 = vrot.slane %v11131, %v11152
    %v11155 = vunpack.c.l.s4 1966171168
    %v11156 = vunpack.c.0.s8 %v11155
    %v11157 = vlaneseq
    %v11158 = vshrl.u32 %v11157, 7
    %v11159 = vsub.s32 %v11156, %v11158
    %v11160 = vrot.slane %v11132, %v11159
    %v11161 = vcombine.low %v11139, %v11146
    %v11162 = vcombine.low %v11153, %v11160
    %v11164 = vunpack.c.l.s4 1966171168
    %v11165 = vunpack.c.0.s8 %v11164
    %v11166 = vlaneseq
    %v11167 = vshrl.u32 %v11166, 7
    %v11168 = vsub.s32 %v11165, %v11167
    %v11169 = vrot.slane %v11161, %v11168
    %v11171 = vunpack.c.l.s4 1966171168
    %v11172 = vunpack.c.0.s8 %v11171
    %v11173 = vlaneseq
    %v11174 = vshrl.u32 %v11173, 7
    %v11175 = vsub.s32 %v11172, %v11174
    %v11176 = vrot.slane %v11162, %v11175
    %v11177 = vcombine.low %v11169, %v11176
    %v11179 = vadd.f32 %v10730, %v11177
    %v11180 = vpack.c.bf16 %v11179, %v11179
    %11181 = vmatprep.subr.bf16.mxu0 %v1069
    %11182 = vmatpush1.bf16.msra.mxu0 %v1068
    %11183 = vmatprep.subr.bf16.mxu0 %v1072
    %11184 = vmatpush1.bf16.msra.mxu0 %v1071
    %11185 = vmatprep.subr.bf16.mxu0 %v1075
    %11186 = vmatpush1.bf16.msra.mxu0 %v1074
    %11187 = vmatprep.subr.bf16.mxu0 %v1078
    %11188 = vmatpush1.bf16.msra.mxu0 %v1077
    %11189 = vmatprep.subr.bf16.mxu0 %v1081
    %11190 = vmatpush1.bf16.msra.mxu0 %v1080
    %11191 = vmatprep.subr.bf16.mxu0 %v1084
    %11192 = vmatpush1.bf16.msra.mxu0 %v1083
    %11193 = vmatprep.subr.bf16.mxu0 %v1087
    %11194 = vmatpush1.bf16.msra.mxu0 %v1086
    %11195 = vmatprep.subr.bf16.mxu0 %v1090
    %11196 = vmatpush1.bf16.msra.mxu0 %v1089
    %11197 = vmatprep.subr.bf16.mxu0 0
    %11198 = vmatpush1.bf16.msra.mxu0 0
    %11199 = vmatprep.subr.bf16.mxu0 0
    %11200 = vmatpush1.bf16.msra.mxu0 0
    %11201 = vmatprep.subr.bf16.mxu0 0
    %11202 = vmatpush1.bf16.msra.mxu0 0
    %11203 = vmatprep.subr.bf16.mxu0 0
    %11204 = vmatpush1.bf16.msra.mxu0 0
    %11205 = vmatprep.subr.bf16.mxu0 0
    %11206 = vmatpush1.bf16.msra.mxu0 0
    %11207 = vmatprep.subr.bf16.mxu0 0
    %11208 = vmatpush1.bf16.msra.mxu0 0
    %11209 = vmatprep.subr.bf16.mxu0 0
    %11210 = vmatpush1.bf16.msra.mxu0 0
    %11211 = vmatprep.subr.bf16.mxu0 0
    %11212 = vmatpush1.bf16.msra.mxu0 0
    %11213 = vmatprep.mubr.bf16.mxu0 0
    %11214 = vmatmul.mubr.bf16.gmra.mrb[0].mxu0 %v11180
    %v11215 = vpop.f32.mrb[0].mxu0
    %v11216 = vadd.f32 0.0, %v11215
    %v11217 = vpop.f32.mrb[0].mxu0
    %v11218 = vadd.f32 0.0, %v11217
    %v11219 = vpop.f32.mrb[0].mxu0
    %v11220 = vpop.f32.mrb[0].mxu0
    %11221 = vdwg.mxu0
    %11222 = vmatprep.subr.bf16.mxu0 0
    %11223 = vmatpush1.bf16.msra.mxu0 %v1070
    %11224 = vmatprep.subr.bf16.mxu0 0
    %11225 = vmatpush1.bf16.msra.mxu0 %v1073
    %11226 = vmatprep.subr.bf16.mxu0 0
    %11227 = vmatpush1.bf16.msra.mxu0 %v1076
    %11228 = vmatprep.subr.bf16.mxu0 0
    %11229 = vmatpush1.bf16.msra.mxu0 %v1079
    %11230 = vmatprep.subr.bf16.mxu0 0
    %11231 = vmatpush1.bf16.msra.mxu0 %v1082
    %11232 = vmatprep.subr.bf16.mxu0 0
    %11233 = vmatpush1.bf16.msra.mxu0 %v1085
    %11234 = vmatprep.subr.bf16.mxu0 0
    %11235 = vmatpush1.bf16.msra.mxu0 %v1088
    %11236 = vmatprep.subr.bf16.mxu0 0
    %11237 = vmatpush1.bf16.msra.mxu0 %v1091
    %11238 = vmatprep.subr.bf16.mxu0 0
    %11239 = vmatpush1.bf16.msra.mxu0 0
    %11240 = vmatprep.subr.bf16.mxu0 0
    %11241 = vmatpush1.bf16.msra.mxu0 0
    %11242 = vmatprep.subr.bf16.mxu0 0
    %11243 = vmatpush1.bf16.msra.mxu0 0
    %11244 = vmatprep.subr.bf16.mxu0 0
    %11245 = vmatpush1.bf16.msra.mxu0 0
    %11246 = vmatprep.subr.bf16.mxu0 0
    %11247 = vmatpush1.bf16.msra.mxu0 0
    %11248 = vmatprep.subr.bf16.mxu0 0
    %11249 = vmatpush1.bf16.msra.mxu0 0
    %11250 = vmatprep.subr.bf16.mxu0 0
    %11251 = vmatpush1.bf16.msra.mxu0 0
    %11252 = vmatprep.subr.bf16.mxu0 0
    %11253 = vmatpush1.bf16.msra.mxu0 0
    %11254 = vmatprep.mubr.bf16.mxu0 0
    %11255 = vmatmul.mubr.bf16.gmra.mrb[0].mxu0 %v11180
    %v11256 = vpop.f32.mrb[0].mxu0
    %v11257 = vadd.f32 0.0, %v11256
    %v11258 = vpop.f32.mrb[0].mxu0
    %v11259 = vpop.f32.mrb[0].mxu0
    %v11260 = vpop.f32.mrb[0].mxu0
    %11261 = vdwg.mxu0
    %v11262 = vrot.slane %v10620, 3
    %v11263 = vrot.slane %v10624, 3
    %v11264 = vrot.slane %v10628, 3
    %v11265 = vrot.slane %v10632, 3
    %v11266 = vrot.slane %v10636, 3
    %v11267 = vrot.slane %v10640, 3
    %v11268 = vrot.slane %v10644, 3
    %v11269 = vrot.slane %v10648, 3
    %v11281 = vcombine.low %v11216, %v11218
    %v11282 = vcombine.high %v11216, %v11218
    %v11283 = vcombine.high %v11257, %v11257
    %v11285 = vunpack.c.l.s4 1966171168
    %v11286 = vunpack.c.0.s8 %v11285
    %v11287 = vlaneseq
    %v11288 = vshrl.u32 %v11287, 7
    %v11289 = vsub.s32 %v11286, %v11288
    %v11290 = vrot.slane %v11281, %v11289
    %v11292 = vunpack.c.l.s4 1966171168
    %v11293 = vunpack.c.0.s8 %v11292
    %v11294 = vlaneseq
    %v11295 = vshrl.u32 %v11294, 7
    %v11296 = vsub.s32 %v11293, %v11295
    %v11297 = vrot.slane %v11282, %v11296
    %v11299 = vunpack.c.l.s4 1966171168
    %v11300 = vunpack.c.0.s8 %v11299
    %v11301 = vlaneseq
    %v11302 = vshrl.u32 %v11301, 7
    %v11303 = vsub.s32 %v11300, %v11302
    %v11304 = vrot.slane %v11257, %v11303
    %v11306 = vunpack.c.l.s4 1966171168
    %v11307 = vunpack.c.0.s8 %v11306
    %v11308 = vlaneseq
    %v11309 = vshrl.u32 %v11308, 7
    %v11310 = vsub.s32 %v11307, %v11309
    %v11311 = vrot.slane %v11283, %v11310
    %v11312 = vcombine.low %v11290, %v11304
    %v11313 = vcombine.high %v11290, %v11304
    %v11314 = vcombine.low %v11297, %v11311
    %v11315 = vcombine.high %v11297, %v11311
    %v11317 = vunpack.c.l.s4 1966171168
    %v11318 = vunpack.c.0.s8 %v11317
    %v11319 = vlaneseq
    %v11320 = vshrl.u32 %v11319, 7
    %v11321 = vsub.s32 %v11318, %v11320
    %v11322 = vrot.slane %v11312, %v11321
    %v11324 = vunpack.c.l.s4 1966171168
    %v11325 = vunpack.c.0.s8 %v11324
    %v11326 = vlaneseq
    %v11327 = vshrl.u32 %v11326, 7
    %v11328 = vsub.s32 %v11325, %v11327
    %v11329 = vrot.slane %v11314, %v11328
    %v11331 = vunpack.c.l.s4 1966171168
    %v11332 = vunpack.c.0.s8 %v11331
    %v11333 = vlaneseq
    %v11334 = vshrl.u32 %v11333, 7
    %v11335 = vsub.s32 %v11332, %v11334
    %v11336 = vrot.slane %v11313, %v11335
    %v11338 = vunpack.c.l.s4 1966171168
    %v11339 = vunpack.c.0.s8 %v11338
    %v11340 = vlaneseq
    %v11341 = vshrl.u32 %v11340, 7
    %v11342 = vsub.s32 %v11339, %v11341
    %v11343 = vrot.slane %v11315, %v11342
    %v11344 = vcombine.high %v11322, %v11322
    %v11345 = vcombine.high %v11329, %v11329
    %v11346 = vcombine.high %v11336, %v11336
    %v11347 = vcombine.high %v11343, %v11343
    %v11356 = vadd.f32 %v11262, %v11322
    %v11357 = vadd.f32 %v11263, %v11336
    %v11358 = vadd.f32 %v11264, %v11344
    %v11359 = vadd.f32 %v11265, %v11346
    %v11360 = vadd.f32 %v11266, %v11329
    %v11361 = vadd.f32 %v11267, %v11343
    %v11362 = vadd.f32 %v11268, %v11345
    %v11363 = vadd.f32 %v11269, %v11347
    %v11364 = vpack.c.bf16 %v10484, %v10484
    %11365 = vmatprep.subr.bf16.mxu0 %v1381
    %11366 = vmatpush1.bf16.msra.mxu0 %v1380
    %11367 = vmatprep.subr.bf16.mxu0 %v1384
    %11368 = vmatpush1.bf16.msra.mxu0 %v1383
    %11369 = vmatprep.subr.bf16.mxu0 %v1387
    %11370 = vmatpush1.bf16.msra.mxu0 %v1386
    %11371 = vmatprep.subr.bf16.mxu0 %v1390
    %11372 = vmatpush1.bf16.msra.mxu0 %v1389
    %11373 = vmatprep.subr.bf16.mxu0 %v1393
    %11374 = vmatpush1.bf16.msra.mxu0 %v1392
    %11375 = vmatprep.subr.bf16.mxu0 %v1396
    %11376 = vmatpush1.bf16.msra.mxu0 %v1395
    %11377 = vmatprep.subr.bf16.mxu0 %v1399
    %11378 = vmatpush1.bf16.msra.mxu0 %v1398
    %11379 = vmatprep.subr.bf16.mxu0 %v1402
    %11380 = vmatpush1.bf16.msra.mxu0 %v1401
    %11381 = vmatprep.subr.bf16.mxu0 0
    %11382 = vmatpush1.bf16.msra.mxu0 0
    %11383 = vmatprep.subr.bf16.mxu0 0
    %11384 = vmatpush1.bf16.msra.mxu0 0
    %11385 = vmatprep.subr.bf16.mxu0 0
    %11386 = vmatpush1.bf16.msra.mxu0 0
    %11387 = vmatprep.subr.bf16.mxu0 0
    %11388 = vmatpush1.bf16.msra.mxu0 0
    %11389 = vmatprep.subr.bf16.mxu0 0
    %11390 = vmatpush1.bf16.msra.mxu0 0
    %11391 = vmatprep.subr.bf16.mxu0 0
    %11392 = vmatpush1.bf16.msra.mxu0 0
    %11393 = vmatprep.subr.bf16.mxu0 0
    %11394 = vmatpush1.bf16.msra.mxu0 0
    %11395 = vmatprep.subr.bf16.mxu0 0
    %11396 = vmatpush1.bf16.msra.mxu0 0
    %11397 = vmatprep.mubr.bf16.mxu0 0
    %11398 = vmatmul.mubr.bf16.gmra.mrb[0].mxu0 %v11364
    %v11399 = vpop.f32.mrb[0].mxu0
    %v11400 = vadd.f32 %v222, %v11399
    %v11401 = vpop.f32.mrb[0].mxu0
    %v11402 = vadd.f32 %v226, %v11401
    %v11403 = vpop.f32.mrb[0].mxu0
    %v11404 = vpop.f32.mrb[0].mxu0
    %11405 = vdwg.mxu0
    %11406 = vmatprep.subr.bf16.mxu0 0
    %11407 = vmatpush1.bf16.msra.mxu0 %v1382
    %11408 = vmatprep.subr.bf16.mxu0 0
    %11409 = vmatpush1.bf16.msra.mxu0 %v1385
    %11410 = vmatprep.subr.bf16.mxu0 0
    %11411 = vmatpush1.bf16.msra.mxu0 %v1388
    %11412 = vmatprep.subr.bf16.mxu0 0
    %11413 = vmatpush1.bf16.msra.mxu0 %v1391
    %11414 = vmatprep.subr.bf16.mxu0 0
    %11415 = vmatpush1.bf16.msra.mxu0 %v1394
    %11416 = vmatprep.subr.bf16.mxu0 0
    %11417 = vmatpush1.bf16.msra.mxu0 %v1397
    %11418 = vmatprep.subr.bf16.mxu0 0
    %11419 = vmatpush1.bf16.msra.mxu0 %v1400
    %11420 = vmatprep.subr.bf16.mxu0 0
    %11421 = vmatpush1.bf16.msra.mxu0 %v1403
    %11422 = vmatprep.subr.bf16.mxu0 0
    %11423 = vmatpush1.bf16.msra.mxu0 0
    %11424 = vmatprep.subr.bf16.mxu0 0
    %11425 = vmatpush1.bf16.msra.mxu0 0
    %11426 = vmatprep.subr.bf16.mxu0 0
    %11427 = vmatpush1.bf16.msra.mxu0 0
    %11428 = vmatprep.subr.bf16.mxu0 0
    %11429 = vmatpush1.bf16.msra.mxu0 0
    %11430 = vmatprep.subr.bf16.mxu0 0
    %11431 = vmatpush1.bf16.msra.mxu0 0
    %11432 = vmatprep.subr.bf16.mxu0 0
    %11433 = vmatpush1.bf16.msra.mxu0 0
    %11434 = vmatprep.subr.bf16.mxu0 0
    %11435 = vmatpush1.bf16.msra.mxu0 0
    %11436 = vmatprep.subr.bf16.mxu0 0
    %11437 = vmatpush1.bf16.msra.mxu0 0
    %11438 = vmatprep.mubr.bf16.mxu0 0
    %11439 = vmatmul.mubr.bf16.gmra.mrb[0].mxu0 %v11364
    %v11440 = vpop.f32.mrb[0].mxu0
    %v11441 = vadd.f32 %v230, %v11440
    %v11442 = vpop.f32.mrb[0].mxu0
    %v11443 = vpop.f32.mrb[0].mxu0
    %v11444 = vpop.f32.mrb[0].mxu0
    %11445 = vdwg.mxu0
    %v11446 = vmul.f32 %v1509, %v10484
    %v11448 = vcombine.high %v11400, %v11400
    %v11450 = vunpack.c.l.s4 1966171168
    %v11451 = vunpack.c.0.s8 %v11450
    %v11452 = vlaneseq
    %v11453 = vshrl.u32 %v11452, 7
    %v11454 = vsub.s32 %v11451, %v11453
    %v11455 = vrot.slane %v11400, %v11454
    %v11457 = vunpack.c.l.s4 1966171168
    %v11458 = vunpack.c.0.s8 %v11457
    %v11459 = vlaneseq
    %v11460 = vshrl.u32 %v11459, 7
    %v11461 = vsub.s32 %v11458, %v11460
    %v11462 = vrot.slane %v11448, %v11461
    %v11463 = vcombine.high %v11455, %v11455
    %v11464 = vcombine.high %v11462, %v11462
    %v11466 = vunpack.c.l.s4 1966171168
    %v11467 = vunpack.c.0.s8 %v11466
    %v11468 = vlaneseq
    %v11469 = vshrl.u32 %v11468, 7
    %v11470 = vsub.s32 %v11467, %v11469
    %v11471 = vrot.slane %v11455, %v11470
    %v11473 = vunpack.c.l.s4 1966171168
    %v11474 = vunpack.c.0.s8 %v11473
    %v11475 = vlaneseq
    %v11476 = vshrl.u32 %v11475, 7
    %v11477 = vsub.s32 %v11474, %v11476
    %v11478 = vrot.slane %v11462, %v11477
    %v11480 = vunpack.c.l.s4 1966171168
    %v11481 = vunpack.c.0.s8 %v11480
    %v11482 = vlaneseq
    %v11483 = vshrl.u32 %v11482, 7
    %v11484 = vsub.s32 %v11481, %v11483
    %v11485 = vrot.slane %v11463, %v11484
    %v11487 = vunpack.c.l.s4 1966171168
    %v11488 = vunpack.c.0.s8 %v11487
    %v11489 = vlaneseq
    %v11490 = vshrl.u32 %v11489, 7
    %v11491 = vsub.s32 %v11488, %v11490
    %v11492 = vrot.slane %v11464, %v11491
    %v11493 = vcombine.high %v11471, %v11471
    %v11494 = vcombine.high %v11478, %v11478
    %v11495 = vcombine.high %v11485, %v11485
    %v11496 = vcombine.high %v11492, %v11492
    %v11505 = vadd.f32 %v11356, %v11471
    %v11506 = vadd.f32 %v11357, %v11485
    %v11507 = vadd.f32 %v11358, %v11493
    %v11508 = vadd.f32 %v11359, %v11495
    %v11509 = vadd.f32 %v11360, %v11478
    %v11510 = vadd.f32 %v11361, %v11492
    %v11511 = vadd.f32 %v11362, %v11494
    %v11512 = vadd.f32 %v11363, %v11496
    %v11513 = vxor.u32 %v11505, 2147483648
    %v11514 = vxor.u32 %v11506, 2147483648
    %v11515 = vxor.u32 %v11507, 2147483648
    %v11516 = vxor.u32 %v11508, 2147483648
    %v11517 = vxor.u32 %v11509, 2147483648
    %v11518 = vxor.u32 %v11510, 2147483648
    %v11519 = vxor.u32 %v11511, 2147483648
    %v11520 = vxor.u32 %v11512, 2147483648
    %v11521 = vmul.f32 %v11513, 1.442695
    %v11522 = vpow.pop %v11521
    %v11523 = vmul.f32 %v11514, 1.442695
    %v11524 = vpow.pop %v11523
    %v11525 = vmul.f32 %v11515, 1.442695
    %v11526 = vpow.pop %v11525
    %v11527 = vmul.f32 %v11516, 1.442695
    %v11528 = vpow.pop %v11527
    %v11529 = vmul.f32 %v11517, 1.442695
    %v11530 = vpow.pop %v11529
    %v11531 = vmul.f32 %v11518, 1.442695
    %v11532 = vpow.pop %v11531
    %v11533 = vmul.f32 %v11519, 1.442695
    %v11534 = vpow.pop %v11533
    %v11535 = vmul.f32 %v11520, 1.442695
    %v11536 = vpow.pop %v11535
    %v11537 = vadd.f32 %v11522, 1.0
    %v11538 = vadd.f32 %v11524, 1.0
    %v11539 = vadd.f32 %v11526, 1.0
    %v11540 = vadd.f32 %v11528, 1.0
    %v11541 = vadd.f32 %v11530, 1.0
    %v11542 = vadd.f32 %v11532, 1.0
    %v11543 = vadd.f32 %v11534, 1.0
    %v11544 = vadd.f32 %v11536, 1.0
    %v11545 = vrcp.pop %v11537
    %v11546 = vmul.f32 1.0, %v11545
    %v11547 = vrcp.pop %v11538
    %v11548 = vmul.f32 1.0, %v11547
    %v11549 = vrcp.pop %v11539
    %v11550 = vmul.f32 1.0, %v11549
    %v11551 = vrcp.pop %v11540
    %v11552 = vmul.f32 1.0, %v11551
    %v11553 = vrcp.pop %v11541
    %v11554 = vmul.f32 1.0, %v11553
    %v11555 = vrcp.pop %v11542
    %v11556 = vmul.f32 1.0, %v11555
    %v11557 = vrcp.pop %v11543
    %v11558 = vmul.f32 1.0, %v11557
    %v11559 = vrcp.pop %v11544
    %v11560 = vmul.f32 1.0, %v11559
    %v11569 = vrot.slane %v11356, 1
    %v11570 = vrot.slane %v11357, 1
    %v11571 = vrot.slane %v11358, 1
    %v11572 = vrot.slane %v11359, 1
    %v11573 = vrot.slane %v11360, 1
    %v11574 = vrot.slane %v11361, 1
    %v11575 = vrot.slane %v11362, 1
    %v11576 = vrot.slane %v11363, 1
    %v11586 = vcombine.high %v11402, %v11402
    %v11588 = vunpack.c.l.s4 1966171168
    %v11589 = vunpack.c.0.s8 %v11588
    %v11590 = vlaneseq
    %v11591 = vshrl.u32 %v11590, 7
    %v11592 = vsub.s32 %v11589, %v11591
    %v11593 = vrot.slane %v11402, %v11592
    %v11595 = vunpack.c.l.s4 1966171168
    %v11596 = vunpack.c.0.s8 %v11595
    %v11597 = vlaneseq
    %v11598 = vshrl.u32 %v11597, 7
    %v11599 = vsub.s32 %v11596, %v11598
    %v11600 = vrot.slane %v11586, %v11599
    %v11601 = vcombine.high %v11593, %v11593
    %v11602 = vcombine.high %v11600, %v11600
    %v11604 = vunpack.c.l.s4 1966171168
    %v11605 = vunpack.c.0.s8 %v11604
    %v11606 = vlaneseq
    %v11607 = vshrl.u32 %v11606, 7
    %v11608 = vsub.s32 %v11605, %v11607
    %v11609 = vrot.slane %v11593, %v11608
    %v11611 = vunpack.c.l.s4 1966171168
    %v11612 = vunpack.c.0.s8 %v11611
    %v11613 = vlaneseq
    %v11614 = vshrl.u32 %v11613, 7
    %v11615 = vsub.s32 %v11612, %v11614
    %v11616 = vrot.slane %v11600, %v11615
    %v11618 = vunpack.c.l.s4 1966171168
    %v11619 = vunpack.c.0.s8 %v11618
    %v11620 = vlaneseq
    %v11621 = vshrl.u32 %v11620, 7
    %v11622 = vsub.s32 %v11619, %v11621
    %v11623 = vrot.slane %v11601, %v11622
    %v11625 = vunpack.c.l.s4 1966171168
    %v11626 = vunpack.c.0.s8 %v11625
    %v11627 = vlaneseq
    %v11628 = vshrl.u32 %v11627, 7
    %v11629 = vsub.s32 %v11626, %v11628
    %v11630 = vrot.slane %v11602, %v11629
    %v11631 = vcombine.high %v11609, %v11609
    %v11632 = vcombine.high %v11616, %v11616
    %v11633 = vcombine.high %v11623, %v11623
    %v11634 = vcombine.high %v11630, %v11630
    %v11643 = vadd.f32 %v11569, %v11609
    %v11644 = vadd.f32 %v11570, %v11623
    %v11645 = vadd.f32 %v11571, %v11631
    %v11646 = vadd.f32 %v11572, %v11633
    %v11647 = vadd.f32 %v11573, %v11616
    %v11648 = vadd.f32 %v11574, %v11630
    %v11649 = vadd.f32 %v11575, %v11632
    %v11650 = vadd.f32 %v11576, %v11634
    %v11651 = vxor.u32 %v11643, 2147483648
    %v11652 = vxor.u32 %v11644, 2147483648
    %v11653 = vxor.u32 %v11645, 2147483648
    %v11654 = vxor.u32 %v11646, 2147483648
    %v11655 = vxor.u32 %v11647, 2147483648
    %v11656 = vxor.u32 %v11648, 2147483648
    %v11657 = vxor.u32 %v11649, 2147483648
    %v11658 = vxor.u32 %v11650, 2147483648
    %v11659 = vmul.f32 %v11651, 1.442695
    %v11660 = vpow.pop %v11659
    %v11661 = vmul.f32 %v11652, 1.442695
    %v11662 = vpow.pop %v11661
    %v11663 = vmul.f32 %v11653, 1.442695
    %v11664 = vpow.pop %v11663
    %v11665 = vmul.f32 %v11654, 1.442695
    %v11666 = vpow.pop %v11665
    %v11667 = vmul.f32 %v11655, 1.442695
    %v11668 = vpow.pop %v11667
    %v11669 = vmul.f32 %v11656, 1.442695
    %v11670 = vpow.pop %v11669
    %v11671 = vmul.f32 %v11657, 1.442695
    %v11672 = vpow.pop %v11671
    %v11673 = vmul.f32 %v11658, 1.442695
    %v11674 = vpow.pop %v11673
    %v11675 = vadd.f32 %v11660, 1.0
    %v11676 = vadd.f32 %v11662, 1.0
    %v11677 = vadd.f32 %v11664, 1.0
    %v11678 = vadd.f32 %v11666, 1.0
    %v11679 = vadd.f32 %v11668, 1.0
    %v11680 = vadd.f32 %v11670, 1.0
    %v11681 = vadd.f32 %v11672, 1.0
    %v11682 = vadd.f32 %v11674, 1.0
    %v11683 = vrcp.pop %v11675
    %v11684 = vmul.f32 1.0, %v11683
    %v11685 = vrcp.pop %v11676
    %v11686 = vmul.f32 1.0, %v11685
    %v11687 = vrcp.pop %v11677
    %v11688 = vmul.f32 1.0, %v11687
    %v11689 = vrcp.pop %v11678
    %v11690 = vmul.f32 1.0, %v11689
    %v11691 = vrcp.pop %v11679
    %v11692 = vmul.f32 1.0, %v11691
    %v11693 = vrcp.pop %v11680
    %v11694 = vmul.f32 1.0, %v11693
    %v11695 = vrcp.pop %v11681
    %v11696 = vmul.f32 1.0, %v11695
    %v11697 = vrcp.pop %v11682
    %v11698 = vmul.f32 1.0, %v11697
    %v11700 = vcombine.high %v11441, %v11441
    %v11702 = vunpack.c.l.s4 1966171168
    %v11703 = vunpack.c.0.s8 %v11702
    %v11704 = vlaneseq
    %v11705 = vshrl.u32 %v11704, 7
    %v11706 = vsub.s32 %v11703, %v11705
    %v11707 = vrot.slane %v11441, %v11706
    %v11709 = vunpack.c.l.s4 1966171168
    %v11710 = vunpack.c.0.s8 %v11709
    %v11711 = vlaneseq
    %v11712 = vshrl.u32 %v11711, 7
    %v11713 = vsub.s32 %v11710, %v11712
    %v11714 = vrot.slane %v11700, %v11713
    %v11715 = vcombine.high %v11707, %v11707
    %v11716 = vcombine.high %v11714, %v11714
    %v11718 = vunpack.c.l.s4 1966171168
    %v11719 = vunpack.c.0.s8 %v11718
    %v11720 = vlaneseq
    %v11721 = vshrl.u32 %v11720, 7
    %v11722 = vsub.s32 %v11719, %v11721
    %v11723 = vrot.slane %v11707, %v11722
    %v11725 = vunpack.c.l.s4 1966171168
    %v11726 = vunpack.c.0.s8 %v11725
    %v11727 = vlaneseq
    %v11728 = vshrl.u32 %v11727, 7
    %v11729 = vsub.s32 %v11726, %v11728
    %v11730 = vrot.slane %v11714, %v11729
    %v11732 = vunpack.c.l.s4 1966171168
    %v11733 = vunpack.c.0.s8 %v11732
    %v11734 = vlaneseq
    %v11735 = vshrl.u32 %v11734, 7
    %v11736 = vsub.s32 %v11733, %v11735
    %v11737 = vrot.slane %v11715, %v11736
    %v11739 = vunpack.c.l.s4 1966171168
    %v11740 = vunpack.c.0.s8 %v11739
    %v11741 = vlaneseq
    %v11742 = vshrl.u32 %v11741, 7
    %v11743 = vsub.s32 %v11740, %v11742
    %v11744 = vrot.slane %v11716, %v11743
    %v11745 = vcombine.high %v11723, %v11723
    %v11746 = vcombine.high %v11730, %v11730
    %v11747 = vcombine.high %v11737, %v11737
    %v11748 = vcombine.high %v11744, %v11744
    %v11757 = vmul.f32 %v11546, %v11723
    %v11758 = vmul.f32 %v11548, %v11737
    %v11759 = vmul.f32 %v11550, %v11745
    %v11760 = vmul.f32 %v11552, %v11747
    %v11761 = vmul.f32 %v11554, %v11730
    %v11762 = vmul.f32 %v11556, %v11744
    %v11763 = vmul.f32 %v11558, %v11746
    %v11764 = vmul.f32 %v11560, %v11748
    %v11765 = vrot.slane %v11356, 2
    %v11766 = vrot.slane %v11357, 2
    %v11767 = vrot.slane %v11358, 2
    %v11768 = vrot.slane %v11359, 2
    %v11769 = vrot.slane %v11360, 2
    %v11770 = vrot.slane %v11361, 2
    %v11771 = vrot.slane %v11362, 2
    %v11772 = vrot.slane %v11363, 2
    %v11781 = vadd.f32 %v11765, %v11757
    %v11782 = vadd.f32 %v11766, %v11758
    %v11783 = vadd.f32 %v11767, %v11759
    %v11784 = vadd.f32 %v11768, %v11760
    %v11785 = vadd.f32 %v11769, %v11761
    %v11786 = vadd.f32 %v11770, %v11762
    %v11787 = vadd.f32 %v11771, %v11763
    %v11788 = vadd.f32 %v11772, %v11764
    %v11789 = vtanh.pop %v11781
    %v11790 = vtanh.pop %v11782
    %v11791 = vtanh.pop %v11783
    %v11792 = vtanh.pop %v11784
    %v11793 = vtanh.pop %v11785
    %v11794 = vtanh.pop %v11786
    %v11795 = vtanh.pop %v11787
    %v11796 = vtanh.pop %v11788
    %v11797 = vsub.f32 1.0, %v11684
    %v11798 = vsub.f32 1.0, %v11686
    %v11799 = vsub.f32 1.0, %v11688
    %v11800 = vsub.f32 1.0, %v11690
    %v11801 = vsub.f32 1.0, %v11692
    %v11802 = vsub.f32 1.0, %v11694
    %v11803 = vsub.f32 1.0, %v11696
    %v11804 = vsub.f32 1.0, %v11698
    %v11805 = vmul.f32 %v11797, %v11789
    %v11806 = vmul.f32 %v11798, %v11790
    %v11807 = vmul.f32 %v11799, %v11791
    %v11808 = vmul.f32 %v11800, %v11792
    %v11809 = vmul.f32 %v11801, %v11793
    %v11810 = vmul.f32 %v11802, %v11794
    %v11811 = vmul.f32 %v11803, %v11795
    %v11812 = vmul.f32 %v11804, %v11796
    %v11813 = vmul.f32 %v11684, %v10575
    %v11814 = vmul.f32 %v11686, %v10589
    %v11815 = vmul.f32 %v11688, %v10597
    %v11816 = vmul.f32 %v11690, %v10599
    %v11817 = vmul.f32 %v11692, %v10582
    %v11818 = vmul.f32 %v11694, %v10596
    %v11819 = vmul.f32 %v11696, %v10598
    %v11820 = vmul.f32 %v11698, %v10600
    %v11821 = vadd.f32 %v11805, %v11813
    %v11822 = vadd.f32 %v11806, %v11814
    %v11823 = vadd.f32 %v11807, %v11815
    %v11824 = vadd.f32 %v11808, %v11816
    %v11825 = vadd.f32 %v11809, %v11817
    %v11826 = vadd.f32 %v11810, %v11818
    %v11827 = vadd.f32 %v11811, %v11819
    %v11828 = vadd.f32 %v11812, %v11820
    %v11829 = vmul.f32 %v1951, %v11821
    %v11830 = vmul.f32 %v1951, %v11822
    %v11831 = vmul.f32 %v1951, %v11823
    %v11832 = vmul.f32 %v1951, %v11824
    %v11833 = vmul.f32 %v1951, %v11825
    %v11834 = vmul.f32 %v1951, %v11826
    %v11835 = vmul.f32 %v1951, %v11827
    %v11836 = vmul.f32 %v1951, %v11828
    %v11845 = vcombine.low %v11829, %v11830
    %v11846 = vcombine.low %v11831, %v11832
    %v11847 = vcombine.low %v11833, %v11834
    %v11848 = vcombine.low %v11835, %v11836
    %v11850 = vunpack.c.l.s4 1966171168
    %v11851 = vunpack.c.0.s8 %v11850
    %v11852 = vlaneseq
    %v11853 = vshrl.u32 %v11852, 7
    %v11854 = vsub.s32 %v11851, %v11853
    %v11855 = vrot.slane %v11845, %v11854
    %v11857 = vunpack.c.l.s4 1966171168
    %v11858 = vunpack.c.0.s8 %v11857
    %v11859 = vlaneseq
    %v11860 = vshrl.u32 %v11859, 7
    %v11861 = vsub.s32 %v11858, %v11860
    %v11862 = vrot.slane %v11846, %v11861
    %v11864 = vunpack.c.l.s4 1966171168
    %v11865 = vunpack.c.0.s8 %v11864
    %v11866 = vlaneseq
    %v11867 = vshrl.u32 %v11866, 7
    %v11868 = vsub.s32 %v11865, %v11867
    %v11869 = vrot.slane %v11847, %v11868
    %v11871 = vunpack.c.l.s4 1966171168
    %v11872 = vunpack.c.0.s8 %v11871
    %v11873 = vlaneseq
    %v11874 = vshrl.u32 %v11873, 7
    %v11875 = vsub.s32 %v11872, %v11874
    %v11876 = vrot.slane %v11848, %v11875
    %v11877 = vcombine.low %v11855, %v11862
    %v11878 = vcombine.low %v11869, %v11876
    %v11880 = vunpack.c.l.s4 1966171168
    %v11881 = vunpack.c.0.s8 %v11880
    %v11882 = vlaneseq
    %v11883 = vshrl.u32 %v11882, 7
    %v11884 = vsub.s32 %v11881, %v11883
    %v11885 = vrot.slane %v11877, %v11884
    %v11887 = vunpack.c.l.s4 1966171168
    %v11888 = vunpack.c.0.s8 %v11887
    %v11889 = vlaneseq
    %v11890 = vshrl.u32 %v11889, 7
    %v11891 = vsub.s32 %v11888, %v11890
    %v11892 = vrot.slane %v11878, %v11891
    %v11893 = vcombine.low %v11885, %v11892
    %v11895 = vadd.f32 %v11446, %v11893
    %v11897 = vcombine.high %v11179, %v11179
    %v11899 = vunpack.c.l.s4 1966171168
    %v11900 = vunpack.c.0.s8 %v11899
    %v11901 = vlaneseq
    %v11902 = vshrl.u32 %v11901, 7
    %v11903 = vsub.s32 %v11900, %v11902
    %v11904 = vrot.slane %v11179, %v11903
    %v11906 = vunpack.c.l.s4 1966171168
    %v11907 = vunpack.c.0.s8 %v11906
    %v11908 = vlaneseq
    %v11909 = vshrl.u32 %v11908, 7
    %v11910 = vsub.s32 %v11907, %v11909
    %v11911 = vrot.slane %v11897, %v11910
    %v11912 = vcombine.high %v11904, %v11904
    %v11913 = vcombine.high %v11911, %v11911
    %v11915 = vunpack.c.l.s4 1966171168
    %v11916 = vunpack.c.0.s8 %v11915
    %v11917 = vlaneseq
    %v11918 = vshrl.u32 %v11917, 7
    %v11919 = vsub.s32 %v11916, %v11918
    %v11920 = vrot.slane %v11904, %v11919
    %v11922 = vunpack.c.l.s4 1966171168
    %v11923 = vunpack.c.0.s8 %v11922
    %v11924 = vlaneseq
    %v11925 = vshrl.u32 %v11924, 7
    %v11926 = vsub.s32 %v11923, %v11925
    %v11927 = vrot.slane %v11911, %v11926
    %v11929 = vunpack.c.l.s4 1966171168
    %v11930 = vunpack.c.0.s8 %v11929
    %v11931 = vlaneseq
    %v11932 = vshrl.u32 %v11931, 7
    %v11933 = vsub.s32 %v11930, %v11932
    %v11934 = vrot.slane %v11912, %v11933
    %v11936 = vunpack.c.l.s4 1966171168
    %v11937 = vunpack.c.0.s8 %v11936
    %v11938 = vlaneseq
    %v11939 = vshrl.u32 %v11938, 7
    %v11940 = vsub.s32 %v11937, %v11939
    %v11941 = vrot.slane %v11913, %v11940
    %v11942 = vcombine.high %v11920, %v11920
    %v11943 = vcombine.high %v11927, %v11927
    %v11944 = vcombine.high %v11934, %v11934
    %v11945 = vcombine.high %v11941, %v11941
    %11954 = vst [vmem:[#allocation14 + $0x7] sm:$0x1] %v11920
    %11955 = vst [vmem:[#allocation14 + $0x17] sm:$0x1] %v11934
    %11956 = vst [vmem:[#allocation14 + $0x27] sm:$0x1] %v11942
    %11957 = vst [vmem:[#allocation14 + $0x37] sm:$0x1] %v11944
    %11958 = vst [vmem:[#allocation14 + $0x47] sm:$0x1] %v11927
    %11959 = vst [vmem:[#allocation14 + $0x57] sm:$0x1] %v11941
    %11960 = vst [vmem:[#allocation14 + $0x67] sm:$0x1] %v11943
    %11961 = vst [vmem:[#allocation14 + $0x77] sm:$0x1] %v11945
    %v11963 = vcombine.high %v11895, %v11895
    %v11965 = vunpack.c.l.s4 1966171168
    %v11966 = vunpack.c.0.s8 %v11965
    %v11967 = vlaneseq
    %v11968 = vshrl.u32 %v11967, 7
    %v11969 = vsub.s32 %v11966, %v11968
    %v11970 = vrot.slane %v11895, %v11969
    %v11972 = vunpack.c.l.s4 1966171168
    %v11973 = vunpack.c.0.s8 %v11972
    %v11974 = vlaneseq
    %v11975 = vshrl.u32 %v11974, 7
    %v11976 = vsub.s32 %v11973, %v11975
    %v11977 = vrot.slane %v11963, %v11976
    %v11978 = vcombine.high %v11970, %v11970
    %v11979 = vcombine.high %v11977, %v11977
    %v11981 = vunpack.c.l.s4 1966171168
    %v11982 = vunpack.c.0.s8 %v11981
    %v11983 = vlaneseq
    %v11984 = vshrl.u32 %v11983, 7
    %v11985 = vsub.s32 %v11982, %v11984
    %v11986 = vrot.slane %v11970, %v11985
    %v11988 = vunpack.c.l.s4 1966171168
    %v11989 = vunpack.c.0.s8 %v11988
    %v11990 = vlaneseq
    %v11991 = vshrl.u32 %v11990, 7
    %v11992 = vsub.s32 %v11989, %v11991
    %v11993 = vrot.slane %v11977, %v11992
    %v11995 = vunpack.c.l.s4 1966171168
    %v11996 = vunpack.c.0.s8 %v11995
    %v11997 = vlaneseq
    %v11998 = vshrl.u32 %v11997, 7
    %v11999 = vsub.s32 %v11996, %v11998
    %v12000 = vrot.slane %v11978, %v11999
    %v12002 = vunpack.c.l.s4 1966171168
    %v12003 = vunpack.c.0.s8 %v12002
    %v12004 = vlaneseq
    %v12005 = vshrl.u32 %v12004, 7
    %v12006 = vsub.s32 %v12003, %v12005
    %v12007 = vrot.slane %v11979, %v12006
    %v12008 = vcombine.high %v11986, %v11986
    %v12009 = vcombine.high %v11993, %v11993
    %v12010 = vcombine.high %v12000, %v12000
    %v12011 = vcombine.high %v12007, %v12007
    %12020 = vst [vmem:[#allocation14 + $0xf] sm:$0x1] %v11986
    %12021 = vst [vmem:[#allocation14 + $0x1f] sm:$0x1] %v12000
    %12022 = vst [vmem:[#allocation14 + $0x2f] sm:$0x1] %v12008
    %12023 = vst [vmem:[#allocation14 + $0x3f] sm:$0x1] %v12010
    %12024 = vst [vmem:[#allocation14 + $0x4f] sm:$0x1] %v11993
    %12025 = vst [vmem:[#allocation14 + $0x5f] sm:$0x1] %v12007
    %12026 = vst [vmem:[#allocation14 + $0x6f] sm:$0x1] %v12009
    %12027 = vst [vmem:[#allocation14 + $0x7f] sm:$0x1] %v12011
    %12028 = vst [vmem:[#allocation2] sm:$0xff] %v11179
    %12029 = vst [vmem:[#allocation3] sm:$0xff] %v11895
    // Predicated region
    $region54: #{tpu_custom_call.1} parent=1 // pred_check
      _
    $region55: #{tpu_custom_call.1} parent=1 // pred_check_branch
      %12031 = sbr.rel (0) target = $region57
    $region56: #{tpu_custom_call.1} parent=1 // pred_region
      %s12033 = ssub.s32 2048, 2048
      %12034 = vsyncadd [#allocation6], %s12033
      %s12035 = sshll.u32 [#allocation14], 4
      %s12036 = int_to_ptr.vmem [resolvable:$true] %s12035
      %12041 = dma.vmem_to_hbm [thread:$0]  %s12036, 2048, %s7, [#allocation6], 256, 256, 16
    $region57: #{tpu_custom_call.1} parent=1 // pred_fallthru
      _
    // Predicated region
    $region58: #{tpu_custom_call.1} parent=1 // pred_check
      _
    $region59: #{tpu_custom_call.1} parent=1 // pred_check_branch
      %12043 = sbr.rel (0) target = $region61
    $region60: #{tpu_custom_call.1} parent=1 // pred_region
      %12044 = dma.done [#allocation6], 2048
    $region61: #{tpu_custom_call.1} parent=1 // pred_fallthru
      _
    %12045 = vsyncpa [#allocation5], 1
    %12046 = vsyncpa [#allocation10], 1
    %12047 = vsyncpa [#allocation13], 1
    %12048 = vsyncpa [#allocation6], 1
    %12049 = vsyncpa [#allocation7], 1

</llo_original>
